<compile_context>
chip_gen: v5e
topology: v5e:2x2
jax: 0.10.0
libtpu: 0.0.40
codegen_flags: <defaults>
</compile_context>

<pallas_src>
import functools

import jax
import jax.numpy as jnp
from jax import lax
from jax.experimental import pallas as pl
from jax.experimental.pallas import tpu as pltpu

EPS = 1e-5
EXPANSION = 4
LANE = 128          # channel dims are zero-padded to multiples of this
TM = 512            # row tile for the 1x1-conv GEMMs / elementwise kernels


def _ru(x, m):
    return (x + m - 1) // m * m


def _ctile(c):
    # MXU-friendly channel tile.
    return 256 if c % 256 == 0 else 128


def _etile(n):
    # Channel tile for the elementwise BN kernels (full width when small).
    if n <= 512:
        return n
    for c in (512, 256, 128):
        if n % c == 0:
            return c
    return n


def _choose_tho(ho, wo, max_rows=2048):
    """Output-row tile for the 3x3 conv: divides ho, keeps the accumulator
    bounded, and keeps the flat (tho*wo) row-block a multiple of 8."""
    for cand in range(ho, 0, -1):
        if ho % cand == 0 and cand * wo <= max_rows and (cand * wo) % 8 == 0:
            return cand
    # TODO(synk): odd spatial sizes (e.g. 7x7 with batch>1) need a masked
    # last row tile; fall back to whole-image rows.
    return ho


def _vmem_limit():
    # Per-chip budget: ~3/4 of physical VMEM (v7x: 64->48 MiB,
    # v5e/v6e: 128->96 MiB), capped at 100 MiB.
    try:
        cap = int(pltpu.get_tpu_info().vmem_capacity_bytes)
    except Exception:
        cap = 64 * 1024 * 1024
    return min(cap * 3 // 4, 100 * 1024 * 1024)


VMEM_LIMIT = _vmem_limit()


# ---------------------------------------------------------------------------
# Kernels
# ---------------------------------------------------------------------------
def _mm_stats_kernel(x_ref, w_ref, y_ref, st_ref, acc_ref):
    """Tiled GEMM (bf16 in, f32 acc) + per-(M-tile) per-channel sum/sumsq."""
    k = pl.program_id(2)

    @pl.when(k == 0)
    def _():
        acc_ref[...] = jnp.zeros_like(acc_ref)

    acc_ref[...] += jnp.dot(x_ref[...], w_ref[...],
                            preferred_element_type=jnp.float32)

    @pl.when(k == pl.num_programs(2) - 1)
    def _():
        acc = acc_ref[...]
        y_ref[...] = acc.astype(y_ref.dtype)
        s1 = jnp.sum(acc, axis=0, keepdims=True)
        s2 = jnp.sum(acc * acc, axis=0, keepdims=True)
        st_ref[...] = jnp.concatenate([s1, s2], axis=0)[None]


def _conv3x3_stats_kernel(x_ref, w_ref, y_ref, st_ref, acc_ref, *,
                          stride, tho, wo, n_htiles):
    """3x3 conv, row-tiled: nine shifted-window bf16 GEMMs accumulated in a
    (tho*wo, tn) f32 VMEM scratch; flat lane-dense output + BN partials."""
    cin = x_ref.shape[-1]
    acc_ref[...] = jnp.zeros_like(acc_ref)

    if n_htiles > 1:
        row0 = pl.program_id(1) * (tho * stride)
        if (tho * stride) % 8 == 0:
            row0 = pl.multiple_of(row0, 8)

    for kh in range(3):
        for kw in range(3):
            if stride == 1:
                cols = slice(kw, kw + wo)
            else:
                cols = slice(kw, kw + stride * (wo - 1) + 1, stride)
            if n_htiles == 1:
                if stride == 1:
                    win = x_ref[0, kh:kh + tho, cols, :]
                else:
                    # TODO(synk): stride != 1 path is not exercised by the
                    # harness (stride=1); validate before using downsampling.
                    win = x_ref[0, kh:kh + stride * (tho - 1) + 1:stride,
                                cols, :]
            else:
                if stride == 1:
                    win = x_ref[0, pl.ds(row0 + kh, tho), cols, :]
                else:
                    # TODO(synk): strided + row-tiled windows untested.
                    win = x_ref[0, pl.ds(row0 + kh, tho, stride=stride),
                                cols, :]
            acc_ref[...] += jnp.dot(win.reshape(tho * wo, cin),
                                    w_ref[kh * 3 + kw],
                                    preferred_element_type=jnp.float32)

    acc = acc_ref[...]
    y_ref[...] = acc.astype(y_ref.dtype)
    s1 = jnp.sum(acc, axis=0, keepdims=True)
    s2 = jnp.sum(acc * acc, axis=0, keepdims=True)
    st_ref[...] = jnp.concatenate([s1, s2], axis=0)[None]


def _bn_act_kernel(y_ref, s_ref, b_ref, o_ref, *, relu, valid_rows, tm):
    out = y_ref[...].astype(jnp.float32) * s_ref[...] + b_ref[...]
    if relu:
        out = jnp.maximum(out, 0.0)
    if valid_rows is None:
        o_ref[...] = out.astype(o_ref.dtype)
    else:
        last = pl.num_programs(0) - 1

        @pl.when(pl.program_id(0) == last)
        def _():
            row = pl.program_id(0) * tm + lax.broadcasted_iota(
                jnp.int32, out.shape, 0)
            o_ref[...] = jnp.where(row < valid_rows, out, 0.0).astype(o_ref.dtype)

        @pl.when(pl.program_id(0) != last)
        def _():
            o_ref[...] = out.astype(o_ref.dtype)


def _bn_add_act_kernel(y_ref, s_ref, b_ref, r_ref, rs_ref, rb_ref, o_ref):
    out = (y_ref[...].astype(jnp.float32) * s_ref[...] + b_ref[...]
           + r_ref[...].astype(jnp.float32) * rs_ref[...] + rb_ref[...])
    o_ref[...] = jnp.maximum(out, 0.0).astype(o_ref.dtype)


# ---------------------------------------------------------------------------
# pallas_call wrappers
# ---------------------------------------------------------------------------
def matmul_stats(x, w, *, out_dtype=jnp.bfloat16):
    M, K = x.shape
    K2, N = w.shape
    assert K == K2 and M % TM == 0 and K % LANE == 0 and N % LANE == 0
    tm, tk, tn = TM, _ctile(K), _ctile(N)
    nm, nn, nk = M // tm, N // tn, K // tk
    return pl.pallas_call(
        _mm_stats_kernel,
        out_shape=(jax.ShapeDtypeStruct((M, N), out_dtype),
                   jax.ShapeDtypeStruct((nm, 2, N), jnp.float32)),
        grid=(nm, nn, nk),
        in_specs=[pl.BlockSpec((tm, tk), lambda i, j, k: (i, k)),
                  pl.BlockSpec((tk, tn), lambda i, j, k: (k, j))],
        out_specs=(pl.BlockSpec((tm, tn), lambda i, j, k: (i, j)),
                   pl.BlockSpec((1, 2, tn), lambda i, j, k: (i, 0, j))),
        scratch_shapes=[pltpu.VMEM((tm, tn), jnp.float32)],
        compiler_params=pltpu.CompilerParams(
            dimension_semantics=("parallel", "parallel", "arbitrary"),
            vmem_limit_bytes=VMEM_LIMIT),
        cost_estimate=pl.CostEstimate(
            flops=2 * M * N * K, transcendentals=0,
            bytes_accessed=M * K * 2 + K * N * 2
            + M * N * jnp.dtype(out_dtype).itemsize),
    )(x, w)


def conv3x3_stats(xpad, w9, *, stride, out_dtype=jnp.bfloat16):
    nb, hp, wp, cin = xpad.shape
    n = w9.shape[-1]
    ho = (hp - 3) // stride + 1
    wo = (wp - 3) // stride + 1
    tn = _ctile(n)
    tho = _choose_tho(ho, wo)
    nh = ho // tho
    assert ho % tho == 0 and ((tho * wo) % 8 == 0 or nb * nh == 1)
    m2 = nb * ho * wo
    kern = functools.partial(_conv3x3_stats_kernel, stride=stride,
                             tho=tho, wo=wo, n_htiles=nh)
    y, st = pl.pallas_call(
        kern,
        out_shape=(jax.ShapeDtypeStruct((m2, n), out_dtype),
                   jax.ShapeDtypeStruct((nb * nh, 2, n), jnp.float32)),
        grid=(nb, nh, n // tn),
        in_specs=[pl.BlockSpec((1, hp, wp, cin), lambda b, r, j: (b, 0, 0, 0)),
                  pl.BlockSpec((9, cin, tn), lambda b, r, j: (0, 0, j))],
        out_specs=(pl.BlockSpec((tho * wo, tn),
                                lambda b, r, j, nh=nh: (b * nh + r, j)),
                   pl.BlockSpec((1, 2, tn),
                                lambda b, r, j, nh=nh: (b * nh + r, 0, j))),
        scratch_shapes=[pltpu.VMEM((tho * wo, tn), jnp.float32)],
        compiler_params=pltpu.CompilerParams(
            dimension_semantics=("parallel", "parallel", "parallel"),
            vmem_limit_bytes=VMEM_LIMIT),
        cost_estimate=pl.CostEstimate(
            flops=2 * m2 * n * 9 * cin, transcendentals=0,
            bytes_accessed=xpad.size * xpad.dtype.itemsize + w9.size * 2
            + m2 * n * jnp.dtype(out_dtype).itemsize),
    )(xpad, w9)
    return y, st


def bn_act(y, scale, shift, *, relu, out_dtype, valid_rows=None):
    M, N = y.shape
    tm, tn = min(TM, M), _etile(N)
    assert M % tm == 0 and N % tn == 0
    kern = functools.partial(_bn_act_kernel, relu=relu,
                             valid_rows=valid_rows, tm=tm)
    return pl.pallas_call(
        kern,
        out_shape=jax.ShapeDtypeStruct((M, N), out_dtype),
        grid=(M // tm, N // tn),
        in_specs=[pl.BlockSpec((tm, tn), lambda i, j: (i, j)),
                  pl.BlockSpec((1, tn), lambda i, j: (0, j)),
                  pl.BlockSpec((1, tn), lambda i, j: (0, j))],
        out_specs=pl.BlockSpec((tm, tn), lambda i, j: (i, j)),
        compiler_params=pltpu.CompilerParams(
            dimension_semantics=("parallel", "parallel"),
            vmem_limit_bytes=VMEM_LIMIT),
    )(y, scale, shift)


def bn_add_act(y, scale, shift, res, res_scale, res_shift):
    M, N = y.shape
    tm, tn = min(TM, M), _etile(N)
    assert M % tm == 0 and N % tn == 0
    return pl.pallas_call(
        _bn_add_act_kernel,
        out_shape=jax.ShapeDtypeStruct((M, N), jnp.float32),
        grid=(M // tm, N // tn),
        in_specs=[pl.BlockSpec((tm, tn), lambda i, j: (i, j)),
                  pl.BlockSpec((1, tn), lambda i, j: (0, j)),
                  pl.BlockSpec((1, tn), lambda i, j: (0, j)),
                  pl.BlockSpec((tm, tn), lambda i, j: (i, j)),
                  pl.BlockSpec((1, tn), lambda i, j: (0, j)),
                  pl.BlockSpec((1, tn), lambda i, j: (0, j))],
        out_specs=pl.BlockSpec((tm, tn), lambda i, j: (i, j)),
        compiler_params=pltpu.CompilerParams(
            dimension_semantics=("parallel", "parallel"),
            vmem_limit_bytes=VMEM_LIMIT),
    )(y, scale, shift, res, res_scale, res_shift)


def finalize_bn(stats, count, gamma, beta):
    """Partial (sum, sumsq) -> per-channel scale/shift (tiny, plain JAX)."""
    s = jnp.sum(stats, axis=0)                       # (2, N)
    mean = s[0] / count
    var = jnp.maximum(s[1] / count - mean * mean, 0.0)  # biased var (train BN)
    scale = gamma * lax.rsqrt(var + EPS)
    shift = beta - mean * scale
    return scale.reshape(1, -1), shift.reshape(1, -1)


# ---------------------------------------------------------------------------
# Parameters (deterministic, synthetic) and forward pass
# ---------------------------------------------------------------------------
def init_bottleneck_params(key, in_planes, planes, stride):
    out_planes = EXPANSION * planes
    ks = jax.random.split(key, 8)

    def conv1x1(k, cin, cout):
        w = 0.1 * jax.random.normal(k, (cout, cin, 1, 1), jnp.float32)
        return jnp.transpose(w, (2, 3, 1, 0)).reshape(cin, cout)

    def conv3x3(k, cin, cout):
        w = 0.1 * jax.random.normal(k, (cout, cin, 3, 3), jnp.float32)
        return jnp.transpose(w, (2, 3, 1, 0)).reshape(9, cin, cout)

    def bn(k, c):
        g = 1.0 + 0.1 * jax.random.normal(k, (c,), jnp.float32)
        b = 0.1 * jax.random.normal(jax.random.fold_in(k, 1), (c,), jnp.float32)
        return g, b

    p = {"w1": conv1x1(ks[0], in_planes, planes)}
    p["g1"], p["b1"] = bn(ks[1], planes)
    p["w2"] = conv3x3(ks[2], planes, planes)
    p["g2"], p["b2"] = bn(ks[3], planes)
    p["w3"] = conv1x1(ks[4], planes, out_planes)
    p["g3"], p["b3"] = bn(ks[5], out_planes)
    if stride != 1 or in_planes != out_planes:
        p["ws"] = conv1x1(ks[6], in_planes, out_planes)
        p["gs"], p["bs"] = bn(ks[7], out_planes)
    return p


def bottleneck_forward(x_nchw, params, *, stride):
    x = jnp.transpose(x_nchw, (0, 2, 3, 1)).astype(jnp.float32)   # NHWC
    nb, h, w, cin = x.shape
    planes = params["w1"].shape[1]
    out_planes = EXPANSION * planes

    cin_p = _ru(cin, LANE)
    pl_p = _ru(planes, LANE)
    out_p = _ru(out_planes, LANE)

    ho = (h + 2 - 3) // stride + 1
    wo = (w + 2 - 3) // stride + 1
    m1, m2 = nb * h * w, nb * ho * wo
    mp1, mp2 = _ru(m1, TM), _ru(m2, TM)

    # channel-pad input, flatten spatial to rows (zero-padded extra rows so
    # they contribute 0 to the in-kernel BN sums)
    xc = jnp.pad(x, ((0, 0), (0, 0), (0, 0), (0, cin_p - cin)))
    x2d = xc.reshape(m1, cin_p)
    if mp1 != m1:
        x2d = jnp.pad(x2d, ((0, mp1 - m1), (0, 0)))

    # padded bf16 weights / padded BN params (pad value 0 keeps extra
    # channels exactly zero through the whole block)
    w1 = jnp.pad(params["w1"], ((0, cin_p - cin), (0, pl_p - planes))).astype(jnp.bfloat16)
    w2 = jnp.pad(params["w2"], ((0, 0), (0, pl_p - planes), (0, pl_p - planes))).astype(jnp.bfloat16)
    w3 = jnp.pad(params["w3"], ((0, pl_p - planes), (0, out_p - out_planes))).astype(jnp.bfloat16)
    g1 = jnp.pad(params["g1"], (0, pl_p - planes))
    b1 = jnp.pad(params["b1"], (0, pl_p - planes))
    g2 = jnp.pad(params["g2"], (0, pl_p - planes))
    b2 = jnp.pad(params["b2"], (0, pl_p - planes))
    g3 = jnp.pad(params["g3"], (0, out_p - out_planes))
    b3 = jnp.pad(params["b3"], (0, out_p - out_planes))

    # conv1 (1x1) + bn1 + relu  -> bf16 activation
    y1, st1 = matmul_stats(x2d.astype(jnp.bfloat16), w1, out_dtype=jnp.bfloat16)
    sc1, sh1 = finalize_bn(st1, m1, g1, b1)
    a1 = bn_act(y1, sc1, sh1, relu=True, out_dtype=jnp.bfloat16)
    a1 = a1[:m1].reshape(nb, h, w, pl_p)
    # TODO(synk): fuse this spatial pad into the bn_act output BlockSpec to
    # save one (bf16) activation round trip.
    a1 = jnp.pad(a1, ((0, 0), (1, 1), (1, 1), (0, 0)))            # pad=1

    # conv2 (3x3, stride, pad=1) + bn2 + relu — im2col fused in-kernel
    y2, st2 = conv3x3_stats(a1, w2, stride=stride, out_dtype=jnp.bfloat16)
    sc2, sh2 = finalize_bn(st2, m2, g2, b2)
    if mp2 != m2:
        y2 = jnp.pad(y2, ((0, mp2 - m2), (0, 0)))
    a2 = bn_act(y2, sc2, sh2, relu=True, out_dtype=jnp.bfloat16,
                valid_rows=m2 if mp2 != m2 else None)

    # conv3 (1x1) + bn3
    y3, st3 = matmul_stats(a2, w3, out_dtype=jnp.bfloat16)
    sc3, sh3 = finalize_bn(st3, m2, g3, b3)

    # shortcut branch
    if "ws" in params:
        ws = jnp.pad(params["ws"], ((0, cin_p - cin), (0, out_p - out_planes))).astype(jnp.bfloat16)
        gs = jnp.pad(params["gs"], (0, out_p - out_planes))
        bs = jnp.pad(params["bs"], (0, out_p - out_planes))
        xs = xc[:, ::stride, ::stride, :].reshape(m2, cin_p)
        if mp2 != m2:
            xs = jnp.pad(xs, ((0, mp2 - m2), (0, 0)))
        ysc, sts = matmul_stats(xs.astype(jnp.bfloat16), ws, out_dtype=jnp.bfloat16)
        res_sc, res_sh = finalize_bn(sts, m2, gs, bs)
        res = ysc
    else:
        # identity shortcut (stride==1 and cin==out_planes -> shapes align)
        res = x2d
        res_sc = jnp.ones((1, out_p), jnp.float32)
        res_sh = jnp.zeros((1, out_p), jnp.float32)

    # bn3 apply + shortcut-bn apply + residual add + relu, fully fused
    out = bn_add_act(y3, sc3, sh3, res, res_sc, res_sh)
    out = out[:m2].reshape(nb, ho, wo, out_p)[..., :out_planes]
    return jnp.transpose(out, (0, 3, 1, 2))                       # back to NCHW


# ---------------------------------------------------------------------------
# Plain-JAX reference (training-mode BN, biased variance) for a sanity check
# ---------------------------------------------------------------------------
def _bn_ref(y, g, b):
    mean = jnp.mean(y, axis=(0, 1, 2))
    var = jnp.mean((y - mean) ** 2, axis=(0, 1, 2))
    return (y - mean) * (g * lax.rsqrt(var + EPS)) + b


def reference_forward(x_nchw, params, *, stride):
    x = jnp.transpose(x_nchw, (0, 2, 3, 1)).astype(jnp.float32)
    dn = ("NHWC", "HWIO", "NHWC")
    cin = x.shape[-1]
    planes = params["w1"].shape[1]
    out_planes = EXPANSION * planes

    out = lax.conv_general_dilated(x, params["w1"].reshape(1, 1, cin, planes),
                                   (1, 1), "VALID", dimension_numbers=dn)
    out = jax.nn.relu(_bn_ref(out, params["g1"], params["b1"]))
    out = lax.conv_general_dilated(out, params["w2"].reshape(3, 3, planes, planes),
                                   (stride, stride), ((1, 1), (1, 1)),
                                   dimension_numbers=dn)
    out = jax.nn.relu(_bn_ref(out, params["g2"], params["b2"]))
    out = lax.conv_general_dilated(out, params["w3"].reshape(1, 1, planes, out_planes),
                                   (1, 1), "VALID", dimension_numbers=dn)
    out = _bn_ref(out, params["g3"], params["b3"])
    if "ws" in params:
        sc = lax.conv_general_dilated(x, params["ws"].reshape(1, 1, cin, out_planes),
                                      (stride, stride), "VALID",
                                      dimension_numbers=dn)
        sc = _bn_ref(sc, params["gs"], params["bs"])
    else:
        sc = x
    out = jax.nn.relu(out + sc)
    return jnp.transpose(out, (0, 3, 1, 2))


if __name__ == "__main__":
    key = jax.random.PRNGKey(0)
    k_x, k_p = jax.random.split(key)

    batch, in_planes, planes, spatial, stride = 2, 4, 4, 16, 1
    x = jax.random.normal(k_x, (batch, in_planes, spatial, spatial), jnp.float32)
    params = init_bottleneck_params(k_p, in_planes, planes, stride)

    fwd = jax.jit(functools.partial(bottleneck_forward, stride=stride))
    y = fwd(x, params)
    jax.block_until_ready(y)

    expected = (batch, EXPANSION * planes, spatial // stride, spatial // stride)
    assert y.shape == expected, (y.shape, expected)
    assert bool(jnp.all(y >= 0.0))  # post-ReLU

    # Loose tolerance: kernel uses bf16 MXU inputs / bf16 intermediates.
    ref = reference_forward(x, params, stride=stride)
    max_err = float(jnp.max(jnp.abs(y - ref)))
    assert bool(jnp.allclose(y, ref, rtol=1e-1, atol=1e-1)), max_err

    print("KERNEL_OK")
</pallas_src>

<mosaic_0001>
module attributes {stable_mosaic.version = 11 : i64} {
  func.func @_mm_stats_kernel(%arg0: i32, %arg1: i32, %arg2: i32, %arg3: memref<512x128xbf16, #tpu.memory_space<vmem>>, %arg4: memref<128x128xbf16, #tpu.memory_space<vmem>>, %arg5: memref<512x128xbf16, #tpu.memory_space<vmem>>, %arg6: memref<1x2x128xf32, #tpu.memory_space<vmem>>, %arg7: memref<512x128xf32, #tpu.memory_space<vmem>>) attributes {dimension_semantics = [#tpu.dimension_semantics<parallel>, #tpu.dimension_semantics<parallel>, #tpu.dimension_semantics<arbitrary>], iteration_bounds = array<i64: 1, 1, 1>, scalar_prefetch = 0 : i64, scratch_operands = 1 : i64, tpu.core_type = #tpu.core_type<tc>, window_params = [{transform_indices = @transform_0, window_bounds = array<i64: 512, 128>}, {transform_indices = @transform_1, window_bounds = array<i64: 128, 128>}, {transform_indices = @transform_2, window_bounds = array<i64: 512, 128>}, {transform_indices = @transform_3, window_bounds = array<i64: 1, 2, 128>}]} {
    %c0_i32 = arith.constant 0 : i32
    %0 = arith.cmpi eq, %arg2, %c0_i32 : i32
    %1 = arith.extui %0 : i1 to i32
    %c0_i32_0 = arith.constant 0 : i32
    %2 = arith.cmpi ne, %1, %c0_i32_0 : i32
    scf.if %2 {
      %cst_10 = arith.constant 0.000000e+00 : f32
      %12 = vector.broadcast %cst_10 : f32 to vector<512x128xf32>
      %c0_11 = arith.constant 0 : index
      %c0_12 = arith.constant 0 : index
      %13 = vector.load %arg7[%c0_11, %c0_12] : memref<512x128xf32, #tpu.memory_space<vmem>>, vector<512x128xf32>
      tpu.vector_store %arg7[%c0_11, %c0_12], %12 {strides = array<i32>} : memref<512x128xf32, #tpu.memory_space<vmem>>, vector<512x128xf32>,
    } else {
    }
    %c0 = arith.constant 0 : index
    %c0_1 = arith.constant 0 : index
    %3 = vector.load %arg7[%c0, %c0_1] : memref<512x128xf32, #tpu.memory_space<vmem>>, vector<512x128xf32>
    %c0_2 = arith.constant 0 : index
    %c0_3 = arith.constant 0 : index
    %4 = vector.load %arg3[%c0_2, %c0_3] : memref<512x128xbf16, #tpu.memory_space<vmem>>, vector<512x128xbf16>
    %c0_4 = arith.constant 0 : index
    %c0_5 = arith.constant 0 : index
    %5 = vector.load %arg4[%c0_4, %c0_5] : memref<128x128xbf16, #tpu.memory_space<vmem>>, vector<128x128xbf16>
    %cst = arith.constant dense<0.000000e+00> : vector<512x128xf32>
    %6 = tpu.matmul %4, %5, %cst {dimension_numbers = #tpu.dot_dimension_numbers<[1], [0], [0], [1], [0, 0, 1, 1], [], []>} : vector<512x128xbf16>, vector<128x128xbf16>, vector<512x128xf32> -> vector<512x128xf32>
    %7 = arith.addf %3, %6 : vector<512x128xf32>
    %c0_6 = arith.constant 0 : index
    %c0_7 = arith.constant 0 : index
    %8 = vector.load %arg7[%c0_6, %c0_7] : memref<512x128xf32, #tpu.memory_space<vmem>>, vector<512x128xf32>
    tpu.vector_store %arg7[%c0_6, %c0_7], %7 {strides = array<i32>} : memref<512x128xf32, #tpu.memory_space<vmem>>, vector<512x128xf32>,
    %c0_i32_8 = arith.constant 0 : i32
    %9 = arith.cmpi eq, %arg2, %c0_i32_8 : i32
    %10 = arith.extui %9 : i1 to i32
    %c0_i32_9 = arith.constant 0 : i32
    %11 = arith.cmpi ne, %10, %c0_i32_9 : i32
    scf.if %11 {
      %c0_10 = arith.constant 0 : index
      %c0_11 = arith.constant 0 : index
      %12 = vector.load %arg7[%c0_10, %c0_11] : memref<512x128xf32, #tpu.memory_space<vmem>>, vector<512x128xf32>
      %13 = arith.truncf %12 : vector<512x128xf32> to vector<512x128xbf16>
      %c0_12 = arith.constant 0 : index
      %c0_13 = arith.constant 0 : index
      %14 = vector.load %arg5[%c0_12, %c0_13] : memref<512x128xbf16, #tpu.memory_space<vmem>>, vector<512x128xbf16>
      tpu.vector_store %arg5[%c0_12, %c0_13], %13 {strides = array<i32>} : memref<512x128xbf16, #tpu.memory_space<vmem>>, vector<512x128xbf16>,
      %cst_14 = arith.constant dense<0.000000e+00> : vector<128xf32>
      %15 = vector.multi_reduction <add>, %12, %cst_14 [0] : vector<512x128xf32> to vector<128xf32>
      %16 = vector.shape_cast %15 : vector<128xf32> to vector<1x128xf32>
      %17 = arith.mulf %12, %12 : vector<512x128xf32>
      %cst_15 = arith.constant dense<0.000000e+00> : vector<128xf32>
      %18 = vector.multi_reduction <add>, %17, %cst_15 [0] : vector<512x128xf32> to vector<128xf32>
      %19 = vector.shape_cast %18 : vector<128xf32> to vector<1x128xf32>
      %20 = tpu.concatenate %16, %19 in 0 : vector<1x128xf32>, vector<1x128xf32> -> vector<2x128xf32>
      %21 = vector.shape_cast %20 : vector<2x128xf32> to vector<1x2x128xf32>
      %c0_16 = arith.constant 0 : index
      %c0_17 = arith.constant 0 : index
      %c0_18 = arith.constant 0 : index
      %22 = vector.load %arg6[%c0_16, %c0_17, %c0_18] : memref<1x2x128xf32, #tpu.memory_space<vmem>>, vector<1x2x128xf32>
      tpu.vector_store %arg6[%c0_16, %c0_17, %c0_18], %21 {strides = array<i32>} : memref<1x2x128xf32, #tpu.memory_space<vmem>>, vector<1x2x128xf32>,
    } else {
    }
    return
  }
  func.func @transform_0(%arg0: i32, %arg1: i32, %arg2: i32) -> (i32, i32) {
    %c0_i32 = arith.constant 0 : i32
    return %arg0, %arg2 : i32, i32
  }
  func.func @transform_1(%arg0: i32, %arg1: i32, %arg2: i32) -> (i32, i32) {
    %c0_i32 = arith.constant 0 : i32
    return %arg2, %arg1 : i32, i32
  }
  func.func @transform_2(%arg0: i32, %arg1: i32, %arg2: i32) -> (i32, i32) {
    %c0_i32 = arith.constant 0 : i32
    return %arg0, %arg1 : i32, i32
  }
  func.func @transform_3(%arg0: i32, %arg1: i32, %arg2: i32) -> (i32, i32, i32) {
    %c0_i32 = arith.constant 0 : i32
    %c0_i32_0 = arith.constant 0 : i32
    return %arg0, %c0_i32, %arg1 : i32, i32, i32
  }
}

module attributes {stable_mosaic.version = 11 : i64} {
  func.func @_bn_act_kernel(%arg0: i32, %arg1: i32, %arg2: memref<512x128xbf16, #tpu.memory_space<vmem>>, %arg3: memref<1x128xf32, #tpu.memory_space<vmem>>, %arg4: memref<1x128xf32, #tpu.memory_space<vmem>>, %arg5: memref<512x128xbf16, #tpu.memory_space<vmem>>) attributes {dimension_semantics = [#tpu.dimension_semantics<parallel>, #tpu.dimension_semantics<parallel>], iteration_bounds = array<i64: 1, 1>, scalar_prefetch = 0 : i64, scratch_operands = 0 : i64, tpu.core_type = #tpu.core_type<tc>, window_params = [{transform_indices = @transform_0, window_bounds = array<i64: 512, 128>}, {transform_indices = @transform_1, window_bounds = array<i64: 1, 128>}, {transform_indices = @transform_2, window_bounds = array<i64: 1, 128>}, {transform_indices = @transform_3, window_bounds = array<i64: 512, 128>}]} {
    %c0 = arith.constant 0 : index
    %c0_0 = arith.constant 0 : index
    %0 = vector.load %arg2[%c0, %c0_0] : memref<512x128xbf16, #tpu.memory_space<vmem>>, vector<512x128xbf16>
    %1 = arith.extf %0 : vector<512x128xbf16> to vector<512x128xf32>
    %c0_1 = arith.constant 0 : index
    %c0_2 = arith.constant 0 : index
    %2 = vector.load %arg3[%c0_1, %c0_2] : memref<1x128xf32, #tpu.memory_space<vmem>>, vector<1x128xf32>
    %3 = vector.broadcast %2 : vector<1x128xf32> to vector<512x128xf32>
    %4 = arith.mulf %1, %3 : vector<512x128xf32>
    %c0_3 = arith.constant 0 : index
    %c0_4 = arith.constant 0 : index
    %5 = vector.load %arg4[%c0_3, %c0_4] : memref<1x128xf32, #tpu.memory_space<vmem>>, vector<1x128xf32>
    %6 = vector.broadcast %5 : vector<1x128xf32> to vector<512x128xf32>
    %7 = arith.addf %4, %6 : vector<512x128xf32>
    %cst = arith.constant 0.000000e+00 : f32
    %8 = vector.broadcast %cst : f32 to vector<512x128xf32>
    %9 = arith.maximumf %7, %8 : vector<512x128xf32>
    %10 = arith.truncf %9 : vector<512x128xf32> to vector<512x128xbf16>
    %c0_5 = arith.constant 0 : index
    %c0_6 = arith.constant 0 : index
    %11 = vector.load %arg5[%c0_5, %c0_6] : memref<512x128xbf16, #tpu.memory_space<vmem>>, vector<512x128xbf16>
    tpu.vector_store %arg5[%c0_5, %c0_6], %10 {strides = array<i32>} : memref<512x128xbf16, #tpu.memory_space<vmem>>, vector<512x128xbf16>,
    return
  }
  func.func @transform_0(%arg0: i32, %arg1: i32) -> (i32, i32) {
    %c0_i32 = arith.constant 0 : i32
    return %arg0, %arg1 : i32, i32
  }
  func.func @transform_1(%arg0: i32, %arg1: i32) -> (i32, i32) {
    %c0_i32 = arith.constant 0 : i32
    %c0_i32_0 = arith.constant 0 : i32
    return %c0_i32, %arg1 : i32, i32
  }
  func.func @transform_2(%arg0: i32, %arg1: i32) -> (i32, i32) {
    %c0_i32 = arith.constant 0 : i32
    %c0_i32_0 = arith.constant 0 : i32
    return %c0_i32, %arg1 : i32, i32
  }
  func.func @transform_3(%arg0: i32, %arg1: i32) -> (i32, i32) {
    %c0_i32 = arith.constant 0 : i32
    return %arg0, %arg1 : i32, i32
  }
}

module attributes {stable_mosaic.version = 11 : i64} {
  func.func @_conv3x3_stats_kernel(%arg0: i32, %arg1: i32, %arg2: i32, %arg3: memref<1x18x18x128xbf16, #tpu.memory_space<vmem>>, %arg4: memref<9x128x128xbf16, #tpu.memory_space<vmem>>, %arg5: memref<256x128xbf16, #tpu.memory_space<vmem>>, %arg6: memref<1x2x128xf32, #tpu.memory_space<vmem>>, %arg7: memref<256x128xf32, #tpu.memory_space<vmem>>) attributes {dimension_semantics = [#tpu.dimension_semantics<parallel>, #tpu.dimension_semantics<parallel>, #tpu.dimension_semantics<parallel>], iteration_bounds = array<i64: 2, 1, 1>, scalar_prefetch = 0 : i64, scratch_operands = 1 : i64, tpu.core_type = #tpu.core_type<tc>, window_params = [{transform_indices = @transform_0, window_bounds = array<i64: 1, 18, 18, 128>}, {transform_indices = @transform_1, window_bounds = array<i64: 9, 128, 128>}, {transform_indices = @transform_2, window_bounds = array<i64: 256, 128>}, {transform_indices = @transform_3, window_bounds = array<i64: 1, 2, 128>}]} {
    %cst = arith.constant 0.000000e+00 : f32
    %0 = vector.broadcast %cst : f32 to vector<256x128xf32>
    %c0 = arith.constant 0 : index
    %c0_0 = arith.constant 0 : index
    %1 = vector.load %arg7[%c0, %c0_0] : memref<256x128xf32, #tpu.memory_space<vmem>>, vector<256x128xf32>
    tpu.vector_store %arg7[%c0, %c0_0], %0 {strides = array<i32>} : memref<256x128xf32, #tpu.memory_space<vmem>>, vector<256x128xf32>,
    %c0_1 = arith.constant 0 : index
    %c0_2 = arith.constant 0 : index
    %c0_3 = arith.constant 0 : index
    %c0_4 = arith.constant 0 : index
    %2 = vector.load %arg3[%c0_1, %c0_2, %c0_3, %c0_4] : memref<1x18x18x128xbf16, #tpu.memory_space<vmem>>, vector<1x16x16x128xbf16>
    %3 = vector.shape_cast %2 : vector<1x16x16x128xbf16> to vector<16x16x128xbf16>
    %c0_5 = arith.constant 0 : index
    %c0_6 = arith.constant 0 : index
    %4 = vector.load %arg7[%c0_5, %c0_6] : memref<256x128xf32, #tpu.memory_space<vmem>>, vector<256x128xf32>
    %5 = vector.shape_cast %3 : vector<16x16x128xbf16> to vector<256x128xbf16>
    %c0_7 = arith.constant 0 : index
    %c0_8 = arith.constant 0 : index
    %c0_9 = arith.constant 0 : index
    %6 = vector.load %arg4[%c0_7, %c0_8, %c0_9] : memref<9x128x128xbf16, #tpu.memory_space<vmem>>, vector<1x128x128xbf16>
    %7 = vector.shape_cast %6 : vector<1x128x128xbf16> to vector<128x128xbf16>
    %cst_10 = arith.constant dense<0.000000e+00> : vector<256x128xf32>
    %8 = tpu.matmul %5, %7, %cst_10 {dimension_numbers = #tpu.dot_dimension_numbers<[1], [0], [0], [1], [0, 0, 1, 1], [], []>} : vector<256x128xbf16>, vector<128x128xbf16>, vector<256x128xf32> -> vector<256x128xf32>
    %9 = arith.addf %4, %8 : vector<256x128xf32>
    %c0_11 = arith.constant 0 : index
    %c0_12 = arith.constant 0 : index
    %10 = vector.load %arg7[%c0_11, %c0_12] : memref<256x128xf32, #tpu.memory_space<vmem>>, vector<256x128xf32>
    tpu.vector_store %arg7[%c0_11, %c0_12], %9 {strides = array<i32>} : memref<256x128xf32, #tpu.memory_space<vmem>>, vector<256x128xf32>,
    %c0_13 = arith.constant 0 : index
    %c0_14 = arith.constant 0 : index
    %c1 = arith.constant 1 : index
    %c0_15 = arith.constant 0 : index
    %11 = vector.load %arg3[%c0_13, %c0_14, %c1, %c0_15] : memref<1x18x18x128xbf16, #tpu.memory_space<vmem>>, vector<1x16x16x128xbf16>
    %12 = vector.shape_cast %11 : vector<1x16x16x128xbf16> to vector<16x16x128xbf16>
    %c0_16 = arith.constant 0 : index
    %c0_17 = arith.constant 0 : index
    %13 = vector.load %arg7[%c0_16, %c0_17] : memref<256x128xf32, #tpu.memory_space<vmem>>, vector<256x128xf32>
    %14 = vector.shape_cast %12 : vector<16x16x128xbf16> to vector<256x128xbf16>
    %c1_18 = arith.constant 1 : index
    %c0_19 = arith.constant 0 : index
    %c0_20 = arith.constant 0 : index
    %15 = vector.load %arg4[%c1_18, %c0_19, %c0_20] : memref<9x128x128xbf16, #tpu.memory_space<vmem>>, vector<1x128x128xbf16>
    %16 = vector.shape_cast %15 : vector<1x128x128xbf16> to vector<128x128xbf16>
    %cst_21 = arith.constant dense<0.000000e+00> : vector<256x128xf32>
    %17 = tpu.matmul %14, %16, %cst_21 {dimension_numbers = #tpu.dot_dimension_numbers<[1], [0], [0], [1], [0, 0, 1, 1], [], []>} : vector<256x128xbf16>, vector<128x128xbf16>, vector<256x128xf32> -> vector<256x128xf32>
    %18 = arith.addf %13, %17 : vector<256x128xf32>
    %c0_22 = arith.constant 0 : index
    %c0_23 = arith.constant 0 : index
    %19 = vector.load %arg7[%c0_22, %c0_23] : memref<256x128xf32, #tpu.memory_space<vmem>>, vector<256x128xf32>
    tpu.vector_store %arg7[%c0_22, %c0_23], %18 {strides = array<i32>} : memref<256x128xf32, #tpu.memory_space<vmem>>, vector<256x128xf32>,
    %c0_24 = arith.constant 0 : index
    %c0_25 = arith.constant 0 : index
    %c2 = arith.constant 2 : index
    %c0_26 = arith.constant 0 : index
    %20 = vector.load %arg3[%c0_24, %c0_25, %c2, %c0_26] : memref<1x18x18x128xbf16, #tpu.memory_space<vmem>>, vector<1x16x16x128xbf16>
    %21 = vector.shape_cast %20 : vector<1x16x16x128xbf16> to vector<16x16x128xbf16>
    %c0_27 = arith.constant 0 : index
    %c0_28 = arith.constant 0 : index
    %22 = vector.load %arg7[%c0_27, %c0_28] : memref<256x128xf32, #tpu.memory_space<vmem>>, vector<256x128xf32>
    %23 = vector.shape_cast %21 : vector<16x16x128xbf16> to vector<256x128xbf16>
    %c2_29 = arith.constant 2 : index
    %c0_30 = arith.constant 0 : index
    %c0_31 = arith.constant 0 : index
    %24 = vector.load %arg4[%c2_29, %c0_30, %c0_31] : memref<9x128x128xbf16, #tpu.memory_space<vmem>>, vector<1x128x128xbf16>
    %25 = vector.shape_cast %24 : vector<1x128x128xbf16> to vector<128x128xbf16>
    %cst_32 = arith.constant dense<0.000000e+00> : vector<256x128xf32>
    %26 = tpu.matmul %23, %25, %cst_32 {dimension_numbers = #tpu.dot_dimension_numbers<[1], [0], [0], [1], [0, 0, 1, 1], [], []>} : vector<256x128xbf16>, vector<128x128xbf16>, vector<256x128xf32> -> vector<256x128xf32>
    %27 = arith.addf %22, %26 : vector<256x128xf32>
    %c0_33 = arith.constant 0 : index
    %c0_34 = arith.constant 0 : index
    %28 = vector.load %arg7[%c0_33, %c0_34] : memref<256x128xf32, #tpu.memory_space<vmem>>, vector<256x128xf32>
    tpu.vector_store %arg7[%c0_33, %c0_34], %27 {strides = array<i32>} : memref<256x128xf32, #tpu.memory_space<vmem>>, vector<256x128xf32>,
    %c0_35 = arith.constant 0 : index
    %c1_36 = arith.constant 1 : index
    %c0_37 = arith.constant 0 : index
    %c0_38 = arith.constant 0 : index
    %29 = vector.load %arg3[%c0_35, %c1_36, %c0_37, %c0_38] : memref<1x18x18x128xbf16, #tpu.memory_space<vmem>>, vector<1x16x16x128xbf16>
    %30 = vector.shape_cast %29 : vector<1x16x16x128xbf16> to vector<16x16x128xbf16>
    %c0_39 = arith.constant 0 : index
    %c0_40 = arith.constant 0 : index
    %31 = vector.load %arg7[%c0_39, %c0_40] : memref<256x128xf32, #tpu.memory_space<vmem>>, vector<256x128xf32>
    %32 = vector.shape_cast %30 : vector<16x16x128xbf16> to vector<256x128xbf16>
    %c3 = arith.constant 3 : index
    %c0_41 = arith.constant 0 : index
    %c0_42 = arith.constant 0 : index
    %33 = vector.load %arg4[%c3, %c0_41, %c0_42] : memref<9x128x128xbf16, #tpu.memory_space<vmem>>, vector<1x128x128xbf16>
    %34 = vector.shape_cast %33 : vector<1x128x128xbf16> to vector<128x128xbf16>
    %cst_43 = arith.constant dense<0.000000e+00> : vector<256x128xf32>
    %35 = tpu.matmul %32, %34, %cst_43 {dimension_numbers = #tpu.dot_dimension_numbers<[1], [0], [0], [1], [0, 0, 1, 1], [], []>} : vector<256x128xbf16>, vector<128x128xbf16>, vector<256x128xf32> -> vector<256x128xf32>
    %36 = arith.addf %31, %35 : vector<256x128xf32>
    %c0_44 = arith.constant 0 : index
    %c0_45 = arith.constant 0 : index
    %37 = vector.load %arg7[%c0_44, %c0_45] : memref<256x128xf32, #tpu.memory_space<vmem>>, vector<256x128xf32>
    tpu.vector_store %arg7[%c0_44, %c0_45], %36 {strides = array<i32>} : memref<256x128xf32, #tpu.memory_space<vmem>>, vector<256x128xf32>,
    %c0_46 = arith.constant 0 : index
    %c1_47 = arith.constant 1 : index
    %c1_48 = arith.constant 1 : index
    %c0_49 = arith.constant 0 : index
    %38 = vector.load %arg3[%c0_46, %c1_47, %c1_48, %c0_49] : memref<1x18x18x128xbf16, #tpu.memory_space<vmem>>, vector<1x16x16x128xbf16>
    %39 = vector.shape_cast %38 : vector<1x16x16x128xbf16> to vector<16x16x128xbf16>
    %c0_50 = arith.constant 0 : index
    %c0_51 = arith.constant 0 : index
    %40 = vector.load %arg7[%c0_50, %c0_51] : memref<256x128xf32, #tpu.memory_space<vmem>>, vector<256x128xf32>
    %41 = vector.shape_cast %39 : vector<16x16x128xbf16> to vector<256x128xbf16>
    %c4 = arith.constant 4 : index
    %c0_52 = arith.constant 0 : index
    %c0_53 = arith.constant 0 : index
    %42 = vector.load %arg4[%c4, %c0_52, %c0_53] : memref<9x128x128xbf16, #tpu.memory_space<vmem>>, vector<1x128x128xbf16>
    %43 = vector.shape_cast %42 : vector<1x128x128xbf16> to vector<128x128xbf16>
    %cst_54 = arith.constant dense<0.000000e+00> : vector<256x128xf32>
    %44 = tpu.matmul %41, %43, %cst_54 {dimension_numbers = #tpu.dot_dimension_numbers<[1], [0], [0], [1], [0, 0, 1, 1], [], []>} : vector<256x128xbf16>, vector<128x128xbf16>, vector<256x128xf32> -> vector<256x128xf32>
    %45 = arith.addf %40, %44 : vector<256x128xf32>
    %c0_55 = arith.constant 0 : index
    %c0_56 = arith.constant 0 : index
    %46 = vector.load %arg7[%c0_55, %c0_56] : memref<256x128xf32, #tpu.memory_space<vmem>>, vector<256x128xf32>
    tpu.vector_store %arg7[%c0_55, %c0_56], %45 {strides = array<i32>} : memref<256x128xf32, #tpu.memory_space<vmem>>, vector<256x128xf32>,
    %c0_57 = arith.constant 0 : index
    %c1_58 = arith.constant 1 : index
    %c2_59 = arith.constant 2 : index
    %c0_60 = arith.constant 0 : index
    %47 = vector.load %arg3[%c0_57, %c1_58, %c2_59, %c0_60] : memref<1x18x18x128xbf16, #tpu.memory_space<vmem>>, vector<1x16x16x128xbf16>
    %48 = vector.shape_cast %47 : vector<1x16x16x128xbf16> to vector<16x16x128xbf16>
    %c0_61 = arith.constant 0 : index
    %c0_62 = arith.constant 0 : index
    %49 = vector.load %arg7[%c0_61, %c0_62] : memref<256x128xf32, #tpu.memory_space<vmem>>, vector<256x128xf32>
    %50 = vector.shape_cast %48 : vector<16x16x128xbf16> to vector<256x128xbf16>
    %c5 = arith.constant 5 : index
    %c0_63 = arith.constant 0 : index
    %c0_64 = arith.constant 0 : index
    %51 = vector.load %arg4[%c5, %c0_63, %c0_64] : memref<9x128x128xbf16, #tpu.memory_space<vmem>>, vector<1x128x128xbf16>
    %52 = vector.shape_cast %51 : vector<1x128x128xbf16> to vector<128x128xbf16>
    %cst_65 = arith.constant dense<0.000000e+00> : vector<256x128xf32>
    %53 = tpu.matmul %50, %52, %cst_65 {dimension_numbers = #tpu.dot_dimension_numbers<[1], [0], [0], [1], [0, 0, 1, 1], [], []>} : vector<256x128xbf16>, vector<128x128xbf16>, vector<256x128xf32> -> vector<256x128xf32>
    %54 = arith.addf %49, %53 : vector<256x128xf32>
    %c0_66 = arith.constant 0 : index
    %c0_67 = arith.constant 0 : index
    %55 = vector.load %arg7[%c0_66, %c0_67] : memref<256x128xf32, #tpu.memory_space<vmem>>, vector<256x128xf32>
    tpu.vector_store %arg7[%c0_66, %c0_67], %54 {strides = array<i32>} : memref<256x128xf32, #tpu.memory_space<vmem>>, vector<256x128xf32>,
    %c0_68 = arith.constant 0 : index
    %c2_69 = arith.constant 2 : index
    %c0_70 = arith.constant 0 : index
    %c0_71 = arith.constant 0 : index
    %56 = vector.load %arg3[%c0_68, %c2_69, %c0_70, %c0_71] : memref<1x18x18x128xbf16, #tpu.memory_space<vmem>>, vector<1x16x16x128xbf16>
    %57 = vector.shape_cast %56 : vector<1x16x16x128xbf16> to vector<16x16x128xbf16>
    %c0_72 = arith.constant 0 : index
    %c0_73 = arith.constant 0 : index
    %58 = vector.load %arg7[%c0_72, %c0_73] : memref<256x128xf32, #tpu.memory_space<vmem>>, vector<256x128xf32>
    %59 = vector.shape_cast %57 : vector<16x16x128xbf16> to vector<256x128xbf16>
    %c6 = arith.constant 6 : index
    %c0_74 = arith.constant 0 : index
    %c0_75 = arith.constant 0 : index
    %60 = vector.load %arg4[%c6, %c0_74, %c0_75] : memref<9x128x128xbf16, #tpu.memory_space<vmem>>, vector<1x128x128xbf16>
    %61 = vector.shape_cast %60 : vector<1x128x128xbf16> to vector<128x128xbf16>
    %cst_76 = arith.constant dense<0.000000e+00> : vector<256x128xf32>
    %62 = tpu.matmul %59, %61, %cst_76 {dimension_numbers = #tpu.dot_dimension_numbers<[1], [0], [0], [1], [0, 0, 1, 1], [], []>} : vector<256x128xbf16>, vector<128x128xbf16>, vector<256x128xf32> -> vector<256x128xf32>
    %63 = arith.addf %58, %62 : vector<256x128xf32>
    %c0_77 = arith.constant 0 : index
    %c0_78 = arith.constant 0 : index
    %64 = vector.load %arg7[%c0_77, %c0_78] : memref<256x128xf32, #tpu.memory_space<vmem>>, vector<256x128xf32>
    tpu.vector_store %arg7[%c0_77, %c0_78], %63 {strides = array<i32>} : memref<256x128xf32, #tpu.memory_space<vmem>>, vector<256x128xf32>,
    %c0_79 = arith.constant 0 : index
    %c2_80 = arith.constant 2 : index
    %c1_81 = arith.constant 1 : index
    %c0_82 = arith.constant 0 : index
    %65 = vector.load %arg3[%c0_79, %c2_80, %c1_81, %c0_82] : memref<1x18x18x128xbf16, #tpu.memory_space<vmem>>, vector<1x16x16x128xbf16>
    %66 = vector.shape_cast %65 : vector<1x16x16x128xbf16> to vector<16x16x128xbf16>
    %c0_83 = arith.constant 0 : index
    %c0_84 = arith.constant 0 : index
    %67 = vector.load %arg7[%c0_83, %c0_84] : memref<256x128xf32, #tpu.memory_space<vmem>>, vector<256x128xf32>
    %68 = vector.shape_cast %66 : vector<16x16x128xbf16> to vector<256x128xbf16>
    %c7 = arith.constant 7 : index
    %c0_85 = arith.constant 0 : index
    %c0_86 = arith.constant 0 : index
    %69 = vector.load %arg4[%c7, %c0_85, %c0_86] : memref<9x128x128xbf16, #tpu.memory_space<vmem>>, vector<1x128x128xbf16>
    %70 = vector.shape_cast %69 : vector<1x128x128xbf16> to vector<128x128xbf16>
    %cst_87 = arith.constant dense<0.000000e+00> : vector<256x128xf32>
    %71 = tpu.matmul %68, %70, %cst_87 {dimension_numbers = #tpu.dot_dimension_numbers<[1], [0], [0], [1], [0, 0, 1, 1], [], []>} : vector<256x128xbf16>, vector<128x128xbf16>, vector<256x128xf32> -> vector<256x128xf32>
    %72 = arith.addf %67, %71 : vector<256x128xf32>
    %c0_88 = arith.constant 0 : index
    %c0_89 = arith.constant 0 : index
    %73 = vector.load %arg7[%c0_88, %c0_89] : memref<256x128xf32, #tpu.memory_space<vmem>>, vector<256x128xf32>
    tpu.vector_store %arg7[%c0_88, %c0_89], %72 {strides = array<i32>} : memref<256x128xf32, #tpu.memory_space<vmem>>, vector<256x128xf32>,
    %c0_90 = arith.constant 0 : index
    %c2_91 = arith.constant 2 : index
    %c2_92 = arith.constant 2 : index
    %c0_93 = arith.constant 0 : index
    %74 = vector.load %arg3[%c0_90, %c2_91, %c2_92, %c0_93] : memref<1x18x18x128xbf16, #tpu.memory_space<vmem>>, vector<1x16x16x128xbf16>
    %75 = vector.shape_cast %74 : vector<1x16x16x128xbf16> to vector<16x16x128xbf16>
    %c0_94 = arith.constant 0 : index
    %c0_95 = arith.constant 0 : index
    %76 = vector.load %arg7[%c0_94, %c0_95] : memref<256x128xf32, #tpu.memory_space<vmem>>, vector<256x128xf32>
    %77 = vector.shape_cast %75 : vector<16x16x128xbf16> to vector<256x128xbf16>
    %c8 = arith.constant 8 : index
    %c0_96 = arith.constant 0 : index
    %c0_97 = arith.constant 0 : index
    %78 = vector.load %arg4[%c8, %c0_96, %c0_97] : memref<9x128x128xbf16, #tpu.memory_space<vmem>>, vector<1x128x128xbf16>
    %79 = vector.shape_cast %78 : vector<1x128x128xbf16> to vector<128x128xbf16>
    %cst_98 = arith.constant dense<0.000000e+00> : vector<256x128xf32>
    %80 = tpu.matmul %77, %79, %cst_98 {dimension_numbers = #tpu.dot_dimension_numbers<[1], [0], [0], [1], [0, 0, 1, 1], [], []>} : vector<256x128xbf16>, vector<128x128xbf16>, vector<256x128xf32> -> vector<256x128xf32>
    %81 = arith.addf %76, %80 : vector<256x128xf32>
    %c0_99 = arith.constant 0 : index
    %c0_100 = arith.constant 0 : index
    %82 = vector.load %arg7[%c0_99, %c0_100] : memref<256x128xf32, #tpu.memory_space<vmem>>, vector<256x128xf32>
    tpu.vector_store %arg7[%c0_99, %c0_100], %81 {strides = array<i32>} : memref<256x128xf32, #tpu.memory_space<vmem>>, vector<256x128xf32>,
    %c0_101 = arith.constant 0 : index
    %c0_102 = arith.constant 0 : index
    %83 = vector.load %arg7[%c0_101, %c0_102] : memref<256x128xf32, #tpu.memory_space<vmem>>, vector<256x128xf32>
    %84 = arith.truncf %83 : vector<256x128xf32> to vector<256x128xbf16>
    %c0_103 = arith.constant 0 : index
    %c0_104 = arith.constant 0 : index
    %85 = vector.load %arg5[%c0_103, %c0_104] : memref<256x128xbf16, #tpu.memory_space<vmem>>, vector<256x128xbf16>
    tpu.vector_store %arg5[%c0_103, %c0_104], %84 {strides = array<i32>} : memref<256x128xbf16, #tpu.memory_space<vmem>>, vector<256x128xbf16>,
    %cst_105 = arith.constant dense<0.000000e+00> : vector<128xf32>
    %86 = vector.multi_reduction <add>, %83, %cst_105 [0] : vector<256x128xf32> to vector<128xf32>
    %87 = vector.shape_cast %86 : vector<128xf32> to vector<1x128xf32>
    %88 = arith.mulf %83, %83 : vector<256x128xf32>
    %cst_106 = arith.constant dense<0.000000e+00> : vector<128xf32>
    %89 = vector.multi_reduction <add>, %88, %cst_106 [0] : vector<256x128xf32> to vector<128xf32>
    %90 = vector.shape_cast %89 : vector<128xf32> to vector<1x128xf32>
    %91 = tpu.concatenate %87, %90 in 0 : vector<1x128xf32>, vector<1x128xf32> -> vector<2x128xf32>
    %92 = vector.shape_cast %91 : vector<2x128xf32> to vector<1x2x128xf32>
    %c0_107 = arith.constant 0 : index
    %c0_108 = arith.constant 0 : index
    %c0_109 = arith.constant 0 : index
    %93 = vector.load %arg6[%c0_107, %c0_108, %c0_109] : memref<1x2x128xf32, #tpu.memory_space<vmem>>, vector<1x2x128xf32>
    tpu.vector_store %arg6[%c0_107, %c0_108, %c0_109], %92 {strides = array<i32>} : memref<1x2x128xf32, #tpu.memory_space<vmem>>, vector<1x2x128xf32>,
    return
  }
  func.func @transform_0(%arg0: i32, %arg1: i32, %arg2: i32) -> (i32, i32, i32, i32) {
    %c0_i32 = arith.constant 0 : i32
    %c0_i32_0 = arith.constant 0 : i32
    %c0_i32_1 = arith.constant 0 : i32
    %c0_i32_2 = arith.constant 0 : i32
    return %arg0, %c0_i32, %c0_i32_0, %c0_i32_1 : i32, i32, i32, i32
  }
  func.func @transform_1(%arg0: i32, %arg1: i32, %arg2: i32) -> (i32, i32, i32) {
    %c0_i32 = arith.constant 0 : i32
    %c0_i32_0 = arith.constant 0 : i32
    %c0_i32_1 = arith.constant 0 : i32
    return %c0_i32, %c0_i32_0, %arg2 : i32, i32, i32
  }
  func.func @transform_2(%arg0: i32, %arg1: i32, %arg2: i32) -> (i32, i32) {
    %c1_i32 = arith.constant 1 : i32
    %0 = arith.muli %arg0, %c1_i32 : i32
    %1 = arith.addi %0, %arg1 : i32
    %c0_i32 = arith.constant 0 : i32
    return %1, %arg2 : i32, i32
  }
  func.func @transform_3(%arg0: i32, %arg1: i32, %arg2: i32) -> (i32, i32, i32) {
    %c1_i32 = arith.constant 1 : i32
    %0 = arith.muli %arg0, %c1_i32 : i32
    %1 = arith.addi %0, %arg1 : i32
    %c0_i32 = arith.constant 0 : i32
    %c0_i32_0 = arith.constant 0 : i32
    return %1, %c0_i32, %arg2 : i32, i32, i32
  }
}

module attributes {stable_mosaic.version = 11 : i64} {
  func.func @_bn_add_act_kernel(%arg0: i32, %arg1: i32, %arg2: memref<512x128xbf16, #tpu.memory_space<vmem>>, %arg3: memref<1x128xf32, #tpu.memory_space<vmem>>, %arg4: memref<1x128xf32, #tpu.memory_space<vmem>>, %arg5: memref<512x128xbf16, #tpu.memory_space<vmem>>, %arg6: memref<1x128xf32, #tpu.memory_space<vmem>>, %arg7: memref<1x128xf32, #tpu.memory_space<vmem>>, %arg8: memref<512x128xf32, #tpu.memory_space<vmem>>) attributes {dimension_semantics = [#tpu.dimension_semantics<parallel>, #tpu.dimension_semantics<parallel>], iteration_bounds = array<i64: 1, 1>, scalar_prefetch = 0 : i64, scratch_operands = 0 : i64, tpu.core_type = #tpu.core_type<tc>, window_params = [{transform_indices = @transform_0, window_bounds = array<i64: 512, 128>}, {transform_indices = @transform_1, window_bounds = array<i64: 1, 128>}, {transform_indices = @transform_2, window_bounds = array<i64: 1, 128>}, {transform_indices = @transform_3, window_bounds = array<i64: 512, 128>}, {transform_indices = @transform_4, window_bounds = array<i64: 1, 128>}, {transform_indices = @transform_5, window_bounds = array<i64: 1, 128>}, {transform_indices = @transform_6, window_bounds = array<i64: 512, 128>}]} {
    %c0 = arith.constant 0 : index
    %c0_0 = arith.constant 0 : index
    %0 = vector.load %arg2[%c0, %c0_0] : memref<512x128xbf16, #tpu.memory_space<vmem>>, vector<512x128xbf16>
    %1 = arith.extf %0 : vector<512x128xbf16> to vector<512x128xf32>
    %c0_1 = arith.constant 0 : index
    %c0_2 = arith.constant 0 : index
    %2 = vector.load %arg3[%c0_1, %c0_2] : memref<1x128xf32, #tpu.memory_space<vmem>>, vector<1x128xf32>
    %3 = vector.broadcast %2 : vector<1x128xf32> to vector<512x128xf32>
    %4 = arith.mulf %1, %3 : vector<512x128xf32>
    %c0_3 = arith.constant 0 : index
    %c0_4 = arith.constant 0 : index
    %5 = vector.load %arg4[%c0_3, %c0_4] : memref<1x128xf32, #tpu.memory_space<vmem>>, vector<1x128xf32>
    %6 = vector.broadcast %5 : vector<1x128xf32> to vector<512x128xf32>
    %7 = arith.addf %4, %6 : vector<512x128xf32>
    %c0_5 = arith.constant 0 : index
    %c0_6 = arith.constant 0 : index
    %8 = vector.load %arg5[%c0_5, %c0_6] : memref<512x128xbf16, #tpu.memory_space<vmem>>, vector<512x128xbf16>
    %9 = arith.extf %8 : vector<512x128xbf16> to vector<512x128xf32>
    %c0_7 = arith.constant 0 : index
    %c0_8 = arith.constant 0 : index
    %10 = vector.load %arg6[%c0_7, %c0_8] : memref<1x128xf32, #tpu.memory_space<vmem>>, vector<1x128xf32>
    %11 = vector.broadcast %10 : vector<1x128xf32> to vector<512x128xf32>
    %12 = arith.mulf %9, %11 : vector<512x128xf32>
    %13 = arith.addf %7, %12 : vector<512x128xf32>
    %c0_9 = arith.constant 0 : index
    %c0_10 = arith.constant 0 : index
    %14 = vector.load %arg7[%c0_9, %c0_10] : memref<1x128xf32, #tpu.memory_space<vmem>>, vector<1x128xf32>
    %15 = vector.broadcast %14 : vector<1x128xf32> to vector<512x128xf32>
    %16 = arith.addf %13, %15 : vector<512x128xf32>
    %cst = arith.constant 0.000000e+00 : f32
    %17 = vector.broadcast %cst : f32 to vector<512x128xf32>
    %18 = arith.maximumf %16, %17 : vector<512x128xf32>
    %c0_11 = arith.constant 0 : index
    %c0_12 = arith.constant 0 : index
    %19 = vector.load %arg8[%c0_11, %c0_12] : memref<512x128xf32, #tpu.memory_space<vmem>>, vector<512x128xf32>
    tpu.vector_store %arg8[%c0_11, %c0_12], %18 {strides = array<i32>} : memref<512x128xf32, #tpu.memory_space<vmem>>, vector<512x128xf32>,
    return
  }
  func.func @transform_0(%arg0: i32, %arg1: i32) -> (i32, i32) {
    %c0_i32 = arith.constant 0 : i32
    return %arg0, %arg1 : i32, i32
  }
  func.func @transform_1(%arg0: i32, %arg1: i32) -> (i32, i32) {
    %c0_i32 = arith.constant 0 : i32
    %c0_i32_0 = arith.constant 0 : i32
    return %c0_i32, %arg1 : i32, i32
  }
  func.func @transform_2(%arg0: i32, %arg1: i32) -> (i32, i32) {
    %c0_i32 = arith.constant 0 : i32
    %c0_i32_0 = arith.constant 0 : i32
    return %c0_i32, %arg1 : i32, i32
  }
  func.func @transform_3(%arg0: i32, %arg1: i32) -> (i32, i32) {
    %c0_i32 = arith.constant 0 : i32
    return %arg0, %arg1 : i32, i32
  }
  func.func @transform_4(%arg0: i32, %arg1: i32) -> (i32, i32) {
    %c0_i32 = arith.constant 0 : i32
    %c0_i32_0 = arith.constant 0 : i32
    return %c0_i32, %arg1 : i32, i32
  }
  func.func @transform_5(%arg0: i32, %arg1: i32) -> (i32, i32) {
    %c0_i32 = arith.constant 0 : i32
    %c0_i32_0 = arith.constant 0 : i32
    return %c0_i32, %arg1 : i32, i32
  }
  func.func @transform_6(%arg0: i32, %arg1: i32) -> (i32, i32) {
    %c0_i32 = arith.constant 0 : i32
    return %arg0, %arg1 : i32, i32
  }
}

</mosaic_0001>

<llo_original>
// kernel: bottleneck_forward.8
$region0: #{bottleneck_forward.8}
  #allocation0 [shape = 'u32[]', space=smem, size = 0x4, offset = 0x4, fixed_abs, tag = 'smem constant byte address 0x4 - core index']
  #allocation1 [shape = 'u32[72,128]{1,0:T(1,128)}', space=vmem, size = 0x9000, scoped, tag = 'internal scratch']
  %s0 = inlined_call_operand.vmem [shape: bf16[512,128], index: 0, kind: input, shape index: {}]
  %s1 = inlined_call_operand.vmem [shape: f32[1,128], index: 1, kind: input, shape index: {}]
  %s2 = inlined_call_operand.vmem [shape: f32[1,128], index: 2, kind: input, shape index: {}]
  %s3 = inlined_call_operand.vmem [shape: bf16[512,128], index: 3, kind: output, shape index: {}]
  %s4 = sld [smem:[#allocation0]]
  $region22: #{bottleneck_forward.8} parent=0
    _
  %s6 = ssub.s32 1, %s4
  %s7 = scalar_select 0, %s6, %s4
  // Predicated region
  $region2: #{bottleneck_forward.8} parent=0 // pred_check
    _
  $region3: #{bottleneck_forward.8} parent=0 // pred_check_branch
    %9 = sbr.rel (0) target = $region5
  $region4: #{bottleneck_forward.8} parent=0 // pred_region
    _
  $region5: #{bottleneck_forward.8} parent=0 // pred_fallthru
    _
  // Predicated region
  $region6: #{bottleneck_forward.8} parent=0 // pred_check
    _
  $region7: #{bottleneck_forward.8} parent=0 // pred_check_branch
    %11 = sbr.rel (0) target = $region9
  $region8: #{bottleneck_forward.8} parent=0 // pred_region
    _
  $region9: #{bottleneck_forward.8} parent=0 // pred_fallthru
    _
  // Predicated region
  $region10: #{bottleneck_forward.8} parent=0 // pred_check
    _
  $region11: #{bottleneck_forward.8} parent=0 // pred_check_branch
    %13 = sbr.rel (0) target = $region13
  $region12: #{bottleneck_forward.8} parent=0 // pred_region
    _
  $region13: #{bottleneck_forward.8} parent=0 // pred_fallthru
    _
  %v14 = vld [vmem:[%s0] sm:$0xf]
  %v15 = vld [vmem:[%s0 + $0x4] sm:$0xf]
  %v16 = vld [vmem:[%s0 + $0x8] sm:$0xf]
  %v17 = vld [vmem:[%s0 + $0xc] sm:$0xf]
  %v18 = vld [vmem:[%s0 + $0x10] sm:$0xf]
  %v19 = vld [vmem:[%s0 + $0x14] sm:$0xf]
  %v20 = vld [vmem:[%s0 + $0x18] sm:$0xf]
  %v21 = vld [vmem:[%s0 + $0x1c] sm:$0xf]
  %v22 = vld [vmem:[%s0 + $0x20] sm:$0xf]
  %v23 = vld [vmem:[%s0 + $0x24] sm:$0xf]
  %v24 = vld [vmem:[%s0 + $0x28] sm:$0xf]
  %v25 = vld [vmem:[%s0 + $0x2c] sm:$0xf]
  %v26 = vld [vmem:[%s0 + $0x30] sm:$0xf]
  %v27 = vld [vmem:[%s0 + $0x34] sm:$0xf]
  %v28 = vld [vmem:[%s0 + $0x38] sm:$0xf]
  %v29 = vld [vmem:[%s0 + $0x3c] sm:$0xf]
  %v30 = vld [vmem:[%s0 + $0x40] sm:$0xf]
  %v31 = vld [vmem:[%s0 + $0x44] sm:$0xf]
  %v32 = vld [vmem:[%s0 + $0x48] sm:$0xf]
  %v33 = vld [vmem:[%s0 + $0x4c] sm:$0xf]
  %v34 = vld [vmem:[%s0 + $0x50] sm:$0xf]
  %v35 = vld [vmem:[%s0 + $0x54] sm:$0xf]
  %v36 = vld [vmem:[%s0 + $0x58] sm:$0xf]
  %v37 = vld [vmem:[%s0 + $0x5c] sm:$0xf]
  %v38 = vld [vmem:[%s0 + $0x60] sm:$0xf]
  %v39 = vld [vmem:[%s0 + $0x64] sm:$0xf]
  %v40 = vld [vmem:[%s0 + $0x68] sm:$0xf]
  %v41 = vld [vmem:[%s0 + $0x6c] sm:$0xf]
  %v42 = vld [vmem:[%s0 + $0x70] sm:$0xf]
  %v43 = vld [vmem:[%s0 + $0x74] sm:$0xf]
  %v44 = vld [vmem:[%s0 + $0x78] sm:$0xf]
  %v45 = vld [vmem:[%s0 + $0x7c] sm:$0xf]
  %v46 = vld [vmem:[%s0 + $0x80] sm:$0xf]
  %v47 = vld [vmem:[%s0 + $0x84] sm:$0xf]
  %v48 = vld [vmem:[%s0 + $0x88] sm:$0xf]
  %v49 = vld [vmem:[%s0 + $0x8c] sm:$0xf]
  %v50 = vld [vmem:[%s0 + $0x90] sm:$0xf]
  %v51 = vld [vmem:[%s0 + $0x94] sm:$0xf]
  %v52 = vld [vmem:[%s0 + $0x98] sm:$0xf]
  %v53 = vld [vmem:[%s0 + $0x9c] sm:$0xf]
  %v54 = vld [vmem:[%s0 + $0xa0] sm:$0xf]
  %v55 = vld [vmem:[%s0 + $0xa4] sm:$0xf]
  %v56 = vld [vmem:[%s0 + $0xa8] sm:$0xf]
  %v57 = vld [vmem:[%s0 + $0xac] sm:$0xf]
  %v58 = vld [vmem:[%s0 + $0xb0] sm:$0xf]
  %v59 = vld [vmem:[%s0 + $0xb4] sm:$0xf]
  %v60 = vld [vmem:[%s0 + $0xb8] sm:$0xf]
  %v61 = vld [vmem:[%s0 + $0xbc] sm:$0xf]
  %v62 = vld [vmem:[%s0 + $0xc0] sm:$0xf]
  %v63 = vld [vmem:[%s0 + $0xc4] sm:$0xf]
  %v64 = vld [vmem:[%s0 + $0xc8] sm:$0xf]
  %v65 = vld [vmem:[%s0 + $0xcc] sm:$0xf]
  %v66 = vld [vmem:[%s0 + $0xd0] sm:$0xf]
  %v67 = vld [vmem:[%s0 + $0xd4] sm:$0xf]
  %v68 = vld [vmem:[%s0 + $0xd8] sm:$0xf]
  %v69 = vld [vmem:[%s0 + $0xdc] sm:$0xf]
  %v70 = vld [vmem:[%s0 + $0xe0] sm:$0xf]
  %v71 = vld [vmem:[%s0 + $0xe4] sm:$0xf]
  %v72 = vld [vmem:[%s0 + $0xe8] sm:$0xf]
  %v73 = vld [vmem:[%s0 + $0xec] sm:$0xf]
  %v74 = vld [vmem:[%s0 + $0xf0] sm:$0xf]
  %v75 = vld [vmem:[%s0 + $0xf4] sm:$0xf]
  %v76 = vld [vmem:[%s0 + $0xf8] sm:$0xf]
  %v77 = vld [vmem:[%s0 + $0xfc] sm:$0xf]
  %v78 = vunpack.c.l.bf16 %v14
  %v79 = vunpack.c.l.bf16 %v15
  %v80 = vunpack.c.l.bf16 %v16
  %v81 = vunpack.c.l.bf16 %v17
  %v82 = vunpack.c.l.bf16 %v18
  %v83 = vunpack.c.l.bf16 %v19
  %v84 = vunpack.c.l.bf16 %v20
  %v85 = vunpack.c.l.bf16 %v21
  %v86 = vunpack.c.l.bf16 %v22
  %v87 = vunpack.c.l.bf16 %v23
  %v88 = vunpack.c.l.bf16 %v24
  %v89 = vunpack.c.l.bf16 %v25
  %v90 = vunpack.c.l.bf16 %v26
  %v91 = vunpack.c.l.bf16 %v27
  %v92 = vunpack.c.l.bf16 %v28
  %v93 = vunpack.c.l.bf16 %v29
  %v94 = vunpack.c.l.bf16 %v30
  %v95 = vunpack.c.l.bf16 %v31
  %v96 = vunpack.c.l.bf16 %v32
  %v97 = vunpack.c.l.bf16 %v33
  %v98 = vunpack.c.l.bf16 %v34
  %v99 = vunpack.c.l.bf16 %v35
  %v100 = vunpack.c.l.bf16 %v36
  %v101 = vunpack.c.l.bf16 %v37
  %v102 = vunpack.c.l.bf16 %v38
  %v103 = vunpack.c.l.bf16 %v39
  %v104 = vunpack.c.l.bf16 %v40
  %v105 = vunpack.c.l.bf16 %v41
  %v106 = vunpack.c.l.bf16 %v42
  %v107 = vunpack.c.l.bf16 %v43
  %v108 = vunpack.c.l.bf16 %v44
  %v109 = vunpack.c.l.bf16 %v45
  %v110 = vunpack.c.l.bf16 %v46
  %v111 = vunpack.c.l.bf16 %v47
  %v112 = vunpack.c.l.bf16 %v48
  %v113 = vunpack.c.l.bf16 %v49
  %v114 = vunpack.c.l.bf16 %v50
  %v115 = vunpack.c.l.bf16 %v51
  %v116 = vunpack.c.l.bf16 %v52
  %v117 = vunpack.c.l.bf16 %v53
  %v118 = vunpack.c.l.bf16 %v54
  %v119 = vunpack.c.l.bf16 %v55
  %v120 = vunpack.c.l.bf16 %v56
  %v121 = vunpack.c.l.bf16 %v57
  %v122 = vunpack.c.l.bf16 %v58
  %v123 = vunpack.c.l.bf16 %v59
  %v124 = vunpack.c.l.bf16 %v60
  %v125 = vunpack.c.l.bf16 %v61
  %v126 = vunpack.c.l.bf16 %v62
  %v127 = vunpack.c.l.bf16 %v63
  %v128 = vunpack.c.l.bf16 %v64
  %v129 = vunpack.c.l.bf16 %v65
  %v130 = vunpack.c.l.bf16 %v66
  %v131 = vunpack.c.l.bf16 %v67
  %v132 = vunpack.c.l.bf16 %v68
  %v133 = vunpack.c.l.bf16 %v69
  %v134 = vunpack.c.l.bf16 %v70
  %v135 = vunpack.c.l.bf16 %v71
  %v136 = vunpack.c.l.bf16 %v72
  %v137 = vunpack.c.l.bf16 %v73
  %v138 = vunpack.c.l.bf16 %v74
  %v139 = vunpack.c.l.bf16 %v75
  %v140 = vunpack.c.l.bf16 %v76
  %v141 = vunpack.c.l.bf16 %v77
  %v142 = vld [vmem:[%s1] sm:$0x1]
  %v144 = vperm.slane %v142, 0
  %v146 = vmul.f32 %v78, %v144
  %v147 = vmul.f32 %v79, %v144
  %v148 = vmul.f32 %v80, %v144
  %v149 = vmul.f32 %v81, %v144
  %v150 = vmul.f32 %v82, %v144
  %v151 = vmul.f32 %v83, %v144
  %v152 = vmul.f32 %v84, %v144
  %v153 = vmul.f32 %v85, %v144
  %v154 = vmul.f32 %v86, %v144
  %v155 = vmul.f32 %v87, %v144
  %v156 = vmul.f32 %v88, %v144
  %v157 = vmul.f32 %v89, %v144
  %v158 = vmul.f32 %v90, %v144
  %v159 = vmul.f32 %v91, %v144
  %v160 = vmul.f32 %v92, %v144
  %v161 = vmul.f32 %v93, %v144
  %v162 = vmul.f32 %v94, %v144
  %v163 = vmul.f32 %v95, %v144
  %v164 = vmul.f32 %v96, %v144
  %v165 = vmul.f32 %v97, %v144
  %v166 = vmul.f32 %v98, %v144
  %v167 = vmul.f32 %v99, %v144
  %v168 = vmul.f32 %v100, %v144
  %v169 = vmul.f32 %v101, %v144
  %v170 = vmul.f32 %v102, %v144
  %v171 = vmul.f32 %v103, %v144
  %v172 = vmul.f32 %v104, %v144
  %v173 = vmul.f32 %v105, %v144
  %v174 = vmul.f32 %v106, %v144
  %v175 = vmul.f32 %v107, %v144
  %v176 = vmul.f32 %v108, %v144
  %v177 = vmul.f32 %v109, %v144
  %v178 = vmul.f32 %v110, %v144
  %v179 = vmul.f32 %v111, %v144
  %v180 = vmul.f32 %v112, %v144
  %v181 = vmul.f32 %v113, %v144
  %v182 = vmul.f32 %v114, %v144
  %v183 = vmul.f32 %v115, %v144
  %v184 = vmul.f32 %v116, %v144
  %v185 = vmul.f32 %v117, %v144
  %v186 = vmul.f32 %v118, %v144
  %v187 = vmul.f32 %v119, %v144
  %v188 = vmul.f32 %v120, %v144
  %v189 = vmul.f32 %v121, %v144
  %v190 = vmul.f32 %v122, %v144
  %v191 = vmul.f32 %v123, %v144
  %v192 = vmul.f32 %v124, %v144
  %v193 = vmul.f32 %v125, %v144
  %v194 = vmul.f32 %v126, %v144
  %v195 = vmul.f32 %v127, %v144
  %v196 = vmul.f32 %v128, %v144
  %v197 = vmul.f32 %v129, %v144
  %v198 = vmul.f32 %v130, %v144
  %v199 = vmul.f32 %v131, %v144
  %v200 = vmul.f32 %v132, %v144
  %v201 = vmul.f32 %v133, %v144
  %v202 = vmul.f32 %v134, %v144
  %v203 = vmul.f32 %v135, %v144
  %v204 = vmul.f32 %v136, %v144
  %v205 = vmul.f32 %v137, %v144
  %v206 = vmul.f32 %v138, %v144
  %v207 = vmul.f32 %v139, %v144
  %v208 = vmul.f32 %v140, %v144
  %v209 = vmul.f32 %v141, %v144
  %v210 = vld [vmem:[%s2] sm:$0x1]
  %v212 = vperm.slane %v210, 0
  %v214 = vadd.f32 %v146, %v212
  %v215 = vadd.f32 %v147, %v212
  %v216 = vadd.f32 %v148, %v212
  %v217 = vadd.f32 %v149, %v212
  %v218 = vadd.f32 %v150, %v212
  %v219 = vadd.f32 %v151, %v212
  %v220 = vadd.f32 %v152, %v212
  %v221 = vadd.f32 %v153, %v212
  %v222 = vadd.f32 %v154, %v212
  %v223 = vadd.f32 %v155, %v212
  %v224 = vadd.f32 %v156, %v212
  %v225 = vadd.f32 %v157, %v212
  %v226 = vadd.f32 %v158, %v212
  %v227 = vadd.f32 %v159, %v212
  %v228 = vadd.f32 %v160, %v212
  %v229 = vadd.f32 %v161, %v212
  %v230 = vadd.f32 %v162, %v212
  %v231 = vadd.f32 %v163, %v212
  %v232 = vadd.f32 %v164, %v212
  %v233 = vadd.f32 %v165, %v212
  %v234 = vadd.f32 %v166, %v212
  %v235 = vadd.f32 %v167, %v212
  %v236 = vadd.f32 %v168, %v212
  %v237 = vadd.f32 %v169, %v212
  %v238 = vadd.f32 %v170, %v212
  %v239 = vadd.f32 %v171, %v212
  %v240 = vadd.f32 %v172, %v212
  %v241 = vadd.f32 %v173, %v212
  %v242 = vadd.f32 %v174, %v212
  %v243 = vadd.f32 %v175, %v212
  %v244 = vadd.f32 %v176, %v212
  %v245 = vadd.f32 %v177, %v212
  %v246 = vadd.f32 %v178, %v212
  %v247 = vadd.f32 %v179, %v212
  %v248 = vadd.f32 %v180, %v212
  %v249 = vadd.f32 %v181, %v212
  %v250 = vadd.f32 %v182, %v212
  %v251 = vadd.f32 %v183, %v212
  %v252 = vadd.f32 %v184, %v212
  %v253 = vadd.f32 %v185, %v212
  %v254 = vadd.f32 %v186, %v212
  %v255 = vadd.f32 %v187, %v212
  %v256 = vadd.f32 %v188, %v212
  %v257 = vadd.f32 %v189, %v212
  %v258 = vadd.f32 %v190, %v212
  %v259 = vadd.f32 %v191, %v212
  %v260 = vadd.f32 %v192, %v212
  %v261 = vadd.f32 %v193, %v212
  %v262 = vadd.f32 %v194, %v212
  %v263 = vadd.f32 %v195, %v212
  %v264 = vadd.f32 %v196, %v212
  %v265 = vadd.f32 %v197, %v212
  %v266 = vadd.f32 %v198, %v212
  %v267 = vadd.f32 %v199, %v212
  %v268 = vadd.f32 %v200, %v212
  %v269 = vadd.f32 %v201, %v212
  %v270 = vadd.f32 %v202, %v212
  %v271 = vadd.f32 %v203, %v212
  %v272 = vadd.f32 %v204, %v212
  %v273 = vadd.f32 %v205, %v212
  %v274 = vadd.f32 %v206, %v212
  %v275 = vadd.f32 %v207, %v212
  %v276 = vadd.f32 %v208, %v212
  %v277 = vadd.f32 %v209, %v212
  %v278 = vmax.f32 %v214, 0.0
  %v279 = vmax.f32 %v215, 0.0
  %v280 = vmax.f32 %v216, 0.0
  %v281 = vmax.f32 %v217, 0.0
  %v282 = vmax.f32 %v218, 0.0
  %v283 = vmax.f32 %v219, 0.0
  %v284 = vmax.f32 %v220, 0.0
  %v285 = vmax.f32 %v221, 0.0
  %v286 = vmax.f32 %v222, 0.0
  %v287 = vmax.f32 %v223, 0.0
  %v288 = vmax.f32 %v224, 0.0
  %v289 = vmax.f32 %v225, 0.0
  %v290 = vmax.f32 %v226, 0.0
  %v291 = vmax.f32 %v227, 0.0
  %v292 = vmax.f32 %v228, 0.0
  %v293 = vmax.f32 %v229, 0.0
  %v294 = vmax.f32 %v230, 0.0
  %v295 = vmax.f32 %v231, 0.0
  %v296 = vmax.f32 %v232, 0.0
  %v297 = vmax.f32 %v233, 0.0
  %v298 = vmax.f32 %v234, 0.0
  %v299 = vmax.f32 %v235, 0.0
  %v300 = vmax.f32 %v236, 0.0
  %v301 = vmax.f32 %v237, 0.0
  %v302 = vmax.f32 %v238, 0.0
  %v303 = vmax.f32 %v239, 0.0
  %v304 = vmax.f32 %v240, 0.0
  %v305 = vmax.f32 %v241, 0.0
  %v306 = vmax.f32 %v242, 0.0
  %v307 = vmax.f32 %v243, 0.0
  %v308 = vmax.f32 %v244, 0.0
  %v309 = vmax.f32 %v245, 0.0
  %v310 = vmax.f32 %v246, 0.0
  %v311 = vmax.f32 %v247, 0.0
  %v312 = vmax.f32 %v248, 0.0
  %v313 = vmax.f32 %v249, 0.0
  %v314 = vmax.f32 %v250, 0.0
  %v315 = vmax.f32 %v251, 0.0
  %v316 = vmax.f32 %v252, 0.0
  %v317 = vmax.f32 %v253, 0.0
  %v318 = vmax.f32 %v254, 0.0
  %v319 = vmax.f32 %v255, 0.0
  %v320 = vmax.f32 %v256, 0.0
  %v321 = vmax.f32 %v257, 0.0
  %v322 = vmax.f32 %v258, 0.0
  %v323 = vmax.f32 %v259, 0.0
  %v324 = vmax.f32 %v260, 0.0
  %v325 = vmax.f32 %v261, 0.0
  %v326 = vmax.f32 %v262, 0.0
  %v327 = vmax.f32 %v263, 0.0
  %v328 = vmax.f32 %v264, 0.0
  %v329 = vmax.f32 %v265, 0.0
  %v330 = vmax.f32 %v266, 0.0
  %v331 = vmax.f32 %v267, 0.0
  %v332 = vmax.f32 %v268, 0.0
  %v333 = vmax.f32 %v269, 0.0
  %v334 = vmax.f32 %v270, 0.0
  %v335 = vmax.f32 %v271, 0.0
  %v336 = vmax.f32 %v272, 0.0
  %v337 = vmax.f32 %v273, 0.0
  %v338 = vmax.f32 %v274, 0.0
  %v339 = vmax.f32 %v275, 0.0
  %v340 = vmax.f32 %v276, 0.0
  %v341 = vmax.f32 %v277, 0.0
  %v342 = vpack.c.bf16 %v278, %v278
  %v343 = vpack.c.bf16 %v279, %v279
  %v344 = vpack.c.bf16 %v280, %v280
  %v345 = vpack.c.bf16 %v281, %v281
  %v346 = vpack.c.bf16 %v282, %v282
  %v347 = vpack.c.bf16 %v283, %v283
  %v348 = vpack.c.bf16 %v284, %v284
  %v349 = vpack.c.bf16 %v285, %v285
  %v350 = vpack.c.bf16 %v286, %v286
  %v351 = vpack.c.bf16 %v287, %v287
  %v352 = vpack.c.bf16 %v288, %v288
  %v353 = vpack.c.bf16 %v289, %v289
  %v354 = vpack.c.bf16 %v290, %v290
  %v355 = vpack.c.bf16 %v291, %v291
  %v356 = vpack.c.bf16 %v292, %v292
  %v357 = vpack.c.bf16 %v293, %v293
  %v358 = vpack.c.bf16 %v294, %v294
  %v359 = vpack.c.bf16 %v295, %v295
  %v360 = vpack.c.bf16 %v296, %v296
  %v361 = vpack.c.bf16 %v297, %v297
  %v362 = vpack.c.bf16 %v298, %v298
  %v363 = vpack.c.bf16 %v299, %v299
  %v364 = vpack.c.bf16 %v300, %v300
  %v365 = vpack.c.bf16 %v301, %v301
  %v366 = vpack.c.bf16 %v302, %v302
  %v367 = vpack.c.bf16 %v303, %v303
  %v368 = vpack.c.bf16 %v304, %v304
  %v369 = vpack.c.bf16 %v305, %v305
  %v370 = vpack.c.bf16 %v306, %v306
  %v371 = vpack.c.bf16 %v307, %v307
  %v372 = vpack.c.bf16 %v308, %v308
  %v373 = vpack.c.bf16 %v309, %v309
  %v374 = vpack.c.bf16 %v310, %v310
  %v375 = vpack.c.bf16 %v311, %v311
  %v376 = vpack.c.bf16 %v312, %v312
  %v377 = vpack.c.bf16 %v313, %v313
  %v378 = vpack.c.bf16 %v314, %v314
  %v379 = vpack.c.bf16 %v315, %v315
  %v380 = vpack.c.bf16 %v316, %v316
  %v381 = vpack.c.bf16 %v317, %v317
  %v382 = vpack.c.bf16 %v318, %v318
  %v383 = vpack.c.bf16 %v319, %v319
  %v384 = vpack.c.bf16 %v320, %v320
  %v385 = vpack.c.bf16 %v321, %v321
  %v386 = vpack.c.bf16 %v322, %v322
  %v387 = vpack.c.bf16 %v323, %v323
  %v388 = vpack.c.bf16 %v324, %v324
  %v389 = vpack.c.bf16 %v325, %v325
  %v390 = vpack.c.bf16 %v326, %v326
  %v391 = vpack.c.bf16 %v327, %v327
  %v392 = vpack.c.bf16 %v328, %v328
  %v393 = vpack.c.bf16 %v329, %v329
  %v394 = vpack.c.bf16 %v330, %v330
  %v395 = vpack.c.bf16 %v331, %v331
  %v396 = vpack.c.bf16 %v332, %v332
  %v397 = vpack.c.bf16 %v333, %v333
  %v398 = vpack.c.bf16 %v334, %v334
  %v399 = vpack.c.bf16 %v335, %v335
  %v400 = vpack.c.bf16 %v336, %v336
  %v401 = vpack.c.bf16 %v337, %v337
  %v402 = vpack.c.bf16 %v338, %v338
  %v403 = vpack.c.bf16 %v339, %v339
  %v404 = vpack.c.bf16 %v340, %v340
  %v405 = vpack.c.bf16 %v341, %v341
  %406 = vst [vmem:[%s3] sm:$0xf] %v342
  %407 = vst [vmem:[%s3 + $0x4] sm:$0xf] %v343
  %408 = vst [vmem:[%s3 + $0x8] sm:$0xf] %v344
  %409 = vst [vmem:[%s3 + $0xc] sm:$0xf] %v345
  %410 = vst [vmem:[%s3 + $0x10] sm:$0xf] %v346
  %411 = vst [vmem:[%s3 + $0x14] sm:$0xf] %v347
  %412 = vst [vmem:[%s3 + $0x18] sm:$0xf] %v348
  %413 = vst [vmem:[%s3 + $0x1c] sm:$0xf] %v349
  %414 = vst [vmem:[%s3 + $0x20] sm:$0xf] %v350
  %415 = vst [vmem:[%s3 + $0x24] sm:$0xf] %v351
  %416 = vst [vmem:[%s3 + $0x28] sm:$0xf] %v352
  %417 = vst [vmem:[%s3 + $0x2c] sm:$0xf] %v353
  %418 = vst [vmem:[%s3 + $0x30] sm:$0xf] %v354
  %419 = vst [vmem:[%s3 + $0x34] sm:$0xf] %v355
  %420 = vst [vmem:[%s3 + $0x38] sm:$0xf] %v356
  %421 = vst [vmem:[%s3 + $0x3c] sm:$0xf] %v357
  %422 = vst [vmem:[%s3 + $0x40] sm:$0xf] %v358
  %423 = vst [vmem:[%s3 + $0x44] sm:$0xf] %v359
  %424 = vst [vmem:[%s3 + $0x48] sm:$0xf] %v360
  %425 = vst [vmem:[%s3 + $0x4c] sm:$0xf] %v361
  %426 = vst [vmem:[%s3 + $0x50] sm:$0xf] %v362
  %427 = vst [vmem:[%s3 + $0x54] sm:$0xf] %v363
  %428 = vst [vmem:[%s3 + $0x58] sm:$0xf] %v364
  %429 = vst [vmem:[%s3 + $0x5c] sm:$0xf] %v365
  %430 = vst [vmem:[%s3 + $0x60] sm:$0xf] %v366
  %431 = vst [vmem:[%s3 + $0x64] sm:$0xf] %v367
  %432 = vst [vmem:[%s3 + $0x68] sm:$0xf] %v368
  %433 = vst [vmem:[%s3 + $0x6c] sm:$0xf] %v369
  %434 = vst [vmem:[%s3 + $0x70] sm:$0xf] %v370
  %435 = vst [vmem:[%s3 + $0x74] sm:$0xf] %v371
  %436 = vst [vmem:[%s3 + $0x78] sm:$0xf] %v372
  %437 = vst [vmem:[%s3 + $0x7c] sm:$0xf] %v373
  %438 = vst [vmem:[%s3 + $0x80] sm:$0xf] %v374
  %439 = vst [vmem:[%s3 + $0x84] sm:$0xf] %v375
  %440 = vst [vmem:[%s3 + $0x88] sm:$0xf] %v376
  %441 = vst [vmem:[%s3 + $0x8c] sm:$0xf] %v377
  %442 = vst [vmem:[%s3 + $0x90] sm:$0xf] %v378
  %443 = vst [vmem:[%s3 + $0x94] sm:$0xf] %v379
  %444 = vst [vmem:[%s3 + $0x98] sm:$0xf] %v380
  %445 = vst [vmem:[%s3 + $0x9c] sm:$0xf] %v381
  %446 = vst [vmem:[%s3 + $0xa0] sm:$0xf] %v382
  %447 = vst [vmem:[%s3 + $0xa4] sm:$0xf] %v383
  %448 = vst [vmem:[%s3 + $0xa8] sm:$0xf] %v384
  %449 = vst [vmem:[%s3 + $0xac] sm:$0xf] %v385
  %450 = vst [vmem:[%s3 + $0xb0] sm:$0xf] %v386
  %451 = vst [vmem:[%s3 + $0xb4] sm:$0xf] %v387
  %452 = vst [vmem:[%s3 + $0xb8] sm:$0xf] %v388
  %453 = vst [vmem:[%s3 + $0xbc] sm:$0xf] %v389
  %454 = vst [vmem:[%s3 + $0xc0] sm:$0xf] %v390
  %455 = vst [vmem:[%s3 + $0xc4] sm:$0xf] %v391
  %456 = vst [vmem:[%s3 + $0xc8] sm:$0xf] %v392
  %457 = vst [vmem:[%s3 + $0xcc] sm:$0xf] %v393
  %458 = vst [vmem:[%s3 + $0xd0] sm:$0xf] %v394
  %459 = vst [vmem:[%s3 + $0xd4] sm:$0xf] %v395
  %460 = vst [vmem:[%s3 + $0xd8] sm:$0xf] %v396
  %461 = vst [vmem:[%s3 + $0xdc] sm:$0xf] %v397
  %462 = vst [vmem:[%s3 + $0xe0] sm:$0xf] %v398
  %463 = vst [vmem:[%s3 + $0xe4] sm:$0xf] %v399
  %464 = vst [vmem:[%s3 + $0xe8] sm:$0xf] %v400
  %465 = vst [vmem:[%s3 + $0xec] sm:$0xf] %v401
  %466 = vst [vmem:[%s3 + $0xf0] sm:$0xf] %v402
  %467 = vst [vmem:[%s3 + $0xf4] sm:$0xf] %v403
  %468 = vst [vmem:[%s3 + $0xf8] sm:$0xf] %v404
  %469 = vst [vmem:[%s3 + $0xfc] sm:$0xf] %v405
  // Predicated region
  $region14: #{bottleneck_forward.8} parent=0 // pred_check
    _
  $region15: #{bottleneck_forward.8} parent=0 // pred_check_branch
    %471 = sbr.rel (0) target = $region17
  $region16: #{bottleneck_forward.8} parent=0 // pred_region
    _
  $region17: #{bottleneck_forward.8} parent=0 // pred_fallthru
    _
  // Predicated region
  $region18: #{bottleneck_forward.8} parent=0 // pred_check
    _
  $region19: #{bottleneck_forward.8} parent=0 // pred_check_branch
    %473 = sbr.rel (0) target = $region21
  $region20: #{bottleneck_forward.8} parent=0 // pred_region
    _
  $region21: #{bottleneck_forward.8} parent=0 // pred_fallthru
    _

// kernel: bottleneck_forward.7
$region0: #{bottleneck_forward.7}
  #allocation0 [shape = 'u32[]', space=smem, size = 0x4, offset = 0x4, fixed_abs, tag = 'smem constant byte address 0x4 - core index']
  #allocation1 [shape = 'u32[72,128]{1,0:T(1,128)}', space=vmem, size = 0x9000, scoped, tag = 'internal scratch']
  #allocation2 [shape = 'f32[512,128]{1,0:T(8,128)}', space=vmem, size = 0x40000, scoped, tag = 'scratch operand']
  %s0 = inlined_call_operand.vmem [shape: bf16[512,128], index: 0, kind: input, shape index: {}]
  %s1 = inlined_call_operand.vmem [shape: bf16[128,128], index: 1, kind: input, shape index: {}]
  %s2 = inlined_call_operand.vmem [shape: bf16[512,128], index: 2, kind: output, shape index: {0}]
  %s3 = inlined_call_operand.vmem [shape: f32[1,2,128], index: 3, kind: output, shape index: {1}]
  %4 = xla_tuple %s2, %s3
  %s5 = sld [smem:[#allocation0]]
  $region34: #{bottleneck_forward.7} parent=0
    _
  %s7 = ssub.s32 1, %s5
  %s8 = scalar_select 0, %s7, %s5
  // Predicated region
  $region2: #{bottleneck_forward.7} parent=0 // pred_check
    _
  $region3: #{bottleneck_forward.7} parent=0 // pred_check_branch
    %10 = sbr.rel (0) target = $region5
  $region4: #{bottleneck_forward.7} parent=0 // pred_region
    _
  $region5: #{bottleneck_forward.7} parent=0 // pred_fallthru
    _
  // Predicated region
  $region6: #{bottleneck_forward.7} parent=0 // pred_check
    _
  $region7: #{bottleneck_forward.7} parent=0 // pred_check_branch
    %12 = sbr.rel (0) target = $region9
  $region8: #{bottleneck_forward.7} parent=0 // pred_region
    _
  $region9: #{bottleneck_forward.7} parent=0 // pred_fallthru
    _
  %p13 = scmp.eq.s32.totalorder 0, 0
  // Predicated region
  $region10: #{bottleneck_forward.7} parent=0 // pred_check
    %p14 = pneg %p13
  $region11: #{bottleneck_forward.7} parent=0 // pred_check_branch
    %16 = sbr.rel (%p14) target = $region13
  $region12: #{bottleneck_forward.7} parent=0 // pred_region
    %17 = vst [vmem:[#allocation2] sm:$0xff] 0.0
    %18 = vst [vmem:[#allocation2 + $0x8] sm:$0xff] 0.0
    %19 = vst [vmem:[#allocation2 + $0x10] sm:$0xff] 0.0
    %20 = vst [vmem:[#allocation2 + $0x18] sm:$0xff] 0.0
    %21 = vst [vmem:[#allocation2 + $0x20] sm:$0xff] 0.0
    %22 = vst [vmem:[#allocation2 + $0x28] sm:$0xff] 0.0
    %23 = vst [vmem:[#allocation2 + $0x30] sm:$0xff] 0.0
    %24 = vst [vmem:[#allocation2 + $0x38] sm:$0xff] 0.0
    %25 = vst [vmem:[#allocation2 + $0x40] sm:$0xff] 0.0
    %26 = vst [vmem:[#allocation2 + $0x48] sm:$0xff] 0.0
    %27 = vst [vmem:[#allocation2 + $0x50] sm:$0xff] 0.0
    %28 = vst [vmem:[#allocation2 + $0x58] sm:$0xff] 0.0
    %29 = vst [vmem:[#allocation2 + $0x60] sm:$0xff] 0.0
    %30 = vst [vmem:[#allocation2 + $0x68] sm:$0xff] 0.0
    %31 = vst [vmem:[#allocation2 + $0x70] sm:$0xff] 0.0
    %32 = vst [vmem:[#allocation2 + $0x78] sm:$0xff] 0.0
    %33 = vst [vmem:[#allocation2 + $0x80] sm:$0xff] 0.0
    %34 = vst [vmem:[#allocation2 + $0x88] sm:$0xff] 0.0
    %35 = vst [vmem:[#allocation2 + $0x90] sm:$0xff] 0.0
    %36 = vst [vmem:[#allocation2 + $0x98] sm:$0xff] 0.0
    %37 = vst [vmem:[#allocation2 + $0xa0] sm:$0xff] 0.0
    %38 = vst [vmem:[#allocation2 + $0xa8] sm:$0xff] 0.0
    %39 = vst [vmem:[#allocation2 + $0xb0] sm:$0xff] 0.0
    %40 = vst [vmem:[#allocation2 + $0xb8] sm:$0xff] 0.0
    %41 = vst [vmem:[#allocation2 + $0xc0] sm:$0xff] 0.0
    %42 = vst [vmem:[#allocation2 + $0xc8] sm:$0xff] 0.0
    %43 = vst [vmem:[#allocation2 + $0xd0] sm:$0xff] 0.0
    %44 = vst [vmem:[#allocation2 + $0xd8] sm:$0xff] 0.0
    %45 = vst [vmem:[#allocation2 + $0xe0] sm:$0xff] 0.0
    %46 = vst [vmem:[#allocation2 + $0xe8] sm:$0xff] 0.0
    %47 = vst [vmem:[#allocation2 + $0xf0] sm:$0xff] 0.0
    %48 = vst [vmem:[#allocation2 + $0xf8] sm:$0xff] 0.0
    %49 = vst [vmem:[#allocation2 + $0x100] sm:$0xff] 0.0
    %50 = vst [vmem:[#allocation2 + $0x108] sm:$0xff] 0.0
    %51 = vst [vmem:[#allocation2 + $0x110] sm:$0xff] 0.0
    %52 = vst [vmem:[#allocation2 + $0x118] sm:$0xff] 0.0
    %53 = vst [vmem:[#allocation2 + $0x120] sm:$0xff] 0.0
    %54 = vst [vmem:[#allocation2 + $0x128] sm:$0xff] 0.0
    %55 = vst [vmem:[#allocation2 + $0x130] sm:$0xff] 0.0
    %56 = vst [vmem:[#allocation2 + $0x138] sm:$0xff] 0.0
    %57 = vst [vmem:[#allocation2 + $0x140] sm:$0xff] 0.0
    %58 = vst [vmem:[#allocation2 + $0x148] sm:$0xff] 0.0
    %59 = vst [vmem:[#allocation2 + $0x150] sm:$0xff] 0.0
    %60 = vst [vmem:[#allocation2 + $0x158] sm:$0xff] 0.0
    %61 = vst [vmem:[#allocation2 + $0x160] sm:$0xff] 0.0
    %62 = vst [vmem:[#allocation2 + $0x168] sm:$0xff] 0.0
    %63 = vst [vmem:[#allocation2 + $0x170] sm:$0xff] 0.0
    %64 = vst [vmem:[#allocation2 + $0x178] sm:$0xff] 0.0
    %65 = vst [vmem:[#allocation2 + $0x180] sm:$0xff] 0.0
    %66 = vst [vmem:[#allocation2 + $0x188] sm:$0xff] 0.0
    %67 = vst [vmem:[#allocation2 + $0x190] sm:$0xff] 0.0
    %68 = vst [vmem:[#allocation2 + $0x198] sm:$0xff] 0.0
    %69 = vst [vmem:[#allocation2 + $0x1a0] sm:$0xff] 0.0
    %70 = vst [vmem:[#allocation2 + $0x1a8] sm:$0xff] 0.0
    %71 = vst [vmem:[#allocation2 + $0x1b0] sm:$0xff] 0.0
    %72 = vst [vmem:[#allocation2 + $0x1b8] sm:$0xff] 0.0
    %73 = vst [vmem:[#allocation2 + $0x1c0] sm:$0xff] 0.0
    %74 = vst [vmem:[#allocation2 + $0x1c8] sm:$0xff] 0.0
    %75 = vst [vmem:[#allocation2 + $0x1d0] sm:$0xff] 0.0
    %76 = vst [vmem:[#allocation2 + $0x1d8] sm:$0xff] 0.0
    %77 = vst [vmem:[#allocation2 + $0x1e0] sm:$0xff] 0.0
    %78 = vst [vmem:[#allocation2 + $0x1e8] sm:$0xff] 0.0
    %79 = vst [vmem:[#allocation2 + $0x1f0] sm:$0xff] 0.0
    %80 = vst [vmem:[#allocation2 + $0x1f8] sm:$0xff] 0.0
  $region13: #{bottleneck_forward.7} parent=0 // pred_fallthru
    _
  %v81 = vld [vmem:[#allocation2] sm:$0xff]
  %v82 = vld [vmem:[#allocation2 + $0x8] sm:$0xff]
  %v83 = vld [vmem:[#allocation2 + $0x10] sm:$0xff]
  %v84 = vld [vmem:[#allocation2 + $0x18] sm:$0xff]
  %v85 = vld [vmem:[#allocation2 + $0x20] sm:$0xff]
  %v86 = vld [vmem:[#allocation2 + $0x28] sm:$0xff]
  %v87 = vld [vmem:[#allocation2 + $0x30] sm:$0xff]
  %v88 = vld [vmem:[#allocation2 + $0x38] sm:$0xff]
  %v89 = vld [vmem:[#allocation2 + $0x40] sm:$0xff]
  %v90 = vld [vmem:[#allocation2 + $0x48] sm:$0xff]
  %v91 = vld [vmem:[#allocation2 + $0x50] sm:$0xff]
  %v92 = vld [vmem:[#allocation2 + $0x58] sm:$0xff]
  %v93 = vld [vmem:[#allocation2 + $0x60] sm:$0xff]
  %v94 = vld [vmem:[#allocation2 + $0x68] sm:$0xff]
  %v95 = vld [vmem:[#allocation2 + $0x70] sm:$0xff]
  %v96 = vld [vmem:[#allocation2 + $0x78] sm:$0xff]
  %v97 = vld [vmem:[#allocation2 + $0x80] sm:$0xff]
  %v98 = vld [vmem:[#allocation2 + $0x88] sm:$0xff]
  %v99 = vld [vmem:[#allocation2 + $0x90] sm:$0xff]
  %v100 = vld [vmem:[#allocation2 + $0x98] sm:$0xff]
  %v101 = vld [vmem:[#allocation2 + $0xa0] sm:$0xff]
  %v102 = vld [vmem:[#allocation2 + $0xa8] sm:$0xff]
  %v103 = vld [vmem:[#allocation2 + $0xb0] sm:$0xff]
  %v104 = vld [vmem:[#allocation2 + $0xb8] sm:$0xff]
  %v105 = vld [vmem:[#allocation2 + $0xc0] sm:$0xff]
  %v106 = vld [vmem:[#allocation2 + $0xc8] sm:$0xff]
  %v107 = vld [vmem:[#allocation2 + $0xd0] sm:$0xff]
  %v108 = vld [vmem:[#allocation2 + $0xd8] sm:$0xff]
  %v109 = vld [vmem:[#allocation2 + $0xe0] sm:$0xff]
  %v110 = vld [vmem:[#allocation2 + $0xe8] sm:$0xff]
  %v111 = vld [vmem:[#allocation2 + $0xf0] sm:$0xff]
  %v112 = vld [vmem:[#allocation2 + $0xf8] sm:$0xff]
  %v113 = vld [vmem:[#allocation2 + $0x100] sm:$0xff]
  %v114 = vld [vmem:[#allocation2 + $0x108] sm:$0xff]
  %v115 = vld [vmem:[#allocation2 + $0x110] sm:$0xff]
  %v116 = vld [vmem:[#allocation2 + $0x118] sm:$0xff]
  %v117 = vld [vmem:[#allocation2 + $0x120] sm:$0xff]
  %v118 = vld [vmem:[#allocation2 + $0x128] sm:$0xff]
  %v119 = vld [vmem:[#allocation2 + $0x130] sm:$0xff]
  %v120 = vld [vmem:[#allocation2 + $0x138] sm:$0xff]
  %v121 = vld [vmem:[#allocation2 + $0x140] sm:$0xff]
  %v122 = vld [vmem:[#allocation2 + $0x148] sm:$0xff]
  %v123 = vld [vmem:[#allocation2 + $0x150] sm:$0xff]
  %v124 = vld [vmem:[#allocation2 + $0x158] sm:$0xff]
  %v125 = vld [vmem:[#allocation2 + $0x160] sm:$0xff]
  %v126 = vld [vmem:[#allocation2 + $0x168] sm:$0xff]
  %v127 = vld [vmem:[#allocation2 + $0x170] sm:$0xff]
  %v128 = vld [vmem:[#allocation2 + $0x178] sm:$0xff]
  %v129 = vld [vmem:[#allocation2 + $0x180] sm:$0xff]
  %v130 = vld [vmem:[#allocation2 + $0x188] sm:$0xff]
  %v131 = vld [vmem:[#allocation2 + $0x190] sm:$0xff]
  %v132 = vld [vmem:[#allocation2 + $0x198] sm:$0xff]
  %v133 = vld [vmem:[#allocation2 + $0x1a0] sm:$0xff]
  %v134 = vld [vmem:[#allocation2 + $0x1a8] sm:$0xff]
  %v135 = vld [vmem:[#allocation2 + $0x1b0] sm:$0xff]
  %v136 = vld [vmem:[#allocation2 + $0x1b8] sm:$0xff]
  %v137 = vld [vmem:[#allocation2 + $0x1c0] sm:$0xff]
  %v138 = vld [vmem:[#allocation2 + $0x1c8] sm:$0xff]
  %v139 = vld [vmem:[#allocation2 + $0x1d0] sm:$0xff]
  %v140 = vld [vmem:[#allocation2 + $0x1d8] sm:$0xff]
  %v141 = vld [vmem:[#allocation2 + $0x1e0] sm:$0xff]
  %v142 = vld [vmem:[#allocation2 + $0x1e8] sm:$0xff]
  %v143 = vld [vmem:[#allocation2 + $0x1f0] sm:$0xff]
  %v144 = vld [vmem:[#allocation2 + $0x1f8] sm:$0xff]
  %v145 = vld [vmem:[%s0] sm:$0xf]
  %v146 = vld [vmem:[%s0 + $0x4] sm:$0xf]
  %v147 = vld [vmem:[%s0 + $0x8] sm:$0xf]
  %v148 = vld [vmem:[%s0 + $0xc] sm:$0xf]
  %v149 = vld [vmem:[%s0 + $0x10] sm:$0xf]
  %v150 = vld [vmem:[%s0 + $0x14] sm:$0xf]
  %v151 = vld [vmem:[%s0 + $0x18] sm:$0xf]
  %v152 = vld [vmem:[%s0 + $0x1c] sm:$0xf]
  %v153 = vld [vmem:[%s0 + $0x20] sm:$0xf]
  %v154 = vld [vmem:[%s0 + $0x24] sm:$0xf]
  %v155 = vld [vmem:[%s0 + $0x28] sm:$0xf]
  %v156 = vld [vmem:[%s0 + $0x2c] sm:$0xf]
  %v157 = vld [vmem:[%s0 + $0x30] sm:$0xf]
  %v158 = vld [vmem:[%s0 + $0x34] sm:$0xf]
  %v159 = vld [vmem:[%s0 + $0x38] sm:$0xf]
  %v160 = vld [vmem:[%s0 + $0x3c] sm:$0xf]
  %v161 = vld [vmem:[%s0 + $0x40] sm:$0xf]
  %v162 = vld [vmem:[%s0 + $0x44] sm:$0xf]
  %v163 = vld [vmem:[%s0 + $0x48] sm:$0xf]
  %v164 = vld [vmem:[%s0 + $0x4c] sm:$0xf]
  %v165 = vld [vmem:[%s0 + $0x50] sm:$0xf]
  %v166 = vld [vmem:[%s0 + $0x54] sm:$0xf]
  %v167 = vld [vmem:[%s0 + $0x58] sm:$0xf]
  %v168 = vld [vmem:[%s0 + $0x5c] sm:$0xf]
  %v169 = vld [vmem:[%s0 + $0x60] sm:$0xf]
  %v170 = vld [vmem:[%s0 + $0x64] sm:$0xf]
  %v171 = vld [vmem:[%s0 + $0x68] sm:$0xf]
  %v172 = vld [vmem:[%s0 + $0x6c] sm:$0xf]
  %v173 = vld [vmem:[%s0 + $0x70] sm:$0xf]
  %v174 = vld [vmem:[%s0 + $0x74] sm:$0xf]
  %v175 = vld [vmem:[%s0 + $0x78] sm:$0xf]
  %v176 = vld [vmem:[%s0 + $0x7c] sm:$0xf]
  %v177 = vld [vmem:[%s0 + $0x80] sm:$0xf]
  %v178 = vld [vmem:[%s0 + $0x84] sm:$0xf]
  %v179 = vld [vmem:[%s0 + $0x88] sm:$0xf]
  %v180 = vld [vmem:[%s0 + $0x8c] sm:$0xf]
  %v181 = vld [vmem:[%s0 + $0x90] sm:$0xf]
  %v182 = vld [vmem:[%s0 + $0x94] sm:$0xf]
  %v183 = vld [vmem:[%s0 + $0x98] sm:$0xf]
  %v184 = vld [vmem:[%s0 + $0x9c] sm:$0xf]
  %v185 = vld [vmem:[%s0 + $0xa0] sm:$0xf]
  %v186 = vld [vmem:[%s0 + $0xa4] sm:$0xf]
  %v187 = vld [vmem:[%s0 + $0xa8] sm:$0xf]
  %v188 = vld [vmem:[%s0 + $0xac] sm:$0xf]
  %v189 = vld [vmem:[%s0 + $0xb0] sm:$0xf]
  %v190 = vld [vmem:[%s0 + $0xb4] sm:$0xf]
  %v191 = vld [vmem:[%s0 + $0xb8] sm:$0xf]
  %v192 = vld [vmem:[%s0 + $0xbc] sm:$0xf]
  %v193 = vld [vmem:[%s0 + $0xc0] sm:$0xf]
  %v194 = vld [vmem:[%s0 + $0xc4] sm:$0xf]
  %v195 = vld [vmem:[%s0 + $0xc8] sm:$0xf]
  %v196 = vld [vmem:[%s0 + $0xcc] sm:$0xf]
  %v197 = vld [vmem:[%s0 + $0xd0] sm:$0xf]
  %v198 = vld [vmem:[%s0 + $0xd4] sm:$0xf]
  %v199 = vld [vmem:[%s0 + $0xd8] sm:$0xf]
  %v200 = vld [vmem:[%s0 + $0xdc] sm:$0xf]
  %v201 = vld [vmem:[%s0 + $0xe0] sm:$0xf]
  %v202 = vld [vmem:[%s0 + $0xe4] sm:$0xf]
  %v203 = vld [vmem:[%s0 + $0xe8] sm:$0xf]
  %v204 = vld [vmem:[%s0 + $0xec] sm:$0xf]
  %v205 = vld [vmem:[%s0 + $0xf0] sm:$0xf]
  %v206 = vld [vmem:[%s0 + $0xf4] sm:$0xf]
  %v207 = vld [vmem:[%s0 + $0xf8] sm:$0xf]
  %v208 = vld [vmem:[%s0 + $0xfc] sm:$0xf]
  %v209 = vld [vmem:[%s1] sm:$0xf]
  %v210 = vld [vmem:[%s1 + $0x4] sm:$0xf]
  %v211 = vld [vmem:[%s1 + $0x8] sm:$0xf]
  %v212 = vld [vmem:[%s1 + $0xc] sm:$0xf]
  %v213 = vld [vmem:[%s1 + $0x10] sm:$0xf]
  %v214 = vld [vmem:[%s1 + $0x14] sm:$0xf]
  %v215 = vld [vmem:[%s1 + $0x18] sm:$0xf]
  %v216 = vld [vmem:[%s1 + $0x1c] sm:$0xf]
  %v217 = vld [vmem:[%s1 + $0x20] sm:$0xf]
  %v218 = vld [vmem:[%s1 + $0x24] sm:$0xf]
  %v219 = vld [vmem:[%s1 + $0x28] sm:$0xf]
  %v220 = vld [vmem:[%s1 + $0x2c] sm:$0xf]
  %v221 = vld [vmem:[%s1 + $0x30] sm:$0xf]
  %v222 = vld [vmem:[%s1 + $0x34] sm:$0xf]
  %v223 = vld [vmem:[%s1 + $0x38] sm:$0xf]
  %v224 = vld [vmem:[%s1 + $0x3c] sm:$0xf]
  %v289 = vunpack.c.l.b16 %v145
  %v290 = vunpack.c.l.b16 %v146
  %v291 = vunpack.c.l.b16 %v147
  %v292 = vunpack.c.l.b16 %v148
  %v293 = vunpack.c.l.b16 %v149
  %v294 = vunpack.c.l.b16 %v150
  %v295 = vunpack.c.l.b16 %v151
  %v296 = vunpack.c.l.b16 %v152
  %v297 = vunpack.c.l.b16 %v153
  %v298 = vunpack.c.l.b16 %v154
  %v299 = vunpack.c.l.b16 %v155
  %v300 = vunpack.c.l.b16 %v156
  %v301 = vunpack.c.l.b16 %v157
  %v302 = vunpack.c.l.b16 %v158
  %v303 = vunpack.c.l.b16 %v159
  %v304 = vunpack.c.l.b16 %v160
  %v305 = vunpack.c.l.b16 %v161
  %v306 = vunpack.c.l.b16 %v162
  %v307 = vunpack.c.l.b16 %v163
  %v308 = vunpack.c.l.b16 %v164
  %v309 = vunpack.c.l.b16 %v165
  %v310 = vunpack.c.l.b16 %v166
  %v311 = vunpack.c.l.b16 %v167
  %v312 = vunpack.c.l.b16 %v168
  %v313 = vunpack.c.l.b16 %v169
  %v314 = vunpack.c.l.b16 %v170
  %v315 = vunpack.c.l.b16 %v171
  %v316 = vunpack.c.l.b16 %v172
  %v317 = vunpack.c.l.b16 %v173
  %v318 = vunpack.c.l.b16 %v174
  %v319 = vunpack.c.l.b16 %v175
  %v320 = vunpack.c.l.b16 %v176
  %v321 = vunpack.c.l.b16 %v177
  %v322 = vunpack.c.l.b16 %v178
  %v323 = vunpack.c.l.b16 %v179
  %v324 = vunpack.c.l.b16 %v180
  %v325 = vunpack.c.l.b16 %v181
  %v326 = vunpack.c.l.b16 %v182
  %v327 = vunpack.c.l.b16 %v183
  %v328 = vunpack.c.l.b16 %v184
  %v329 = vunpack.c.l.b16 %v185
  %v330 = vunpack.c.l.b16 %v186
  %v331 = vunpack.c.l.b16 %v187
  %v332 = vunpack.c.l.b16 %v188
  %v333 = vunpack.c.l.b16 %v189
  %v334 = vunpack.c.l.b16 %v190
  %v335 = vunpack.c.l.b16 %v191
  %v336 = vunpack.c.l.b16 %v192
  %v337 = vunpack.c.l.b16 %v193
  %v338 = vunpack.c.l.b16 %v194
  %v339 = vunpack.c.l.b16 %v195
  %v340 = vunpack.c.l.b16 %v196
  %v341 = vunpack.c.l.b16 %v197
  %v342 = vunpack.c.l.b16 %v198
  %v343 = vunpack.c.l.b16 %v199
  %v344 = vunpack.c.l.b16 %v200
  %v345 = vunpack.c.l.b16 %v201
  %v346 = vunpack.c.l.b16 %v202
  %v347 = vunpack.c.l.b16 %v203
  %v348 = vunpack.c.l.b16 %v204
  %v349 = vunpack.c.l.b16 %v205
  %v350 = vunpack.c.l.b16 %v206
  %v351 = vunpack.c.l.b16 %v207
  %v352 = vunpack.c.l.b16 %v208
  %v353 = vpack.c.b16 %v290, %v289
  %v354 = vpack.c.b16 %v292, %v291
  %v355 = vpack.c.b16 %v294, %v293
  %v356 = vpack.c.b16 %v296, %v295
  %v357 = vpack.c.b16 %v298, %v297
  %v358 = vpack.c.b16 %v300, %v299
  %v359 = vpack.c.b16 %v302, %v301
  %v360 = vpack.c.b16 %v304, %v303
  %v361 = vpack.c.b16 %v306, %v305
  %v362 = vpack.c.b16 %v308, %v307
  %v363 = vpack.c.b16 %v310, %v309
  %v364 = vpack.c.b16 %v312, %v311
  %v365 = vpack.c.b16 %v314, %v313
  %v366 = vpack.c.b16 %v316, %v315
  %v367 = vpack.c.b16 %v318, %v317
  %v368 = vpack.c.b16 %v320, %v319
  %v369 = vpack.c.b16 %v322, %v321
  %v370 = vpack.c.b16 %v324, %v323
  %v371 = vpack.c.b16 %v326, %v325
  %v372 = vpack.c.b16 %v328, %v327
  %v373 = vpack.c.b16 %v330, %v329
  %v374 = vpack.c.b16 %v332, %v331
  %v375 = vpack.c.b16 %v334, %v333
  %v376 = vpack.c.b16 %v336, %v335
  %v377 = vpack.c.b16 %v338, %v337
  %v378 = vpack.c.b16 %v340, %v339
  %v379 = vpack.c.b16 %v342, %v341
  %v380 = vpack.c.b16 %v344, %v343
  %v381 = vpack.c.b16 %v346, %v345
  %v382 = vpack.c.b16 %v348, %v347
  %v383 = vpack.c.b16 %v350, %v349
  %v384 = vpack.c.b16 %v352, %v351
  %v433 = vunpack.c.l.b16 %v209
  %v434 = vunpack.c.l.b16 %v210
  %v435 = vunpack.c.l.b16 %v211
  %v436 = vunpack.c.l.b16 %v212
  %v437 = vunpack.c.l.b16 %v213
  %v438 = vunpack.c.l.b16 %v214
  %v439 = vunpack.c.l.b16 %v215
  %v440 = vunpack.c.l.b16 %v216
  %v441 = vunpack.c.l.b16 %v217
  %v442 = vunpack.c.l.b16 %v218
  %v443 = vunpack.c.l.b16 %v219
  %v444 = vunpack.c.l.b16 %v220
  %v445 = vunpack.c.l.b16 %v221
  %v446 = vunpack.c.l.b16 %v222
  %v447 = vunpack.c.l.b16 %v223
  %v448 = vunpack.c.l.b16 %v224
  %v449 = vpack.c.b16 %v434, %v433
  %v450 = vpack.c.b16 %v436, %v435
  %v451 = vpack.c.b16 %v438, %v437
  %v452 = vpack.c.b16 %v440, %v439
  %v453 = vpack.c.b16 %v442, %v441
  %v454 = vpack.c.b16 %v444, %v443
  %v455 = vpack.c.b16 %v446, %v445
  %v456 = vpack.c.b16 %v448, %v447
  %465 = vmatpush.bf16.msra.mxu0 %v456
  %466 = vmatpush.bf16.msra.mxu0 %v455
  %467 = vmatpush.bf16.msra.mxu0 %v454
  %468 = vmatpush.bf16.msra.mxu0 %v453
  %469 = vmatpush.bf16.msra.mxu0 %v452
  %470 = vmatpush.bf16.msra.mxu0 %v451
  %471 = vmatpush.bf16.msra.mxu0 %v450
  %472 = vmatpush.bf16.msra.mxu0 %v449
  %473 = vmatmul.bf16.gmra.mxu0 %v353
  %v474 = vpop.f32.mrf.mxu0
  %v475 = vadd.f32 0.0, %v474
  %v476 = vpop.f32.mrf.mxu0
  %v477 = vadd.f32 0.0, %v476
  %478 = vmatmul.bf16.gmra.mxu0 %v354
  %v479 = vpop.f32.mrf.mxu0
  %v480 = vadd.f32 0.0, %v479
  %v481 = vpop.f32.mrf.mxu0
  %v482 = vadd.f32 0.0, %v481
  %483 = vmatmul.bf16.gmra.mxu0 %v355
  %v484 = vpop.f32.mrf.mxu0
  %v485 = vadd.f32 0.0, %v484
  %v486 = vpop.f32.mrf.mxu0
  %v487 = vadd.f32 0.0, %v486
  %488 = vmatmul.bf16.gmra.mxu0 %v356
  %v489 = vpop.f32.mrf.mxu0
  %v490 = vadd.f32 0.0, %v489
  %v491 = vpop.f32.mrf.mxu0
  %v492 = vadd.f32 0.0, %v491
  %493 = vmatmul.bf16.gmra.mxu0 %v357
  %v494 = vpop.f32.mrf.mxu0
  %v495 = vadd.f32 0.0, %v494
  %v496 = vpop.f32.mrf.mxu0
  %v497 = vadd.f32 0.0, %v496
  %498 = vmatmul.bf16.gmra.mxu0 %v358
  %v499 = vpop.f32.mrf.mxu0
  %v500 = vadd.f32 0.0, %v499
  %v501 = vpop.f32.mrf.mxu0
  %v502 = vadd.f32 0.0, %v501
  %503 = vmatmul.bf16.gmra.mxu0 %v359
  %v504 = vpop.f32.mrf.mxu0
  %v505 = vadd.f32 0.0, %v504
  %v506 = vpop.f32.mrf.mxu0
  %v507 = vadd.f32 0.0, %v506
  %508 = vmatmul.bf16.gmra.mxu0 %v360
  %v509 = vpop.f32.mrf.mxu0
  %v510 = vadd.f32 0.0, %v509
  %v511 = vpop.f32.mrf.mxu0
  %v512 = vadd.f32 0.0, %v511
  %513 = vmatmul.bf16.gmra.mxu0 %v361
  %v514 = vpop.f32.mrf.mxu0
  %v515 = vadd.f32 0.0, %v514
  %v516 = vpop.f32.mrf.mxu0
  %v517 = vadd.f32 0.0, %v516
  %518 = vmatmul.bf16.gmra.mxu0 %v362
  %v519 = vpop.f32.mrf.mxu0
  %v520 = vadd.f32 0.0, %v519
  %v521 = vpop.f32.mrf.mxu0
  %v522 = vadd.f32 0.0, %v521
  %523 = vmatmul.bf16.gmra.mxu0 %v363
  %v524 = vpop.f32.mrf.mxu0
  %v525 = vadd.f32 0.0, %v524
  %v526 = vpop.f32.mrf.mxu0
  %v527 = vadd.f32 0.0, %v526
  %528 = vmatmul.bf16.gmra.mxu0 %v364
  %v529 = vpop.f32.mrf.mxu0
  %v530 = vadd.f32 0.0, %v529
  %v531 = vpop.f32.mrf.mxu0
  %v532 = vadd.f32 0.0, %v531
  %533 = vmatmul.bf16.gmra.mxu0 %v365
  %v534 = vpop.f32.mrf.mxu0
  %v535 = vadd.f32 0.0, %v534
  %v536 = vpop.f32.mrf.mxu0
  %v537 = vadd.f32 0.0, %v536
  %538 = vmatmul.bf16.gmra.mxu0 %v366
  %v539 = vpop.f32.mrf.mxu0
  %v540 = vadd.f32 0.0, %v539
  %v541 = vpop.f32.mrf.mxu0
  %v542 = vadd.f32 0.0, %v541
  %543 = vmatmul.bf16.gmra.mxu0 %v367
  %v544 = vpop.f32.mrf.mxu0
  %v545 = vadd.f32 0.0, %v544
  %v546 = vpop.f32.mrf.mxu0
  %v547 = vadd.f32 0.0, %v546
  %548 = vmatmul.bf16.gmra.mxu0 %v368
  %v549 = vpop.f32.mrf.mxu0
  %v550 = vadd.f32 0.0, %v549
  %v551 = vpop.f32.mrf.mxu0
  %v552 = vadd.f32 0.0, %v551
  %553 = vmatmul.bf16.gmra.mxu0 %v369
  %v554 = vpop.f32.mrf.mxu0
  %v555 = vadd.f32 0.0, %v554
  %v556 = vpop.f32.mrf.mxu0
  %v557 = vadd.f32 0.0, %v556
  %558 = vmatmul.bf16.gmra.mxu0 %v370
  %v559 = vpop.f32.mrf.mxu0
  %v560 = vadd.f32 0.0, %v559
  %v561 = vpop.f32.mrf.mxu0
  %v562 = vadd.f32 0.0, %v561
  %563 = vmatmul.bf16.gmra.mxu0 %v371
  %v564 = vpop.f32.mrf.mxu0
  %v565 = vadd.f32 0.0, %v564
  %v566 = vpop.f32.mrf.mxu0
  %v567 = vadd.f32 0.0, %v566
  %568 = vmatmul.bf16.gmra.mxu0 %v372
  %v569 = vpop.f32.mrf.mxu0
  %v570 = vadd.f32 0.0, %v569
  %v571 = vpop.f32.mrf.mxu0
  %v572 = vadd.f32 0.0, %v571
  %573 = vmatmul.bf16.gmra.mxu0 %v373
  %v574 = vpop.f32.mrf.mxu0
  %v575 = vadd.f32 0.0, %v574
  %v576 = vpop.f32.mrf.mxu0
  %v577 = vadd.f32 0.0, %v576
  %578 = vmatmul.bf16.gmra.mxu0 %v374
  %v579 = vpop.f32.mrf.mxu0
  %v580 = vadd.f32 0.0, %v579
  %v581 = vpop.f32.mrf.mxu0
  %v582 = vadd.f32 0.0, %v581
  %583 = vmatmul.bf16.gmra.mxu0 %v375
  %v584 = vpop.f32.mrf.mxu0
  %v585 = vadd.f32 0.0, %v584
  %v586 = vpop.f32.mrf.mxu0
  %v587 = vadd.f32 0.0, %v586
  %588 = vmatmul.bf16.gmra.mxu0 %v376
  %v589 = vpop.f32.mrf.mxu0
  %v590 = vadd.f32 0.0, %v589
  %v591 = vpop.f32.mrf.mxu0
  %v592 = vadd.f32 0.0, %v591
  %593 = vmatmul.bf16.gmra.mxu0 %v377
  %v594 = vpop.f32.mrf.mxu0
  %v595 = vadd.f32 0.0, %v594
  %v596 = vpop.f32.mrf.mxu0
  %v597 = vadd.f32 0.0, %v596
  %598 = vmatmul.bf16.gmra.mxu0 %v378
  %v599 = vpop.f32.mrf.mxu0
  %v600 = vadd.f32 0.0, %v599
  %v601 = vpop.f32.mrf.mxu0
  %v602 = vadd.f32 0.0, %v601
  %603 = vmatmul.bf16.gmra.mxu0 %v379
  %v604 = vpop.f32.mrf.mxu0
  %v605 = vadd.f32 0.0, %v604
  %v606 = vpop.f32.mrf.mxu0
  %v607 = vadd.f32 0.0, %v606
  %608 = vmatmul.bf16.gmra.mxu0 %v380
  %v609 = vpop.f32.mrf.mxu0
  %v610 = vadd.f32 0.0, %v609
  %v611 = vpop.f32.mrf.mxu0
  %v612 = vadd.f32 0.0, %v611
  %613 = vmatmul.bf16.gmra.mxu0 %v381
  %v614 = vpop.f32.mrf.mxu0
  %v615 = vadd.f32 0.0, %v614
  %v616 = vpop.f32.mrf.mxu0
  %v617 = vadd.f32 0.0, %v616
  %618 = vmatmul.bf16.gmra.mxu0 %v382
  %v619 = vpop.f32.mrf.mxu0
  %v620 = vadd.f32 0.0, %v619
  %v621 = vpop.f32.mrf.mxu0
  %v622 = vadd.f32 0.0, %v621
  %623 = vmatmul.bf16.gmra.mxu0 %v383
  %v624 = vpop.f32.mrf.mxu0
  %v625 = vadd.f32 0.0, %v624
  %v626 = vpop.f32.mrf.mxu0
  %v627 = vadd.f32 0.0, %v626
  %628 = vmatmul.bf16.gmra.mxu0 %v384
  %v629 = vpop.f32.mrf.mxu0
  %v630 = vadd.f32 0.0, %v629
  %v631 = vpop.f32.mrf.mxu0
  %v632 = vadd.f32 0.0, %v631
  %633 = vdwg.mxu0
  %v634 = vadd.f32 %v81, %v475
  %v635 = vadd.f32 %v82, %v477
  %v636 = vadd.f32 %v83, %v480
  %v637 = vadd.f32 %v84, %v482
  %v638 = vadd.f32 %v85, %v485
  %v639 = vadd.f32 %v86, %v487
  %v640 = vadd.f32 %v87, %v490
  %v641 = vadd.f32 %v88, %v492
  %v642 = vadd.f32 %v89, %v495
  %v643 = vadd.f32 %v90, %v497
  %v644 = vadd.f32 %v91, %v500
  %v645 = vadd.f32 %v92, %v502
  %v646 = vadd.f32 %v93, %v505
  %v647 = vadd.f32 %v94, %v507
  %v648 = vadd.f32 %v95, %v510
  %v649 = vadd.f32 %v96, %v512
  %v650 = vadd.f32 %v97, %v515
  %v651 = vadd.f32 %v98, %v517
  %v652 = vadd.f32 %v99, %v520
  %v653 = vadd.f32 %v100, %v522
  %v654 = vadd.f32 %v101, %v525
  %v655 = vadd.f32 %v102, %v527
  %v656 = vadd.f32 %v103, %v530
  %v657 = vadd.f32 %v104, %v532
  %v658 = vadd.f32 %v105, %v535
  %v659 = vadd.f32 %v106, %v537
  %v660 = vadd.f32 %v107, %v540
  %v661 = vadd.f32 %v108, %v542
  %v662 = vadd.f32 %v109, %v545
  %v663 = vadd.f32 %v110, %v547
  %v664 = vadd.f32 %v111, %v550
  %v665 = vadd.f32 %v112, %v552
  %v666 = vadd.f32 %v113, %v555
  %v667 = vadd.f32 %v114, %v557
  %v668 = vadd.f32 %v115, %v560
  %v669 = vadd.f32 %v116, %v562
  %v670 = vadd.f32 %v117, %v565
  %v671 = vadd.f32 %v118, %v567
  %v672 = vadd.f32 %v119, %v570
  %v673 = vadd.f32 %v120, %v572
  %v674 = vadd.f32 %v121, %v575
  %v675 = vadd.f32 %v122, %v577
  %v676 = vadd.f32 %v123, %v580
  %v677 = vadd.f32 %v124, %v582
  %v678 = vadd.f32 %v125, %v585
  %v679 = vadd.f32 %v126, %v587
  %v680 = vadd.f32 %v127, %v590
  %v681 = vadd.f32 %v128, %v592
  %v682 = vadd.f32 %v129, %v595
  %v683 = vadd.f32 %v130, %v597
  %v684 = vadd.f32 %v131, %v600
  %v685 = vadd.f32 %v132, %v602
  %v686 = vadd.f32 %v133, %v605
  %v687 = vadd.f32 %v134, %v607
  %v688 = vadd.f32 %v135, %v610
  %v689 = vadd.f32 %v136, %v612
  %v690 = vadd.f32 %v137, %v615
  %v691 = vadd.f32 %v138, %v617
  %v692 = vadd.f32 %v139, %v620
  %v693 = vadd.f32 %v140, %v622
  %v694 = vadd.f32 %v141, %v625
  %v695 = vadd.f32 %v142, %v627
  %v696 = vadd.f32 %v143, %v630
  %v697 = vadd.f32 %v144, %v632
  %698 = vst [vmem:[#allocation2] sm:$0xff] %v634
  %699 = vst [vmem:[#allocation2 + $0x8] sm:$0xff] %v635
  %700 = vst [vmem:[#allocation2 + $0x10] sm:$0xff] %v636
  %701 = vst [vmem:[#allocation2 + $0x18] sm:$0xff] %v637
  %702 = vst [vmem:[#allocation2 + $0x20] sm:$0xff] %v638
  %703 = vst [vmem:[#allocation2 + $0x28] sm:$0xff] %v639
  %704 = vst [vmem:[#allocation2 + $0x30] sm:$0xff] %v640
  %705 = vst [vmem:[#allocation2 + $0x38] sm:$0xff] %v641
  %706 = vst [vmem:[#allocation2 + $0x40] sm:$0xff] %v642
  %707 = vst [vmem:[#allocation2 + $0x48] sm:$0xff] %v643
  %708 = vst [vmem:[#allocation2 + $0x50] sm:$0xff] %v644
  %709 = vst [vmem:[#allocation2 + $0x58] sm:$0xff] %v645
  %710 = vst [vmem:[#allocation2 + $0x60] sm:$0xff] %v646
  %711 = vst [vmem:[#allocation2 + $0x68] sm:$0xff] %v647
  %712 = vst [vmem:[#allocation2 + $0x70] sm:$0xff] %v648
  %713 = vst [vmem:[#allocation2 + $0x78] sm:$0xff] %v649
  %714 = vst [vmem:[#allocation2 + $0x80] sm:$0xff] %v650
  %715 = vst [vmem:[#allocation2 + $0x88] sm:$0xff] %v651
  %716 = vst [vmem:[#allocation2 + $0x90] sm:$0xff] %v652
  %717 = vst [vmem:[#allocation2 + $0x98] sm:$0xff] %v653
  %718 = vst [vmem:[#allocation2 + $0xa0] sm:$0xff] %v654
  %719 = vst [vmem:[#allocation2 + $0xa8] sm:$0xff] %v655
  %720 = vst [vmem:[#allocation2 + $0xb0] sm:$0xff] %v656
  %721 = vst [vmem:[#allocation2 + $0xb8] sm:$0xff] %v657
  %722 = vst [vmem:[#allocation2 + $0xc0] sm:$0xff] %v658
  %723 = vst [vmem:[#allocation2 + $0xc8] sm:$0xff] %v659
  %724 = vst [vmem:[#allocation2 + $0xd0] sm:$0xff] %v660
  %725 = vst [vmem:[#allocation2 + $0xd8] sm:$0xff] %v661
  %726 = vst [vmem:[#allocation2 + $0xe0] sm:$0xff] %v662
  %727 = vst [vmem:[#allocation2 + $0xe8] sm:$0xff] %v663
  %728 = vst [vmem:[#allocation2 + $0xf0] sm:$0xff] %v664
  %729 = vst [vmem:[#allocation2 + $0xf8] sm:$0xff] %v665
  %730 = vst [vmem:[#allocation2 + $0x100] sm:$0xff] %v666
  %731 = vst [vmem:[#allocation2 + $0x108] sm:$0xff] %v667
  %732 = vst [vmem:[#allocation2 + $0x110] sm:$0xff] %v668
  %733 = vst [vmem:[#allocation2 + $0x118] sm:$0xff] %v669
  %734 = vst [vmem:[#allocation2 + $0x120] sm:$0xff] %v670
  %735 = vst [vmem:[#allocation2 + $0x128] sm:$0xff] %v671
  %736 = vst [vmem:[#allocation2 + $0x130] sm:$0xff] %v672
  %737 = vst [vmem:[#allocation2 + $0x138] sm:$0xff] %v673
  %738 = vst [vmem:[#allocation2 + $0x140] sm:$0xff] %v674
  %739 = vst [vmem:[#allocation2 + $0x148] sm:$0xff] %v675
  %740 = vst [vmem:[#allocation2 + $0x150] sm:$0xff] %v676
  %741 = vst [vmem:[#allocation2 + $0x158] sm:$0xff] %v677
  %742 = vst [vmem:[#allocation2 + $0x160] sm:$0xff] %v678
  %743 = vst [vmem:[#allocation2 + $0x168] sm:$0xff] %v679
  %744 = vst [vmem:[#allocation2 + $0x170] sm:$0xff] %v680
  %745 = vst [vmem:[#allocation2 + $0x178] sm:$0xff] %v681
  %746 = vst [vmem:[#allocation2 + $0x180] sm:$0xff] %v682
  %747 = vst [vmem:[#allocation2 + $0x188] sm:$0xff] %v683
  %748 = vst [vmem:[#allocation2 + $0x190] sm:$0xff] %v684
  %749 = vst [vmem:[#allocation2 + $0x198] sm:$0xff] %v685
  %750 = vst [vmem:[#allocation2 + $0x1a0] sm:$0xff] %v686
  %751 = vst [vmem:[#allocation2 + $0x1a8] sm:$0xff] %v687
  %752 = vst [vmem:[#allocation2 + $0x1b0] sm:$0xff] %v688
  %753 = vst [vmem:[#allocation2 + $0x1b8] sm:$0xff] %v689
  %754 = vst [vmem:[#allocation2 + $0x1c0] sm:$0xff] %v690
  %755 = vst [vmem:[#allocation2 + $0x1c8] sm:$0xff] %v691
  %756 = vst [vmem:[#allocation2 + $0x1d0] sm:$0xff] %v692
  %757 = vst [vmem:[#allocation2 + $0x1d8] sm:$0xff] %v693
  %758 = vst [vmem:[#allocation2 + $0x1e0] sm:$0xff] %v694
  %759 = vst [vmem:[#allocation2 + $0x1e8] sm:$0xff] %v695
  %760 = vst [vmem:[#allocation2 + $0x1f0] sm:$0xff] %v696
  %761 = vst [vmem:[#allocation2 + $0x1f8] sm:$0xff] %v697
  // Predicated region
  $region14: #{bottleneck_forward.7} parent=0 // pred_check
    %p762 = pneg %p13
  $region15: #{bottleneck_forward.7} parent=0 // pred_check_branch
    %764 = sbr.rel (%p762) target = $region17
  $region16: #{bottleneck_forward.7} parent=0 // pred_region
    %v765 = vld [vmem:[#allocation2] sm:$0xff]
    %v766 = vld [vmem:[#allocation2 + $0x8] sm:$0xff]
    %v767 = vld [vmem:[#allocation2 + $0x10] sm:$0xff]
    %v768 = vld [vmem:[#allocation2 + $0x18] sm:$0xff]
    %v769 = vld [vmem:[#allocation2 + $0x20] sm:$0xff]
    %v770 = vld [vmem:[#allocation2 + $0x28] sm:$0xff]
    %v771 = vld [vmem:[#allocation2 + $0x30] sm:$0xff]
    %v772 = vld [vmem:[#allocation2 + $0x38] sm:$0xff]
    %v773 = vld [vmem:[#allocation2 + $0x40] sm:$0xff]
    %v774 = vld [vmem:[#allocation2 + $0x48] sm:$0xff]
    %v775 = vld [vmem:[#allocation2 + $0x50] sm:$0xff]
    %v776 = vld [vmem:[#allocation2 + $0x58] sm:$0xff]
    %v777 = vld [vmem:[#allocation2 + $0x60] sm:$0xff]
    %v778 = vld [vmem:[#allocation2 + $0x68] sm:$0xff]
    %v779 = vld [vmem:[#allocation2 + $0x70] sm:$0xff]
    %v780 = vld [vmem:[#allocation2 + $0x78] sm:$0xff]
    %v781 = vld [vmem:[#allocation2 + $0x80] sm:$0xff]
    %v782 = vld [vmem:[#allocation2 + $0x88] sm:$0xff]
    %v783 = vld [vmem:[#allocation2 + $0x90] sm:$0xff]
    %v784 = vld [vmem:[#allocation2 + $0x98] sm:$0xff]
    %v785 = vld [vmem:[#allocation2 + $0xa0] sm:$0xff]
    %v786 = vld [vmem:[#allocation2 + $0xa8] sm:$0xff]
    %v787 = vld [vmem:[#allocation2 + $0xb0] sm:$0xff]
    %v788 = vld [vmem:[#allocation2 + $0xb8] sm:$0xff]
    %v789 = vld [vmem:[#allocation2 + $0xc0] sm:$0xff]
    %v790 = vld [vmem:[#allocation2 + $0xc8] sm:$0xff]
    %v791 = vld [vmem:[#allocation2 + $0xd0] sm:$0xff]
    %v792 = vld [vmem:[#allocation2 + $0xd8] sm:$0xff]
    %v793 = vld [vmem:[#allocation2 + $0xe0] sm:$0xff]
    %v794 = vld [vmem:[#allocation2 + $0xe8] sm:$0xff]
    %v795 = vld [vmem:[#allocation2 + $0xf0] sm:$0xff]
    %v796 = vld [vmem:[#allocation2 + $0xf8] sm:$0xff]
    %v797 = vld [vmem:[#allocation2 + $0x100] sm:$0xff]
    %v798 = vld [vmem:[#allocation2 + $0x108] sm:$0xff]
    %v799 = vld [vmem:[#allocation2 + $0x110] sm:$0xff]
    %v800 = vld [vmem:[#allocation2 + $0x118] sm:$0xff]
    %v801 = vld [vmem:[#allocation2 + $0x120] sm:$0xff]
    %v802 = vld [vmem:[#allocation2 + $0x128] sm:$0xff]
    %v803 = vld [vmem:[#allocation2 + $0x130] sm:$0xff]
    %v804 = vld [vmem:[#allocation2 + $0x138] sm:$0xff]
    %v805 = vld [vmem:[#allocation2 + $0x140] sm:$0xff]
    %v806 = vld [vmem:[#allocation2 + $0x148] sm:$0xff]
    %v807 = vld [vmem:[#allocation2 + $0x150] sm:$0xff]
    %v808 = vld [vmem:[#allocation2 + $0x158] sm:$0xff]
    %v809 = vld [vmem:[#allocation2 + $0x160] sm:$0xff]
    %v810 = vld [vmem:[#allocation2 + $0x168] sm:$0xff]
    %v811 = vld [vmem:[#allocation2 + $0x170] sm:$0xff]
    %v812 = vld [vmem:[#allocation2 + $0x178] sm:$0xff]
    %v813 = vld [vmem:[#allocation2 + $0x180] sm:$0xff]
    %v814 = vld [vmem:[#allocation2 + $0x188] sm:$0xff]
    %v815 = vld [vmem:[#allocation2 + $0x190] sm:$0xff]
    %v816 = vld [vmem:[#allocation2 + $0x198] sm:$0xff]
    %v817 = vld [vmem:[#allocation2 + $0x1a0] sm:$0xff]
    %v818 = vld [vmem:[#allocation2 + $0x1a8] sm:$0xff]
    %v819 = vld [vmem:[#allocation2 + $0x1b0] sm:$0xff]
    %v820 = vld [vmem:[#allocation2 + $0x1b8] sm:$0xff]
    %v821 = vld [vmem:[#allocation2 + $0x1c0] sm:$0xff]
    %v822 = vld [vmem:[#allocation2 + $0x1c8] sm:$0xff]
    %v823 = vld [vmem:[#allocation2 + $0x1d0] sm:$0xff]
    %v824 = vld [vmem:[#allocation2 + $0x1d8] sm:$0xff]
    %v825 = vld [vmem:[#allocation2 + $0x1e0] sm:$0xff]
    %v826 = vld [vmem:[#allocation2 + $0x1e8] sm:$0xff]
    %v827 = vld [vmem:[#allocation2 + $0x1f0] sm:$0xff]
    %v828 = vld [vmem:[#allocation2 + $0x1f8] sm:$0xff]
    %v829 = vpack.c.bf16 %v765, %v765
    %v830 = vpack.c.bf16 %v766, %v766
    %v831 = vpack.c.bf16 %v767, %v767
    %v832 = vpack.c.bf16 %v768, %v768
    %v833 = vpack.c.bf16 %v769, %v769
    %v834 = vpack.c.bf16 %v770, %v770
    %v835 = vpack.c.bf16 %v771, %v771
    %v836 = vpack.c.bf16 %v772, %v772
    %v837 = vpack.c.bf16 %v773, %v773
    %v838 = vpack.c.bf16 %v774, %v774
    %v839 = vpack.c.bf16 %v775, %v775
    %v840 = vpack.c.bf16 %v776, %v776
    %v841 = vpack.c.bf16 %v777, %v777
    %v842 = vpack.c.bf16 %v778, %v778
    %v843 = vpack.c.bf16 %v779, %v779
    %v844 = vpack.c.bf16 %v780, %v780
    %v845 = vpack.c.bf16 %v781, %v781
    %v846 = vpack.c.bf16 %v782, %v782
    %v847 = vpack.c.bf16 %v783, %v783
    %v848 = vpack.c.bf16 %v784, %v784
    %v849 = vpack.c.bf16 %v785, %v785
    %v850 = vpack.c.bf16 %v786, %v786
    %v851 = vpack.c.bf16 %v787, %v787
    %v852 = vpack.c.bf16 %v788, %v788
    %v853 = vpack.c.bf16 %v789, %v789
    %v854 = vpack.c.bf16 %v790, %v790
    %v855 = vpack.c.bf16 %v791, %v791
    %v856 = vpack.c.bf16 %v792, %v792
    %v857 = vpack.c.bf16 %v793, %v793
    %v858 = vpack.c.bf16 %v794, %v794
    %v859 = vpack.c.bf16 %v795, %v795
    %v860 = vpack.c.bf16 %v796, %v796
    %v861 = vpack.c.bf16 %v797, %v797
    %v862 = vpack.c.bf16 %v798, %v798
    %v863 = vpack.c.bf16 %v799, %v799
    %v864 = vpack.c.bf16 %v800, %v800
    %v865 = vpack.c.bf16 %v801, %v801
    %v866 = vpack.c.bf16 %v802, %v802
    %v867 = vpack.c.bf16 %v803, %v803
    %v868 = vpack.c.bf16 %v804, %v804
    %v869 = vpack.c.bf16 %v805, %v805
    %v870 = vpack.c.bf16 %v806, %v806
    %v871 = vpack.c.bf16 %v807, %v807
    %v872 = vpack.c.bf16 %v808, %v808
    %v873 = vpack.c.bf16 %v809, %v809
    %v874 = vpack.c.bf16 %v810, %v810
    %v875 = vpack.c.bf16 %v811, %v811
    %v876 = vpack.c.bf16 %v812, %v812
    %v877 = vpack.c.bf16 %v813, %v813
    %v878 = vpack.c.bf16 %v814, %v814
    %v879 = vpack.c.bf16 %v815, %v815
    %v880 = vpack.c.bf16 %v816, %v816
    %v881 = vpack.c.bf16 %v817, %v817
    %v882 = vpack.c.bf16 %v818, %v818
    %v883 = vpack.c.bf16 %v819, %v819
    %v884 = vpack.c.bf16 %v820, %v820
    %v885 = vpack.c.bf16 %v821, %v821
    %v886 = vpack.c.bf16 %v822, %v822
    %v887 = vpack.c.bf16 %v823, %v823
    %v888 = vpack.c.bf16 %v824, %v824
    %v889 = vpack.c.bf16 %v825, %v825
    %v890 = vpack.c.bf16 %v826, %v826
    %v891 = vpack.c.bf16 %v827, %v827
    %v892 = vpack.c.bf16 %v828, %v828
    %893 = vst [vmem:[%s2] sm:$0xf] %v829
    %894 = vst [vmem:[%s2 + $0x4] sm:$0xf] %v830
    %895 = vst [vmem:[%s2 + $0x8] sm:$0xf] %v831
    %896 = vst [vmem:[%s2 + $0xc] sm:$0xf] %v832
    %897 = vst [vmem:[%s2 + $0x10] sm:$0xf] %v833
    %898 = vst [vmem:[%s2 + $0x14] sm:$0xf] %v834
    %899 = vst [vmem:[%s2 + $0x18] sm:$0xf] %v835
    %900 = vst [vmem:[%s2 + $0x1c] sm:$0xf] %v836
    %901 = vst [vmem:[%s2 + $0x20] sm:$0xf] %v837
    %902 = vst [vmem:[%s2 + $0x24] sm:$0xf] %v838
    %903 = vst [vmem:[%s2 + $0x28] sm:$0xf] %v839
    %904 = vst [vmem:[%s2 + $0x2c] sm:$0xf] %v840
    %905 = vst [vmem:[%s2 + $0x30] sm:$0xf] %v841
    %906 = vst [vmem:[%s2 + $0x34] sm:$0xf] %v842
    %907 = vst [vmem:[%s2 + $0x38] sm:$0xf] %v843
    %908 = vst [vmem:[%s2 + $0x3c] sm:$0xf] %v844
    %909 = vst [vmem:[%s2 + $0x40] sm:$0xf] %v845
    %910 = vst [vmem:[%s2 + $0x44] sm:$0xf] %v846
    %911 = vst [vmem:[%s2 + $0x48] sm:$0xf] %v847
    %912 = vst [vmem:[%s2 + $0x4c] sm:$0xf] %v848
    %913 = vst [vmem:[%s2 + $0x50] sm:$0xf] %v849
    %914 = vst [vmem:[%s2 + $0x54] sm:$0xf] %v850
    %915 = vst [vmem:[%s2 + $0x58] sm:$0xf] %v851
    %916 = vst [vmem:[%s2 + $0x5c] sm:$0xf] %v852
    %917 = vst [vmem:[%s2 + $0x60] sm:$0xf] %v853
    %918 = vst [vmem:[%s2 + $0x64] sm:$0xf] %v854
    %919 = vst [vmem:[%s2 + $0x68] sm:$0xf] %v855
    %920 = vst [vmem:[%s2 + $0x6c] sm:$0xf] %v856
    %921 = vst [vmem:[%s2 + $0x70] sm:$0xf] %v857
    %922 = vst [vmem:[%s2 + $0x74] sm:$0xf] %v858
    %923 = vst [vmem:[%s2 + $0x78] sm:$0xf] %v859
    %924 = vst [vmem:[%s2 + $0x7c] sm:$0xf] %v860
    %925 = vst [vmem:[%s2 + $0x80] sm:$0xf] %v861
    %926 = vst [vmem:[%s2 + $0x84] sm:$0xf] %v862
    %927 = vst [vmem:[%s2 + $0x88] sm:$0xf] %v863
    %928 = vst [vmem:[%s2 + $0x8c] sm:$0xf] %v864
    %929 = vst [vmem:[%s2 + $0x90] sm:$0xf] %v865
    %930 = vst [vmem:[%s2 + $0x94] sm:$0xf] %v866
    %931 = vst [vmem:[%s2 + $0x98] sm:$0xf] %v867
    %932 = vst [vmem:[%s2 + $0x9c] sm:$0xf] %v868
    %933 = vst [vmem:[%s2 + $0xa0] sm:$0xf] %v869
    %934 = vst [vmem:[%s2 + $0xa4] sm:$0xf] %v870
    %935 = vst [vmem:[%s2 + $0xa8] sm:$0xf] %v871
    %936 = vst [vmem:[%s2 + $0xac] sm:$0xf] %v872
    %937 = vst [vmem:[%s2 + $0xb0] sm:$0xf] %v873
    %938 = vst [vmem:[%s2 + $0xb4] sm:$0xf] %v874
    %939 = vst [vmem:[%s2 + $0xb8] sm:$0xf] %v875
    %940 = vst [vmem:[%s2 + $0xbc] sm:$0xf] %v876
    %941 = vst [vmem:[%s2 + $0xc0] sm:$0xf] %v877
    %942 = vst [vmem:[%s2 + $0xc4] sm:$0xf] %v878
    %943 = vst [vmem:[%s2 + $0xc8] sm:$0xf] %v879
    %944 = vst [vmem:[%s2 + $0xcc] sm:$0xf] %v880
    %945 = vst [vmem:[%s2 + $0xd0] sm:$0xf] %v881
    %946 = vst [vmem:[%s2 + $0xd4] sm:$0xf] %v882
    %947 = vst [vmem:[%s2 + $0xd8] sm:$0xf] %v883
    %948 = vst [vmem:[%s2 + $0xdc] sm:$0xf] %v884
    %949 = vst [vmem:[%s2 + $0xe0] sm:$0xf] %v885
    %950 = vst [vmem:[%s2 + $0xe4] sm:$0xf] %v886
    %951 = vst [vmem:[%s2 + $0xe8] sm:$0xf] %v887
    %952 = vst [vmem:[%s2 + $0xec] sm:$0xf] %v888
    %953 = vst [vmem:[%s2 + $0xf0] sm:$0xf] %v889
    %954 = vst [vmem:[%s2 + $0xf4] sm:$0xf] %v890
    %955 = vst [vmem:[%s2 + $0xf8] sm:$0xf] %v891
    %956 = vst [vmem:[%s2 + $0xfc] sm:$0xf] %v892
    %v957 = vadd.f32 %v765, %v766
    %v958 = vadd.f32 %v957, %v767
    %v959 = vadd.f32 %v958, %v768
    %v960 = vadd.f32 %v959, %v769
    %v961 = vadd.f32 %v960, %v770
    %v962 = vadd.f32 %v961, %v771
    %v963 = vadd.f32 %v962, %v772
    %v964 = vadd.f32 %v963, %v773
    %v965 = vadd.f32 %v964, %v774
    %v966 = vadd.f32 %v965, %v775
    %v967 = vadd.f32 %v966, %v776
    %v968 = vadd.f32 %v967, %v777
    %v969 = vadd.f32 %v968, %v778
    %v970 = vadd.f32 %v969, %v779
    %v971 = vadd.f32 %v970, %v780
    %v972 = vadd.f32 %v971, %v781
    %v973 = vadd.f32 %v972, %v782
    %v974 = vadd.f32 %v973, %v783
    %v975 = vadd.f32 %v974, %v784
    %v976 = vadd.f32 %v975, %v785
    %v977 = vadd.f32 %v976, %v786
    %v978 = vadd.f32 %v977, %v787
    %v979 = vadd.f32 %v978, %v788
    %v980 = vadd.f32 %v979, %v789
    %v981 = vadd.f32 %v980, %v790
    %v982 = vadd.f32 %v981, %v791
    %v983 = vadd.f32 %v982, %v792
    %v984 = vadd.f32 %v983, %v793
    %v985 = vadd.f32 %v984, %v794
    %v986 = vadd.f32 %v985, %v795
    %v987 = vadd.f32 %v986, %v796
    %v988 = vadd.f32 %v987, %v797
    %v989 = vadd.f32 %v988, %v798
    %v990 = vadd.f32 %v989, %v799
    %v991 = vadd.f32 %v990, %v800
    %v992 = vadd.f32 %v991, %v801
    %v993 = vadd.f32 %v992, %v802
    %v994 = vadd.f32 %v993, %v803
    %v995 = vadd.f32 %v994, %v804
    %v996 = vadd.f32 %v995, %v805
    %v997 = vadd.f32 %v996, %v806
    %v998 = vadd.f32 %v997, %v807
    %v999 = vadd.f32 %v998, %v808
    %v1000 = vadd.f32 %v999, %v809
    %v1001 = vadd.f32 %v1000, %v810
    %v1002 = vadd.f32 %v1001, %v811
    %v1003 = vadd.f32 %v1002, %v812
    %v1004 = vadd.f32 %v1003, %v813
    %v1005 = vadd.f32 %v1004, %v814
    %v1006 = vadd.f32 %v1005, %v815
    %v1007 = vadd.f32 %v1006, %v816
    %v1008 = vadd.f32 %v1007, %v817
    %v1009 = vadd.f32 %v1008, %v818
    %v1010 = vadd.f32 %v1009, %v819
    %v1011 = vadd.f32 %v1010, %v820
    %v1012 = vadd.f32 %v1011, %v821
    %v1013 = vadd.f32 %v1012, %v822
    %v1014 = vadd.f32 %v1013, %v823
    %v1015 = vadd.f32 %v1014, %v824
    %v1016 = vadd.f32 %v1015, %v825
    %v1017 = vadd.f32 %v1016, %v826
    %v1018 = vadd.f32 %v1017, %v827
    %v1019 = vadd.f32 %v1018, %v828
    %v1020 = vrot.slane %v1019, 4
    %v1021 = vadd.f32 %v1019, %v1020
    %v1022 = vrot.slane %v1021, 2
    %v1023 = vadd.f32 %v1021, %v1022
    %v1024 = vrot.slane %v1023, 1
    %v1025 = vadd.f32 %v1023, %v1024
    %v1026 = vmul.f32 %v765, %v765
    %v1027 = vmul.f32 %v766, %v766
    %v1028 = vmul.f32 %v767, %v767
    %v1029 = vmul.f32 %v768, %v768
    %v1030 = vmul.f32 %v769, %v769
    %v1031 = vmul.f32 %v770, %v770
    %v1032 = vmul.f32 %v771, %v771
    %v1033 = vmul.f32 %v772, %v772
    %v1034 = vmul.f32 %v773, %v773
    %v1035 = vmul.f32 %v774, %v774
    %v1036 = vmul.f32 %v775, %v775
    %v1037 = vmul.f32 %v776, %v776
    %v1038 = vmul.f32 %v777, %v777
    %v1039 = vmul.f32 %v778, %v778
    %v1040 = vmul.f32 %v779, %v779
    %v1041 = vmul.f32 %v780, %v780
    %v1042 = vmul.f32 %v781, %v781
    %v1043 = vmul.f32 %v782, %v782
    %v1044 = vmul.f32 %v783, %v783
    %v1045 = vmul.f32 %v784, %v784
    %v1046 = vmul.f32 %v785, %v785
    %v1047 = vmul.f32 %v786, %v786
    %v1048 = vmul.f32 %v787, %v787
    %v1049 = vmul.f32 %v788, %v788
    %v1050 = vmul.f32 %v789, %v789
    %v1051 = vmul.f32 %v790, %v790
    %v1052 = vmul.f32 %v791, %v791
    %v1053 = vmul.f32 %v792, %v792
    %v1054 = vmul.f32 %v793, %v793
    %v1055 = vmul.f32 %v794, %v794
    %v1056 = vmul.f32 %v795, %v795
    %v1057 = vmul.f32 %v796, %v796
    %v1058 = vmul.f32 %v797, %v797
    %v1059 = vmul.f32 %v798, %v798
    %v1060 = vmul.f32 %v799, %v799
    %v1061 = vmul.f32 %v800, %v800
    %v1062 = vmul.f32 %v801, %v801
    %v1063 = vmul.f32 %v802, %v802
    %v1064 = vmul.f32 %v803, %v803
    %v1065 = vmul.f32 %v804, %v804
    %v1066 = vmul.f32 %v805, %v805
    %v1067 = vmul.f32 %v806, %v806
    %v1068 = vmul.f32 %v807, %v807
    %v1069 = vmul.f32 %v808, %v808
    %v1070 = vmul.f32 %v809, %v809
    %v1071 = vmul.f32 %v810, %v810
    %v1072 = vmul.f32 %v811, %v811
    %v1073 = vmul.f32 %v812, %v812
    %v1074 = vmul.f32 %v813, %v813
    %v1075 = vmul.f32 %v814, %v814
    %v1076 = vmul.f32 %v815, %v815
    %v1077 = vmul.f32 %v816, %v816
    %v1078 = vmul.f32 %v817, %v817
    %v1079 = vmul.f32 %v818, %v818
    %v1080 = vmul.f32 %v819, %v819
    %v1081 = vmul.f32 %v820, %v820
    %v1082 = vmul.f32 %v821, %v821
    %v1083 = vmul.f32 %v822, %v822
    %v1084 = vmul.f32 %v823, %v823
    %v1085 = vmul.f32 %v824, %v824
    %v1086 = vmul.f32 %v825, %v825
    %v1087 = vmul.f32 %v826, %v826
    %v1088 = vmul.f32 %v827, %v827
    %v1089 = vmul.f32 %v828, %v828
    %v1090 = vadd.f32 %v1026, %v1027
    %v1091 = vadd.f32 %v1090, %v1028
    %v1092 = vadd.f32 %v1091, %v1029
    %v1093 = vadd.f32 %v1092, %v1030
    %v1094 = vadd.f32 %v1093, %v1031
    %v1095 = vadd.f32 %v1094, %v1032
    %v1096 = vadd.f32 %v1095, %v1033
    %v1097 = vadd.f32 %v1096, %v1034
    %v1098 = vadd.f32 %v1097, %v1035
    %v1099 = vadd.f32 %v1098, %v1036
    %v1100 = vadd.f32 %v1099, %v1037
    %v1101 = vadd.f32 %v1100, %v1038
    %v1102 = vadd.f32 %v1101, %v1039
    %v1103 = vadd.f32 %v1102, %v1040
    %v1104 = vadd.f32 %v1103, %v1041
    %v1105 = vadd.f32 %v1104, %v1042
    %v1106 = vadd.f32 %v1105, %v1043
    %v1107 = vadd.f32 %v1106, %v1044
    %v1108 = vadd.f32 %v1107, %v1045
    %v1109 = vadd.f32 %v1108, %v1046
    %v1110 = vadd.f32 %v1109, %v1047
    %v1111 = vadd.f32 %v1110, %v1048
    %v1112 = vadd.f32 %v1111, %v1049
    %v1113 = vadd.f32 %v1112, %v1050
    %v1114 = vadd.f32 %v1113, %v1051
    %v1115 = vadd.f32 %v1114, %v1052
    %v1116 = vadd.f32 %v1115, %v1053
    %v1117 = vadd.f32 %v1116, %v1054
    %v1118 = vadd.f32 %v1117, %v1055
    %v1119 = vadd.f32 %v1118, %v1056
    %v1120 = vadd.f32 %v1119, %v1057
    %v1121 = vadd.f32 %v1120, %v1058
    %v1122 = vadd.f32 %v1121, %v1059
    %v1123 = vadd.f32 %v1122, %v1060
    %v1124 = vadd.f32 %v1123, %v1061
    %v1125 = vadd.f32 %v1124, %v1062
    %v1126 = vadd.f32 %v1125, %v1063
    %v1127 = vadd.f32 %v1126, %v1064
    %v1128 = vadd.f32 %v1127, %v1065
    %v1129 = vadd.f32 %v1128, %v1066
    %v1130 = vadd.f32 %v1129, %v1067
    %v1131 = vadd.f32 %v1130, %v1068
    %v1132 = vadd.f32 %v1131, %v1069
    %v1133 = vadd.f32 %v1132, %v1070
    %v1134 = vadd.f32 %v1133, %v1071
    %v1135 = vadd.f32 %v1134, %v1072
    %v1136 = vadd.f32 %v1135, %v1073
    %v1137 = vadd.f32 %v1136, %v1074
    %v1138 = vadd.f32 %v1137, %v1075
    %v1139 = vadd.f32 %v1138, %v1076
    %v1140 = vadd.f32 %v1139, %v1077
    %v1141 = vadd.f32 %v1140, %v1078
    %v1142 = vadd.f32 %v1141, %v1079
    %v1143 = vadd.f32 %v1142, %v1080
    %v1144 = vadd.f32 %v1143, %v1081
    %v1145 = vadd.f32 %v1144, %v1082
    %v1146 = vadd.f32 %v1145, %v1083
    %v1147 = vadd.f32 %v1146, %v1084
    %v1148 = vadd.f32 %v1147, %v1085
    %v1149 = vadd.f32 %v1148, %v1086
    %v1150 = vadd.f32 %v1149, %v1087
    %v1151 = vadd.f32 %v1150, %v1088
    %v1152 = vadd.f32 %v1151, %v1089
    %v1153 = vrot.slane %v1152, 4
    %v1154 = vadd.f32 %v1152, %v1153
    %v1155 = vrot.slane %v1154, 2
    %v1156 = vadd.f32 %v1154, %v1155
    %v1157 = vrot.slane %v1156, 1
    %v1158 = vadd.f32 %v1156, %v1157
    %vm1159 = vcmask 1040384
    %v1160 = vsel %vm1159, %v1025, %v1158
    %1161 = vst [vmem:[%s3] sm:$0x3] %v1160
  $region17: #{bottleneck_forward.7} parent=0 // pred_fallthru
    _
  // Predicated region
  $region18: #{bottleneck_forward.7} parent=0 // pred_check
    _
  $region19: #{bottleneck_forward.7} parent=0 // pred_check_branch
    %1163 = sbr.rel (0) target = $region21
  $region20: #{bottleneck_forward.7} parent=0 // pred_region
    _
  $region21: #{bottleneck_forward.7} parent=0 // pred_fallthru
    _
  // Predicated region
  $region22: #{bottleneck_forward.7} parent=0 // pred_check
    _
  $region23: #{bottleneck_forward.7} parent=0 // pred_check_branch
    %1165 = sbr.rel (0) target = $region25
  $region24: #{bottleneck_forward.7} parent=0 // pred_region
    _
  $region25: #{bottleneck_forward.7} parent=0 // pred_fallthru
    _
  // Predicated region
  $region26: #{bottleneck_forward.7} parent=0 // pred_check
    _
  $region27: #{bottleneck_forward.7} parent=0 // pred_check_branch
    %1167 = sbr.rel (0) target = $region29
  $region28: #{bottleneck_forward.7} parent=0 // pred_region
    _
  $region29: #{bottleneck_forward.7} parent=0 // pred_fallthru
    _
  // Predicated region
  $region30: #{bottleneck_forward.7} parent=0 // pred_check
    _
  $region31: #{bottleneck_forward.7} parent=0 // pred_check_branch
    %1169 = sbr.rel (0) target = $region33
  $region32: #{bottleneck_forward.7} parent=0 // pred_region
    _
  $region33: #{bottleneck_forward.7} parent=0 // pred_fallthru
    _

// kernel: bottleneck_forward.13
$region0: #{bottleneck_forward.13}
  #allocation0 [shape = 'u32[]', space=smem, size = 0x4, offset = 0x4, fixed_abs, tag = 'smem constant byte address 0x4 - core index']
  #allocation1 [shape = 'u32[72,128]{1,0:T(1,128)}', space=vmem, size = 0x9000, scoped, tag = 'internal scratch']
  %s0 = inlined_call_operand.vmem [shape: bf16[512,128], index: 0, kind: input, shape index: {}]
  %s1 = inlined_call_operand.vmem [shape: f32[1,128], index: 1, kind: input, shape index: {}]
  %s2 = inlined_call_operand.vmem [shape: f32[1,128], index: 2, kind: input, shape index: {}]
  %s3 = inlined_call_operand.vmem [shape: bf16[512,128], index: 3, kind: input, shape index: {}]
  %s4 = inlined_call_operand.vmem [shape: f32[1,128], index: 4, kind: input, shape index: {}]
  %s5 = inlined_call_operand.vmem [shape: f32[1,128], index: 5, kind: input, shape index: {}]
  %s6 = inlined_call_operand.vmem [shape: f32[512,128], index: 6, kind: output, shape index: {}]
  %s7 = sld [smem:[#allocation0]]
  $region34: #{bottleneck_forward.13} parent=0
    _
  %s9 = ssub.s32 1, %s7
  %s10 = scalar_select 0, %s9, %s7
  // Predicated region
  $region2: #{bottleneck_forward.13} parent=0 // pred_check
    _
  $region3: #{bottleneck_forward.13} parent=0 // pred_check_branch
    %12 = sbr.rel (0) target = $region5
  $region4: #{bottleneck_forward.13} parent=0 // pred_region
    _
  $region5: #{bottleneck_forward.13} parent=0 // pred_fallthru
    _
  // Predicated region
  $region6: #{bottleneck_forward.13} parent=0 // pred_check
    _
  $region7: #{bottleneck_forward.13} parent=0 // pred_check_branch
    %14 = sbr.rel (0) target = $region9
  $region8: #{bottleneck_forward.13} parent=0 // pred_region
    _
  $region9: #{bottleneck_forward.13} parent=0 // pred_fallthru
    _
  // Predicated region
  $region10: #{bottleneck_forward.13} parent=0 // pred_check
    _
  $region11: #{bottleneck_forward.13} parent=0 // pred_check_branch
    %16 = sbr.rel (0) target = $region13
  $region12: #{bottleneck_forward.13} parent=0 // pred_region
    _
  $region13: #{bottleneck_forward.13} parent=0 // pred_fallthru
    _
  // Predicated region
  $region14: #{bottleneck_forward.13} parent=0 // pred_check
    _
  $region15: #{bottleneck_forward.13} parent=0 // pred_check_branch
    %18 = sbr.rel (0) target = $region17
  $region16: #{bottleneck_forward.13} parent=0 // pred_region
    _
  $region17: #{bottleneck_forward.13} parent=0 // pred_fallthru
    _
  // Predicated region
  $region18: #{bottleneck_forward.13} parent=0 // pred_check
    _
  $region19: #{bottleneck_forward.13} parent=0 // pred_check_branch
    %20 = sbr.rel (0) target = $region21
  $region20: #{bottleneck_forward.13} parent=0 // pred_region
    _
  $region21: #{bottleneck_forward.13} parent=0 // pred_fallthru
    _
  // Predicated region
  $region22: #{bottleneck_forward.13} parent=0 // pred_check
    _
  $region23: #{bottleneck_forward.13} parent=0 // pred_check_branch
    %22 = sbr.rel (0) target = $region25
  $region24: #{bottleneck_forward.13} parent=0 // pred_region
    _
  $region25: #{bottleneck_forward.13} parent=0 // pred_fallthru
    _
  %v23 = vld [vmem:[%s0] sm:$0xf]
  %v24 = vld [vmem:[%s0 + $0x4] sm:$0xf]
  %v25 = vld [vmem:[%s0 + $0x8] sm:$0xf]
  %v26 = vld [vmem:[%s0 + $0xc] sm:$0xf]
  %v27 = vld [vmem:[%s0 + $0x10] sm:$0xf]
  %v28 = vld [vmem:[%s0 + $0x14] sm:$0xf]
  %v29 = vld [vmem:[%s0 + $0x18] sm:$0xf]
  %v30 = vld [vmem:[%s0 + $0x1c] sm:$0xf]
  %v31 = vld [vmem:[%s0 + $0x20] sm:$0xf]
  %v32 = vld [vmem:[%s0 + $0x24] sm:$0xf]
  %v33 = vld [vmem:[%s0 + $0x28] sm:$0xf]
  %v34 = vld [vmem:[%s0 + $0x2c] sm:$0xf]
  %v35 = vld [vmem:[%s0 + $0x30] sm:$0xf]
  %v36 = vld [vmem:[%s0 + $0x34] sm:$0xf]
  %v37 = vld [vmem:[%s0 + $0x38] sm:$0xf]
  %v38 = vld [vmem:[%s0 + $0x3c] sm:$0xf]
  %v39 = vld [vmem:[%s0 + $0x40] sm:$0xf]
  %v40 = vld [vmem:[%s0 + $0x44] sm:$0xf]
  %v41 = vld [vmem:[%s0 + $0x48] sm:$0xf]
  %v42 = vld [vmem:[%s0 + $0x4c] sm:$0xf]
  %v43 = vld [vmem:[%s0 + $0x50] sm:$0xf]
  %v44 = vld [vmem:[%s0 + $0x54] sm:$0xf]
  %v45 = vld [vmem:[%s0 + $0x58] sm:$0xf]
  %v46 = vld [vmem:[%s0 + $0x5c] sm:$0xf]
  %v47 = vld [vmem:[%s0 + $0x60] sm:$0xf]
  %v48 = vld [vmem:[%s0 + $0x64] sm:$0xf]
  %v49 = vld [vmem:[%s0 + $0x68] sm:$0xf]
  %v50 = vld [vmem:[%s0 + $0x6c] sm:$0xf]
  %v51 = vld [vmem:[%s0 + $0x70] sm:$0xf]
  %v52 = vld [vmem:[%s0 + $0x74] sm:$0xf]
  %v53 = vld [vmem:[%s0 + $0x78] sm:$0xf]
  %v54 = vld [vmem:[%s0 + $0x7c] sm:$0xf]
  %v55 = vld [vmem:[%s0 + $0x80] sm:$0xf]
  %v56 = vld [vmem:[%s0 + $0x84] sm:$0xf]
  %v57 = vld [vmem:[%s0 + $0x88] sm:$0xf]
  %v58 = vld [vmem:[%s0 + $0x8c] sm:$0xf]
  %v59 = vld [vmem:[%s0 + $0x90] sm:$0xf]
  %v60 = vld [vmem:[%s0 + $0x94] sm:$0xf]
  %v61 = vld [vmem:[%s0 + $0x98] sm:$0xf]
  %v62 = vld [vmem:[%s0 + $0x9c] sm:$0xf]
  %v63 = vld [vmem:[%s0 + $0xa0] sm:$0xf]
  %v64 = vld [vmem:[%s0 + $0xa4] sm:$0xf]
  %v65 = vld [vmem:[%s0 + $0xa8] sm:$0xf]
  %v66 = vld [vmem:[%s0 + $0xac] sm:$0xf]
  %v67 = vld [vmem:[%s0 + $0xb0] sm:$0xf]
  %v68 = vld [vmem:[%s0 + $0xb4] sm:$0xf]
  %v69 = vld [vmem:[%s0 + $0xb8] sm:$0xf]
  %v70 = vld [vmem:[%s0 + $0xbc] sm:$0xf]
  %v71 = vld [vmem:[%s0 + $0xc0] sm:$0xf]
  %v72 = vld [vmem:[%s0 + $0xc4] sm:$0xf]
  %v73 = vld [vmem:[%s0 + $0xc8] sm:$0xf]
  %v74 = vld [vmem:[%s0 + $0xcc] sm:$0xf]
  %v75 = vld [vmem:[%s0 + $0xd0] sm:$0xf]
  %v76 = vld [vmem:[%s0 + $0xd4] sm:$0xf]
  %v77 = vld [vmem:[%s0 + $0xd8] sm:$0xf]
  %v78 = vld [vmem:[%s0 + $0xdc] sm:$0xf]
  %v79 = vld [vmem:[%s0 + $0xe0] sm:$0xf]
  %v80 = vld [vmem:[%s0 + $0xe4] sm:$0xf]
  %v81 = vld [vmem:[%s0 + $0xe8] sm:$0xf]
  %v82 = vld [vmem:[%s0 + $0xec] sm:$0xf]
  %v83 = vld [vmem:[%s0 + $0xf0] sm:$0xf]
  %v84 = vld [vmem:[%s0 + $0xf4] sm:$0xf]
  %v85 = vld [vmem:[%s0 + $0xf8] sm:$0xf]
  %v86 = vld [vmem:[%s0 + $0xfc] sm:$0xf]
  %v87 = vunpack.c.l.bf16 %v23
  %v88 = vunpack.c.l.bf16 %v24
  %v89 = vunpack.c.l.bf16 %v25
  %v90 = vunpack.c.l.bf16 %v26
  %v91 = vunpack.c.l.bf16 %v27
  %v92 = vunpack.c.l.bf16 %v28
  %v93 = vunpack.c.l.bf16 %v29
  %v94 = vunpack.c.l.bf16 %v30
  %v95 = vunpack.c.l.bf16 %v31
  %v96 = vunpack.c.l.bf16 %v32
  %v97 = vunpack.c.l.bf16 %v33
  %v98 = vunpack.c.l.bf16 %v34
  %v99 = vunpack.c.l.bf16 %v35
  %v100 = vunpack.c.l.bf16 %v36
  %v101 = vunpack.c.l.bf16 %v37
  %v102 = vunpack.c.l.bf16 %v38
  %v103 = vunpack.c.l.bf16 %v39
  %v104 = vunpack.c.l.bf16 %v40
  %v105 = vunpack.c.l.bf16 %v41
  %v106 = vunpack.c.l.bf16 %v42
  %v107 = vunpack.c.l.bf16 %v43
  %v108 = vunpack.c.l.bf16 %v44
  %v109 = vunpack.c.l.bf16 %v45
  %v110 = vunpack.c.l.bf16 %v46
  %v111 = vunpack.c.l.bf16 %v47
  %v112 = vunpack.c.l.bf16 %v48
  %v113 = vunpack.c.l.bf16 %v49
  %v114 = vunpack.c.l.bf16 %v50
  %v115 = vunpack.c.l.bf16 %v51
  %v116 = vunpack.c.l.bf16 %v52
  %v117 = vunpack.c.l.bf16 %v53
  %v118 = vunpack.c.l.bf16 %v54
  %v119 = vunpack.c.l.bf16 %v55
  %v120 = vunpack.c.l.bf16 %v56
  %v121 = vunpack.c.l.bf16 %v57
  %v122 = vunpack.c.l.bf16 %v58
  %v123 = vunpack.c.l.bf16 %v59
  %v124 = vunpack.c.l.bf16 %v60
  %v125 = vunpack.c.l.bf16 %v61
  %v126 = vunpack.c.l.bf16 %v62
  %v127 = vunpack.c.l.bf16 %v63
  %v128 = vunpack.c.l.bf16 %v64
  %v129 = vunpack.c.l.bf16 %v65
  %v130 = vunpack.c.l.bf16 %v66
  %v131 = vunpack.c.l.bf16 %v67
  %v132 = vunpack.c.l.bf16 %v68
  %v133 = vunpack.c.l.bf16 %v69
  %v134 = vunpack.c.l.bf16 %v70
  %v135 = vunpack.c.l.bf16 %v71
  %v136 = vunpack.c.l.bf16 %v72
  %v137 = vunpack.c.l.bf16 %v73
  %v138 = vunpack.c.l.bf16 %v74
  %v139 = vunpack.c.l.bf16 %v75
  %v140 = vunpack.c.l.bf16 %v76
  %v141 = vunpack.c.l.bf16 %v77
  %v142 = vunpack.c.l.bf16 %v78
  %v143 = vunpack.c.l.bf16 %v79
  %v144 = vunpack.c.l.bf16 %v80
  %v145 = vunpack.c.l.bf16 %v81
  %v146 = vunpack.c.l.bf16 %v82
  %v147 = vunpack.c.l.bf16 %v83
  %v148 = vunpack.c.l.bf16 %v84
  %v149 = vunpack.c.l.bf16 %v85
  %v150 = vunpack.c.l.bf16 %v86
  %v151 = vld [vmem:[%s1] sm:$0x1]
  %v153 = vperm.slane %v151, 0
  %v155 = vmul.f32 %v87, %v153
  %v156 = vmul.f32 %v88, %v153
  %v157 = vmul.f32 %v89, %v153
  %v158 = vmul.f32 %v90, %v153
  %v159 = vmul.f32 %v91, %v153
  %v160 = vmul.f32 %v92, %v153
  %v161 = vmul.f32 %v93, %v153
  %v162 = vmul.f32 %v94, %v153
  %v163 = vmul.f32 %v95, %v153
  %v164 = vmul.f32 %v96, %v153
  %v165 = vmul.f32 %v97, %v153
  %v166 = vmul.f32 %v98, %v153
  %v167 = vmul.f32 %v99, %v153
  %v168 = vmul.f32 %v100, %v153
  %v169 = vmul.f32 %v101, %v153
  %v170 = vmul.f32 %v102, %v153
  %v171 = vmul.f32 %v103, %v153
  %v172 = vmul.f32 %v104, %v153
  %v173 = vmul.f32 %v105, %v153
  %v174 = vmul.f32 %v106, %v153
  %v175 = vmul.f32 %v107, %v153
  %v176 = vmul.f32 %v108, %v153
  %v177 = vmul.f32 %v109, %v153
  %v178 = vmul.f32 %v110, %v153
  %v179 = vmul.f32 %v111, %v153
  %v180 = vmul.f32 %v112, %v153
  %v181 = vmul.f32 %v113, %v153
  %v182 = vmul.f32 %v114, %v153
  %v183 = vmul.f32 %v115, %v153
  %v184 = vmul.f32 %v116, %v153
  %v185 = vmul.f32 %v117, %v153
  %v186 = vmul.f32 %v118, %v153
  %v187 = vmul.f32 %v119, %v153
  %v188 = vmul.f32 %v120, %v153
  %v189 = vmul.f32 %v121, %v153
  %v190 = vmul.f32 %v122, %v153
  %v191 = vmul.f32 %v123, %v153
  %v192 = vmul.f32 %v124, %v153
  %v193 = vmul.f32 %v125, %v153
  %v194 = vmul.f32 %v126, %v153
  %v195 = vmul.f32 %v127, %v153
  %v196 = vmul.f32 %v128, %v153
  %v197 = vmul.f32 %v129, %v153
  %v198 = vmul.f32 %v130, %v153
  %v199 = vmul.f32 %v131, %v153
  %v200 = vmul.f32 %v132, %v153
  %v201 = vmul.f32 %v133, %v153
  %v202 = vmul.f32 %v134, %v153
  %v203 = vmul.f32 %v135, %v153
  %v204 = vmul.f32 %v136, %v153
  %v205 = vmul.f32 %v137, %v153
  %v206 = vmul.f32 %v138, %v153
  %v207 = vmul.f32 %v139, %v153
  %v208 = vmul.f32 %v140, %v153
  %v209 = vmul.f32 %v141, %v153
  %v210 = vmul.f32 %v142, %v153
  %v211 = vmul.f32 %v143, %v153
  %v212 = vmul.f32 %v144, %v153
  %v213 = vmul.f32 %v145, %v153
  %v214 = vmul.f32 %v146, %v153
  %v215 = vmul.f32 %v147, %v153
  %v216 = vmul.f32 %v148, %v153
  %v217 = vmul.f32 %v149, %v153
  %v218 = vmul.f32 %v150, %v153
  %v219 = vld [vmem:[%s2] sm:$0x1]
  %v221 = vperm.slane %v219, 0
  %v223 = vadd.f32 %v155, %v221
  %v224 = vadd.f32 %v156, %v221
  %v225 = vadd.f32 %v157, %v221
  %v226 = vadd.f32 %v158, %v221
  %v227 = vadd.f32 %v159, %v221
  %v228 = vadd.f32 %v160, %v221
  %v229 = vadd.f32 %v161, %v221
  %v230 = vadd.f32 %v162, %v221
  %v231 = vadd.f32 %v163, %v221
  %v232 = vadd.f32 %v164, %v221
  %v233 = vadd.f32 %v165, %v221
  %v234 = vadd.f32 %v166, %v221
  %v235 = vadd.f32 %v167, %v221
  %v236 = vadd.f32 %v168, %v221
  %v237 = vadd.f32 %v169, %v221
  %v238 = vadd.f32 %v170, %v221
  %v239 = vadd.f32 %v171, %v221
  %v240 = vadd.f32 %v172, %v221
  %v241 = vadd.f32 %v173, %v221
  %v242 = vadd.f32 %v174, %v221
  %v243 = vadd.f32 %v175, %v221
  %v244 = vadd.f32 %v176, %v221
  %v245 = vadd.f32 %v177, %v221
  %v246 = vadd.f32 %v178, %v221
  %v247 = vadd.f32 %v179, %v221
  %v248 = vadd.f32 %v180, %v221
  %v249 = vadd.f32 %v181, %v221
  %v250 = vadd.f32 %v182, %v221
  %v251 = vadd.f32 %v183, %v221
  %v252 = vadd.f32 %v184, %v221
  %v253 = vadd.f32 %v185, %v221
  %v254 = vadd.f32 %v186, %v221
  %v255 = vadd.f32 %v187, %v221
  %v256 = vadd.f32 %v188, %v221
  %v257 = vadd.f32 %v189, %v221
  %v258 = vadd.f32 %v190, %v221
  %v259 = vadd.f32 %v191, %v221
  %v260 = vadd.f32 %v192, %v221
  %v261 = vadd.f32 %v193, %v221
  %v262 = vadd.f32 %v194, %v221
  %v263 = vadd.f32 %v195, %v221
  %v264 = vadd.f32 %v196, %v221
  %v265 = vadd.f32 %v197, %v221
  %v266 = vadd.f32 %v198, %v221
  %v267 = vadd.f32 %v199, %v221
  %v268 = vadd.f32 %v200, %v221
  %v269 = vadd.f32 %v201, %v221
  %v270 = vadd.f32 %v202, %v221
  %v271 = vadd.f32 %v203, %v221
  %v272 = vadd.f32 %v204, %v221
  %v273 = vadd.f32 %v205, %v221
  %v274 = vadd.f32 %v206, %v221
  %v275 = vadd.f32 %v207, %v221
  %v276 = vadd.f32 %v208, %v221
  %v277 = vadd.f32 %v209, %v221
  %v278 = vadd.f32 %v210, %v221
  %v279 = vadd.f32 %v211, %v221
  %v280 = vadd.f32 %v212, %v221
  %v281 = vadd.f32 %v213, %v221
  %v282 = vadd.f32 %v214, %v221
  %v283 = vadd.f32 %v215, %v221
  %v284 = vadd.f32 %v216, %v221
  %v285 = vadd.f32 %v217, %v221
  %v286 = vadd.f32 %v218, %v221
  %v287 = vld [vmem:[%s3] sm:$0xf]
  %v288 = vld [vmem:[%s3 + $0x4] sm:$0xf]
  %v289 = vld [vmem:[%s3 + $0x8] sm:$0xf]
  %v290 = vld [vmem:[%s3 + $0xc] sm:$0xf]
  %v291 = vld [vmem:[%s3 + $0x10] sm:$0xf]
  %v292 = vld [vmem:[%s3 + $0x14] sm:$0xf]
  %v293 = vld [vmem:[%s3 + $0x18] sm:$0xf]
  %v294 = vld [vmem:[%s3 + $0x1c] sm:$0xf]
  %v295 = vld [vmem:[%s3 + $0x20] sm:$0xf]
  %v296 = vld [vmem:[%s3 + $0x24] sm:$0xf]
  %v297 = vld [vmem:[%s3 + $0x28] sm:$0xf]
  %v298 = vld [vmem:[%s3 + $0x2c] sm:$0xf]
  %v299 = vld [vmem:[%s3 + $0x30] sm:$0xf]
  %v300 = vld [vmem:[%s3 + $0x34] sm:$0xf]
  %v301 = vld [vmem:[%s3 + $0x38] sm:$0xf]
  %v302 = vld [vmem:[%s3 + $0x3c] sm:$0xf]
  %v303 = vld [vmem:[%s3 + $0x40] sm:$0xf]
  %v304 = vld [vmem:[%s3 + $0x44] sm:$0xf]
  %v305 = vld [vmem:[%s3 + $0x48] sm:$0xf]
  %v306 = vld [vmem:[%s3 + $0x4c] sm:$0xf]
  %v307 = vld [vmem:[%s3 + $0x50] sm:$0xf]
  %v308 = vld [vmem:[%s3 + $0x54] sm:$0xf]
  %v309 = vld [vmem:[%s3 + $0x58] sm:$0xf]
  %v310 = vld [vmem:[%s3 + $0x5c] sm:$0xf]
  %v311 = vld [vmem:[%s3 + $0x60] sm:$0xf]
  %v312 = vld [vmem:[%s3 + $0x64] sm:$0xf]
  %v313 = vld [vmem:[%s3 + $0x68] sm:$0xf]
  %v314 = vld [vmem:[%s3 + $0x6c] sm:$0xf]
  %v315 = vld [vmem:[%s3 + $0x70] sm:$0xf]
  %v316 = vld [vmem:[%s3 + $0x74] sm:$0xf]
  %v317 = vld [vmem:[%s3 + $0x78] sm:$0xf]
  %v318 = vld [vmem:[%s3 + $0x7c] sm:$0xf]
  %v319 = vld [vmem:[%s3 + $0x80] sm:$0xf]
  %v320 = vld [vmem:[%s3 + $0x84] sm:$0xf]
  %v321 = vld [vmem:[%s3 + $0x88] sm:$0xf]
  %v322 = vld [vmem:[%s3 + $0x8c] sm:$0xf]
  %v323 = vld [vmem:[%s3 + $0x90] sm:$0xf]
  %v324 = vld [vmem:[%s3 + $0x94] sm:$0xf]
  %v325 = vld [vmem:[%s3 + $0x98] sm:$0xf]
  %v326 = vld [vmem:[%s3 + $0x9c] sm:$0xf]
  %v327 = vld [vmem:[%s3 + $0xa0] sm:$0xf]
  %v328 = vld [vmem:[%s3 + $0xa4] sm:$0xf]
  %v329 = vld [vmem:[%s3 + $0xa8] sm:$0xf]
  %v330 = vld [vmem:[%s3 + $0xac] sm:$0xf]
  %v331 = vld [vmem:[%s3 + $0xb0] sm:$0xf]
  %v332 = vld [vmem:[%s3 + $0xb4] sm:$0xf]
  %v333 = vld [vmem:[%s3 + $0xb8] sm:$0xf]
  %v334 = vld [vmem:[%s3 + $0xbc] sm:$0xf]
  %v335 = vld [vmem:[%s3 + $0xc0] sm:$0xf]
  %v336 = vld [vmem:[%s3 + $0xc4] sm:$0xf]
  %v337 = vld [vmem:[%s3 + $0xc8] sm:$0xf]
  %v338 = vld [vmem:[%s3 + $0xcc] sm:$0xf]
  %v339 = vld [vmem:[%s3 + $0xd0] sm:$0xf]
  %v340 = vld [vmem:[%s3 + $0xd4] sm:$0xf]
  %v341 = vld [vmem:[%s3 + $0xd8] sm:$0xf]
  %v342 = vld [vmem:[%s3 + $0xdc] sm:$0xf]
  %v343 = vld [vmem:[%s3 + $0xe0] sm:$0xf]
  %v344 = vld [vmem:[%s3 + $0xe4] sm:$0xf]
  %v345 = vld [vmem:[%s3 + $0xe8] sm:$0xf]
  %v346 = vld [vmem:[%s3 + $0xec] sm:$0xf]
  %v347 = vld [vmem:[%s3 + $0xf0] sm:$0xf]
  %v348 = vld [vmem:[%s3 + $0xf4] sm:$0xf]
  %v349 = vld [vmem:[%s3 + $0xf8] sm:$0xf]
  %v350 = vld [vmem:[%s3 + $0xfc] sm:$0xf]
  %v351 = vunpack.c.l.bf16 %v287
  %v352 = vunpack.c.l.bf16 %v288
  %v353 = vunpack.c.l.bf16 %v289
  %v354 = vunpack.c.l.bf16 %v290
  %v355 = vunpack.c.l.bf16 %v291
  %v356 = vunpack.c.l.bf16 %v292
  %v357 = vunpack.c.l.bf16 %v293
  %v358 = vunpack.c.l.bf16 %v294
  %v359 = vunpack.c.l.bf16 %v295
  %v360 = vunpack.c.l.bf16 %v296
  %v361 = vunpack.c.l.bf16 %v297
  %v362 = vunpack.c.l.bf16 %v298
  %v363 = vunpack.c.l.bf16 %v299
  %v364 = vunpack.c.l.bf16 %v300
  %v365 = vunpack.c.l.bf16 %v301
  %v366 = vunpack.c.l.bf16 %v302
  %v367 = vunpack.c.l.bf16 %v303
  %v368 = vunpack.c.l.bf16 %v304
  %v369 = vunpack.c.l.bf16 %v305
  %v370 = vunpack.c.l.bf16 %v306
  %v371 = vunpack.c.l.bf16 %v307
  %v372 = vunpack.c.l.bf16 %v308
  %v373 = vunpack.c.l.bf16 %v309
  %v374 = vunpack.c.l.bf16 %v310
  %v375 = vunpack.c.l.bf16 %v311
  %v376 = vunpack.c.l.bf16 %v312
  %v377 = vunpack.c.l.bf16 %v313
  %v378 = vunpack.c.l.bf16 %v314
  %v379 = vunpack.c.l.bf16 %v315
  %v380 = vunpack.c.l.bf16 %v316
  %v381 = vunpack.c.l.bf16 %v317
  %v382 = vunpack.c.l.bf16 %v318
  %v383 = vunpack.c.l.bf16 %v319
  %v384 = vunpack.c.l.bf16 %v320
  %v385 = vunpack.c.l.bf16 %v321
  %v386 = vunpack.c.l.bf16 %v322
  %v387 = vunpack.c.l.bf16 %v323
  %v388 = vunpack.c.l.bf16 %v324
  %v389 = vunpack.c.l.bf16 %v325
  %v390 = vunpack.c.l.bf16 %v326
  %v391 = vunpack.c.l.bf16 %v327
  %v392 = vunpack.c.l.bf16 %v328
  %v393 = vunpack.c.l.bf16 %v329
  %v394 = vunpack.c.l.bf16 %v330
  %v395 = vunpack.c.l.bf16 %v331
  %v396 = vunpack.c.l.bf16 %v332
  %v397 = vunpack.c.l.bf16 %v333
  %v398 = vunpack.c.l.bf16 %v334
  %v399 = vunpack.c.l.bf16 %v335
  %v400 = vunpack.c.l.bf16 %v336
  %v401 = vunpack.c.l.bf16 %v337
  %v402 = vunpack.c.l.bf16 %v338
  %v403 = vunpack.c.l.bf16 %v339
  %v404 = vunpack.c.l.bf16 %v340
  %v405 = vunpack.c.l.bf16 %v341
  %v406 = vunpack.c.l.bf16 %v342
  %v407 = vunpack.c.l.bf16 %v343
  %v408 = vunpack.c.l.bf16 %v344
  %v409 = vunpack.c.l.bf16 %v345
  %v410 = vunpack.c.l.bf16 %v346
  %v411 = vunpack.c.l.bf16 %v347
  %v412 = vunpack.c.l.bf16 %v348
  %v413 = vunpack.c.l.bf16 %v349
  %v414 = vunpack.c.l.bf16 %v350
  %v415 = vld [vmem:[%s4] sm:$0x1]
  %v417 = vperm.slane %v415, 0
  %v419 = vmul.f32 %v351, %v417
  %v420 = vmul.f32 %v352, %v417
  %v421 = vmul.f32 %v353, %v417
  %v422 = vmul.f32 %v354, %v417
  %v423 = vmul.f32 %v355, %v417
  %v424 = vmul.f32 %v356, %v417
  %v425 = vmul.f32 %v357, %v417
  %v426 = vmul.f32 %v358, %v417
  %v427 = vmul.f32 %v359, %v417
  %v428 = vmul.f32 %v360, %v417
  %v429 = vmul.f32 %v361, %v417
  %v430 = vmul.f32 %v362, %v417
  %v431 = vmul.f32 %v363, %v417
  %v432 = vmul.f32 %v364, %v417
  %v433 = vmul.f32 %v365, %v417
  %v434 = vmul.f32 %v366, %v417
  %v435 = vmul.f32 %v367, %v417
  %v436 = vmul.f32 %v368, %v417
  %v437 = vmul.f32 %v369, %v417
  %v438 = vmul.f32 %v370, %v417
  %v439 = vmul.f32 %v371, %v417
  %v440 = vmul.f32 %v372, %v417
  %v441 = vmul.f32 %v373, %v417
  %v442 = vmul.f32 %v374, %v417
  %v443 = vmul.f32 %v375, %v417
  %v444 = vmul.f32 %v376, %v417
  %v445 = vmul.f32 %v377, %v417
  %v446 = vmul.f32 %v378, %v417
  %v447 = vmul.f32 %v379, %v417
  %v448 = vmul.f32 %v380, %v417
  %v449 = vmul.f32 %v381, %v417
  %v450 = vmul.f32 %v382, %v417
  %v451 = vmul.f32 %v383, %v417
  %v452 = vmul.f32 %v384, %v417
  %v453 = vmul.f32 %v385, %v417
  %v454 = vmul.f32 %v386, %v417
  %v455 = vmul.f32 %v387, %v417
  %v456 = vmul.f32 %v388, %v417
  %v457 = vmul.f32 %v389, %v417
  %v458 = vmul.f32 %v390, %v417
  %v459 = vmul.f32 %v391, %v417
  %v460 = vmul.f32 %v392, %v417
  %v461 = vmul.f32 %v393, %v417
  %v462 = vmul.f32 %v394, %v417
  %v463 = vmul.f32 %v395, %v417
  %v464 = vmul.f32 %v396, %v417
  %v465 = vmul.f32 %v397, %v417
  %v466 = vmul.f32 %v398, %v417
  %v467 = vmul.f32 %v399, %v417
  %v468 = vmul.f32 %v400, %v417
  %v469 = vmul.f32 %v401, %v417
  %v470 = vmul.f32 %v402, %v417
  %v471 = vmul.f32 %v403, %v417
  %v472 = vmul.f32 %v404, %v417
  %v473 = vmul.f32 %v405, %v417
  %v474 = vmul.f32 %v406, %v417
  %v475 = vmul.f32 %v407, %v417
  %v476 = vmul.f32 %v408, %v417
  %v477 = vmul.f32 %v409, %v417
  %v478 = vmul.f32 %v410, %v417
  %v479 = vmul.f32 %v411, %v417
  %v480 = vmul.f32 %v412, %v417
  %v481 = vmul.f32 %v413, %v417
  %v482 = vmul.f32 %v414, %v417
  %v483 = vadd.f32 %v223, %v419
  %v484 = vadd.f32 %v224, %v420
  %v485 = vadd.f32 %v225, %v421
  %v486 = vadd.f32 %v226, %v422
  %v487 = vadd.f32 %v227, %v423
  %v488 = vadd.f32 %v228, %v424
  %v489 = vadd.f32 %v229, %v425
  %v490 = vadd.f32 %v230, %v426
  %v491 = vadd.f32 %v231, %v427
  %v492 = vadd.f32 %v232, %v428
  %v493 = vadd.f32 %v233, %v429
  %v494 = vadd.f32 %v234, %v430
  %v495 = vadd.f32 %v235, %v431
  %v496 = vadd.f32 %v236, %v432
  %v497 = vadd.f32 %v237, %v433
  %v498 = vadd.f32 %v238, %v434
  %v499 = vadd.f32 %v239, %v435
  %v500 = vadd.f32 %v240, %v436
  %v501 = vadd.f32 %v241, %v437
  %v502 = vadd.f32 %v242, %v438
  %v503 = vadd.f32 %v243, %v439
  %v504 = vadd.f32 %v244, %v440
  %v505 = vadd.f32 %v245, %v441
  %v506 = vadd.f32 %v246, %v442
  %v507 = vadd.f32 %v247, %v443
  %v508 = vadd.f32 %v248, %v444
  %v509 = vadd.f32 %v249, %v445
  %v510 = vadd.f32 %v250, %v446
  %v511 = vadd.f32 %v251, %v447
  %v512 = vadd.f32 %v252, %v448
  %v513 = vadd.f32 %v253, %v449
  %v514 = vadd.f32 %v254, %v450
  %v515 = vadd.f32 %v255, %v451
  %v516 = vadd.f32 %v256, %v452
  %v517 = vadd.f32 %v257, %v453
  %v518 = vadd.f32 %v258, %v454
  %v519 = vadd.f32 %v259, %v455
  %v520 = vadd.f32 %v260, %v456
  %v521 = vadd.f32 %v261, %v457
  %v522 = vadd.f32 %v262, %v458
  %v523 = vadd.f32 %v263, %v459
  %v524 = vadd.f32 %v264, %v460
  %v525 = vadd.f32 %v265, %v461
  %v526 = vadd.f32 %v266, %v462
  %v527 = vadd.f32 %v267, %v463
  %v528 = vadd.f32 %v268, %v464
  %v529 = vadd.f32 %v269, %v465
  %v530 = vadd.f32 %v270, %v466
  %v531 = vadd.f32 %v271, %v467
  %v532 = vadd.f32 %v272, %v468
  %v533 = vadd.f32 %v273, %v469
  %v534 = vadd.f32 %v274, %v470
  %v535 = vadd.f32 %v275, %v471
  %v536 = vadd.f32 %v276, %v472
  %v537 = vadd.f32 %v277, %v473
  %v538 = vadd.f32 %v278, %v474
  %v539 = vadd.f32 %v279, %v475
  %v540 = vadd.f32 %v280, %v476
  %v541 = vadd.f32 %v281, %v477
  %v542 = vadd.f32 %v282, %v478
  %v543 = vadd.f32 %v283, %v479
  %v544 = vadd.f32 %v284, %v480
  %v545 = vadd.f32 %v285, %v481
  %v546 = vadd.f32 %v286, %v482
  %v547 = vld [vmem:[%s5] sm:$0x1]
  %v549 = vperm.slane %v547, 0
  %v551 = vadd.f32 %v483, %v549
  %v552 = vadd.f32 %v484, %v549
  %v553 = vadd.f32 %v485, %v549
  %v554 = vadd.f32 %v486, %v549
  %v555 = vadd.f32 %v487, %v549
  %v556 = vadd.f32 %v488, %v549
  %v557 = vadd.f32 %v489, %v549
  %v558 = vadd.f32 %v490, %v549
  %v559 = vadd.f32 %v491, %v549
  %v560 = vadd.f32 %v492, %v549
  %v561 = vadd.f32 %v493, %v549
  %v562 = vadd.f32 %v494, %v549
  %v563 = vadd.f32 %v495, %v549
  %v564 = vadd.f32 %v496, %v549
  %v565 = vadd.f32 %v497, %v549
  %v566 = vadd.f32 %v498, %v549
  %v567 = vadd.f32 %v499, %v549
  %v568 = vadd.f32 %v500, %v549
  %v569 = vadd.f32 %v501, %v549
  %v570 = vadd.f32 %v502, %v549
  %v571 = vadd.f32 %v503, %v549
  %v572 = vadd.f32 %v504, %v549
  %v573 = vadd.f32 %v505, %v549
  %v574 = vadd.f32 %v506, %v549
  %v575 = vadd.f32 %v507, %v549
  %v576 = vadd.f32 %v508, %v549
  %v577 = vadd.f32 %v509, %v549
  %v578 = vadd.f32 %v510, %v549
  %v579 = vadd.f32 %v511, %v549
  %v580 = vadd.f32 %v512, %v549
  %v581 = vadd.f32 %v513, %v549
  %v582 = vadd.f32 %v514, %v549
  %v583 = vadd.f32 %v515, %v549
  %v584 = vadd.f32 %v516, %v549
  %v585 = vadd.f32 %v517, %v549
  %v586 = vadd.f32 %v518, %v549
  %v587 = vadd.f32 %v519, %v549
  %v588 = vadd.f32 %v520, %v549
  %v589 = vadd.f32 %v521, %v549
  %v590 = vadd.f32 %v522, %v549
  %v591 = vadd.f32 %v523, %v549
  %v592 = vadd.f32 %v524, %v549
  %v593 = vadd.f32 %v525, %v549
  %v594 = vadd.f32 %v526, %v549
  %v595 = vadd.f32 %v527, %v549
  %v596 = vadd.f32 %v528, %v549
  %v597 = vadd.f32 %v529, %v549
  %v598 = vadd.f32 %v530, %v549
  %v599 = vadd.f32 %v531, %v549
  %v600 = vadd.f32 %v532, %v549
  %v601 = vadd.f32 %v533, %v549
  %v602 = vadd.f32 %v534, %v549
  %v603 = vadd.f32 %v535, %v549
  %v604 = vadd.f32 %v536, %v549
  %v605 = vadd.f32 %v537, %v549
  %v606 = vadd.f32 %v538, %v549
  %v607 = vadd.f32 %v539, %v549
  %v608 = vadd.f32 %v540, %v549
  %v609 = vadd.f32 %v541, %v549
  %v610 = vadd.f32 %v542, %v549
  %v611 = vadd.f32 %v543, %v549
  %v612 = vadd.f32 %v544, %v549
  %v613 = vadd.f32 %v545, %v549
  %v614 = vadd.f32 %v546, %v549
  %v615 = vmax.f32 %v551, 0.0
  %v616 = vmax.f32 %v552, 0.0
  %v617 = vmax.f32 %v553, 0.0
  %v618 = vmax.f32 %v554, 0.0
  %v619 = vmax.f32 %v555, 0.0
  %v620 = vmax.f32 %v556, 0.0
  %v621 = vmax.f32 %v557, 0.0
  %v622 = vmax.f32 %v558, 0.0
  %v623 = vmax.f32 %v559, 0.0
  %v624 = vmax.f32 %v560, 0.0
  %v625 = vmax.f32 %v561, 0.0
  %v626 = vmax.f32 %v562, 0.0
  %v627 = vmax.f32 %v563, 0.0
  %v628 = vmax.f32 %v564, 0.0
  %v629 = vmax.f32 %v565, 0.0
  %v630 = vmax.f32 %v566, 0.0
  %v631 = vmax.f32 %v567, 0.0
  %v632 = vmax.f32 %v568, 0.0
  %v633 = vmax.f32 %v569, 0.0
  %v634 = vmax.f32 %v570, 0.0
  %v635 = vmax.f32 %v571, 0.0
  %v636 = vmax.f32 %v572, 0.0
  %v637 = vmax.f32 %v573, 0.0
  %v638 = vmax.f32 %v574, 0.0
  %v639 = vmax.f32 %v575, 0.0
  %v640 = vmax.f32 %v576, 0.0
  %v641 = vmax.f32 %v577, 0.0
  %v642 = vmax.f32 %v578, 0.0
  %v643 = vmax.f32 %v579, 0.0
  %v644 = vmax.f32 %v580, 0.0
  %v645 = vmax.f32 %v581, 0.0
  %v646 = vmax.f32 %v582, 0.0
  %v647 = vmax.f32 %v583, 0.0
  %v648 = vmax.f32 %v584, 0.0
  %v649 = vmax.f32 %v585, 0.0
  %v650 = vmax.f32 %v586, 0.0
  %v651 = vmax.f32 %v587, 0.0
  %v652 = vmax.f32 %v588, 0.0
  %v653 = vmax.f32 %v589, 0.0
  %v654 = vmax.f32 %v590, 0.0
  %v655 = vmax.f32 %v591, 0.0
  %v656 = vmax.f32 %v592, 0.0
  %v657 = vmax.f32 %v593, 0.0
  %v658 = vmax.f32 %v594, 0.0
  %v659 = vmax.f32 %v595, 0.0
  %v660 = vmax.f32 %v596, 0.0
  %v661 = vmax.f32 %v597, 0.0
  %v662 = vmax.f32 %v598, 0.0
  %v663 = vmax.f32 %v599, 0.0
  %v664 = vmax.f32 %v600, 0.0
  %v665 = vmax.f32 %v601, 0.0
  %v666 = vmax.f32 %v602, 0.0
  %v667 = vmax.f32 %v603, 0.0
  %v668 = vmax.f32 %v604, 0.0
  %v669 = vmax.f32 %v605, 0.0
  %v670 = vmax.f32 %v606, 0.0
  %v671 = vmax.f32 %v607, 0.0
  %v672 = vmax.f32 %v608, 0.0
  %v673 = vmax.f32 %v609, 0.0
  %v674 = vmax.f32 %v610, 0.0
  %v675 = vmax.f32 %v611, 0.0
  %v676 = vmax.f32 %v612, 0.0
  %v677 = vmax.f32 %v613, 0.0
  %v678 = vmax.f32 %v614, 0.0
  %679 = vst [vmem:[%s6] sm:$0xff] %v615
  %680 = vst [vmem:[%s6 + $0x8] sm:$0xff] %v616
  %681 = vst [vmem:[%s6 + $0x10] sm:$0xff] %v617
  %682 = vst [vmem:[%s6 + $0x18] sm:$0xff] %v618
  %683 = vst [vmem:[%s6 + $0x20] sm:$0xff] %v619
  %684 = vst [vmem:[%s6 + $0x28] sm:$0xff] %v620
  %685 = vst [vmem:[%s6 + $0x30] sm:$0xff] %v621
  %686 = vst [vmem:[%s6 + $0x38] sm:$0xff] %v622
  %687 = vst [vmem:[%s6 + $0x40] sm:$0xff] %v623
  %688 = vst [vmem:[%s6 + $0x48] sm:$0xff] %v624
  %689 = vst [vmem:[%s6 + $0x50] sm:$0xff] %v625
  %690 = vst [vmem:[%s6 + $0x58] sm:$0xff] %v626
  %691 = vst [vmem:[%s6 + $0x60] sm:$0xff] %v627
  %692 = vst [vmem:[%s6 + $0x68] sm:$0xff] %v628
  %693 = vst [vmem:[%s6 + $0x70] sm:$0xff] %v629
  %694 = vst [vmem:[%s6 + $0x78] sm:$0xff] %v630
  %695 = vst [vmem:[%s6 + $0x80] sm:$0xff] %v631
  %696 = vst [vmem:[%s6 + $0x88] sm:$0xff] %v632
  %697 = vst [vmem:[%s6 + $0x90] sm:$0xff] %v633
  %698 = vst [vmem:[%s6 + $0x98] sm:$0xff] %v634
  %699 = vst [vmem:[%s6 + $0xa0] sm:$0xff] %v635
  %700 = vst [vmem:[%s6 + $0xa8] sm:$0xff] %v636
  %701 = vst [vmem:[%s6 + $0xb0] sm:$0xff] %v637
  %702 = vst [vmem:[%s6 + $0xb8] sm:$0xff] %v638
  %703 = vst [vmem:[%s6 + $0xc0] sm:$0xff] %v639
  %704 = vst [vmem:[%s6 + $0xc8] sm:$0xff] %v640
  %705 = vst [vmem:[%s6 + $0xd0] sm:$0xff] %v641
  %706 = vst [vmem:[%s6 + $0xd8] sm:$0xff] %v642
  %707 = vst [vmem:[%s6 + $0xe0] sm:$0xff] %v643
  %708 = vst [vmem:[%s6 + $0xe8] sm:$0xff] %v644
  %709 = vst [vmem:[%s6 + $0xf0] sm:$0xff] %v645
  %710 = vst [vmem:[%s6 + $0xf8] sm:$0xff] %v646
  %711 = vst [vmem:[%s6 + $0x100] sm:$0xff] %v647
  %712 = vst [vmem:[%s6 + $0x108] sm:$0xff] %v648
  %713 = vst [vmem:[%s6 + $0x110] sm:$0xff] %v649
  %714 = vst [vmem:[%s6 + $0x118] sm:$0xff] %v650
  %715 = vst [vmem:[%s6 + $0x120] sm:$0xff] %v651
  %716 = vst [vmem:[%s6 + $0x128] sm:$0xff] %v652
  %717 = vst [vmem:[%s6 + $0x130] sm:$0xff] %v653
  %718 = vst [vmem:[%s6 + $0x138] sm:$0xff] %v654
  %719 = vst [vmem:[%s6 + $0x140] sm:$0xff] %v655
  %720 = vst [vmem:[%s6 + $0x148] sm:$0xff] %v656
  %721 = vst [vmem:[%s6 + $0x150] sm:$0xff] %v657
  %722 = vst [vmem:[%s6 + $0x158] sm:$0xff] %v658
  %723 = vst [vmem:[%s6 + $0x160] sm:$0xff] %v659
  %724 = vst [vmem:[%s6 + $0x168] sm:$0xff] %v660
  %725 = vst [vmem:[%s6 + $0x170] sm:$0xff] %v661
  %726 = vst [vmem:[%s6 + $0x178] sm:$0xff] %v662
  %727 = vst [vmem:[%s6 + $0x180] sm:$0xff] %v663
  %728 = vst [vmem:[%s6 + $0x188] sm:$0xff] %v664
  %729 = vst [vmem:[%s6 + $0x190] sm:$0xff] %v665
  %730 = vst [vmem:[%s6 + $0x198] sm:$0xff] %v666
  %731 = vst [vmem:[%s6 + $0x1a0] sm:$0xff] %v667
  %732 = vst [vmem:[%s6 + $0x1a8] sm:$0xff] %v668
  %733 = vst [vmem:[%s6 + $0x1b0] sm:$0xff] %v669
  %734 = vst [vmem:[%s6 + $0x1b8] sm:$0xff] %v670
  %735 = vst [vmem:[%s6 + $0x1c0] sm:$0xff] %v671
  %736 = vst [vmem:[%s6 + $0x1c8] sm:$0xff] %v672
  %737 = vst [vmem:[%s6 + $0x1d0] sm:$0xff] %v673
  %738 = vst [vmem:[%s6 + $0x1d8] sm:$0xff] %v674
  %739 = vst [vmem:[%s6 + $0x1e0] sm:$0xff] %v675
  %740 = vst [vmem:[%s6 + $0x1e8] sm:$0xff] %v676
  %741 = vst [vmem:[%s6 + $0x1f0] sm:$0xff] %v677
  %742 = vst [vmem:[%s6 + $0x1f8] sm:$0xff] %v678
  // Predicated region
  $region26: #{bottleneck_forward.13} parent=0 // pred_check
    _
  $region27: #{bottleneck_forward.13} parent=0 // pred_check_branch
    %744 = sbr.rel (0) target = $region29
  $region28: #{bottleneck_forward.13} parent=0 // pred_region
    _
  $region29: #{bottleneck_forward.13} parent=0 // pred_fallthru
    _
  // Predicated region
  $region30: #{bottleneck_forward.13} parent=0 // pred_check
    _
  $region31: #{bottleneck_forward.13} parent=0 // pred_check_branch
    %746 = sbr.rel (0) target = $region33
  $region32: #{bottleneck_forward.13} parent=0 // pred_region
    _
  $region33: #{bottleneck_forward.13} parent=0 // pred_fallthru
    _

// kernel: bottleneck_forward.9
$region0: #{bottleneck_forward.9}
  #allocation0 [shape = 'u32[]', space=smem, size = 0x4, offset = 0x4, fixed_abs, tag = 'smem constant byte address 0x4 - core index']
  #allocation1 [shape = 'u32[72,128]{1,0:T(1,128)}', space=vmem, size = 0x9000, scoped, tag = 'internal scratch']
  #allocation2 [shape = 'f32[256,128]{1,0:T(8,128)}', space=vmem, size = 0x20000, scoped, tag = 'scratch operand']
  %s0 = inlined_call_operand.vmem [shape: bf16[2,18,18,128], index: 0, kind: input, shape index: {}]
  %s1 = inlined_call_operand.vmem [shape: bf16[9,128,128], index: 1, kind: input, shape index: {}]
  %s2 = inlined_call_operand.vmem [shape: bf16[512,128], index: 2, kind: output, shape index: {0}]
  %s3 = inlined_call_operand.vmem [shape: f32[2,2,128], index: 3, kind: output, shape index: {1}]
  %4 = xla_tuple %s2, %s3
  %s5 = sld [smem:[#allocation0]]
  $region49: #{bottleneck_forward.9} parent=0
    _
  %s7 = ssub.s32 1, %s5
  %s8 = scalar_select 0, %s7, %s5
  loop: start=0, step=1, limit=4
  $region2: #{bottleneck_forward.9} parent=0 // loop_pre_header
    _
  $region3: #{bottleneck_forward.9} parent=0 // loop_header
    %s10 = sphi 0, %s14
    %p11 = scmp.ge.s32.totalorder %s10, 4
    %s17 = sphi 0, %s36
    %s18 = sphi 0, %s32
    %s19 = sphi 0, %s28
    %s20 = sphi 0, %s17
    %s21 = sphi 0, %s18
    %s22 = sphi 0, %s19
    %s23 = sphi 0, %s20
    %s24 = sphi 0, %s21
    %s25 = sphi 0, %s22
    %s39 = sphi 0, %s41
    %s42 = sphi 0, %s39
    %s43 = sphi 0, %s42
    %s59 = sphi 0, %s43
    %s65 = sphi 0, %s67
    %s68 = sphi 0, %s65
    %s69 = sphi 0, %s68
    %s85 = sphi 0, %s69
    %s95 = sphi 0, %s97
    %s98 = sphi 0, %s95
    %s99 = sphi 0, %s98
    %s115 = sphi 0, %s99
    %s125 = sphi 0, %s127
    %s128 = sphi 0, %s125
    %s129 = sphi 0, %s128
    %s145 = sphi 0, %s129
  $region4: #{bottleneck_forward.9} parent=0 // loop_header_branch
    %13 = sbr.rel (%p11) target = $region8
  $region5: #{bottleneck_forward.9} parent=0 // loop_body
    %s15 = ssub.s32 %s10, 1
    %s16 = ssub.s32 %s10, 2
    %s26 = sadd.s32 1, %s19
    %p27 = scmp.ge.s32.totalorder %s26, 1
    %s28 = scalar_select %p27, 0, %s26
    %s29 = sadd.s32 1, %s18
    %s30 = scalar_select %p27, %s29, %s18
    %p31 = scmp.ge.s32.totalorder %s30, 1
    %s32 = scalar_select %p31, 0, %s30
    %s33 = sadd.s32 1, %s17
    %s34 = scalar_select %p31, %s33, %s17
    %p35 = scmp.ge.s32.totalorder %s34, 2
    %s36 = scalar_select %p35, 0, %s34
    %s37 = ssub.s32 %s17, %s36
    %p38 = scmp.eq.s32.totalorder %s37, 0
    %s40 = sadd.s32 %s39, 1
    %s41 = scalar_select %p38, %s39, %s40
    %p44 = pneg %p38
    %p45 = scmp.eq.s32.totalorder %s10, 1
    %p46 = por %p44, %p45
    %p47 = scmp.ne.s32.totalorder %s39, %s42
    %p48 = scmp.eq.s32.totalorder %s10, 0
    %p49 = por %p47, %p48
    %p50 = scmp.ne.s32.totalorder %s39, %s42
    %p51 = scmp.eq.s32.totalorder %s15, 1
    %p52 = por %p50, %p51
    %p53 = scmp.ne.s32.totalorder %s42, %s43
    %p54 = scmp.eq.s32.totalorder %s15, 0
    %p55 = por %p53, %p54
    %p56 = scmp.ne.s32.totalorder %s42, %s43
    %p57 = scmp.eq.s32.totalorder %s16, 1
    %p58 = por %p56, %p57
    %p60 = scmp.ne.s32.totalorder %s43, %s59
    %p61 = scmp.eq.s32.totalorder %s16, 0
    %p62 = por %p60, %p61
    %s63 = ssub.s32 %s19, %s28
    %p64 = scmp.eq.s32.totalorder %s63, 0
    %s66 = sadd.s32 %s65, 1
    %s67 = scalar_select %p64, %s65, %s66
    %p70 = pneg %p64
    %p71 = scmp.eq.s32.totalorder %s10, 1
    %p72 = por %p70, %p71
    %p73 = scmp.ne.s32.totalorder %s65, %s68
    %p74 = scmp.eq.s32.totalorder %s10, 0
    %p75 = por %p73, %p74
    %p76 = scmp.ne.s32.totalorder %s65, %s68
    %p77 = scmp.eq.s32.totalorder %s15, 1
    %p78 = por %p76, %p77
    %p79 = scmp.ne.s32.totalorder %s68, %s69
    %p80 = scmp.eq.s32.totalorder %s15, 0
    %p81 = por %p79, %p80
    %p82 = scmp.ne.s32.totalorder %s68, %s69
    %p83 = scmp.eq.s32.totalorder %s16, 1
    %p84 = por %p82, %p83
    %p86 = scmp.ne.s32.totalorder %s69, %s85
    %p87 = scmp.eq.s32.totalorder %s16, 0
    %p88 = por %p86, %p87
    %s89 = sadd.s32 %s17, %s18
    %s90 = sadd.s32 %s36, %s32
    %s91 = ssub.s32 %s89, %s90
    %s92 = ssub.s32 %s19, %s28
    %s93 = sor.u32 %s91, %s92
    %p94 = scmp.eq.s32.totalorder %s93, 0
    %s96 = sadd.s32 %s95, 1
    %s97 = scalar_select %p94, %s95, %s96
    %p100 = pneg %p94
    %p101 = scmp.eq.s32.totalorder %s10, 1
    %p102 = por %p100, %p101
    %p103 = scmp.ne.s32.totalorder %s95, %s98
    %p104 = scmp.eq.s32.totalorder %s10, 0
    %p105 = por %p103, %p104
    %p106 = scmp.ne.s32.totalorder %s95, %s98
    %p107 = scmp.eq.s32.totalorder %s15, 1
    %p108 = por %p106, %p107
    %p109 = scmp.ne.s32.totalorder %s98, %s99
    %p110 = scmp.eq.s32.totalorder %s15, 0
    %p111 = por %p109, %p110
    %p112 = scmp.ne.s32.totalorder %s98, %s99
    %p113 = scmp.eq.s32.totalorder %s16, 1
    %p114 = por %p112, %p113
    %p116 = scmp.ne.s32.totalorder %s99, %s115
    %p117 = scmp.eq.s32.totalorder %s16, 0
    %p118 = por %p116, %p117
    %s119 = sadd.s32 %s17, %s18
    %s120 = sadd.s32 %s36, %s32
    %s121 = ssub.s32 %s119, %s120
    %s122 = ssub.s32 %s19, %s28
    %s123 = sor.u32 %s121, %s122
    %p124 = scmp.eq.s32.totalorder %s123, 0
    %s126 = sadd.s32 %s125, 1
    %s127 = scalar_select %p124, %s125, %s126
    %p130 = pneg %p124
    %p131 = scmp.eq.s32.totalorder %s10, 1
    %p132 = por %p130, %p131
    %p133 = scmp.ne.s32.totalorder %s125, %s128
    %p134 = scmp.eq.s32.totalorder %s10, 0
    %p135 = por %p133, %p134
    %p136 = scmp.ne.s32.totalorder %s125, %s128
    %p137 = scmp.eq.s32.totalorder %s15, 1
    %p138 = por %p136, %p137
    %p139 = scmp.ne.s32.totalorder %s128, %s129
    %p140 = scmp.eq.s32.totalorder %s15, 0
    %p141 = por %p139, %p140
    %p142 = scmp.ne.s32.totalorder %s128, %s129
    %p143 = scmp.eq.s32.totalorder %s16, 1
    %p144 = por %p142, %p143
    %p146 = scmp.ne.s32.totalorder %s129, %s145
    %p147 = scmp.eq.s32.totalorder %s16, 0
    %p148 = por %p146, %p147
    %p149 = scmp.le.s32.totalorder 1, %s10
    %p150 = scmp.lt.s32.totalorder %s10, 3
    %p151 = pnand %p149, %p150
    %p152 = pneg %p151
    // Predicated region
    $region9: #{bottleneck_forward.9} parent=5 // pred_check
      _
    $region10: #{bottleneck_forward.9} parent=5 // pred_check_branch
      %154 = sbr.rel (%p151) target = $region12
    $region11: #{bottleneck_forward.9} parent=5 // pred_region
      %s155 = ssub.s32 %s10, 1
      // Predicated region
      $region13: #{bottleneck_forward.9} parent=11 // pred_check
        %p156 = pneg %p81
      $region14: #{bottleneck_forward.9} parent=11 // pred_check_branch
        %158 = sbr.rel (%p156) target = $region16
      $region15: #{bottleneck_forward.9} parent=11 // pred_region
        %p159 = scmp.lt.s32.totalorder %s22, 0
        %s160 = scalar_select %p159, %s22, 0
        %s161 = smul.addr %s160, 4
        %s162 = scalar_lea.vmem %s1, %s161
      $region16: #{bottleneck_forward.9} parent=11 // pred_fallthru
        _
    $region12: #{bottleneck_forward.9} parent=5 // pred_fallthru
      _
    %p163 = scmp.lt.s32.totalorder %s10, 2
    // Predicated region
    $region17: #{bottleneck_forward.9} parent=5 // pred_check
      %p164 = pneg %p163
    $region18: #{bottleneck_forward.9} parent=5 // pred_check_branch
      %166 = sbr.rel (%p164) target = $region20
    $region19: #{bottleneck_forward.9} parent=5 // pred_region
      // Predicated region
      $region21: #{bottleneck_forward.9} parent=19 // pred_check
        %p167 = pneg %p49
      $region22: #{bottleneck_forward.9} parent=19 // pred_check_branch
        %169 = sbr.rel (%p167) target = $region24
      $region23: #{bottleneck_forward.9} parent=19 // pred_region
        %p170 = scmp.lt.s32.totalorder %s17, 1
        %s171 = scalar_select %p170, %s17, 1
        %s172 = smul.addr %s171, 54
        %s173 = smul.addr %s172, 4
        %s174 = scalar_lea.vmem %s0, %s173
      $region24: #{bottleneck_forward.9} parent=19 // pred_fallthru
        _
    $region20: #{bottleneck_forward.9} parent=5 // pred_fallthru
      _
    %p175 = scmp.le.s32.totalorder 1, %s10
    %p176 = scmp.lt.s32.totalorder %s10, 3
    %p177 = pnand %p175, %p176
    %p178 = pneg %p177
    // Predicated region
    $region25: #{bottleneck_forward.9} parent=5 // pred_check
      _
    $region26: #{bottleneck_forward.9} parent=5 // pred_check_branch
      %180 = sbr.rel (%p177) target = $region28
    $region27: #{bottleneck_forward.9} parent=5 // pred_region
      %s181 = ssub.s32 %s10, 1
      %p182 = scmp.lt.s32.totalorder %s20, 1
      %s183 = scalar_select %p182, %s20, 1
      %s184 = smul.addr %s183, 54
      %s185 = smul.addr %s184, 4
      %s186 = scalar_lea.vmem %s0, %s185
      %p187 = pneg %p55
      %p188 = pneg %p52
      %p189 = scmp.lt.s32.totalorder %s22, 0
      %s190 = scalar_select %p189, %s22, 0
      %s191 = smul.addr %s190, 4
      %s192 = scalar_lea.vmem %s1, %s191
      %p193 = pneg %p81
      %p194 = pneg %p78
      %p195 = pneg %p111
      %p196 = pneg %p108
      %s197 = sadd.s32 %s20, %s21
      %s198 = smul.u32 32, %s197
      %p199 = scmp.lt.s32.totalorder %s198, 63
      %s200 = scalar_select %p199, %s198, 63
      %p201 = scmp.lt.s32.totalorder %s22, 0
      %s202 = scalar_select %p201, %s22, 0
      %s203 = sadd.s32 %s202, %s200
      %s204 = smul.addr %s203, 4
      %s205 = scalar_lea.vmem %s2, %s204
      %p206 = pneg %p141
      %p207 = pneg %p138
      %s208 = sadd.s32 %s20, %s21
      %p209 = scmp.lt.s32.totalorder %s208, 1
      %s210 = scalar_select %p209, %s208, 1
      %p211 = scmp.lt.s32.totalorder %s22, 0
      %s212 = scalar_select %p211, %s22, 0
      %s213 = sadd.s32 %s212, %s210
      %s214 = smul.addr %s213, 2
      %s215 = scalar_lea.vmem %s3, %s214
      %p216 = scmp.lt.s32.totalorder %s20, 1
      %s217 = scalar_select %p216, %s20, 1
      %s218 = smul.addr %s217, 54
      %s219 = smul.addr %s218, 4
      %s220 = scalar_lea.vmem %s0, %s219
      %p221 = scmp.lt.s32.totalorder %s22, 0
      %s222 = scalar_select %p221, %s22, 0
      %s223 = smul.addr %s222, 4
      %s224 = scalar_lea.vmem %s1, %s223
      %s225 = sadd.s32 %s20, %s21
      %s226 = smul.u32 32, %s225
      %p227 = scmp.lt.s32.totalorder %s226, 63
      %s228 = scalar_select %p227, %s226, 63
      %p229 = scmp.lt.s32.totalorder %s22, 0
      %s230 = scalar_select %p229, %s22, 0
      %s231 = sadd.s32 %s230, %s228
      %s232 = smul.addr %s231, 4
      %s233 = scalar_lea.vmem %s2, %s232
      %s234 = sadd.s32 %s20, %s21
      %s235 = smul.u32 32, %s234
      %s236 = sadd.s32 %s20, %s21
      %p237 = scmp.lt.s32.totalorder %s236, 1
      %s238 = scalar_select %p237, %s236, 1
      %p239 = scmp.lt.s32.totalorder %s22, 0
      %s240 = scalar_select %p239, %s22, 0
      %s241 = sadd.s32 %s240, %s238
      %s242 = smul.addr %s241, 2
      %s243 = scalar_lea.vmem %s3, %s242
      %s244 = sadd.s32 %s20, %s21
      %245 = vst [vmem:[#allocation2] sm:$0xff] 0.0
      %246 = vst [vmem:[#allocation2 + $0x8] sm:$0xff] 0.0
      %247 = vst [vmem:[#allocation2 + $0x10] sm:$0xff] 0.0
      %248 = vst [vmem:[#allocation2 + $0x18] sm:$0xff] 0.0
      %249 = vst [vmem:[#allocation2 + $0x20] sm:$0xff] 0.0
      %250 = vst [vmem:[#allocation2 + $0x28] sm:$0xff] 0.0
      %251 = vst [vmem:[#allocation2 + $0x30] sm:$0xff] 0.0
      %252 = vst [vmem:[#allocation2 + $0x38] sm:$0xff] 0.0
      %253 = vst [vmem:[#allocation2 + $0x40] sm:$0xff] 0.0
      %254 = vst [vmem:[#allocation2 + $0x48] sm:$0xff] 0.0
      %255 = vst [vmem:[#allocation2 + $0x50] sm:$0xff] 0.0
      %256 = vst [vmem:[#allocation2 + $0x58] sm:$0xff] 0.0
      %257 = vst [vmem:[#allocation2 + $0x60] sm:$0xff] 0.0
      %258 = vst [vmem:[#allocation2 + $0x68] sm:$0xff] 0.0
      %259 = vst [vmem:[#allocation2 + $0x70] sm:$0xff] 0.0
      %260 = vst [vmem:[#allocation2 + $0x78] sm:$0xff] 0.0
      %261 = vst [vmem:[#allocation2 + $0x80] sm:$0xff] 0.0
      %262 = vst [vmem:[#allocation2 + $0x88] sm:$0xff] 0.0
      %263 = vst [vmem:[#allocation2 + $0x90] sm:$0xff] 0.0
      %264 = vst [vmem:[#allocation2 + $0x98] sm:$0xff] 0.0
      %265 = vst [vmem:[#allocation2 + $0xa0] sm:$0xff] 0.0
      %266 = vst [vmem:[#allocation2 + $0xa8] sm:$0xff] 0.0
      %267 = vst [vmem:[#allocation2 + $0xb0] sm:$0xff] 0.0
      %268 = vst [vmem:[#allocation2 + $0xb8] sm:$0xff] 0.0
      %269 = vst [vmem:[#allocation2 + $0xc0] sm:$0xff] 0.0
      %270 = vst [vmem:[#allocation2 + $0xc8] sm:$0xff] 0.0
      %271 = vst [vmem:[#allocation2 + $0xd0] sm:$0xff] 0.0
      %272 = vst [vmem:[#allocation2 + $0xd8] sm:$0xff] 0.0
      %273 = vst [vmem:[#allocation2 + $0xe0] sm:$0xff] 0.0
      %274 = vst [vmem:[#allocation2 + $0xe8] sm:$0xff] 0.0
      %275 = vst [vmem:[#allocation2 + $0xf0] sm:$0xff] 0.0
      %276 = vst [vmem:[#allocation2 + $0xf8] sm:$0xff] 0.0
      %v277 = vld [vmem:[%s220] sm:$0xf]
      %v278 = vld [vmem:[%s220 + $0x4] sm:$0xf]
      %v279 = vld [vmem:[%s220 + $0xc] sm:$0xf]
      %v280 = vld [vmem:[%s220 + $0x10] sm:$0xf]
      %v281 = vld [vmem:[%s220 + $0x18] sm:$0xf]
      %v282 = vld [vmem:[%s220 + $0x1c] sm:$0xf]
      %v283 = vld [vmem:[%s220 + $0x24] sm:$0xf]
      %v284 = vld [vmem:[%s220 + $0x28] sm:$0xf]
      %v285 = vld [vmem:[%s220 + $0x30] sm:$0xf]
      %v286 = vld [vmem:[%s220 + $0x34] sm:$0xf]
      %v287 = vld [vmem:[%s220 + $0x3c] sm:$0xf]
      %v288 = vld [vmem:[%s220 + $0x40] sm:$0xf]
      %v289 = vld [vmem:[%s220 + $0x48] sm:$0xf]
      %v290 = vld [vmem:[%s220 + $0x4c] sm:$0xf]
      %v291 = vld [vmem:[%s220 + $0x54] sm:$0xf]
      %v292 = vld [vmem:[%s220 + $0x58] sm:$0xf]
      %v293 = vld [vmem:[%s220 + $0x60] sm:$0xf]
      %v294 = vld [vmem:[%s220 + $0x64] sm:$0xf]
      %v295 = vld [vmem:[%s220 + $0x6c] sm:$0xf]
      %v296 = vld [vmem:[%s220 + $0x70] sm:$0xf]
      %v297 = vld [vmem:[%s220 + $0x78] sm:$0xf]
      %v298 = vld [vmem:[%s220 + $0x7c] sm:$0xf]
      %v299 = vld [vmem:[%s220 + $0x84] sm:$0xf]
      %v300 = vld [vmem:[%s220 + $0x88] sm:$0xf]
      %v301 = vld [vmem:[%s220 + $0x90] sm:$0xf]
      %v302 = vld [vmem:[%s220 + $0x94] sm:$0xf]
      %v303 = vld [vmem:[%s220 + $0x9c] sm:$0xf]
      %v304 = vld [vmem:[%s220 + $0xa0] sm:$0xf]
      %v305 = vld [vmem:[%s220 + $0xa8] sm:$0xf]
      %v306 = vld [vmem:[%s220 + $0xac] sm:$0xf]
      %v307 = vld [vmem:[%s220 + $0xb4] sm:$0xf]
      %v308 = vld [vmem:[%s220 + $0xb8] sm:$0xf]
      %v309 = vld [vmem:[#allocation2] sm:$0xff]
      %v310 = vld [vmem:[#allocation2 + $0x8] sm:$0xff]
      %v311 = vld [vmem:[#allocation2 + $0x10] sm:$0xff]
      %v312 = vld [vmem:[#allocation2 + $0x18] sm:$0xff]
      %v313 = vld [vmem:[#allocation2 + $0x20] sm:$0xff]
      %v314 = vld [vmem:[#allocation2 + $0x28] sm:$0xff]
      %v315 = vld [vmem:[#allocation2 + $0x30] sm:$0xff]
      %v316 = vld [vmem:[#allocation2 + $0x38] sm:$0xff]
      %v317 = vld [vmem:[#allocation2 + $0x40] sm:$0xff]
      %v318 = vld [vmem:[#allocation2 + $0x48] sm:$0xff]
      %v319 = vld [vmem:[#allocation2 + $0x50] sm:$0xff]
      %v320 = vld [vmem:[#allocation2 + $0x58] sm:$0xff]
      %v321 = vld [vmem:[#allocation2 + $0x60] sm:$0xff]
      %v322 = vld [vmem:[#allocation2 + $0x68] sm:$0xff]
      %v323 = vld [vmem:[#allocation2 + $0x70] sm:$0xff]
      %v324 = vld [vmem:[#allocation2 + $0x78] sm:$0xff]
      %v325 = vld [vmem:[#allocation2 + $0x80] sm:$0xff]
      %v326 = vld [vmem:[#allocation2 + $0x88] sm:$0xff]
      %v327 = vld [vmem:[#allocation2 + $0x90] sm:$0xff]
      %v328 = vld [vmem:[#allocation2 + $0x98] sm:$0xff]
      %v329 = vld [vmem:[#allocation2 + $0xa0] sm:$0xff]
      %v330 = vld [vmem:[#allocation2 + $0xa8] sm:$0xff]
      %v331 = vld [vmem:[#allocation2 + $0xb0] sm:$0xff]
      %v332 = vld [vmem:[#allocation2 + $0xb8] sm:$0xff]
      %v333 = vld [vmem:[#allocation2 + $0xc0] sm:$0xff]
      %v334 = vld [vmem:[#allocation2 + $0xc8] sm:$0xff]
      %v335 = vld [vmem:[#allocation2 + $0xd0] sm:$0xff]
      %v336 = vld [vmem:[#allocation2 + $0xd8] sm:$0xff]
      %v337 = vld [vmem:[#allocation2 + $0xe0] sm:$0xff]
      %v338 = vld [vmem:[#allocation2 + $0xe8] sm:$0xff]
      %v339 = vld [vmem:[#allocation2 + $0xf0] sm:$0xff]
      %v340 = vld [vmem:[#allocation2 + $0xf8] sm:$0xff]
      %v341 = vld [vmem:[%s224] sm:$0xf]
      %v342 = vld [vmem:[%s224 + $0x4] sm:$0xf]
      %v343 = vld [vmem:[%s224 + $0x8] sm:$0xf]
      %v344 = vld [vmem:[%s224 + $0xc] sm:$0xf]
      %v345 = vld [vmem:[%s224 + $0x10] sm:$0xf]
      %v346 = vld [vmem:[%s224 + $0x14] sm:$0xf]
      %v347 = vld [vmem:[%s224 + $0x18] sm:$0xf]
      %v348 = vld [vmem:[%s224 + $0x1c] sm:$0xf]
      %v349 = vld [vmem:[%s224 + $0x20] sm:$0xf]
      %v350 = vld [vmem:[%s224 + $0x24] sm:$0xf]
      %v351 = vld [vmem:[%s224 + $0x28] sm:$0xf]
      %v352 = vld [vmem:[%s224 + $0x2c] sm:$0xf]
      %v353 = vld [vmem:[%s224 + $0x30] sm:$0xf]
      %v354 = vld [vmem:[%s224 + $0x34] sm:$0xf]
      %v355 = vld [vmem:[%s224 + $0x38] sm:$0xf]
      %v356 = vld [vmem:[%s224 + $0x3c] sm:$0xf]
      %v389 = vunpack.c.l.b16 %v277
      %v390 = vunpack.c.l.b16 %v278
      %v391 = vunpack.c.l.b16 %v279
      %v392 = vunpack.c.l.b16 %v280
      %v393 = vunpack.c.l.b16 %v281
      %v394 = vunpack.c.l.b16 %v282
      %v395 = vunpack.c.l.b16 %v283
      %v396 = vunpack.c.l.b16 %v284
      %v397 = vunpack.c.l.b16 %v285
      %v398 = vunpack.c.l.b16 %v286
      %v399 = vunpack.c.l.b16 %v287
      %v400 = vunpack.c.l.b16 %v288
      %v401 = vunpack.c.l.b16 %v289
      %v402 = vunpack.c.l.b16 %v290
      %v403 = vunpack.c.l.b16 %v291
      %v404 = vunpack.c.l.b16 %v292
      %v405 = vunpack.c.l.b16 %v293
      %v406 = vunpack.c.l.b16 %v294
      %v407 = vunpack.c.l.b16 %v295
      %v408 = vunpack.c.l.b16 %v296
      %v409 = vunpack.c.l.b16 %v297
      %v410 = vunpack.c.l.b16 %v298
      %v411 = vunpack.c.l.b16 %v299
      %v412 = vunpack.c.l.b16 %v300
      %v413 = vunpack.c.l.b16 %v301
      %v414 = vunpack.c.l.b16 %v302
      %v415 = vunpack.c.l.b16 %v303
      %v416 = vunpack.c.l.b16 %v304
      %v417 = vunpack.c.l.b16 %v305
      %v418 = vunpack.c.l.b16 %v306
      %v419 = vunpack.c.l.b16 %v307
      %v420 = vunpack.c.l.b16 %v308
      %v421 = vpack.c.b16 %v390, %v389
      %v422 = vpack.c.b16 %v392, %v391
      %v423 = vpack.c.b16 %v394, %v393
      %v424 = vpack.c.b16 %v396, %v395
      %v425 = vpack.c.b16 %v398, %v397
      %v426 = vpack.c.b16 %v400, %v399
      %v427 = vpack.c.b16 %v402, %v401
      %v428 = vpack.c.b16 %v404, %v403
      %v429 = vpack.c.b16 %v406, %v405
      %v430 = vpack.c.b16 %v408, %v407
      %v431 = vpack.c.b16 %v410, %v409
      %v432 = vpack.c.b16 %v412, %v411
      %v433 = vpack.c.b16 %v414, %v413
      %v434 = vpack.c.b16 %v416, %v415
      %v435 = vpack.c.b16 %v418, %v417
      %v436 = vpack.c.b16 %v420, %v419
      %v469 = vunpack.c.l.b16 %v341
      %v470 = vunpack.c.l.b16 %v342
      %v471 = vunpack.c.l.b16 %v343
      %v472 = vunpack.c.l.b16 %v344
      %v473 = vunpack.c.l.b16 %v345
      %v474 = vunpack.c.l.b16 %v346
      %v475 = vunpack.c.l.b16 %v347
      %v476 = vunpack.c.l.b16 %v348
      %v477 = vunpack.c.l.b16 %v349
      %v478 = vunpack.c.l.b16 %v350
      %v479 = vunpack.c.l.b16 %v351
      %v480 = vunpack.c.l.b16 %v352
      %v481 = vunpack.c.l.b16 %v353
      %v482 = vunpack.c.l.b16 %v354
      %v483 = vunpack.c.l.b16 %v355
      %v484 = vunpack.c.l.b16 %v356
      %v485 = vpack.c.b16 %v470, %v469
      %v486 = vpack.c.b16 %v472, %v471
      %v487 = vpack.c.b16 %v474, %v473
      %v488 = vpack.c.b16 %v476, %v475
      %v489 = vpack.c.b16 %v478, %v477
      %v490 = vpack.c.b16 %v480, %v479
      %v491 = vpack.c.b16 %v482, %v481
      %v492 = vpack.c.b16 %v484, %v483
      %501 = vmatpush.bf16.msra.mxu0 %v492
      %502 = vmatpush.bf16.msra.mxu0 %v491
      %503 = vmatpush.bf16.msra.mxu0 %v490
      %504 = vmatpush.bf16.msra.mxu0 %v489
      %505 = vmatpush.bf16.msra.mxu0 %v488
      %506 = vmatpush.bf16.msra.mxu0 %v487
      %507 = vmatpush.bf16.msra.mxu0 %v486
      %508 = vmatpush.bf16.msra.mxu0 %v485
      %509 = vmatmul.bf16.gmra.mxu0 %v421
      %v510 = vpop.f32.mrf.mxu0
      %v511 = vadd.f32 0.0, %v510
      %v512 = vpop.f32.mrf.mxu0
      %v513 = vadd.f32 0.0, %v512
      %514 = vmatmul.bf16.gmra.mxu0 %v422
      %v515 = vpop.f32.mrf.mxu0
      %v516 = vadd.f32 0.0, %v515
      %v517 = vpop.f32.mrf.mxu0
      %v518 = vadd.f32 0.0, %v517
      %519 = vmatmul.bf16.gmra.mxu0 %v423
      %v520 = vpop.f32.mrf.mxu0
      %v521 = vadd.f32 0.0, %v520
      %v522 = vpop.f32.mrf.mxu0
      %v523 = vadd.f32 0.0, %v522
      %524 = vmatmul.bf16.gmra.mxu0 %v424
      %v525 = vpop.f32.mrf.mxu0
      %v526 = vadd.f32 0.0, %v525
      %v527 = vpop.f32.mrf.mxu0
      %v528 = vadd.f32 0.0, %v527
      %529 = vmatmul.bf16.gmra.mxu0 %v425
      %v530 = vpop.f32.mrf.mxu0
      %v531 = vadd.f32 0.0, %v530
      %v532 = vpop.f32.mrf.mxu0
      %v533 = vadd.f32 0.0, %v532
      %534 = vmatmul.bf16.gmra.mxu0 %v426
      %v535 = vpop.f32.mrf.mxu0
      %v536 = vadd.f32 0.0, %v535
      %v537 = vpop.f32.mrf.mxu0
      %v538 = vadd.f32 0.0, %v537
      %539 = vmatmul.bf16.gmra.mxu0 %v427
      %v540 = vpop.f32.mrf.mxu0
      %v541 = vadd.f32 0.0, %v540
      %v542 = vpop.f32.mrf.mxu0
      %v543 = vadd.f32 0.0, %v542
      %544 = vmatmul.bf16.gmra.mxu0 %v428
      %v545 = vpop.f32.mrf.mxu0
      %v546 = vadd.f32 0.0, %v545
      %v547 = vpop.f32.mrf.mxu0
      %v548 = vadd.f32 0.0, %v547
      %549 = vmatmul.bf16.gmra.mxu0 %v429
      %v550 = vpop.f32.mrf.mxu0
      %v551 = vadd.f32 0.0, %v550
      %v552 = vpop.f32.mrf.mxu0
      %v553 = vadd.f32 0.0, %v552
      %554 = vmatmul.bf16.gmra.mxu0 %v430
      %v555 = vpop.f32.mrf.mxu0
      %v556 = vadd.f32 0.0, %v555
      %v557 = vpop.f32.mrf.mxu0
      %v558 = vadd.f32 0.0, %v557
      %559 = vmatmul.bf16.gmra.mxu0 %v431
      %v560 = vpop.f32.mrf.mxu0
      %v561 = vadd.f32 0.0, %v560
      %v562 = vpop.f32.mrf.mxu0
      %v563 = vadd.f32 0.0, %v562
      %564 = vmatmul.bf16.gmra.mxu0 %v432
      %v565 = vpop.f32.mrf.mxu0
      %v566 = vadd.f32 0.0, %v565
      %v567 = vpop.f32.mrf.mxu0
      %v568 = vadd.f32 0.0, %v567
      %569 = vmatmul.bf16.gmra.mxu0 %v433
      %v570 = vpop.f32.mrf.mxu0
      %v571 = vadd.f32 0.0, %v570
      %v572 = vpop.f32.mrf.mxu0
      %v573 = vadd.f32 0.0, %v572
      %574 = vmatmul.bf16.gmra.mxu0 %v434
      %v575 = vpop.f32.mrf.mxu0
      %v576 = vadd.f32 0.0, %v575
      %v577 = vpop.f32.mrf.mxu0
      %v578 = vadd.f32 0.0, %v577
      %579 = vmatmul.bf16.gmra.mxu0 %v435
      %v580 = vpop.f32.mrf.mxu0
      %v581 = vadd.f32 0.0, %v580
      %v582 = vpop.f32.mrf.mxu0
      %v583 = vadd.f32 0.0, %v582
      %584 = vmatmul.bf16.gmra.mxu0 %v436
      %v585 = vpop.f32.mrf.mxu0
      %v586 = vadd.f32 0.0, %v585
      %v587 = vpop.f32.mrf.mxu0
      %v588 = vadd.f32 0.0, %v587
      %589 = vdwg.mxu0
      %v590 = vadd.f32 %v309, %v511
      %v591 = vadd.f32 %v310, %v513
      %v592 = vadd.f32 %v311, %v516
      %v593 = vadd.f32 %v312, %v518
      %v594 = vadd.f32 %v313, %v521
      %v595 = vadd.f32 %v314, %v523
      %v596 = vadd.f32 %v315, %v526
      %v597 = vadd.f32 %v316, %v528
      %v598 = vadd.f32 %v317, %v531
      %v599 = vadd.f32 %v318, %v533
      %v600 = vadd.f32 %v319, %v536
      %v601 = vadd.f32 %v320, %v538
      %v602 = vadd.f32 %v321, %v541
      %v603 = vadd.f32 %v322, %v543
      %v604 = vadd.f32 %v323, %v546
      %v605 = vadd.f32 %v324, %v548
      %v606 = vadd.f32 %v325, %v551
      %v607 = vadd.f32 %v326, %v553
      %v608 = vadd.f32 %v327, %v556
      %v609 = vadd.f32 %v328, %v558
      %v610 = vadd.f32 %v329, %v561
      %v611 = vadd.f32 %v330, %v563
      %v612 = vadd.f32 %v331, %v566
      %v613 = vadd.f32 %v332, %v568
      %v614 = vadd.f32 %v333, %v571
      %v615 = vadd.f32 %v334, %v573
      %v616 = vadd.f32 %v335, %v576
      %v617 = vadd.f32 %v336, %v578
      %v618 = vadd.f32 %v337, %v581
      %v619 = vadd.f32 %v338, %v583
      %v620 = vadd.f32 %v339, %v586
      %v621 = vadd.f32 %v340, %v588
      %622 = vst [vmem:[#allocation2] sm:$0xff] %v590
      %623 = vst [vmem:[#allocation2 + $0x8] sm:$0xff] %v591
      %624 = vst [vmem:[#allocation2 + $0x10] sm:$0xff] %v592
      %625 = vst [vmem:[#allocation2 + $0x18] sm:$0xff] %v593
      %626 = vst [vmem:[#allocation2 + $0x20] sm:$0xff] %v594
      %627 = vst [vmem:[#allocation2 + $0x28] sm:$0xff] %v595
      %628 = vst [vmem:[#allocation2 + $0x30] sm:$0xff] %v596
      %629 = vst [vmem:[#allocation2 + $0x38] sm:$0xff] %v597
      %630 = vst [vmem:[#allocation2 + $0x40] sm:$0xff] %v598
      %631 = vst [vmem:[#allocation2 + $0x48] sm:$0xff] %v599
      %632 = vst [vmem:[#allocation2 + $0x50] sm:$0xff] %v600
      %633 = vst [vmem:[#allocation2 + $0x58] sm:$0xff] %v601
      %634 = vst [vmem:[#allocation2 + $0x60] sm:$0xff] %v602
      %635 = vst [vmem:[#allocation2 + $0x68] sm:$0xff] %v603
      %636 = vst [vmem:[#allocation2 + $0x70] sm:$0xff] %v604
      %637 = vst [vmem:[#allocation2 + $0x78] sm:$0xff] %v605
      %638 = vst [vmem:[#allocation2 + $0x80] sm:$0xff] %v606
      %639 = vst [vmem:[#allocation2 + $0x88] sm:$0xff] %v607
      %640 = vst [vmem:[#allocation2 + $0x90] sm:$0xff] %v608
      %641 = vst [vmem:[#allocation2 + $0x98] sm:$0xff] %v609
      %642 = vst [vmem:[#allocation2 + $0xa0] sm:$0xff] %v610
      %643 = vst [vmem:[#allocation2 + $0xa8] sm:$0xff] %v611
      %644 = vst [vmem:[#allocation2 + $0xb0] sm:$0xff] %v612
      %645 = vst [vmem:[#allocation2 + $0xb8] sm:$0xff] %v613
      %646 = vst [vmem:[#allocation2 + $0xc0] sm:$0xff] %v614
      %647 = vst [vmem:[#allocation2 + $0xc8] sm:$0xff] %v615
      %648 = vst [vmem:[#allocation2 + $0xd0] sm:$0xff] %v616
      %649 = vst [vmem:[#allocation2 + $0xd8] sm:$0xff] %v617
      %650 = vst [vmem:[#allocation2 + $0xe0] sm:$0xff] %v618
      %651 = vst [vmem:[#allocation2 + $0xe8] sm:$0xff] %v619
      %652 = vst [vmem:[#allocation2 + $0xf0] sm:$0xff] %v620
      %653 = vst [vmem:[#allocation2 + $0xf8] sm:$0xff] %v621
      %v654 = vld [vmem:[%s220] sm:$0xf]
      %v655 = vld [vmem:[%s220 + $0x4] sm:$0xf]
      %v656 = vld [vmem:[%s220 + $0x8] sm:$0x1]
      %v657 = vld [vmem:[%s220 + $0xc] sm:$0xf]
      %v658 = vld [vmem:[%s220 + $0x10] sm:$0xf]
      %v659 = vld [vmem:[%s220 + $0x14] sm:$0x1]
      %v660 = vld [vmem:[%s220 + $0x18] sm:$0xf]
      %v661 = vld [vmem:[%s220 + $0x1c] sm:$0xf]
      %v662 = vld [vmem:[%s220 + $0x20] sm:$0x1]
      %v663 = vld [vmem:[%s220 + $0x24] sm:$0xf]
      %v664 = vld [vmem:[%s220 + $0x28] sm:$0xf]
      %v665 = vld [vmem:[%s220 + $0x2c] sm:$0x1]
      %v666 = vld [vmem:[%s220 + $0x30] sm:$0xf]
      %v667 = vld [vmem:[%s220 + $0x34] sm:$0xf]
      %v668 = vld [vmem:[%s220 + $0x38] sm:$0x1]
      %v669 = vld [vmem:[%s220 + $0x3c] sm:$0xf]
      %v670 = vld [vmem:[%s220 + $0x40] sm:$0xf]
      %v671 = vld [vmem:[%s220 + $0x44] sm:$0x1]
      %v672 = vld [vmem:[%s220 + $0x48] sm:$0xf]
      %v673 = vld [vmem:[%s220 + $0x4c] sm:$0xf]
      %v674 = vld [vmem:[%s220 + $0x50] sm:$0x1]
      %v675 = vld [vmem:[%s220 + $0x54] sm:$0xf]
      %v676 = vld [vmem:[%s220 + $0x58] sm:$0xf]
      %v677 = vld [vmem:[%s220 + $0x5c] sm:$0x1]
      %v678 = vld [vmem:[%s220 + $0x60] sm:$0xf]
      %v679 = vld [vmem:[%s220 + $0x64] sm:$0xf]
      %v680 = vld [vmem:[%s220 + $0x68] sm:$0x1]
      %v681 = vld [vmem:[%s220 + $0x6c] sm:$0xf]
      %v682 = vld [vmem:[%s220 + $0x70] sm:$0xf]
      %v683 = vld [vmem:[%s220 + $0x74] sm:$0x1]
      %v684 = vld [vmem:[%s220 + $0x78] sm:$0xf]
      %v685 = vld [vmem:[%s220 + $0x7c] sm:$0xf]
      %v686 = vld [vmem:[%s220 + $0x80] sm:$0x1]
      %v687 = vld [vmem:[%s220 + $0x84] sm:$0xf]
      %v688 = vld [vmem:[%s220 + $0x88] sm:$0xf]
      %v689 = vld [vmem:[%s220 + $0x8c] sm:$0x1]
      %v690 = vld [vmem:[%s220 + $0x90] sm:$0xf]
      %v691 = vld [vmem:[%s220 + $0x94] sm:$0xf]
      %v692 = vld [vmem:[%s220 + $0x98] sm:$0x1]
      %v693 = vld [vmem:[%s220 + $0x9c] sm:$0xf]
      %v694 = vld [vmem:[%s220 + $0xa0] sm:$0xf]
      %v695 = vld [vmem:[%s220 + $0xa4] sm:$0x1]
      %v696 = vld [vmem:[%s220 + $0xa8] sm:$0xf]
      %v697 = vld [vmem:[%s220 + $0xac] sm:$0xf]
      %v698 = vld [vmem:[%s220 + $0xb0] sm:$0x1]
      %v699 = vld [vmem:[%s220 + $0xb4] sm:$0xf]
      %v700 = vld [vmem:[%s220 + $0xb8] sm:$0xf]
      %v701 = vld [vmem:[%s220 + $0xbc] sm:$0x1]
      %v702 = vld [vmem:[#allocation2] sm:$0xff]
      %v703 = vld [vmem:[#allocation2 + $0x8] sm:$0xff]
      %v704 = vld [vmem:[#allocation2 + $0x10] sm:$0xff]
      %v705 = vld [vmem:[#allocation2 + $0x18] sm:$0xff]
      %v706 = vld [vmem:[#allocation2 + $0x20] sm:$0xff]
      %v707 = vld [vmem:[#allocation2 + $0x28] sm:$0xff]
      %v708 = vld [vmem:[#allocation2 + $0x30] sm:$0xff]
      %v709 = vld [vmem:[#allocation2 + $0x38] sm:$0xff]
      %v710 = vld [vmem:[#allocation2 + $0x40] sm:$0xff]
      %v711 = vld [vmem:[#allocation2 + $0x48] sm:$0xff]
      %v712 = vld [vmem:[#allocation2 + $0x50] sm:$0xff]
      %v713 = vld [vmem:[#allocation2 + $0x58] sm:$0xff]
      %v714 = vld [vmem:[#allocation2 + $0x60] sm:$0xff]
      %v715 = vld [vmem:[#allocation2 + $0x68] sm:$0xff]
      %v716 = vld [vmem:[#allocation2 + $0x70] sm:$0xff]
      %v717 = vld [vmem:[#allocation2 + $0x78] sm:$0xff]
      %v718 = vld [vmem:[#allocation2 + $0x80] sm:$0xff]
      %v719 = vld [vmem:[#allocation2 + $0x88] sm:$0xff]
      %v720 = vld [vmem:[#allocation2 + $0x90] sm:$0xff]
      %v721 = vld [vmem:[#allocation2 + $0x98] sm:$0xff]
      %v722 = vld [vmem:[#allocation2 + $0xa0] sm:$0xff]
      %v723 = vld [vmem:[#allocation2 + $0xa8] sm:$0xff]
      %v724 = vld [vmem:[#allocation2 + $0xb0] sm:$0xff]
      %v725 = vld [vmem:[#allocation2 + $0xb8] sm:$0xff]
      %v726 = vld [vmem:[#allocation2 + $0xc0] sm:$0xff]
      %v727 = vld [vmem:[#allocation2 + $0xc8] sm:$0xff]
      %v728 = vld [vmem:[#allocation2 + $0xd0] sm:$0xff]
      %v729 = vld [vmem:[#allocation2 + $0xd8] sm:$0xff]
      %v730 = vld [vmem:[#allocation2 + $0xe0] sm:$0xff]
      %v731 = vld [vmem:[#allocation2 + $0xe8] sm:$0xff]
      %v732 = vld [vmem:[#allocation2 + $0xf0] sm:$0xff]
      %v733 = vld [vmem:[#allocation2 + $0xf8] sm:$0xff]
      %vm734 = vsmask.f32 3328
      %vm735 = vsmask.f32 7440
      %vm736 = vmor %vm734, %vm735
      %v738 = vshrl.u32 %v654, 16
      %v740 = vrot.slane %v738, 4
      %v741 = vshll.u32 %v654, 16
      %v743 = vrot.slane %v741, 5
      %v744 = vor.u32 %v740, %v743
      %v745 = vrot.slane %v744, 4
      %v747 = vshll.u32 %v655, 16
      %v749 = vrot.slane %v747, 5
      %v750 = vsel %vm736, %v745, %v749
      %v751 = vshrl.u32 %v655, 16
      %v753 = vrot.slane %v751, 4
      %v754 = vor.u32 %v753, %v749
      %v755 = vrot.slane %v754, 4
      %v757 = vshll.u32 %v656, 16
      %v759 = vrot.slane %v757, 5
      %v760 = vsel %vm736, %v755, %v759
      %v762 = vshrl.u32 %v657, 16
      %v764 = vrot.slane %v762, 4
      %v765 = vshll.u32 %v657, 16
      %v767 = vrot.slane %v765, 5
      %v768 = vor.u32 %v764, %v767
      %v769 = vrot.slane %v768, 4
      %v771 = vshll.u32 %v658, 16
      %v773 = vrot.slane %v771, 5
      %v774 = vsel %vm736, %v769, %v773
      %v775 = vshrl.u32 %v658, 16
      %v777 = vrot.slane %v775, 4
      %v778 = vor.u32 %v777, %v773
      %v779 = vrot.slane %v778, 4
      %v781 = vshll.u32 %v659, 16
      %v783 = vrot.slane %v781, 5
      %v784 = vsel %vm736, %v779, %v783
      %v786 = vshrl.u32 %v660, 16
      %v788 = vrot.slane %v786, 4
      %v789 = vshll.u32 %v660, 16
      %v791 = vrot.slane %v789, 5
      %v792 = vor.u32 %v788, %v791
      %v793 = vrot.slane %v792, 4
      %v795 = vshll.u32 %v661, 16
      %v797 = vrot.slane %v795, 5
      %v798 = vsel %vm736, %v793, %v797
      %v799 = vshrl.u32 %v661, 16
      %v801 = vrot.slane %v799, 4
      %v802 = vor.u32 %v801, %v797
      %v803 = vrot.slane %v802, 4
      %v805 = vshll.u32 %v662, 16
      %v807 = vrot.slane %v805, 5
      %v808 = vsel %vm736, %v803, %v807
      %v810 = vshrl.u32 %v663, 16
      %v812 = vrot.slane %v810, 4
      %v813 = vshll.u32 %v663, 16
      %v815 = vrot.slane %v813, 5
      %v816 = vor.u32 %v812, %v815
      %v817 = vrot.slane %v816, 4
      %v819 = vshll.u32 %v664, 16
      %v821 = vrot.slane %v819, 5
      %v822 = vsel %vm736, %v817, %v821
      %v823 = vshrl.u32 %v664, 16
      %v825 = vrot.slane %v823, 4
      %v826 = vor.u32 %v825, %v821
      %v827 = vrot.slane %v826, 4
      %v829 = vshll.u32 %v665, 16
      %v831 = vrot.slane %v829, 5
      %v832 = vsel %vm736, %v827, %v831
      %v834 = vshrl.u32 %v666, 16
      %v836 = vrot.slane %v834, 4
      %v837 = vshll.u32 %v666, 16
      %v839 = vrot.slane %v837, 5
      %v840 = vor.u32 %v836, %v839
      %v841 = vrot.slane %v840, 4
      %v843 = vshll.u32 %v667, 16
      %v845 = vrot.slane %v843, 5
      %v846 = vsel %vm736, %v841, %v845
      %v847 = vshrl.u32 %v667, 16
      %v849 = vrot.slane %v847, 4
      %v850 = vor.u32 %v849, %v845
      %v851 = vrot.slane %v850, 4
      %v853 = vshll.u32 %v668, 16
      %v855 = vrot.slane %v853, 5
      %v856 = vsel %vm736, %v851, %v855
      %v858 = vshrl.u32 %v669, 16
      %v860 = vrot.slane %v858, 4
      %v861 = vshll.u32 %v669, 16
      %v863 = vrot.slane %v861, 5
      %v864 = vor.u32 %v860, %v863
      %v865 = vrot.slane %v864, 4
      %v867 = vshll.u32 %v670, 16
      %v869 = vrot.slane %v867, 5
      %v870 = vsel %vm736, %v865, %v869
      %v871 = vshrl.u32 %v670, 16
      %v873 = vrot.slane %v871, 4
      %v874 = vor.u32 %v873, %v869
      %v875 = vrot.slane %v874, 4
      %v877 = vshll.u32 %v671, 16
      %v879 = vrot.slane %v877, 5
      %v880 = vsel %vm736, %v875, %v879
      %v882 = vshrl.u32 %v672, 16
      %v884 = vrot.slane %v882, 4
      %v885 = vshll.u32 %v672, 16
      %v887 = vrot.slane %v885, 5
      %v888 = vor.u32 %v884, %v887
      %v889 = vrot.slane %v888, 4
      %v891 = vshll.u32 %v673, 16
      %v893 = vrot.slane %v891, 5
      %v894 = vsel %vm736, %v889, %v893
      %v895 = vshrl.u32 %v673, 16
      %v897 = vrot.slane %v895, 4
      %v898 = vor.u32 %v897, %v893
      %v899 = vrot.slane %v898, 4
      %v901 = vshll.u32 %v674, 16
      %v903 = vrot.slane %v901, 5
      %v904 = vsel %vm736, %v899, %v903
      %v906 = vshrl.u32 %v675, 16
      %v908 = vrot.slane %v906, 4
      %v909 = vshll.u32 %v675, 16
      %v911 = vrot.slane %v909, 5
      %v912 = vor.u32 %v908, %v911
      %v913 = vrot.slane %v912, 4
      %v915 = vshll.u32 %v676, 16
      %v917 = vrot.slane %v915, 5
      %v918 = vsel %vm736, %v913, %v917
      %v919 = vshrl.u32 %v676, 16
      %v921 = vrot.slane %v919, 4
      %v922 = vor.u32 %v921, %v917
      %v923 = vrot.slane %v922, 4
      %v925 = vshll.u32 %v677, 16
      %v927 = vrot.slane %v925, 5
      %v928 = vsel %vm736, %v923, %v927
      %v930 = vshrl.u32 %v678, 16
      %v932 = vrot.slane %v930, 4
      %v933 = vshll.u32 %v678, 16
      %v935 = vrot.slane %v933, 5
      %v936 = vor.u32 %v932, %v935
      %v937 = vrot.slane %v936, 4
      %v939 = vshll.u32 %v679, 16
      %v941 = vrot.slane %v939, 5
      %v942 = vsel %vm736, %v937, %v941
      %v943 = vshrl.u32 %v679, 16
      %v945 = vrot.slane %v943, 4
      %v946 = vor.u32 %v945, %v941
      %v947 = vrot.slane %v946, 4
      %v949 = vshll.u32 %v680, 16
      %v951 = vrot.slane %v949, 5
      %v952 = vsel %vm736, %v947, %v951
      %v954 = vshrl.u32 %v681, 16
      %v956 = vrot.slane %v954, 4
      %v957 = vshll.u32 %v681, 16
      %v959 = vrot.slane %v957, 5
      %v960 = vor.u32 %v956, %v959
      %v961 = vrot.slane %v960, 4
      %v963 = vshll.u32 %v682, 16
      %v965 = vrot.slane %v963, 5
      %v966 = vsel %vm736, %v961, %v965
      %v967 = vshrl.u32 %v682, 16
      %v969 = vrot.slane %v967, 4
      %v970 = vor.u32 %v969, %v965
      %v971 = vrot.slane %v970, 4
      %v973 = vshll.u32 %v683, 16
      %v975 = vrot.slane %v973, 5
      %v976 = vsel %vm736, %v971, %v975
      %v978 = vshrl.u32 %v684, 16
      %v980 = vrot.slane %v978, 4
      %v981 = vshll.u32 %v684, 16
      %v983 = vrot.slane %v981, 5
      %v984 = vor.u32 %v980, %v983
      %v985 = vrot.slane %v984, 4
      %v987 = vshll.u32 %v685, 16
      %v989 = vrot.slane %v987, 5
      %v990 = vsel %vm736, %v985, %v989
      %v991 = vshrl.u32 %v685, 16
      %v993 = vrot.slane %v991, 4
      %v994 = vor.u32 %v993, %v989
      %v995 = vrot.slane %v994, 4
      %v997 = vshll.u32 %v686, 16
      %v999 = vrot.slane %v997, 5
      %v1000 = vsel %vm736, %v995, %v999
      %v1002 = vshrl.u32 %v687, 16
      %v1004 = vrot.slane %v1002, 4
      %v1005 = vshll.u32 %v687, 16
      %v1007 = vrot.slane %v1005, 5
      %v1008 = vor.u32 %v1004, %v1007
      %v1009 = vrot.slane %v1008, 4
      %v1011 = vshll.u32 %v688, 16
      %v1013 = vrot.slane %v1011, 5
      %v1014 = vsel %vm736, %v1009, %v1013
      %v1015 = vshrl.u32 %v688, 16
      %v1017 = vrot.slane %v1015, 4
      %v1018 = vor.u32 %v1017, %v1013
      %v1019 = vrot.slane %v1018, 4
      %v1021 = vshll.u32 %v689, 16
      %v1023 = vrot.slane %v1021, 5
      %v1024 = vsel %vm736, %v1019, %v1023
      %v1026 = vshrl.u32 %v690, 16
      %v1028 = vrot.slane %v1026, 4
      %v1029 = vshll.u32 %v690, 16
      %v1031 = vrot.slane %v1029, 5
      %v1032 = vor.u32 %v1028, %v1031
      %v1033 = vrot.slane %v1032, 4
      %v1035 = vshll.u32 %v691, 16
      %v1037 = vrot.slane %v1035, 5
      %v1038 = vsel %vm736, %v1033, %v1037
      %v1039 = vshrl.u32 %v691, 16
      %v1041 = vrot.slane %v1039, 4
      %v1042 = vor.u32 %v1041, %v1037
      %v1043 = vrot.slane %v1042, 4
      %v1045 = vshll.u32 %v692, 16
      %v1047 = vrot.slane %v1045, 5
      %v1048 = vsel %vm736, %v1043, %v1047
      %v1050 = vshrl.u32 %v693, 16
      %v1052 = vrot.slane %v1050, 4
      %v1053 = vshll.u32 %v693, 16
      %v1055 = vrot.slane %v1053, 5
      %v1056 = vor.u32 %v1052, %v1055
      %v1057 = vrot.slane %v1056, 4
      %v1059 = vshll.u32 %v694, 16
      %v1061 = vrot.slane %v1059, 5
      %v1062 = vsel %vm736, %v1057, %v1061
      %v1063 = vshrl.u32 %v694, 16
      %v1065 = vrot.slane %v1063, 4
      %v1066 = vor.u32 %v1065, %v1061
      %v1067 = vrot.slane %v1066, 4
      %v1069 = vshll.u32 %v695, 16
      %v1071 = vrot.slane %v1069, 5
      %v1072 = vsel %vm736, %v1067, %v1071
      %v1074 = vshrl.u32 %v696, 16
      %v1076 = vrot.slane %v1074, 4
      %v1077 = vshll.u32 %v696, 16
      %v1079 = vrot.slane %v1077, 5
      %v1080 = vor.u32 %v1076, %v1079
      %v1081 = vrot.slane %v1080, 4
      %v1083 = vshll.u32 %v697, 16
      %v1085 = vrot.slane %v1083, 5
      %v1086 = vsel %vm736, %v1081, %v1085
      %v1087 = vshrl.u32 %v697, 16
      %v1089 = vrot.slane %v1087, 4
      %v1090 = vor.u32 %v1089, %v1085
      %v1091 = vrot.slane %v1090, 4
      %v1093 = vshll.u32 %v698, 16
      %v1095 = vrot.slane %v1093, 5
      %v1096 = vsel %vm736, %v1091, %v1095
      %v1098 = vshrl.u32 %v699, 16
      %v1100 = vrot.slane %v1098, 4
      %v1101 = vshll.u32 %v699, 16
      %v1103 = vrot.slane %v1101, 5
      %v1104 = vor.u32 %v1100, %v1103
      %v1105 = vrot.slane %v1104, 4
      %v1107 = vshll.u32 %v700, 16
      %v1109 = vrot.slane %v1107, 5
      %v1110 = vsel %vm736, %v1105, %v1109
      %v1111 = vshrl.u32 %v700, 16
      %v1113 = vrot.slane %v1111, 4
      %v1114 = vor.u32 %v1113, %v1109
      %v1115 = vrot.slane %v1114, 4
      %v1117 = vshll.u32 %v701, 16
      %v1119 = vrot.slane %v1117, 5
      %v1120 = vsel %vm736, %v1115, %v1119
      %s1121 = scalar_lea.vmem %s224, 64
      %v1122 = vld [vmem:[%s1121] sm:$0xf]
      %v1123 = vld [vmem:[%s1121 + $0x4] sm:$0xf]
      %v1124 = vld [vmem:[%s1121 + $0x8] sm:$0xf]
      %v1125 = vld [vmem:[%s1121 + $0xc] sm:$0xf]
      %v1126 = vld [vmem:[%s1121 + $0x10] sm:$0xf]
      %v1127 = vld [vmem:[%s1121 + $0x14] sm:$0xf]
      %v1128 = vld [vmem:[%s1121 + $0x18] sm:$0xf]
      %v1129 = vld [vmem:[%s1121 + $0x1c] sm:$0xf]
      %v1130 = vld [vmem:[%s1121 + $0x20] sm:$0xf]
      %v1131 = vld [vmem:[%s1121 + $0x24] sm:$0xf]
      %v1132 = vld [vmem:[%s1121 + $0x28] sm:$0xf]
      %v1133 = vld [vmem:[%s1121 + $0x2c] sm:$0xf]
      %v1134 = vld [vmem:[%s1121 + $0x30] sm:$0xf]
      %v1135 = vld [vmem:[%s1121 + $0x34] sm:$0xf]
      %v1136 = vld [vmem:[%s1121 + $0x38] sm:$0xf]
      %v1137 = vld [vmem:[%s1121 + $0x3c] sm:$0xf]
      %v1138 = vunpack.c.l.b16 %v750
      %v1139 = vunpack.c.l.b16 %v760
      %v1140 = vunpack.c.l.b16 %v774
      %v1141 = vunpack.c.l.b16 %v784
      %v1142 = vunpack.c.l.b16 %v798
      %v1143 = vunpack.c.l.b16 %v808
      %v1144 = vunpack.c.l.b16 %v822
      %v1145 = vunpack.c.l.b16 %v832
      %v1146 = vunpack.c.l.b16 %v846
      %v1147 = vunpack.c.l.b16 %v856
      %v1148 = vunpack.c.l.b16 %v870
      %v1149 = vunpack.c.l.b16 %v880
      %v1150 = vunpack.c.l.b16 %v894
      %v1151 = vunpack.c.l.b16 %v904
      %v1152 = vunpack.c.l.b16 %v918
      %v1153 = vunpack.c.l.b16 %v928
      %v1154 = vunpack.c.l.b16 %v942
      %v1155 = vunpack.c.l.b16 %v952
      %v1156 = vunpack.c.l.b16 %v966
      %v1157 = vunpack.c.l.b16 %v976
      %v1158 = vunpack.c.l.b16 %v990
      %v1159 = vunpack.c.l.b16 %v1000
      %v1160 = vunpack.c.l.b16 %v1014
      %v1161 = vunpack.c.l.b16 %v1024
      %v1162 = vunpack.c.l.b16 %v1038
      %v1163 = vunpack.c.l.b16 %v1048
      %v1164 = vunpack.c.l.b16 %v1062
      %v1165 = vunpack.c.l.b16 %v1072
      %v1166 = vunpack.c.l.b16 %v1086
      %v1167 = vunpack.c.l.b16 %v1096
      %v1168 = vunpack.c.l.b16 %v1110
      %v1169 = vunpack.c.l.b16 %v1120
      %v1170 = vpack.c.b16 %v1139, %v1138
      %v1171 = vpack.c.b16 %v1141, %v1140
      %v1172 = vpack.c.b16 %v1143, %v1142
      %v1173 = vpack.c.b16 %v1145, %v1144
      %v1174 = vpack.c.b16 %v1147, %v1146
      %v1175 = vpack.c.b16 %v1149, %v1148
      %v1176 = vpack.c.b16 %v1151, %v1150
      %v1177 = vpack.c.b16 %v1153, %v1152
      %v1178 = vpack.c.b16 %v1155, %v1154
      %v1179 = vpack.c.b16 %v1157, %v1156
      %v1180 = vpack.c.b16 %v1159, %v1158
      %v1181 = vpack.c.b16 %v1161, %v1160
      %v1182 = vpack.c.b16 %v1163, %v1162
      %v1183 = vpack.c.b16 %v1165, %v1164
      %v1184 = vpack.c.b16 %v1167, %v1166
      %v1185 = vpack.c.b16 %v1169, %v1168
      %v1218 = vunpack.c.l.b16 %v1122
      %v1219 = vunpack.c.l.b16 %v1123
      %v1220 = vunpack.c.l.b16 %v1124
      %v1221 = vunpack.c.l.b16 %v1125
      %v1222 = vunpack.c.l.b16 %v1126
      %v1223 = vunpack.c.l.b16 %v1127
      %v1224 = vunpack.c.l.b16 %v1128
      %v1225 = vunpack.c.l.b16 %v1129
      %v1226 = vunpack.c.l.b16 %v1130
      %v1227 = vunpack.c.l.b16 %v1131
      %v1228 = vunpack.c.l.b16 %v1132
      %v1229 = vunpack.c.l.b16 %v1133
      %v1230 = vunpack.c.l.b16 %v1134
      %v1231 = vunpack.c.l.b16 %v1135
      %v1232 = vunpack.c.l.b16 %v1136
      %v1233 = vunpack.c.l.b16 %v1137
      %v1234 = vpack.c.b16 %v1219, %v1218
      %v1235 = vpack.c.b16 %v1221, %v1220
      %v1236 = vpack.c.b16 %v1223, %v1222
      %v1237 = vpack.c.b16 %v1225, %v1224
      %v1238 = vpack.c.b16 %v1227, %v1226
      %v1239 = vpack.c.b16 %v1229, %v1228
      %v1240 = vpack.c.b16 %v1231, %v1230
      %v1241 = vpack.c.b16 %v1233, %v1232
      %1250 = vmatpush.bf16.msra.mxu0 %v1241
      %1251 = vmatpush.bf16.msra.mxu0 %v1240
      %1252 = vmatpush.bf16.msra.mxu0 %v1239
      %1253 = vmatpush.bf16.msra.mxu0 %v1238
      %1254 = vmatpush.bf16.msra.mxu0 %v1237
      %1255 = vmatpush.bf16.msra.mxu0 %v1236
      %1256 = vmatpush.bf16.msra.mxu0 %v1235
      %1257 = vmatpush.bf16.msra.mxu0 %v1234
      %1258 = vmatmul.bf16.gmra.mxu0 %v1170
      %v1259 = vpop.f32.mrf.mxu0
      %v1260 = vadd.f32 0.0, %v1259
      %v1261 = vpop.f32.mrf.mxu0
      %v1262 = vadd.f32 0.0, %v1261
      %1263 = vmatmul.bf16.gmra.mxu0 %v1171
      %v1264 = vpop.f32.mrf.mxu0
      %v1265 = vadd.f32 0.0, %v1264
      %v1266 = vpop.f32.mrf.mxu0
      %v1267 = vadd.f32 0.0, %v1266
      %1268 = vmatmul.bf16.gmra.mxu0 %v1172
      %v1269 = vpop.f32.mrf.mxu0
      %v1270 = vadd.f32 0.0, %v1269
      %v1271 = vpop.f32.mrf.mxu0
      %v1272 = vadd.f32 0.0, %v1271
      %1273 = vmatmul.bf16.gmra.mxu0 %v1173
      %v1274 = vpop.f32.mrf.mxu0
      %v1275 = vadd.f32 0.0, %v1274
      %v1276 = vpop.f32.mrf.mxu0
      %v1277 = vadd.f32 0.0, %v1276
      %1278 = vmatmul.bf16.gmra.mxu0 %v1174
      %v1279 = vpop.f32.mrf.mxu0
      %v1280 = vadd.f32 0.0, %v1279
      %v1281 = vpop.f32.mrf.mxu0
      %v1282 = vadd.f32 0.0, %v1281
      %1283 = vmatmul.bf16.gmra.mxu0 %v1175
      %v1284 = vpop.f32.mrf.mxu0
      %v1285 = vadd.f32 0.0, %v1284
      %v1286 = vpop.f32.mrf.mxu0
      %v1287 = vadd.f32 0.0, %v1286
      %1288 = vmatmul.bf16.gmra.mxu0 %v1176
      %v1289 = vpop.f32.mrf.mxu0
      %v1290 = vadd.f32 0.0, %v1289
      %v1291 = vpop.f32.mrf.mxu0
      %v1292 = vadd.f32 0.0, %v1291
      %1293 = vmatmul.bf16.gmra.mxu0 %v1177
      %v1294 = vpop.f32.mrf.mxu0
      %v1295 = vadd.f32 0.0, %v1294
      %v1296 = vpop.f32.mrf.mxu0
      %v1297 = vadd.f32 0.0, %v1296
      %1298 = vmatmul.bf16.gmra.mxu0 %v1178
      %v1299 = vpop.f32.mrf.mxu0
      %v1300 = vadd.f32 0.0, %v1299
      %v1301 = vpop.f32.mrf.mxu0
      %v1302 = vadd.f32 0.0, %v1301
      %1303 = vmatmul.bf16.gmra.mxu0 %v1179
      %v1304 = vpop.f32.mrf.mxu0
      %v1305 = vadd.f32 0.0, %v1304
      %v1306 = vpop.f32.mrf.mxu0
      %v1307 = vadd.f32 0.0, %v1306
      %1308 = vmatmul.bf16.gmra.mxu0 %v1180
      %v1309 = vpop.f32.mrf.mxu0
      %v1310 = vadd.f32 0.0, %v1309
      %v1311 = vpop.f32.mrf.mxu0
      %v1312 = vadd.f32 0.0, %v1311
      %1313 = vmatmul.bf16.gmra.mxu0 %v1181
      %v1314 = vpop.f32.mrf.mxu0
      %v1315 = vadd.f32 0.0, %v1314
      %v1316 = vpop.f32.mrf.mxu0
      %v1317 = vadd.f32 0.0, %v1316
      %1318 = vmatmul.bf16.gmra.mxu0 %v1182
      %v1319 = vpop.f32.mrf.mxu0
      %v1320 = vadd.f32 0.0, %v1319
      %v1321 = vpop.f32.mrf.mxu0
      %v1322 = vadd.f32 0.0, %v1321
      %1323 = vmatmul.bf16.gmra.mxu0 %v1183
      %v1324 = vpop.f32.mrf.mxu0
      %v1325 = vadd.f32 0.0, %v1324
      %v1326 = vpop.f32.mrf.mxu0
      %v1327 = vadd.f32 0.0, %v1326
      %1328 = vmatmul.bf16.gmra.mxu0 %v1184
      %v1329 = vpop.f32.mrf.mxu0
      %v1330 = vadd.f32 0.0, %v1329
      %v1331 = vpop.f32.mrf.mxu0
      %v1332 = vadd.f32 0.0, %v1331
      %1333 = vmatmul.bf16.gmra.mxu0 %v1185
      %v1334 = vpop.f32.mrf.mxu0
      %v1335 = vadd.f32 0.0, %v1334
      %v1336 = vpop.f32.mrf.mxu0
      %v1337 = vadd.f32 0.0, %v1336
      %1338 = vdwg.mxu0
      %v1339 = vadd.f32 %v702, %v1260
      %v1340 = vadd.f32 %v703, %v1262
      %v1341 = vadd.f32 %v704, %v1265
      %v1342 = vadd.f32 %v705, %v1267
      %v1343 = vadd.f32 %v706, %v1270
      %v1344 = vadd.f32 %v707, %v1272
      %v1345 = vadd.f32 %v708, %v1275
      %v1346 = vadd.f32 %v709, %v1277
      %v1347 = vadd.f32 %v710, %v1280
      %v1348 = vadd.f32 %v711, %v1282
      %v1349 = vadd.f32 %v712, %v1285
      %v1350 = vadd.f32 %v713, %v1287
      %v1351 = vadd.f32 %v714, %v1290
      %v1352 = vadd.f32 %v715, %v1292
      %v1353 = vadd.f32 %v716, %v1295
      %v1354 = vadd.f32 %v717, %v1297
      %v1355 = vadd.f32 %v718, %v1300
      %v1356 = vadd.f32 %v719, %v1302
      %v1357 = vadd.f32 %v720, %v1305
      %v1358 = vadd.f32 %v721, %v1307
      %v1359 = vadd.f32 %v722, %v1310
      %v1360 = vadd.f32 %v723, %v1312
      %v1361 = vadd.f32 %v724, %v1315
      %v1362 = vadd.f32 %v725, %v1317
      %v1363 = vadd.f32 %v726, %v1320
      %v1364 = vadd.f32 %v727, %v1322
      %v1365 = vadd.f32 %v728, %v1325
      %v1366 = vadd.f32 %v729, %v1327
      %v1367 = vadd.f32 %v730, %v1330
      %v1368 = vadd.f32 %v731, %v1332
      %v1369 = vadd.f32 %v732, %v1335
      %v1370 = vadd.f32 %v733, %v1337
      %1371 = vst [vmem:[#allocation2] sm:$0xff] %v1339
      %1372 = vst [vmem:[#allocation2 + $0x8] sm:$0xff] %v1340
      %1373 = vst [vmem:[#allocation2 + $0x10] sm:$0xff] %v1341
      %1374 = vst [vmem:[#allocation2 + $0x18] sm:$0xff] %v1342
      %1375 = vst [vmem:[#allocation2 + $0x20] sm:$0xff] %v1343
      %1376 = vst [vmem:[#allocation2 + $0x28] sm:$0xff] %v1344
      %1377 = vst [vmem:[#allocation2 + $0x30] sm:$0xff] %v1345
      %1378 = vst [vmem:[#allocation2 + $0x38] sm:$0xff] %v1346
      %1379 = vst [vmem:[#allocation2 + $0x40] sm:$0xff] %v1347
      %1380 = vst [vmem:[#allocation2 + $0x48] sm:$0xff] %v1348
      %1381 = vst [vmem:[#allocation2 + $0x50] sm:$0xff] %v1349
      %1382 = vst [vmem:[#allocation2 + $0x58] sm:$0xff] %v1350
      %1383 = vst [vmem:[#allocation2 + $0x60] sm:$0xff] %v1351
      %1384 = vst [vmem:[#allocation2 + $0x68] sm:$0xff] %v1352
      %1385 = vst [vmem:[#allocation2 + $0x70] sm:$0xff] %v1353
      %1386 = vst [vmem:[#allocation2 + $0x78] sm:$0xff] %v1354
      %1387 = vst [vmem:[#allocation2 + $0x80] sm:$0xff] %v1355
      %1388 = vst [vmem:[#allocation2 + $0x88] sm:$0xff] %v1356
      %1389 = vst [vmem:[#allocation2 + $0x90] sm:$0xff] %v1357
      %1390 = vst [vmem:[#allocation2 + $0x98] sm:$0xff] %v1358
      %1391 = vst [vmem:[#allocation2 + $0xa0] sm:$0xff] %v1359
      %1392 = vst [vmem:[#allocation2 + $0xa8] sm:$0xff] %v1360
      %1393 = vst [vmem:[#allocation2 + $0xb0] sm:$0xff] %v1361
      %1394 = vst [vmem:[#allocation2 + $0xb8] sm:$0xff] %v1362
      %1395 = vst [vmem:[#allocation2 + $0xc0] sm:$0xff] %v1363
      %1396 = vst [vmem:[#allocation2 + $0xc8] sm:$0xff] %v1364
      %1397 = vst [vmem:[#allocation2 + $0xd0] sm:$0xff] %v1365
      %1398 = vst [vmem:[#allocation2 + $0xd8] sm:$0xff] %v1366
      %1399 = vst [vmem:[#allocation2 + $0xe0] sm:$0xff] %v1367
      %1400 = vst [vmem:[#allocation2 + $0xe8] sm:$0xff] %v1368
      %1401 = vst [vmem:[#allocation2 + $0xf0] sm:$0xff] %v1369
      %1402 = vst [vmem:[#allocation2 + $0xf8] sm:$0xff] %v1370
      %v1403 = vld [vmem:[%s220] sm:$0xe]
      %v1404 = vld [vmem:[%s220 + $0x4] sm:$0xf]
      %v1405 = vld [vmem:[%s220 + $0x8] sm:$0x1]
      %v1406 = vld [vmem:[%s220 + $0xc] sm:$0xe]
      %v1407 = vld [vmem:[%s220 + $0x10] sm:$0xf]
      %v1408 = vld [vmem:[%s220 + $0x14] sm:$0x1]
      %v1409 = vld [vmem:[%s220 + $0x18] sm:$0xe]
      %v1410 = vld [vmem:[%s220 + $0x1c] sm:$0xf]
      %v1411 = vld [vmem:[%s220 + $0x20] sm:$0x1]
      %v1412 = vld [vmem:[%s220 + $0x24] sm:$0xe]
      %v1413 = vld [vmem:[%s220 + $0x28] sm:$0xf]
      %v1414 = vld [vmem:[%s220 + $0x2c] sm:$0x1]
      %v1415 = vld [vmem:[%s220 + $0x30] sm:$0xe]
      %v1416 = vld [vmem:[%s220 + $0x34] sm:$0xf]
      %v1417 = vld [vmem:[%s220 + $0x38] sm:$0x1]
      %v1418 = vld [vmem:[%s220 + $0x3c] sm:$0xe]
      %v1419 = vld [vmem:[%s220 + $0x40] sm:$0xf]
      %v1420 = vld [vmem:[%s220 + $0x44] sm:$0x1]
      %v1421 = vld [vmem:[%s220 + $0x48] sm:$0xe]
      %v1422 = vld [vmem:[%s220 + $0x4c] sm:$0xf]
      %v1423 = vld [vmem:[%s220 + $0x50] sm:$0x1]
      %v1424 = vld [vmem:[%s220 + $0x54] sm:$0xe]
      %v1425 = vld [vmem:[%s220 + $0x58] sm:$0xf]
      %v1426 = vld [vmem:[%s220 + $0x5c] sm:$0x1]
      %v1427 = vld [vmem:[%s220 + $0x60] sm:$0xe]
      %v1428 = vld [vmem:[%s220 + $0x64] sm:$0xf]
      %v1429 = vld [vmem:[%s220 + $0x68] sm:$0x1]
      %v1430 = vld [vmem:[%s220 + $0x6c] sm:$0xe]
      %v1431 = vld [vmem:[%s220 + $0x70] sm:$0xf]
      %v1432 = vld [vmem:[%s220 + $0x74] sm:$0x1]
      %v1433 = vld [vmem:[%s220 + $0x78] sm:$0xe]
      %v1434 = vld [vmem:[%s220 + $0x7c] sm:$0xf]
      %v1435 = vld [vmem:[%s220 + $0x80] sm:$0x1]
      %v1436 = vld [vmem:[%s220 + $0x84] sm:$0xe]
      %v1437 = vld [vmem:[%s220 + $0x88] sm:$0xf]
      %v1438 = vld [vmem:[%s220 + $0x8c] sm:$0x1]
      %v1439 = vld [vmem:[%s220 + $0x90] sm:$0xe]
      %v1440 = vld [vmem:[%s220 + $0x94] sm:$0xf]
      %v1441 = vld [vmem:[%s220 + $0x98] sm:$0x1]
      %v1442 = vld [vmem:[%s220 + $0x9c] sm:$0xe]
      %v1443 = vld [vmem:[%s220 + $0xa0] sm:$0xf]
      %v1444 = vld [vmem:[%s220 + $0xa4] sm:$0x1]
      %v1445 = vld [vmem:[%s220 + $0xa8] sm:$0xe]
      %v1446 = vld [vmem:[%s220 + $0xac] sm:$0xf]
      %v1447 = vld [vmem:[%s220 + $0xb0] sm:$0x1]
      %v1448 = vld [vmem:[%s220 + $0xb4] sm:$0xe]
      %v1449 = vld [vmem:[%s220 + $0xb8] sm:$0xf]
      %v1450 = vld [vmem:[%s220 + $0xbc] sm:$0x1]
      %v1451 = vld [vmem:[#allocation2] sm:$0xff]
      %v1452 = vld [vmem:[#allocation2 + $0x8] sm:$0xff]
      %v1453 = vld [vmem:[#allocation2 + $0x10] sm:$0xff]
      %v1454 = vld [vmem:[#allocation2 + $0x18] sm:$0xff]
      %v1455 = vld [vmem:[#allocation2 + $0x20] sm:$0xff]
      %v1456 = vld [vmem:[#allocation2 + $0x28] sm:$0xff]
      %v1457 = vld [vmem:[#allocation2 + $0x30] sm:$0xff]
      %v1458 = vld [vmem:[#allocation2 + $0x38] sm:$0xff]
      %v1459 = vld [vmem:[#allocation2 + $0x40] sm:$0xff]
      %v1460 = vld [vmem:[#allocation2 + $0x48] sm:$0xff]
      %v1461 = vld [vmem:[#allocation2 + $0x50] sm:$0xff]
      %v1462 = vld [vmem:[#allocation2 + $0x58] sm:$0xff]
      %v1463 = vld [vmem:[#allocation2 + $0x60] sm:$0xff]
      %v1464 = vld [vmem:[#allocation2 + $0x68] sm:$0xff]
      %v1465 = vld [vmem:[#allocation2 + $0x70] sm:$0xff]
      %v1466 = vld [vmem:[#allocation2 + $0x78] sm:$0xff]
      %v1467 = vld [vmem:[#allocation2 + $0x80] sm:$0xff]
      %v1468 = vld [vmem:[#allocation2 + $0x88] sm:$0xff]
      %v1469 = vld [vmem:[#allocation2 + $0x90] sm:$0xff]
      %v1470 = vld [vmem:[#allocation2 + $0x98] sm:$0xff]
      %v1471 = vld [vmem:[#allocation2 + $0xa0] sm:$0xff]
      %v1472 = vld [vmem:[#allocation2 + $0xa8] sm:$0xff]
      %v1473 = vld [vmem:[#allocation2 + $0xb0] sm:$0xff]
      %v1474 = vld [vmem:[#allocation2 + $0xb8] sm:$0xff]
      %v1475 = vld [vmem:[#allocation2 + $0xc0] sm:$0xff]
      %v1476 = vld [vmem:[#allocation2 + $0xc8] sm:$0xff]
      %v1477 = vld [vmem:[#allocation2 + $0xd0] sm:$0xff]
      %v1478 = vld [vmem:[#allocation2 + $0xd8] sm:$0xff]
      %v1479 = vld [vmem:[#allocation2 + $0xe0] sm:$0xff]
      %v1480 = vld [vmem:[#allocation2 + $0xe8] sm:$0xff]
      %v1481 = vld [vmem:[#allocation2 + $0xf0] sm:$0xff]
      %v1482 = vld [vmem:[#allocation2 + $0xf8] sm:$0xff]
      %vm1531 = vcmask 1042432
      %vm1532 = vcmask 1046532
      %vm1533 = vmor %vm1531, %vm1532
      %v1534 = vrot.slane %v1403, 5
      %v1535 = vrot.slane %v1534, 4
      %v1536 = vrot.slane %v1404, 5
      %v1537 = vsel %vm1533, %v1535, %v1536
      %v1538 = vrot.slane %v1536, 4
      %v1539 = vrot.slane %v1405, 5
      %v1540 = vsel %vm1533, %v1538, %v1539
      %v1541 = vrot.slane %v1406, 5
      %v1542 = vrot.slane %v1541, 4
      %v1543 = vrot.slane %v1407, 5
      %v1544 = vsel %vm1533, %v1542, %v1543
      %v1545 = vrot.slane %v1543, 4
      %v1546 = vrot.slane %v1408, 5
      %v1547 = vsel %vm1533, %v1545, %v1546
      %v1548 = vrot.slane %v1409, 5
      %v1549 = vrot.slane %v1548, 4
      %v1550 = vrot.slane %v1410, 5
      %v1551 = vsel %vm1533, %v1549, %v1550
      %v1552 = vrot.slane %v1550, 4
      %v1553 = vrot.slane %v1411, 5
      %v1554 = vsel %vm1533, %v1552, %v1553
      %v1555 = vrot.slane %v1412, 5
      %v1556 = vrot.slane %v1555, 4
      %v1557 = vrot.slane %v1413, 5
      %v1558 = vsel %vm1533, %v1556, %v1557
      %v1559 = vrot.slane %v1557, 4
      %v1560 = vrot.slane %v1414, 5
      %v1561 = vsel %vm1533, %v1559, %v1560
      %v1562 = vrot.slane %v1415, 5
      %v1563 = vrot.slane %v1562, 4
      %v1564 = vrot.slane %v1416, 5
      %v1565 = vsel %vm1533, %v1563, %v1564
      %v1566 = vrot.slane %v1564, 4
      %v1567 = vrot.slane %v1417, 5
      %v1568 = vsel %vm1533, %v1566, %v1567
      %v1569 = vrot.slane %v1418, 5
      %v1570 = vrot.slane %v1569, 4
      %v1571 = vrot.slane %v1419, 5
      %v1572 = vsel %vm1533, %v1570, %v1571
      %v1573 = vrot.slane %v1571, 4
      %v1574 = vrot.slane %v1420, 5
      %v1575 = vsel %vm1533, %v1573, %v1574
      %v1576 = vrot.slane %v1421, 5
      %v1577 = vrot.slane %v1576, 4
      %v1578 = vrot.slane %v1422, 5
      %v1579 = vsel %vm1533, %v1577, %v1578
      %v1580 = vrot.slane %v1578, 4
      %v1581 = vrot.slane %v1423, 5
      %v1582 = vsel %vm1533, %v1580, %v1581
      %v1583 = vrot.slane %v1424, 5
      %v1584 = vrot.slane %v1583, 4
      %v1585 = vrot.slane %v1425, 5
      %v1586 = vsel %vm1533, %v1584, %v1585
      %v1587 = vrot.slane %v1585, 4
      %v1588 = vrot.slane %v1426, 5
      %v1589 = vsel %vm1533, %v1587, %v1588
      %v1590 = vrot.slane %v1427, 5
      %v1591 = vrot.slane %v1590, 4
      %v1592 = vrot.slane %v1428, 5
      %v1593 = vsel %vm1533, %v1591, %v1592
      %v1594 = vrot.slane %v1592, 4
      %v1595 = vrot.slane %v1429, 5
      %v1596 = vsel %vm1533, %v1594, %v1595
      %v1597 = vrot.slane %v1430, 5
      %v1598 = vrot.slane %v1597, 4
      %v1599 = vrot.slane %v1431, 5
      %v1600 = vsel %vm1533, %v1598, %v1599
      %v1601 = vrot.slane %v1599, 4
      %v1602 = vrot.slane %v1432, 5
      %v1603 = vsel %vm1533, %v1601, %v1602
      %v1604 = vrot.slane %v1433, 5
      %v1605 = vrot.slane %v1604, 4
      %v1606 = vrot.slane %v1434, 5
      %v1607 = vsel %vm1533, %v1605, %v1606
      %v1608 = vrot.slane %v1606, 4
      %v1609 = vrot.slane %v1435, 5
      %v1610 = vsel %vm1533, %v1608, %v1609
      %v1611 = vrot.slane %v1436, 5
      %v1612 = vrot.slane %v1611, 4
      %v1613 = vrot.slane %v1437, 5
      %v1614 = vsel %vm1533, %v1612, %v1613
      %v1615 = vrot.slane %v1613, 4
      %v1616 = vrot.slane %v1438, 5
      %v1617 = vsel %vm1533, %v1615, %v1616
      %v1618 = vrot.slane %v1439, 5
      %v1619 = vrot.slane %v1618, 4
      %v1620 = vrot.slane %v1440, 5
      %v1621 = vsel %vm1533, %v1619, %v1620
      %v1622 = vrot.slane %v1620, 4
      %v1623 = vrot.slane %v1441, 5
      %v1624 = vsel %vm1533, %v1622, %v1623
      %v1625 = vrot.slane %v1442, 5
      %v1626 = vrot.slane %v1625, 4
      %v1627 = vrot.slane %v1443, 5
      %v1628 = vsel %vm1533, %v1626, %v1627
      %v1629 = vrot.slane %v1627, 4
      %v1630 = vrot.slane %v1444, 5
      %v1631 = vsel %vm1533, %v1629, %v1630
      %v1632 = vrot.slane %v1445, 5
      %v1633 = vrot.slane %v1632, 4
      %v1634 = vrot.slane %v1446, 5
      %v1635 = vsel %vm1533, %v1633, %v1634
      %v1636 = vrot.slane %v1634, 4
      %v1637 = vrot.slane %v1447, 5
      %v1638 = vsel %vm1533, %v1636, %v1637
      %v1639 = vrot.slane %v1448, 5
      %v1640 = vrot.slane %v1639, 4
      %v1641 = vrot.slane %v1449, 5
      %v1642 = vsel %vm1533, %v1640, %v1641
      %v1643 = vrot.slane %v1641, 4
      %v1644 = vrot.slane %v1450, 5
      %v1645 = vsel %vm1533, %v1643, %v1644
      %s1646 = scalar_lea.vmem %s224, 128
      %v1647 = vld [vmem:[%s1646] sm:$0xf]
      %v1648 = vld [vmem:[%s1646 + $0x4] sm:$0xf]
      %v1649 = vld [vmem:[%s1646 + $0x8] sm:$0xf]
      %v1650 = vld [vmem:[%s1646 + $0xc] sm:$0xf]
      %v1651 = vld [vmem:[%s1646 + $0x10] sm:$0xf]
      %v1652 = vld [vmem:[%s1646 + $0x14] sm:$0xf]
      %v1653 = vld [vmem:[%s1646 + $0x18] sm:$0xf]
      %v1654 = vld [vmem:[%s1646 + $0x1c] sm:$0xf]
      %v1655 = vld [vmem:[%s1646 + $0x20] sm:$0xf]
      %v1656 = vld [vmem:[%s1646 + $0x24] sm:$0xf]
      %v1657 = vld [vmem:[%s1646 + $0x28] sm:$0xf]
      %v1658 = vld [vmem:[%s1646 + $0x2c] sm:$0xf]
      %v1659 = vld [vmem:[%s1646 + $0x30] sm:$0xf]
      %v1660 = vld [vmem:[%s1646 + $0x34] sm:$0xf]
      %v1661 = vld [vmem:[%s1646 + $0x38] sm:$0xf]
      %v1662 = vld [vmem:[%s1646 + $0x3c] sm:$0xf]
      %v1663 = vunpack.c.l.b16 %v1537
      %v1664 = vunpack.c.l.b16 %v1540
      %v1665 = vunpack.c.l.b16 %v1544
      %v1666 = vunpack.c.l.b16 %v1547
      %v1667 = vunpack.c.l.b16 %v1551
      %v1668 = vunpack.c.l.b16 %v1554
      %v1669 = vunpack.c.l.b16 %v1558
      %v1670 = vunpack.c.l.b16 %v1561
      %v1671 = vunpack.c.l.b16 %v1565
      %v1672 = vunpack.c.l.b16 %v1568
      %v1673 = vunpack.c.l.b16 %v1572
      %v1674 = vunpack.c.l.b16 %v1575
      %v1675 = vunpack.c.l.b16 %v1579
      %v1676 = vunpack.c.l.b16 %v1582
      %v1677 = vunpack.c.l.b16 %v1586
      %v1678 = vunpack.c.l.b16 %v1589
      %v1679 = vunpack.c.l.b16 %v1593
      %v1680 = vunpack.c.l.b16 %v1596
      %v1681 = vunpack.c.l.b16 %v1600
      %v1682 = vunpack.c.l.b16 %v1603
      %v1683 = vunpack.c.l.b16 %v1607
      %v1684 = vunpack.c.l.b16 %v1610
      %v1685 = vunpack.c.l.b16 %v1614
      %v1686 = vunpack.c.l.b16 %v1617
      %v1687 = vunpack.c.l.b16 %v1621
      %v1688 = vunpack.c.l.b16 %v1624
      %v1689 = vunpack.c.l.b16 %v1628
      %v1690 = vunpack.c.l.b16 %v1631
      %v1691 = vunpack.c.l.b16 %v1635
      %v1692 = vunpack.c.l.b16 %v1638
      %v1693 = vunpack.c.l.b16 %v1642
      %v1694 = vunpack.c.l.b16 %v1645
      %v1695 = vpack.c.b16 %v1664, %v1663
      %v1696 = vpack.c.b16 %v1666, %v1665
      %v1697 = vpack.c.b16 %v1668, %v1667
      %v1698 = vpack.c.b16 %v1670, %v1669
      %v1699 = vpack.c.b16 %v1672, %v1671
      %v1700 = vpack.c.b16 %v1674, %v1673
      %v1701 = vpack.c.b16 %v1676, %v1675
      %v1702 = vpack.c.b16 %v1678, %v1677
      %v1703 = vpack.c.b16 %v1680, %v1679
      %v1704 = vpack.c.b16 %v1682, %v1681
      %v1705 = vpack.c.b16 %v1684, %v1683
      %v1706 = vpack.c.b16 %v1686, %v1685
      %v1707 = vpack.c.b16 %v1688, %v1687
      %v1708 = vpack.c.b16 %v1690, %v1689
      %v1709 = vpack.c.b16 %v1692, %v1691
      %v1710 = vpack.c.b16 %v1694, %v1693
      %v1743 = vunpack.c.l.b16 %v1647
      %v1744 = vunpack.c.l.b16 %v1648
      %v1745 = vunpack.c.l.b16 %v1649
      %v1746 = vunpack.c.l.b16 %v1650
      %v1747 = vunpack.c.l.b16 %v1651
      %v1748 = vunpack.c.l.b16 %v1652
      %v1749 = vunpack.c.l.b16 %v1653
      %v1750 = vunpack.c.l.b16 %v1654
      %v1751 = vunpack.c.l.b16 %v1655
      %v1752 = vunpack.c.l.b16 %v1656
      %v1753 = vunpack.c.l.b16 %v1657
      %v1754 = vunpack.c.l.b16 %v1658
      %v1755 = vunpack.c.l.b16 %v1659
      %v1756 = vunpack.c.l.b16 %v1660
      %v1757 = vunpack.c.l.b16 %v1661
      %v1758 = vunpack.c.l.b16 %v1662
      %v1759 = vpack.c.b16 %v1744, %v1743
      %v1760 = vpack.c.b16 %v1746, %v1745
      %v1761 = vpack.c.b16 %v1748, %v1747
      %v1762 = vpack.c.b16 %v1750, %v1749
      %v1763 = vpack.c.b16 %v1752, %v1751
      %v1764 = vpack.c.b16 %v1754, %v1753
      %v1765 = vpack.c.b16 %v1756, %v1755
      %v1766 = vpack.c.b16 %v1758, %v1757
      %1775 = vmatpush.bf16.msra.mxu0 %v1766
      %1776 = vmatpush.bf16.msra.mxu0 %v1765
      %1777 = vmatpush.bf16.msra.mxu0 %v1764
      %1778 = vmatpush.bf16.msra.mxu0 %v1763
      %1779 = vmatpush.bf16.msra.mxu0 %v1762
      %1780 = vmatpush.bf16.msra.mxu0 %v1761
      %1781 = vmatpush.bf16.msra.mxu0 %v1760
      %1782 = vmatpush.bf16.msra.mxu0 %v1759
      %1783 = vmatmul.bf16.gmra.mxu0 %v1695
      %v1784 = vpop.f32.mrf.mxu0
      %v1785 = vadd.f32 0.0, %v1784
      %v1786 = vpop.f32.mrf.mxu0
      %v1787 = vadd.f32 0.0, %v1786
      %1788 = vmatmul.bf16.gmra.mxu0 %v1696
      %v1789 = vpop.f32.mrf.mxu0
      %v1790 = vadd.f32 0.0, %v1789
      %v1791 = vpop.f32.mrf.mxu0
      %v1792 = vadd.f32 0.0, %v1791
      %1793 = vmatmul.bf16.gmra.mxu0 %v1697
      %v1794 = vpop.f32.mrf.mxu0
      %v1795 = vadd.f32 0.0, %v1794
      %v1796 = vpop.f32.mrf.mxu0
      %v1797 = vadd.f32 0.0, %v1796
      %1798 = vmatmul.bf16.gmra.mxu0 %v1698
      %v1799 = vpop.f32.mrf.mxu0
      %v1800 = vadd.f32 0.0, %v1799
      %v1801 = vpop.f32.mrf.mxu0
      %v1802 = vadd.f32 0.0, %v1801
      %1803 = vmatmul.bf16.gmra.mxu0 %v1699
      %v1804 = vpop.f32.mrf.mxu0
      %v1805 = vadd.f32 0.0, %v1804
      %v1806 = vpop.f32.mrf.mxu0
      %v1807 = vadd.f32 0.0, %v1806
      %1808 = vmatmul.bf16.gmra.mxu0 %v1700
      %v1809 = vpop.f32.mrf.mxu0
      %v1810 = vadd.f32 0.0, %v1809
      %v1811 = vpop.f32.mrf.mxu0
      %v1812 = vadd.f32 0.0, %v1811
      %1813 = vmatmul.bf16.gmra.mxu0 %v1701
      %v1814 = vpop.f32.mrf.mxu0
      %v1815 = vadd.f32 0.0, %v1814
      %v1816 = vpop.f32.mrf.mxu0
      %v1817 = vadd.f32 0.0, %v1816
      %1818 = vmatmul.bf16.gmra.mxu0 %v1702
      %v1819 = vpop.f32.mrf.mxu0
      %v1820 = vadd.f32 0.0, %v1819
      %v1821 = vpop.f32.mrf.mxu0
      %v1822 = vadd.f32 0.0, %v1821
      %1823 = vmatmul.bf16.gmra.mxu0 %v1703
      %v1824 = vpop.f32.mrf.mxu0
      %v1825 = vadd.f32 0.0, %v1824
      %v1826 = vpop.f32.mrf.mxu0
      %v1827 = vadd.f32 0.0, %v1826
      %1828 = vmatmul.bf16.gmra.mxu0 %v1704
      %v1829 = vpop.f32.mrf.mxu0
      %v1830 = vadd.f32 0.0, %v1829
      %v1831 = vpop.f32.mrf.mxu0
      %v1832 = vadd.f32 0.0, %v1831
      %1833 = vmatmul.bf16.gmra.mxu0 %v1705
      %v1834 = vpop.f32.mrf.mxu0
      %v1835 = vadd.f32 0.0, %v1834
      %v1836 = vpop.f32.mrf.mxu0
      %v1837 = vadd.f32 0.0, %v1836
      %1838 = vmatmul.bf16.gmra.mxu0 %v1706
      %v1839 = vpop.f32.mrf.mxu0
      %v1840 = vadd.f32 0.0, %v1839
      %v1841 = vpop.f32.mrf.mxu0
      %v1842 = vadd.f32 0.0, %v1841
      %1843 = vmatmul.bf16.gmra.mxu0 %v1707
      %v1844 = vpop.f32.mrf.mxu0
      %v1845 = vadd.f32 0.0, %v1844
      %v1846 = vpop.f32.mrf.mxu0
      %v1847 = vadd.f32 0.0, %v1846
      %1848 = vmatmul.bf16.gmra.mxu0 %v1708
      %v1849 = vpop.f32.mrf.mxu0
      %v1850 = vadd.f32 0.0, %v1849
      %v1851 = vpop.f32.mrf.mxu0
      %v1852 = vadd.f32 0.0, %v1851
      %1853 = vmatmul.bf16.gmra.mxu0 %v1709
      %v1854 = vpop.f32.mrf.mxu0
      %v1855 = vadd.f32 0.0, %v1854
      %v1856 = vpop.f32.mrf.mxu0
      %v1857 = vadd.f32 0.0, %v1856
      %1858 = vmatmul.bf16.gmra.mxu0 %v1710
      %v1859 = vpop.f32.mrf.mxu0
      %v1860 = vadd.f32 0.0, %v1859
      %v1861 = vpop.f32.mrf.mxu0
      %v1862 = vadd.f32 0.0, %v1861
      %1863 = vdwg.mxu0
      %v1864 = vadd.f32 %v1451, %v1785
      %v1865 = vadd.f32 %v1452, %v1787
      %v1866 = vadd.f32 %v1453, %v1790
      %v1867 = vadd.f32 %v1454, %v1792
      %v1868 = vadd.f32 %v1455, %v1795
      %v1869 = vadd.f32 %v1456, %v1797
      %v1870 = vadd.f32 %v1457, %v1800
      %v1871 = vadd.f32 %v1458, %v1802
      %v1872 = vadd.f32 %v1459, %v1805
      %v1873 = vadd.f32 %v1460, %v1807
      %v1874 = vadd.f32 %v1461, %v1810
      %v1875 = vadd.f32 %v1462, %v1812
      %v1876 = vadd.f32 %v1463, %v1815
      %v1877 = vadd.f32 %v1464, %v1817
      %v1878 = vadd.f32 %v1465, %v1820
      %v1879 = vadd.f32 %v1466, %v1822
      %v1880 = vadd.f32 %v1467, %v1825
      %v1881 = vadd.f32 %v1468, %v1827
      %v1882 = vadd.f32 %v1469, %v1830
      %v1883 = vadd.f32 %v1470, %v1832
      %v1884 = vadd.f32 %v1471, %v1835
      %v1885 = vadd.f32 %v1472, %v1837
      %v1886 = vadd.f32 %v1473, %v1840
      %v1887 = vadd.f32 %v1474, %v1842
      %v1888 = vadd.f32 %v1475, %v1845
      %v1889 = vadd.f32 %v1476, %v1847
      %v1890 = vadd.f32 %v1477, %v1850
      %v1891 = vadd.f32 %v1478, %v1852
      %v1892 = vadd.f32 %v1479, %v1855
      %v1893 = vadd.f32 %v1480, %v1857
      %v1894 = vadd.f32 %v1481, %v1860
      %v1895 = vadd.f32 %v1482, %v1862
      %1896 = vst [vmem:[#allocation2] sm:$0xff] %v1864
      %1897 = vst [vmem:[#allocation2 + $0x8] sm:$0xff] %v1865
      %1898 = vst [vmem:[#allocation2 + $0x10] sm:$0xff] %v1866
      %1899 = vst [vmem:[#allocation2 + $0x18] sm:$0xff] %v1867
      %1900 = vst [vmem:[#allocation2 + $0x20] sm:$0xff] %v1868
      %1901 = vst [vmem:[#allocation2 + $0x28] sm:$0xff] %v1869
      %1902 = vst [vmem:[#allocation2 + $0x30] sm:$0xff] %v1870
      %1903 = vst [vmem:[#allocation2 + $0x38] sm:$0xff] %v1871
      %1904 = vst [vmem:[#allocation2 + $0x40] sm:$0xff] %v1872
      %1905 = vst [vmem:[#allocation2 + $0x48] sm:$0xff] %v1873
      %1906 = vst [vmem:[#allocation2 + $0x50] sm:$0xff] %v1874
      %1907 = vst [vmem:[#allocation2 + $0x58] sm:$0xff] %v1875
      %1908 = vst [vmem:[#allocation2 + $0x60] sm:$0xff] %v1876
      %1909 = vst [vmem:[#allocation2 + $0x68] sm:$0xff] %v1877
      %1910 = vst [vmem:[#allocation2 + $0x70] sm:$0xff] %v1878
      %1911 = vst [vmem:[#allocation2 + $0x78] sm:$0xff] %v1879
      %1912 = vst [vmem:[#allocation2 + $0x80] sm:$0xff] %v1880
      %1913 = vst [vmem:[#allocation2 + $0x88] sm:$0xff] %v1881
      %1914 = vst [vmem:[#allocation2 + $0x90] sm:$0xff] %v1882
      %1915 = vst [vmem:[#allocation2 + $0x98] sm:$0xff] %v1883
      %1916 = vst [vmem:[#allocation2 + $0xa0] sm:$0xff] %v1884
      %1917 = vst [vmem:[#allocation2 + $0xa8] sm:$0xff] %v1885
      %1918 = vst [vmem:[#allocation2 + $0xb0] sm:$0xff] %v1886
      %1919 = vst [vmem:[#allocation2 + $0xb8] sm:$0xff] %v1887
      %1920 = vst [vmem:[#allocation2 + $0xc0] sm:$0xff] %v1888
      %1921 = vst [vmem:[#allocation2 + $0xc8] sm:$0xff] %v1889
      %1922 = vst [vmem:[#allocation2 + $0xd0] sm:$0xff] %v1890
      %1923 = vst [vmem:[#allocation2 + $0xd8] sm:$0xff] %v1891
      %1924 = vst [vmem:[#allocation2 + $0xe0] sm:$0xff] %v1892
      %1925 = vst [vmem:[#allocation2 + $0xe8] sm:$0xff] %v1893
      %1926 = vst [vmem:[#allocation2 + $0xf0] sm:$0xff] %v1894
      %1927 = vst [vmem:[#allocation2 + $0xf8] sm:$0xff] %v1895
      %s1928 = scalar_lea.vmem %s220, 12
      %v1929 = vld [vmem:[%s1928] sm:$0xf]
      %v1930 = vld [vmem:[%s1928 + $0x4] sm:$0xf]
      %v1931 = vld [vmem:[%s1928 + $0xc] sm:$0xf]
      %v1932 = vld [vmem:[%s1928 + $0x10] sm:$0xf]
      %v1933 = vld [vmem:[%s1928 + $0x18] sm:$0xf]
      %v1934 = vld [vmem:[%s1928 + $0x1c] sm:$0xf]
      %v1935 = vld [vmem:[%s1928 + $0x24] sm:$0xf]
      %v1936 = vld [vmem:[%s1928 + $0x28] sm:$0xf]
      %v1937 = vld [vmem:[%s1928 + $0x30] sm:$0xf]
      %v1938 = vld [vmem:[%s1928 + $0x34] sm:$0xf]
      %v1939 = vld [vmem:[%s1928 + $0x3c] sm:$0xf]
      %v1940 = vld [vmem:[%s1928 + $0x40] sm:$0xf]
      %v1941 = vld [vmem:[%s1928 + $0x48] sm:$0xf]
      %v1942 = vld [vmem:[%s1928 + $0x4c] sm:$0xf]
      %v1943 = vld [vmem:[%s1928 + $0x54] sm:$0xf]
      %v1944 = vld [vmem:[%s1928 + $0x58] sm:$0xf]
      %v1945 = vld [vmem:[%s1928 + $0x60] sm:$0xf]
      %v1946 = vld [vmem:[%s1928 + $0x64] sm:$0xf]
      %v1947 = vld [vmem:[%s1928 + $0x6c] sm:$0xf]
      %v1948 = vld [vmem:[%s1928 + $0x70] sm:$0xf]
      %v1949 = vld [vmem:[%s1928 + $0x78] sm:$0xf]
      %v1950 = vld [vmem:[%s1928 + $0x7c] sm:$0xf]
      %v1951 = vld [vmem:[%s1928 + $0x84] sm:$0xf]
      %v1952 = vld [vmem:[%s1928 + $0x88] sm:$0xf]
      %v1953 = vld [vmem:[%s1928 + $0x90] sm:$0xf]
      %v1954 = vld [vmem:[%s1928 + $0x94] sm:$0xf]
      %v1955 = vld [vmem:[%s1928 + $0x9c] sm:$0xf]
      %v1956 = vld [vmem:[%s1928 + $0xa0] sm:$0xf]
      %v1957 = vld [vmem:[%s1928 + $0xa8] sm:$0xf]
      %v1958 = vld [vmem:[%s1928 + $0xac] sm:$0xf]
      %v1959 = vld [vmem:[%s1928 + $0xb4] sm:$0xf]
      %v1960 = vld [vmem:[%s1928 + $0xb8] sm:$0xf]
      %v1961 = vld [vmem:[#allocation2] sm:$0xff]
      %v1962 = vld [vmem:[#allocation2 + $0x8] sm:$0xff]
      %v1963 = vld [vmem:[#allocation2 + $0x10] sm:$0xff]
      %v1964 = vld [vmem:[#allocation2 + $0x18] sm:$0xff]
      %v1965 = vld [vmem:[#allocation2 + $0x20] sm:$0xff]
      %v1966 = vld [vmem:[#allocation2 + $0x28] sm:$0xff]
      %v1967 = vld [vmem:[#allocation2 + $0x30] sm:$0xff]
      %v1968 = vld [vmem:[#allocation2 + $0x38] sm:$0xff]
      %v1969 = vld [vmem:[#allocation2 + $0x40] sm:$0xff]
      %v1970 = vld [vmem:[#allocation2 + $0x48] sm:$0xff]
      %v1971 = vld [vmem:[#allocation2 + $0x50] sm:$0xff]
      %v1972 = vld [vmem:[#allocation2 + $0x58] sm:$0xff]
      %v1973 = vld [vmem:[#allocation2 + $0x60] sm:$0xff]
      %v1974 = vld [vmem:[#allocation2 + $0x68] sm:$0xff]
      %v1975 = vld [vmem:[#allocation2 + $0x70] sm:$0xff]
      %v1976 = vld [vmem:[#allocation2 + $0x78] sm:$0xff]
      %v1977 = vld [vmem:[#allocation2 + $0x80] sm:$0xff]
      %v1978 = vld [vmem:[#allocation2 + $0x88] sm:$0xff]
      %v1979 = vld [vmem:[#allocation2 + $0x90] sm:$0xff]
      %v1980 = vld [vmem:[#allocation2 + $0x98] sm:$0xff]
      %v1981 = vld [vmem:[#allocation2 + $0xa0] sm:$0xff]
      %v1982 = vld [vmem:[#allocation2 + $0xa8] sm:$0xff]
      %v1983 = vld [vmem:[#allocation2 + $0xb0] sm:$0xff]
      %v1984 = vld [vmem:[#allocation2 + $0xb8] sm:$0xff]
      %v1985 = vld [vmem:[#allocation2 + $0xc0] sm:$0xff]
      %v1986 = vld [vmem:[#allocation2 + $0xc8] sm:$0xff]
      %v1987 = vld [vmem:[#allocation2 + $0xd0] sm:$0xff]
      %v1988 = vld [vmem:[#allocation2 + $0xd8] sm:$0xff]
      %v1989 = vld [vmem:[#allocation2 + $0xe0] sm:$0xff]
      %v1990 = vld [vmem:[#allocation2 + $0xe8] sm:$0xff]
      %v1991 = vld [vmem:[#allocation2 + $0xf0] sm:$0xff]
      %v1992 = vld [vmem:[#allocation2 + $0xf8] sm:$0xff]
      %s1993 = scalar_lea.vmem %s224, 192
      %v1994 = vld [vmem:[%s1993] sm:$0xf]
      %v1995 = vld [vmem:[%s1993 + $0x4] sm:$0xf]
      %v1996 = vld [vmem:[%s1993 + $0x8] sm:$0xf]
      %v1997 = vld [vmem:[%s1993 + $0xc] sm:$0xf]
      %v1998 = vld [vmem:[%s1993 + $0x10] sm:$0xf]
      %v1999 = vld [vmem:[%s1993 + $0x14] sm:$0xf]
      %v2000 = vld [vmem:[%s1993 + $0x18] sm:$0xf]
      %v2001 = vld [vmem:[%s1993 + $0x1c] sm:$0xf]
      %v2002 = vld [vmem:[%s1993 + $0x20] sm:$0xf]
      %v2003 = vld [vmem:[%s1993 + $0x24] sm:$0xf]
      %v2004 = vld [vmem:[%s1993 + $0x28] sm:$0xf]
      %v2005 = vld [vmem:[%s1993 + $0x2c] sm:$0xf]
      %v2006 = vld [vmem:[%s1993 + $0x30] sm:$0xf]
      %v2007 = vld [vmem:[%s1993 + $0x34] sm:$0xf]
      %v2008 = vld [vmem:[%s1993 + $0x38] sm:$0xf]
      %v2009 = vld [vmem:[%s1993 + $0x3c] sm:$0xf]
      %v2042 = vunpack.c.l.b16 %v1929
      %v2043 = vunpack.c.l.b16 %v1930
      %v2044 = vunpack.c.l.b16 %v1931
      %v2045 = vunpack.c.l.b16 %v1932
      %v2046 = vunpack.c.l.b16 %v1933
      %v2047 = vunpack.c.l.b16 %v1934
      %v2048 = vunpack.c.l.b16 %v1935
      %v2049 = vunpack.c.l.b16 %v1936
      %v2050 = vunpack.c.l.b16 %v1937
      %v2051 = vunpack.c.l.b16 %v1938
      %v2052 = vunpack.c.l.b16 %v1939
      %v2053 = vunpack.c.l.b16 %v1940
      %v2054 = vunpack.c.l.b16 %v1941
      %v2055 = vunpack.c.l.b16 %v1942
      %v2056 = vunpack.c.l.b16 %v1943
      %v2057 = vunpack.c.l.b16 %v1944
      %v2058 = vunpack.c.l.b16 %v1945
      %v2059 = vunpack.c.l.b16 %v1946
      %v2060 = vunpack.c.l.b16 %v1947
      %v2061 = vunpack.c.l.b16 %v1948
      %v2062 = vunpack.c.l.b16 %v1949
      %v2063 = vunpack.c.l.b16 %v1950
      %v2064 = vunpack.c.l.b16 %v1951
      %v2065 = vunpack.c.l.b16 %v1952
      %v2066 = vunpack.c.l.b16 %v1953
      %v2067 = vunpack.c.l.b16 %v1954
      %v2068 = vunpack.c.l.b16 %v1955
      %v2069 = vunpack.c.l.b16 %v1956
      %v2070 = vunpack.c.l.b16 %v1957
      %v2071 = vunpack.c.l.b16 %v1958
      %v2072 = vunpack.c.l.b16 %v1959
      %v2073 = vunpack.c.l.b16 %v1960
      %v2074 = vpack.c.b16 %v2043, %v2042
      %v2075 = vpack.c.b16 %v2045, %v2044
      %v2076 = vpack.c.b16 %v2047, %v2046
      %v2077 = vpack.c.b16 %v2049, %v2048
      %v2078 = vpack.c.b16 %v2051, %v2050
      %v2079 = vpack.c.b16 %v2053, %v2052
      %v2080 = vpack.c.b16 %v2055, %v2054
      %v2081 = vpack.c.b16 %v2057, %v2056
      %v2082 = vpack.c.b16 %v2059, %v2058
      %v2083 = vpack.c.b16 %v2061, %v2060
      %v2084 = vpack.c.b16 %v2063, %v2062
      %v2085 = vpack.c.b16 %v2065, %v2064
      %v2086 = vpack.c.b16 %v2067, %v2066
      %v2087 = vpack.c.b16 %v2069, %v2068
      %v2088 = vpack.c.b16 %v2071, %v2070
      %v2089 = vpack.c.b16 %v2073, %v2072
      %v2122 = vunpack.c.l.b16 %v1994
      %v2123 = vunpack.c.l.b16 %v1995
      %v2124 = vunpack.c.l.b16 %v1996
      %v2125 = vunpack.c.l.b16 %v1997
      %v2126 = vunpack.c.l.b16 %v1998
      %v2127 = vunpack.c.l.b16 %v1999
      %v2128 = vunpack.c.l.b16 %v2000
      %v2129 = vunpack.c.l.b16 %v2001
      %v2130 = vunpack.c.l.b16 %v2002
      %v2131 = vunpack.c.l.b16 %v2003
      %v2132 = vunpack.c.l.b16 %v2004
      %v2133 = vunpack.c.l.b16 %v2005
      %v2134 = vunpack.c.l.b16 %v2006
      %v2135 = vunpack.c.l.b16 %v2007
      %v2136 = vunpack.c.l.b16 %v2008
      %v2137 = vunpack.c.l.b16 %v2009
      %v2138 = vpack.c.b16 %v2123, %v2122
      %v2139 = vpack.c.b16 %v2125, %v2124
      %v2140 = vpack.c.b16 %v2127, %v2126
      %v2141 = vpack.c.b16 %v2129, %v2128
      %v2142 = vpack.c.b16 %v2131, %v2130
      %v2143 = vpack.c.b16 %v2133, %v2132
      %v2144 = vpack.c.b16 %v2135, %v2134
      %v2145 = vpack.c.b16 %v2137, %v2136
      %2154 = vmatpush.bf16.msra.mxu0 %v2145
      %2155 = vmatpush.bf16.msra.mxu0 %v2144
      %2156 = vmatpush.bf16.msra.mxu0 %v2143
      %2157 = vmatpush.bf16.msra.mxu0 %v2142
      %2158 = vmatpush.bf16.msra.mxu0 %v2141
      %2159 = vmatpush.bf16.msra.mxu0 %v2140
      %2160 = vmatpush.bf16.msra.mxu0 %v2139
      %2161 = vmatpush.bf16.msra.mxu0 %v2138
      %2162 = vmatmul.bf16.gmra.mxu0 %v2074
      %v2163 = vpop.f32.mrf.mxu0
      %v2164 = vadd.f32 0.0, %v2163
      %v2165 = vpop.f32.mrf.mxu0
      %v2166 = vadd.f32 0.0, %v2165
      %2167 = vmatmul.bf16.gmra.mxu0 %v2075
      %v2168 = vpop.f32.mrf.mxu0
      %v2169 = vadd.f32 0.0, %v2168
      %v2170 = vpop.f32.mrf.mxu0
      %v2171 = vadd.f32 0.0, %v2170
      %2172 = vmatmul.bf16.gmra.mxu0 %v2076
      %v2173 = vpop.f32.mrf.mxu0
      %v2174 = vadd.f32 0.0, %v2173
      %v2175 = vpop.f32.mrf.mxu0
      %v2176 = vadd.f32 0.0, %v2175
      %2177 = vmatmul.bf16.gmra.mxu0 %v2077
      %v2178 = vpop.f32.mrf.mxu0
      %v2179 = vadd.f32 0.0, %v2178
      %v2180 = vpop.f32.mrf.mxu0
      %v2181 = vadd.f32 0.0, %v2180
      %2182 = vmatmul.bf16.gmra.mxu0 %v2078
      %v2183 = vpop.f32.mrf.mxu0
      %v2184 = vadd.f32 0.0, %v2183
      %v2185 = vpop.f32.mrf.mxu0
      %v2186 = vadd.f32 0.0, %v2185
      %2187 = vmatmul.bf16.gmra.mxu0 %v2079
      %v2188 = vpop.f32.mrf.mxu0
      %v2189 = vadd.f32 0.0, %v2188
      %v2190 = vpop.f32.mrf.mxu0
      %v2191 = vadd.f32 0.0, %v2190
      %2192 = vmatmul.bf16.gmra.mxu0 %v2080
      %v2193 = vpop.f32.mrf.mxu0
      %v2194 = vadd.f32 0.0, %v2193
      %v2195 = vpop.f32.mrf.mxu0
      %v2196 = vadd.f32 0.0, %v2195
      %2197 = vmatmul.bf16.gmra.mxu0 %v2081
      %v2198 = vpop.f32.mrf.mxu0
      %v2199 = vadd.f32 0.0, %v2198
      %v2200 = vpop.f32.mrf.mxu0
      %v2201 = vadd.f32 0.0, %v2200
      %2202 = vmatmul.bf16.gmra.mxu0 %v2082
      %v2203 = vpop.f32.mrf.mxu0
      %v2204 = vadd.f32 0.0, %v2203
      %v2205 = vpop.f32.mrf.mxu0
      %v2206 = vadd.f32 0.0, %v2205
      %2207 = vmatmul.bf16.gmra.mxu0 %v2083
      %v2208 = vpop.f32.mrf.mxu0
      %v2209 = vadd.f32 0.0, %v2208
      %v2210 = vpop.f32.mrf.mxu0
      %v2211 = vadd.f32 0.0, %v2210
      %2212 = vmatmul.bf16.gmra.mxu0 %v2084
      %v2213 = vpop.f32.mrf.mxu0
      %v2214 = vadd.f32 0.0, %v2213
      %v2215 = vpop.f32.mrf.mxu0
      %v2216 = vadd.f32 0.0, %v2215
      %2217 = vmatmul.bf16.gmra.mxu0 %v2085
      %v2218 = vpop.f32.mrf.mxu0
      %v2219 = vadd.f32 0.0, %v2218
      %v2220 = vpop.f32.mrf.mxu0
      %v2221 = vadd.f32 0.0, %v2220
      %2222 = vmatmul.bf16.gmra.mxu0 %v2086
      %v2223 = vpop.f32.mrf.mxu0
      %v2224 = vadd.f32 0.0, %v2223
      %v2225 = vpop.f32.mrf.mxu0
      %v2226 = vadd.f32 0.0, %v2225
      %2227 = vmatmul.bf16.gmra.mxu0 %v2087
      %v2228 = vpop.f32.mrf.mxu0
      %v2229 = vadd.f32 0.0, %v2228
      %v2230 = vpop.f32.mrf.mxu0
      %v2231 = vadd.f32 0.0, %v2230
      %2232 = vmatmul.bf16.gmra.mxu0 %v2088
      %v2233 = vpop.f32.mrf.mxu0
      %v2234 = vadd.f32 0.0, %v2233
      %v2235 = vpop.f32.mrf.mxu0
      %v2236 = vadd.f32 0.0, %v2235
      %2237 = vmatmul.bf16.gmra.mxu0 %v2089
      %v2238 = vpop.f32.mrf.mxu0
      %v2239 = vadd.f32 0.0, %v2238
      %v2240 = vpop.f32.mrf.mxu0
      %v2241 = vadd.f32 0.0, %v2240
      %2242 = vdwg.mxu0
      %v2243 = vadd.f32 %v1961, %v2164
      %v2244 = vadd.f32 %v1962, %v2166
      %v2245 = vadd.f32 %v1963, %v2169
      %v2246 = vadd.f32 %v1964, %v2171
      %v2247 = vadd.f32 %v1965, %v2174
      %v2248 = vadd.f32 %v1966, %v2176
      %v2249 = vadd.f32 %v1967, %v2179
      %v2250 = vadd.f32 %v1968, %v2181
      %v2251 = vadd.f32 %v1969, %v2184
      %v2252 = vadd.f32 %v1970, %v2186
      %v2253 = vadd.f32 %v1971, %v2189
      %v2254 = vadd.f32 %v1972, %v2191
      %v2255 = vadd.f32 %v1973, %v2194
      %v2256 = vadd.f32 %v1974, %v2196
      %v2257 = vadd.f32 %v1975, %v2199
      %v2258 = vadd.f32 %v1976, %v2201
      %v2259 = vadd.f32 %v1977, %v2204
      %v2260 = vadd.f32 %v1978, %v2206
      %v2261 = vadd.f32 %v1979, %v2209
      %v2262 = vadd.f32 %v1980, %v2211
      %v2263 = vadd.f32 %v1981, %v2214
      %v2264 = vadd.f32 %v1982, %v2216
      %v2265 = vadd.f32 %v1983, %v2219
      %v2266 = vadd.f32 %v1984, %v2221
      %v2267 = vadd.f32 %v1985, %v2224
      %v2268 = vadd.f32 %v1986, %v2226
      %v2269 = vadd.f32 %v1987, %v2229
      %v2270 = vadd.f32 %v1988, %v2231
      %v2271 = vadd.f32 %v1989, %v2234
      %v2272 = vadd.f32 %v1990, %v2236
      %v2273 = vadd.f32 %v1991, %v2239
      %v2274 = vadd.f32 %v1992, %v2241
      %2275 = vst [vmem:[#allocation2] sm:$0xff] %v2243
      %2276 = vst [vmem:[#allocation2 + $0x8] sm:$0xff] %v2244
      %2277 = vst [vmem:[#allocation2 + $0x10] sm:$0xff] %v2245
      %2278 = vst [vmem:[#allocation2 + $0x18] sm:$0xff] %v2246
      %2279 = vst [vmem:[#allocation2 + $0x20] sm:$0xff] %v2247
      %2280 = vst [vmem:[#allocation2 + $0x28] sm:$0xff] %v2248
      %2281 = vst [vmem:[#allocation2 + $0x30] sm:$0xff] %v2249
      %2282 = vst [vmem:[#allocation2 + $0x38] sm:$0xff] %v2250
      %2283 = vst [vmem:[#allocation2 + $0x40] sm:$0xff] %v2251
      %2284 = vst [vmem:[#allocation2 + $0x48] sm:$0xff] %v2252
      %2285 = vst [vmem:[#allocation2 + $0x50] sm:$0xff] %v2253
      %2286 = vst [vmem:[#allocation2 + $0x58] sm:$0xff] %v2254
      %2287 = vst [vmem:[#allocation2 + $0x60] sm:$0xff] %v2255
      %2288 = vst [vmem:[#allocation2 + $0x68] sm:$0xff] %v2256
      %2289 = vst [vmem:[#allocation2 + $0x70] sm:$0xff] %v2257
      %2290 = vst [vmem:[#allocation2 + $0x78] sm:$0xff] %v2258
      %2291 = vst [vmem:[#allocation2 + $0x80] sm:$0xff] %v2259
      %2292 = vst [vmem:[#allocation2 + $0x88] sm:$0xff] %v2260
      %2293 = vst [vmem:[#allocation2 + $0x90] sm:$0xff] %v2261
      %2294 = vst [vmem:[#allocation2 + $0x98] sm:$0xff] %v2262
      %2295 = vst [vmem:[#allocation2 + $0xa0] sm:$0xff] %v2263
      %2296 = vst [vmem:[#allocation2 + $0xa8] sm:$0xff] %v2264
      %2297 = vst [vmem:[#allocation2 + $0xb0] sm:$0xff] %v2265
      %2298 = vst [vmem:[#allocation2 + $0xb8] sm:$0xff] %v2266
      %2299 = vst [vmem:[#allocation2 + $0xc0] sm:$0xff] %v2267
      %2300 = vst [vmem:[#allocation2 + $0xc8] sm:$0xff] %v2268
      %2301 = vst [vmem:[#allocation2 + $0xd0] sm:$0xff] %v2269
      %2302 = vst [vmem:[#allocation2 + $0xd8] sm:$0xff] %v2270
      %2303 = vst [vmem:[#allocation2 + $0xe0] sm:$0xff] %v2271
      %2304 = vst [vmem:[#allocation2 + $0xe8] sm:$0xff] %v2272
      %2305 = vst [vmem:[#allocation2 + $0xf0] sm:$0xff] %v2273
      %2306 = vst [vmem:[#allocation2 + $0xf8] sm:$0xff] %v2274
      %v2307 = vld [vmem:[%s1928] sm:$0xf]
      %v2308 = vld [vmem:[%s1928 + $0x4] sm:$0xf]
      %v2309 = vld [vmem:[%s1928 + $0x8] sm:$0x1]
      %v2310 = vld [vmem:[%s1928 + $0xc] sm:$0xf]
      %v2311 = vld [vmem:[%s1928 + $0x10] sm:$0xf]
      %v2312 = vld [vmem:[%s1928 + $0x14] sm:$0x1]
      %v2313 = vld [vmem:[%s1928 + $0x18] sm:$0xf]
      %v2314 = vld [vmem:[%s1928 + $0x1c] sm:$0xf]
      %v2315 = vld [vmem:[%s1928 + $0x20] sm:$0x1]
      %v2316 = vld [vmem:[%s1928 + $0x24] sm:$0xf]
      %v2317 = vld [vmem:[%s1928 + $0x28] sm:$0xf]
      %v2318 = vld [vmem:[%s1928 + $0x2c] sm:$0x1]
      %v2319 = vld [vmem:[%s1928 + $0x30] sm:$0xf]
      %v2320 = vld [vmem:[%s1928 + $0x34] sm:$0xf]
      %v2321 = vld [vmem:[%s1928 + $0x38] sm:$0x1]
      %v2322 = vld [vmem:[%s1928 + $0x3c] sm:$0xf]
      %v2323 = vld [vmem:[%s1928 + $0x40] sm:$0xf]
      %v2324 = vld [vmem:[%s1928 + $0x44] sm:$0x1]
      %v2325 = vld [vmem:[%s1928 + $0x48] sm:$0xf]
      %v2326 = vld [vmem:[%s1928 + $0x4c] sm:$0xf]
      %v2327 = vld [vmem:[%s1928 + $0x50] sm:$0x1]
      %v2328 = vld [vmem:[%s1928 + $0x54] sm:$0xf]
      %v2329 = vld [vmem:[%s1928 + $0x58] sm:$0xf]
      %v2330 = vld [vmem:[%s1928 + $0x5c] sm:$0x1]
      %v2331 = vld [vmem:[%s1928 + $0x60] sm:$0xf]
      %v2332 = vld [vmem:[%s1928 + $0x64] sm:$0xf]
      %v2333 = vld [vmem:[%s1928 + $0x68] sm:$0x1]
      %v2334 = vld [vmem:[%s1928 + $0x6c] sm:$0xf]
      %v2335 = vld [vmem:[%s1928 + $0x70] sm:$0xf]
      %v2336 = vld [vmem:[%s1928 + $0x74] sm:$0x1]
      %v2337 = vld [vmem:[%s1928 + $0x78] sm:$0xf]
      %v2338 = vld [vmem:[%s1928 + $0x7c] sm:$0xf]
      %v2339 = vld [vmem:[%s1928 + $0x80] sm:$0x1]
      %v2340 = vld [vmem:[%s1928 + $0x84] sm:$0xf]
      %v2341 = vld [vmem:[%s1928 + $0x88] sm:$0xf]
      %v2342 = vld [vmem:[%s1928 + $0x8c] sm:$0x1]
      %v2343 = vld [vmem:[%s1928 + $0x90] sm:$0xf]
      %v2344 = vld [vmem:[%s1928 + $0x94] sm:$0xf]
      %v2345 = vld [vmem:[%s1928 + $0x98] sm:$0x1]
      %v2346 = vld [vmem:[%s1928 + $0x9c] sm:$0xf]
      %v2347 = vld [vmem:[%s1928 + $0xa0] sm:$0xf]
      %v2348 = vld [vmem:[%s1928 + $0xa4] sm:$0x1]
      %v2349 = vld [vmem:[%s1928 + $0xa8] sm:$0xf]
      %v2350 = vld [vmem:[%s1928 + $0xac] sm:$0xf]
      %v2351 = vld [vmem:[%s1928 + $0xb0] sm:$0x1]
      %v2352 = vld [vmem:[%s1928 + $0xb4] sm:$0xf]
      %v2353 = vld [vmem:[%s1928 + $0xb8] sm:$0xf]
      %v2354 = vld [vmem:[%s1928 + $0xbc] sm:$0x1]
      %v2355 = vld [vmem:[#allocation2] sm:$0xff]
      %v2356 = vld [vmem:[#allocation2 + $0x8] sm:$0xff]
      %v2357 = vld [vmem:[#allocation2 + $0x10] sm:$0xff]
      %v2358 = vld [vmem:[#allocation2 + $0x18] sm:$0xff]
      %v2359 = vld [vmem:[#allocation2 + $0x20] sm:$0xff]
      %v2360 = vld [vmem:[#allocation2 + $0x28] sm:$0xff]
      %v2361 = vld [vmem:[#allocation2 + $0x30] sm:$0xff]
      %v2362 = vld [vmem:[#allocation2 + $0x38] sm:$0xff]
      %v2363 = vld [vmem:[#allocation2 + $0x40] sm:$0xff]
      %v2364 = vld [vmem:[#allocation2 + $0x48] sm:$0xff]
      %v2365 = vld [vmem:[#allocation2 + $0x50] sm:$0xff]
      %v2366 = vld [vmem:[#allocation2 + $0x58] sm:$0xff]
      %v2367 = vld [vmem:[#allocation2 + $0x60] sm:$0xff]
      %v2368 = vld [vmem:[#allocation2 + $0x68] sm:$0xff]
      %v2369 = vld [vmem:[#allocation2 + $0x70] sm:$0xff]
      %v2370 = vld [vmem:[#allocation2 + $0x78] sm:$0xff]
      %v2371 = vld [vmem:[#allocation2 + $0x80] sm:$0xff]
      %v2372 = vld [vmem:[#allocation2 + $0x88] sm:$0xff]
      %v2373 = vld [vmem:[#allocation2 + $0x90] sm:$0xff]
      %v2374 = vld [vmem:[#allocation2 + $0x98] sm:$0xff]
      %v2375 = vld [vmem:[#allocation2 + $0xa0] sm:$0xff]
      %v2376 = vld [vmem:[#allocation2 + $0xa8] sm:$0xff]
      %v2377 = vld [vmem:[#allocation2 + $0xb0] sm:$0xff]
      %v2378 = vld [vmem:[#allocation2 + $0xb8] sm:$0xff]
      %v2379 = vld [vmem:[#allocation2 + $0xc0] sm:$0xff]
      %v2380 = vld [vmem:[#allocation2 + $0xc8] sm:$0xff]
      %v2381 = vld [vmem:[#allocation2 + $0xd0] sm:$0xff]
      %v2382 = vld [vmem:[#allocation2 + $0xd8] sm:$0xff]
      %v2383 = vld [vmem:[#allocation2 + $0xe0] sm:$0xff]
      %v2384 = vld [vmem:[#allocation2 + $0xe8] sm:$0xff]
      %v2385 = vld [vmem:[#allocation2 + $0xf0] sm:$0xff]
      %v2386 = vld [vmem:[#allocation2 + $0xf8] sm:$0xff]
      %v2388 = vshrl.u32 %v2307, 16
      %v2390 = vrot.slane %v2388, 4
      %v2391 = vshll.u32 %v2307, 16
      %v2393 = vrot.slane %v2391, 5
      %v2394 = vor.u32 %v2390, %v2393
      %v2395 = vrot.slane %v2394, 4
      %v2397 = vshll.u32 %v2308, 16
      %v2399 = vrot.slane %v2397, 5
      %v2400 = vsel %vm736, %v2395, %v2399
      %v2401 = vshrl.u32 %v2308, 16
      %v2403 = vrot.slane %v2401, 4
      %v2404 = vor.u32 %v2403, %v2399
      %v2405 = vrot.slane %v2404, 4
      %v2407 = vshll.u32 %v2309, 16
      %v2409 = vrot.slane %v2407, 5
      %v2410 = vsel %vm736, %v2405, %v2409
      %v2412 = vshrl.u32 %v2310, 16
      %v2414 = vrot.slane %v2412, 4
      %v2415 = vshll.u32 %v2310, 16
      %v2417 = vrot.slane %v2415, 5
      %v2418 = vor.u32 %v2414, %v2417
      %v2419 = vrot.slane %v2418, 4
      %v2421 = vshll.u32 %v2311, 16
      %v2423 = vrot.slane %v2421, 5
      %v2424 = vsel %vm736, %v2419, %v2423
      %v2425 = vshrl.u32 %v2311, 16
      %v2427 = vrot.slane %v2425, 4
      %v2428 = vor.u32 %v2427, %v2423
      %v2429 = vrot.slane %v2428, 4
      %v2431 = vshll.u32 %v2312, 16
      %v2433 = vrot.slane %v2431, 5
      %v2434 = vsel %vm736, %v2429, %v2433
      %v2436 = vshrl.u32 %v2313, 16
      %v2438 = vrot.slane %v2436, 4
      %v2439 = vshll.u32 %v2313, 16
      %v2441 = vrot.slane %v2439, 5
      %v2442 = vor.u32 %v2438, %v2441
      %v2443 = vrot.slane %v2442, 4
      %v2445 = vshll.u32 %v2314, 16
      %v2447 = vrot.slane %v2445, 5
      %v2448 = vsel %vm736, %v2443, %v2447
      %v2449 = vshrl.u32 %v2314, 16
      %v2451 = vrot.slane %v2449, 4
      %v2452 = vor.u32 %v2451, %v2447
      %v2453 = vrot.slane %v2452, 4
      %v2455 = vshll.u32 %v2315, 16
      %v2457 = vrot.slane %v2455, 5
      %v2458 = vsel %vm736, %v2453, %v2457
      %v2460 = vshrl.u32 %v2316, 16
      %v2462 = vrot.slane %v2460, 4
      %v2463 = vshll.u32 %v2316, 16
      %v2465 = vrot.slane %v2463, 5
      %v2466 = vor.u32 %v2462, %v2465
      %v2467 = vrot.slane %v2466, 4
      %v2469 = vshll.u32 %v2317, 16
      %v2471 = vrot.slane %v2469, 5
      %v2472 = vsel %vm736, %v2467, %v2471
      %v2473 = vshrl.u32 %v2317, 16
      %v2475 = vrot.slane %v2473, 4
      %v2476 = vor.u32 %v2475, %v2471
      %v2477 = vrot.slane %v2476, 4
      %v2479 = vshll.u32 %v2318, 16
      %v2481 = vrot.slane %v2479, 5
      %v2482 = vsel %vm736, %v2477, %v2481
      %v2484 = vshrl.u32 %v2319, 16
      %v2486 = vrot.slane %v2484, 4
      %v2487 = vshll.u32 %v2319, 16
      %v2489 = vrot.slane %v2487, 5
      %v2490 = vor.u32 %v2486, %v2489
      %v2491 = vrot.slane %v2490, 4
      %v2493 = vshll.u32 %v2320, 16
      %v2495 = vrot.slane %v2493, 5
      %v2496 = vsel %vm736, %v2491, %v2495
      %v2497 = vshrl.u32 %v2320, 16
      %v2499 = vrot.slane %v2497, 4
      %v2500 = vor.u32 %v2499, %v2495
      %v2501 = vrot.slane %v2500, 4
      %v2503 = vshll.u32 %v2321, 16
      %v2505 = vrot.slane %v2503, 5
      %v2506 = vsel %vm736, %v2501, %v2505
      %v2508 = vshrl.u32 %v2322, 16
      %v2510 = vrot.slane %v2508, 4
      %v2511 = vshll.u32 %v2322, 16
      %v2513 = vrot.slane %v2511, 5
      %v2514 = vor.u32 %v2510, %v2513
      %v2515 = vrot.slane %v2514, 4
      %v2517 = vshll.u32 %v2323, 16
      %v2519 = vrot.slane %v2517, 5
      %v2520 = vsel %vm736, %v2515, %v2519
      %v2521 = vshrl.u32 %v2323, 16
      %v2523 = vrot.slane %v2521, 4
      %v2524 = vor.u32 %v2523, %v2519
      %v2525 = vrot.slane %v2524, 4
      %v2527 = vshll.u32 %v2324, 16
      %v2529 = vrot.slane %v2527, 5
      %v2530 = vsel %vm736, %v2525, %v2529
      %v2532 = vshrl.u32 %v2325, 16
      %v2534 = vrot.slane %v2532, 4
      %v2535 = vshll.u32 %v2325, 16
      %v2537 = vrot.slane %v2535, 5
      %v2538 = vor.u32 %v2534, %v2537
      %v2539 = vrot.slane %v2538, 4
      %v2541 = vshll.u32 %v2326, 16
      %v2543 = vrot.slane %v2541, 5
      %v2544 = vsel %vm736, %v2539, %v2543
      %v2545 = vshrl.u32 %v2326, 16
      %v2547 = vrot.slane %v2545, 4
      %v2548 = vor.u32 %v2547, %v2543
      %v2549 = vrot.slane %v2548, 4
      %v2551 = vshll.u32 %v2327, 16
      %v2553 = vrot.slane %v2551, 5
      %v2554 = vsel %vm736, %v2549, %v2553
      %v2556 = vshrl.u32 %v2328, 16
      %v2558 = vrot.slane %v2556, 4
      %v2559 = vshll.u32 %v2328, 16
      %v2561 = vrot.slane %v2559, 5
      %v2562 = vor.u32 %v2558, %v2561
      %v2563 = vrot.slane %v2562, 4
      %v2565 = vshll.u32 %v2329, 16
      %v2567 = vrot.slane %v2565, 5
      %v2568 = vsel %vm736, %v2563, %v2567
      %v2569 = vshrl.u32 %v2329, 16
      %v2571 = vrot.slane %v2569, 4
      %v2572 = vor.u32 %v2571, %v2567
      %v2573 = vrot.slane %v2572, 4
      %v2575 = vshll.u32 %v2330, 16
      %v2577 = vrot.slane %v2575, 5
      %v2578 = vsel %vm736, %v2573, %v2577
      %v2580 = vshrl.u32 %v2331, 16
      %v2582 = vrot.slane %v2580, 4
      %v2583 = vshll.u32 %v2331, 16
      %v2585 = vrot.slane %v2583, 5
      %v2586 = vor.u32 %v2582, %v2585
      %v2587 = vrot.slane %v2586, 4
      %v2589 = vshll.u32 %v2332, 16
      %v2591 = vrot.slane %v2589, 5
      %v2592 = vsel %vm736, %v2587, %v2591
      %v2593 = vshrl.u32 %v2332, 16
      %v2595 = vrot.slane %v2593, 4
      %v2596 = vor.u32 %v2595, %v2591
      %v2597 = vrot.slane %v2596, 4
      %v2599 = vshll.u32 %v2333, 16
      %v2601 = vrot.slane %v2599, 5
      %v2602 = vsel %vm736, %v2597, %v2601
      %v2604 = vshrl.u32 %v2334, 16
      %v2606 = vrot.slane %v2604, 4
      %v2607 = vshll.u32 %v2334, 16
      %v2609 = vrot.slane %v2607, 5
      %v2610 = vor.u32 %v2606, %v2609
      %v2611 = vrot.slane %v2610, 4
      %v2613 = vshll.u32 %v2335, 16
      %v2615 = vrot.slane %v2613, 5
      %v2616 = vsel %vm736, %v2611, %v2615
      %v2617 = vshrl.u32 %v2335, 16
      %v2619 = vrot.slane %v2617, 4
      %v2620 = vor.u32 %v2619, %v2615
      %v2621 = vrot.slane %v2620, 4
      %v2623 = vshll.u32 %v2336, 16
      %v2625 = vrot.slane %v2623, 5
      %v2626 = vsel %vm736, %v2621, %v2625
      %v2628 = vshrl.u32 %v2337, 16
      %v2630 = vrot.slane %v2628, 4
      %v2631 = vshll.u32 %v2337, 16
      %v2633 = vrot.slane %v2631, 5
      %v2634 = vor.u32 %v2630, %v2633
      %v2635 = vrot.slane %v2634, 4
      %v2637 = vshll.u32 %v2338, 16
      %v2639 = vrot.slane %v2637, 5
      %v2640 = vsel %vm736, %v2635, %v2639
      %v2641 = vshrl.u32 %v2338, 16
      %v2643 = vrot.slane %v2641, 4
      %v2644 = vor.u32 %v2643, %v2639
      %v2645 = vrot.slane %v2644, 4
      %v2647 = vshll.u32 %v2339, 16
      %v2649 = vrot.slane %v2647, 5
      %v2650 = vsel %vm736, %v2645, %v2649
      %v2652 = vshrl.u32 %v2340, 16
      %v2654 = vrot.slane %v2652, 4
      %v2655 = vshll.u32 %v2340, 16
      %v2657 = vrot.slane %v2655, 5
      %v2658 = vor.u32 %v2654, %v2657
      %v2659 = vrot.slane %v2658, 4
      %v2661 = vshll.u32 %v2341, 16
      %v2663 = vrot.slane %v2661, 5
      %v2664 = vsel %vm736, %v2659, %v2663
      %v2665 = vshrl.u32 %v2341, 16
      %v2667 = vrot.slane %v2665, 4
      %v2668 = vor.u32 %v2667, %v2663
      %v2669 = vrot.slane %v2668, 4
      %v2671 = vshll.u32 %v2342, 16
      %v2673 = vrot.slane %v2671, 5
      %v2674 = vsel %vm736, %v2669, %v2673
      %v2676 = vshrl.u32 %v2343, 16
      %v2678 = vrot.slane %v2676, 4
      %v2679 = vshll.u32 %v2343, 16
      %v2681 = vrot.slane %v2679, 5
      %v2682 = vor.u32 %v2678, %v2681
      %v2683 = vrot.slane %v2682, 4
      %v2685 = vshll.u32 %v2344, 16
      %v2687 = vrot.slane %v2685, 5
      %v2688 = vsel %vm736, %v2683, %v2687
      %v2689 = vshrl.u32 %v2344, 16
      %v2691 = vrot.slane %v2689, 4
      %v2692 = vor.u32 %v2691, %v2687
      %v2693 = vrot.slane %v2692, 4
      %v2695 = vshll.u32 %v2345, 16
      %v2697 = vrot.slane %v2695, 5
      %v2698 = vsel %vm736, %v2693, %v2697
      %v2700 = vshrl.u32 %v2346, 16
      %v2702 = vrot.slane %v2700, 4
      %v2703 = vshll.u32 %v2346, 16
      %v2705 = vrot.slane %v2703, 5
      %v2706 = vor.u32 %v2702, %v2705
      %v2707 = vrot.slane %v2706, 4
      %v2709 = vshll.u32 %v2347, 16
      %v2711 = vrot.slane %v2709, 5
      %v2712 = vsel %vm736, %v2707, %v2711
      %v2713 = vshrl.u32 %v2347, 16
      %v2715 = vrot.slane %v2713, 4
      %v2716 = vor.u32 %v2715, %v2711
      %v2717 = vrot.slane %v2716, 4
      %v2719 = vshll.u32 %v2348, 16
      %v2721 = vrot.slane %v2719, 5
      %v2722 = vsel %vm736, %v2717, %v2721
      %v2724 = vshrl.u32 %v2349, 16
      %v2726 = vrot.slane %v2724, 4
      %v2727 = vshll.u32 %v2349, 16
      %v2729 = vrot.slane %v2727, 5
      %v2730 = vor.u32 %v2726, %v2729
      %v2731 = vrot.slane %v2730, 4
      %v2733 = vshll.u32 %v2350, 16
      %v2735 = vrot.slane %v2733, 5
      %v2736 = vsel %vm736, %v2731, %v2735
      %v2737 = vshrl.u32 %v2350, 16
      %v2739 = vrot.slane %v2737, 4
      %v2740 = vor.u32 %v2739, %v2735
      %v2741 = vrot.slane %v2740, 4
      %v2743 = vshll.u32 %v2351, 16
      %v2745 = vrot.slane %v2743, 5
      %v2746 = vsel %vm736, %v2741, %v2745
      %v2748 = vshrl.u32 %v2352, 16
      %v2750 = vrot.slane %v2748, 4
      %v2751 = vshll.u32 %v2352, 16
      %v2753 = vrot.slane %v2751, 5
      %v2754 = vor.u32 %v2750, %v2753
      %v2755 = vrot.slane %v2754, 4
      %v2757 = vshll.u32 %v2353, 16
      %v2759 = vrot.slane %v2757, 5
      %v2760 = vsel %vm736, %v2755, %v2759
      %v2761 = vshrl.u32 %v2353, 16
      %v2763 = vrot.slane %v2761, 4
      %v2764 = vor.u32 %v2763, %v2759
      %v2765 = vrot.slane %v2764, 4
      %v2767 = vshll.u32 %v2354, 16
      %v2769 = vrot.slane %v2767, 5
      %v2770 = vsel %vm736, %v2765, %v2769
      %s2771 = scalar_lea.vmem %s224, 256
      %v2772 = vld [vmem:[%s2771] sm:$0xf]
      %v2773 = vld [vmem:[%s2771 + $0x4] sm:$0xf]
      %v2774 = vld [vmem:[%s2771 + $0x8] sm:$0xf]
      %v2775 = vld [vmem:[%s2771 + $0xc] sm:$0xf]
      %v2776 = vld [vmem:[%s2771 + $0x10] sm:$0xf]
      %v2777 = vld [vmem:[%s2771 + $0x14] sm:$0xf]
      %v2778 = vld [vmem:[%s2771 + $0x18] sm:$0xf]
      %v2779 = vld [vmem:[%s2771 + $0x1c] sm:$0xf]
      %v2780 = vld [vmem:[%s2771 + $0x20] sm:$0xf]
      %v2781 = vld [vmem:[%s2771 + $0x24] sm:$0xf]
      %v2782 = vld [vmem:[%s2771 + $0x28] sm:$0xf]
      %v2783 = vld [vmem:[%s2771 + $0x2c] sm:$0xf]
      %v2784 = vld [vmem:[%s2771 + $0x30] sm:$0xf]
      %v2785 = vld [vmem:[%s2771 + $0x34] sm:$0xf]
      %v2786 = vld [vmem:[%s2771 + $0x38] sm:$0xf]
      %v2787 = vld [vmem:[%s2771 + $0x3c] sm:$0xf]
      %v2788 = vunpack.c.l.b16 %v2400
      %v2789 = vunpack.c.l.b16 %v2410
      %v2790 = vunpack.c.l.b16 %v2424
      %v2791 = vunpack.c.l.b16 %v2434
      %v2792 = vunpack.c.l.b16 %v2448
      %v2793 = vunpack.c.l.b16 %v2458
      %v2794 = vunpack.c.l.b16 %v2472
      %v2795 = vunpack.c.l.b16 %v2482
      %v2796 = vunpack.c.l.b16 %v2496
      %v2797 = vunpack.c.l.b16 %v2506
      %v2798 = vunpack.c.l.b16 %v2520
      %v2799 = vunpack.c.l.b16 %v2530
      %v2800 = vunpack.c.l.b16 %v2544
      %v2801 = vunpack.c.l.b16 %v2554
      %v2802 = vunpack.c.l.b16 %v2568
      %v2803 = vunpack.c.l.b16 %v2578
      %v2804 = vunpack.c.l.b16 %v2592
      %v2805 = vunpack.c.l.b16 %v2602
      %v2806 = vunpack.c.l.b16 %v2616
      %v2807 = vunpack.c.l.b16 %v2626
      %v2808 = vunpack.c.l.b16 %v2640
      %v2809 = vunpack.c.l.b16 %v2650
      %v2810 = vunpack.c.l.b16 %v2664
      %v2811 = vunpack.c.l.b16 %v2674
      %v2812 = vunpack.c.l.b16 %v2688
      %v2813 = vunpack.c.l.b16 %v2698
      %v2814 = vunpack.c.l.b16 %v2712
      %v2815 = vunpack.c.l.b16 %v2722
      %v2816 = vunpack.c.l.b16 %v2736
      %v2817 = vunpack.c.l.b16 %v2746
      %v2818 = vunpack.c.l.b16 %v2760
      %v2819 = vunpack.c.l.b16 %v2770
      %v2820 = vpack.c.b16 %v2789, %v2788
      %v2821 = vpack.c.b16 %v2791, %v2790
      %v2822 = vpack.c.b16 %v2793, %v2792
      %v2823 = vpack.c.b16 %v2795, %v2794
      %v2824 = vpack.c.b16 %v2797, %v2796
      %v2825 = vpack.c.b16 %v2799, %v2798
      %v2826 = vpack.c.b16 %v2801, %v2800
      %v2827 = vpack.c.b16 %v2803, %v2802
      %v2828 = vpack.c.b16 %v2805, %v2804
      %v2829 = vpack.c.b16 %v2807, %v2806
      %v2830 = vpack.c.b16 %v2809, %v2808
      %v2831 = vpack.c.b16 %v2811, %v2810
      %v2832 = vpack.c.b16 %v2813, %v2812
      %v2833 = vpack.c.b16 %v2815, %v2814
      %v2834 = vpack.c.b16 %v2817, %v2816
      %v2835 = vpack.c.b16 %v2819, %v2818
      %v2868 = vunpack.c.l.b16 %v2772
      %v2869 = vunpack.c.l.b16 %v2773
      %v2870 = vunpack.c.l.b16 %v2774
      %v2871 = vunpack.c.l.b16 %v2775
      %v2872 = vunpack.c.l.b16 %v2776
      %v2873 = vunpack.c.l.b16 %v2777
      %v2874 = vunpack.c.l.b16 %v2778
      %v2875 = vunpack.c.l.b16 %v2779
      %v2876 = vunpack.c.l.b16 %v2780
      %v2877 = vunpack.c.l.b16 %v2781
      %v2878 = vunpack.c.l.b16 %v2782
      %v2879 = vunpack.c.l.b16 %v2783
      %v2880 = vunpack.c.l.b16 %v2784
      %v2881 = vunpack.c.l.b16 %v2785
      %v2882 = vunpack.c.l.b16 %v2786
      %v2883 = vunpack.c.l.b16 %v2787
      %v2884 = vpack.c.b16 %v2869, %v2868
      %v2885 = vpack.c.b16 %v2871, %v2870
      %v2886 = vpack.c.b16 %v2873, %v2872
      %v2887 = vpack.c.b16 %v2875, %v2874
      %v2888 = vpack.c.b16 %v2877, %v2876
      %v2889 = vpack.c.b16 %v2879, %v2878
      %v2890 = vpack.c.b16 %v2881, %v2880
      %v2891 = vpack.c.b16 %v2883, %v2882
      %2900 = vmatpush.bf16.msra.mxu0 %v2891
      %2901 = vmatpush.bf16.msra.mxu0 %v2890
      %2902 = vmatpush.bf16.msra.mxu0 %v2889
      %2903 = vmatpush.bf16.msra.mxu0 %v2888
      %2904 = vmatpush.bf16.msra.mxu0 %v2887
      %2905 = vmatpush.bf16.msra.mxu0 %v2886
      %2906 = vmatpush.bf16.msra.mxu0 %v2885
      %2907 = vmatpush.bf16.msra.mxu0 %v2884
      %2908 = vmatmul.bf16.gmra.mxu0 %v2820
      %v2909 = vpop.f32.mrf.mxu0
      %v2910 = vadd.f32 0.0, %v2909
      %v2911 = vpop.f32.mrf.mxu0
      %v2912 = vadd.f32 0.0, %v2911
      %2913 = vmatmul.bf16.gmra.mxu0 %v2821
      %v2914 = vpop.f32.mrf.mxu0
      %v2915 = vadd.f32 0.0, %v2914
      %v2916 = vpop.f32.mrf.mxu0
      %v2917 = vadd.f32 0.0, %v2916
      %2918 = vmatmul.bf16.gmra.mxu0 %v2822
      %v2919 = vpop.f32.mrf.mxu0
      %v2920 = vadd.f32 0.0, %v2919
      %v2921 = vpop.f32.mrf.mxu0
      %v2922 = vadd.f32 0.0, %v2921
      %2923 = vmatmul.bf16.gmra.mxu0 %v2823
      %v2924 = vpop.f32.mrf.mxu0
      %v2925 = vadd.f32 0.0, %v2924
      %v2926 = vpop.f32.mrf.mxu0
      %v2927 = vadd.f32 0.0, %v2926
      %2928 = vmatmul.bf16.gmra.mxu0 %v2824
      %v2929 = vpop.f32.mrf.mxu0
      %v2930 = vadd.f32 0.0, %v2929
      %v2931 = vpop.f32.mrf.mxu0
      %v2932 = vadd.f32 0.0, %v2931
      %2933 = vmatmul.bf16.gmra.mxu0 %v2825
      %v2934 = vpop.f32.mrf.mxu0
      %v2935 = vadd.f32 0.0, %v2934
      %v2936 = vpop.f32.mrf.mxu0
      %v2937 = vadd.f32 0.0, %v2936
      %2938 = vmatmul.bf16.gmra.mxu0 %v2826
      %v2939 = vpop.f32.mrf.mxu0
      %v2940 = vadd.f32 0.0, %v2939
      %v2941 = vpop.f32.mrf.mxu0
      %v2942 = vadd.f32 0.0, %v2941
      %2943 = vmatmul.bf16.gmra.mxu0 %v2827
      %v2944 = vpop.f32.mrf.mxu0
      %v2945 = vadd.f32 0.0, %v2944
      %v2946 = vpop.f32.mrf.mxu0
      %v2947 = vadd.f32 0.0, %v2946
      %2948 = vmatmul.bf16.gmra.mxu0 %v2828
      %v2949 = vpop.f32.mrf.mxu0
      %v2950 = vadd.f32 0.0, %v2949
      %v2951 = vpop.f32.mrf.mxu0
      %v2952 = vadd.f32 0.0, %v2951
      %2953 = vmatmul.bf16.gmra.mxu0 %v2829
      %v2954 = vpop.f32.mrf.mxu0
      %v2955 = vadd.f32 0.0, %v2954
      %v2956 = vpop.f32.mrf.mxu0
      %v2957 = vadd.f32 0.0, %v2956
      %2958 = vmatmul.bf16.gmra.mxu0 %v2830
      %v2959 = vpop.f32.mrf.mxu0
      %v2960 = vadd.f32 0.0, %v2959
      %v2961 = vpop.f32.mrf.mxu0
      %v2962 = vadd.f32 0.0, %v2961
      %2963 = vmatmul.bf16.gmra.mxu0 %v2831
      %v2964 = vpop.f32.mrf.mxu0
      %v2965 = vadd.f32 0.0, %v2964
      %v2966 = vpop.f32.mrf.mxu0
      %v2967 = vadd.f32 0.0, %v2966
      %2968 = vmatmul.bf16.gmra.mxu0 %v2832
      %v2969 = vpop.f32.mrf.mxu0
      %v2970 = vadd.f32 0.0, %v2969
      %v2971 = vpop.f32.mrf.mxu0
      %v2972 = vadd.f32 0.0, %v2971
      %2973 = vmatmul.bf16.gmra.mxu0 %v2833
      %v2974 = vpop.f32.mrf.mxu0
      %v2975 = vadd.f32 0.0, %v2974
      %v2976 = vpop.f32.mrf.mxu0
      %v2977 = vadd.f32 0.0, %v2976
      %2978 = vmatmul.bf16.gmra.mxu0 %v2834
      %v2979 = vpop.f32.mrf.mxu0
      %v2980 = vadd.f32 0.0, %v2979
      %v2981 = vpop.f32.mrf.mxu0
      %v2982 = vadd.f32 0.0, %v2981
      %2983 = vmatmul.bf16.gmra.mxu0 %v2835
      %v2984 = vpop.f32.mrf.mxu0
      %v2985 = vadd.f32 0.0, %v2984
      %v2986 = vpop.f32.mrf.mxu0
      %v2987 = vadd.f32 0.0, %v2986
      %2988 = vdwg.mxu0
      %v2989 = vadd.f32 %v2355, %v2910
      %v2990 = vadd.f32 %v2356, %v2912
      %v2991 = vadd.f32 %v2357, %v2915
      %v2992 = vadd.f32 %v2358, %v2917
      %v2993 = vadd.f32 %v2359, %v2920
      %v2994 = vadd.f32 %v2360, %v2922
      %v2995 = vadd.f32 %v2361, %v2925
      %v2996 = vadd.f32 %v2362, %v2927
      %v2997 = vadd.f32 %v2363, %v2930
      %v2998 = vadd.f32 %v2364, %v2932
      %v2999 = vadd.f32 %v2365, %v2935
      %v3000 = vadd.f32 %v2366, %v2937
      %v3001 = vadd.f32 %v2367, %v2940
      %v3002 = vadd.f32 %v2368, %v2942
      %v3003 = vadd.f32 %v2369, %v2945
      %v3004 = vadd.f32 %v2370, %v2947
      %v3005 = vadd.f32 %v2371, %v2950
      %v3006 = vadd.f32 %v2372, %v2952
      %v3007 = vadd.f32 %v2373, %v2955
      %v3008 = vadd.f32 %v2374, %v2957
      %v3009 = vadd.f32 %v2375, %v2960
      %v3010 = vadd.f32 %v2376, %v2962
      %v3011 = vadd.f32 %v2377, %v2965
      %v3012 = vadd.f32 %v2378, %v2967
      %v3013 = vadd.f32 %v2379, %v2970
      %v3014 = vadd.f32 %v2380, %v2972
      %v3015 = vadd.f32 %v2381, %v2975
      %v3016 = vadd.f32 %v2382, %v2977
      %v3017 = vadd.f32 %v2383, %v2980
      %v3018 = vadd.f32 %v2384, %v2982
      %v3019 = vadd.f32 %v2385, %v2985
      %v3020 = vadd.f32 %v2386, %v2987
      %3021 = vst [vmem:[#allocation2] sm:$0xff] %v2989
      %3022 = vst [vmem:[#allocation2 + $0x8] sm:$0xff] %v2990
      %3023 = vst [vmem:[#allocation2 + $0x10] sm:$0xff] %v2991
      %3024 = vst [vmem:[#allocation2 + $0x18] sm:$0xff] %v2992
      %3025 = vst [vmem:[#allocation2 + $0x20] sm:$0xff] %v2993
      %3026 = vst [vmem:[#allocation2 + $0x28] sm:$0xff] %v2994
      %3027 = vst [vmem:[#allocation2 + $0x30] sm:$0xff] %v2995
      %3028 = vst [vmem:[#allocation2 + $0x38] sm:$0xff] %v2996
      %3029 = vst [vmem:[#allocation2 + $0x40] sm:$0xff] %v2997
      %3030 = vst [vmem:[#allocation2 + $0x48] sm:$0xff] %v2998
      %3031 = vst [vmem:[#allocation2 + $0x50] sm:$0xff] %v2999
      %3032 = vst [vmem:[#allocation2 + $0x58] sm:$0xff] %v3000
      %3033 = vst [vmem:[#allocation2 + $0x60] sm:$0xff] %v3001
      %3034 = vst [vmem:[#allocation2 + $0x68] sm:$0xff] %v3002
      %3035 = vst [vmem:[#allocation2 + $0x70] sm:$0xff] %v3003
      %3036 = vst [vmem:[#allocation2 + $0x78] sm:$0xff] %v3004
      %3037 = vst [vmem:[#allocation2 + $0x80] sm:$0xff] %v3005
      %3038 = vst [vmem:[#allocation2 + $0x88] sm:$0xff] %v3006
      %3039 = vst [vmem:[#allocation2 + $0x90] sm:$0xff] %v3007
      %3040 = vst [vmem:[#allocation2 + $0x98] sm:$0xff] %v3008
      %3041 = vst [vmem:[#allocation2 + $0xa0] sm:$0xff] %v3009
      %3042 = vst [vmem:[#allocation2 + $0xa8] sm:$0xff] %v3010
      %3043 = vst [vmem:[#allocation2 + $0xb0] sm:$0xff] %v3011
      %3044 = vst [vmem:[#allocation2 + $0xb8] sm:$0xff] %v3012
      %3045 = vst [vmem:[#allocation2 + $0xc0] sm:$0xff] %v3013
      %3046 = vst [vmem:[#allocation2 + $0xc8] sm:$0xff] %v3014
      %3047 = vst [vmem:[#allocation2 + $0xd0] sm:$0xff] %v3015
      %3048 = vst [vmem:[#allocation2 + $0xd8] sm:$0xff] %v3016
      %3049 = vst [vmem:[#allocation2 + $0xe0] sm:$0xff] %v3017
      %3050 = vst [vmem:[#allocation2 + $0xe8] sm:$0xff] %v3018
      %3051 = vst [vmem:[#allocation2 + $0xf0] sm:$0xff] %v3019
      %3052 = vst [vmem:[#allocation2 + $0xf8] sm:$0xff] %v3020
      %v3053 = vld [vmem:[%s1928] sm:$0xe]
      %v3054 = vld [vmem:[%s1928 + $0x4] sm:$0xf]
      %v3055 = vld [vmem:[%s1928 + $0x8] sm:$0x1]
      %v3056 = vld [vmem:[%s1928 + $0xc] sm:$0xe]
      %v3057 = vld [vmem:[%s1928 + $0x10] sm:$0xf]
      %v3058 = vld [vmem:[%s1928 + $0x14] sm:$0x1]
      %v3059 = vld [vmem:[%s1928 + $0x18] sm:$0xe]
      %v3060 = vld [vmem:[%s1928 + $0x1c] sm:$0xf]
      %v3061 = vld [vmem:[%s1928 + $0x20] sm:$0x1]
      %v3062 = vld [vmem:[%s1928 + $0x24] sm:$0xe]
      %v3063 = vld [vmem:[%s1928 + $0x28] sm:$0xf]
      %v3064 = vld [vmem:[%s1928 + $0x2c] sm:$0x1]
      %v3065 = vld [vmem:[%s1928 + $0x30] sm:$0xe]
      %v3066 = vld [vmem:[%s1928 + $0x34] sm:$0xf]
      %v3067 = vld [vmem:[%s1928 + $0x38] sm:$0x1]
      %v3068 = vld [vmem:[%s1928 + $0x3c] sm:$0xe]
      %v3069 = vld [vmem:[%s1928 + $0x40] sm:$0xf]
      %v3070 = vld [vmem:[%s1928 + $0x44] sm:$0x1]
      %v3071 = vld [vmem:[%s1928 + $0x48] sm:$0xe]
      %v3072 = vld [vmem:[%s1928 + $0x4c] sm:$0xf]
      %v3073 = vld [vmem:[%s1928 + $0x50] sm:$0x1]
      %v3074 = vld [vmem:[%s1928 + $0x54] sm:$0xe]
      %v3075 = vld [vmem:[%s1928 + $0x58] sm:$0xf]
      %v3076 = vld [vmem:[%s1928 + $0x5c] sm:$0x1]
      %v3077 = vld [vmem:[%s1928 + $0x60] sm:$0xe]
      %v3078 = vld [vmem:[%s1928 + $0x64] sm:$0xf]
      %v3079 = vld [vmem:[%s1928 + $0x68] sm:$0x1]
      %v3080 = vld [vmem:[%s1928 + $0x6c] sm:$0xe]
      %v3081 = vld [vmem:[%s1928 + $0x70] sm:$0xf]
      %v3082 = vld [vmem:[%s1928 + $0x74] sm:$0x1]
      %v3083 = vld [vmem:[%s1928 + $0x78] sm:$0xe]
      %v3084 = vld [vmem:[%s1928 + $0x7c] sm:$0xf]
      %v3085 = vld [vmem:[%s1928 + $0x80] sm:$0x1]
      %v3086 = vld [vmem:[%s1928 + $0x84] sm:$0xe]
      %v3087 = vld [vmem:[%s1928 + $0x88] sm:$0xf]
      %v3088 = vld [vmem:[%s1928 + $0x8c] sm:$0x1]
      %v3089 = vld [vmem:[%s1928 + $0x90] sm:$0xe]
      %v3090 = vld [vmem:[%s1928 + $0x94] sm:$0xf]
      %v3091 = vld [vmem:[%s1928 + $0x98] sm:$0x1]
      %v3092 = vld [vmem:[%s1928 + $0x9c] sm:$0xe]
      %v3093 = vld [vmem:[%s1928 + $0xa0] sm:$0xf]
      %v3094 = vld [vmem:[%s1928 + $0xa4] sm:$0x1]
      %v3095 = vld [vmem:[%s1928 + $0xa8] sm:$0xe]
      %v3096 = vld [vmem:[%s1928 + $0xac] sm:$0xf]
      %v3097 = vld [vmem:[%s1928 + $0xb0] sm:$0x1]
      %v3098 = vld [vmem:[%s1928 + $0xb4] sm:$0xe]
      %v3099 = vld [vmem:[%s1928 + $0xb8] sm:$0xf]
      %v3100 = vld [vmem:[%s1928 + $0xbc] sm:$0x1]
      %v3101 = vld [vmem:[#allocation2] sm:$0xff]
      %v3102 = vld [vmem:[#allocation2 + $0x8] sm:$0xff]
      %v3103 = vld [vmem:[#allocation2 + $0x10] sm:$0xff]
      %v3104 = vld [vmem:[#allocation2 + $0x18] sm:$0xff]
      %v3105 = vld [vmem:[#allocation2 + $0x20] sm:$0xff]
      %v3106 = vld [vmem:[#allocation2 + $0x28] sm:$0xff]
      %v3107 = vld [vmem:[#allocation2 + $0x30] sm:$0xff]
      %v3108 = vld [vmem:[#allocation2 + $0x38] sm:$0xff]
      %v3109 = vld [vmem:[#allocation2 + $0x40] sm:$0xff]
      %v3110 = vld [vmem:[#allocation2 + $0x48] sm:$0xff]
      %v3111 = vld [vmem:[#allocation2 + $0x50] sm:$0xff]
      %v3112 = vld [vmem:[#allocation2 + $0x58] sm:$0xff]
      %v3113 = vld [vmem:[#allocation2 + $0x60] sm:$0xff]
      %v3114 = vld [vmem:[#allocation2 + $0x68] sm:$0xff]
      %v3115 = vld [vmem:[#allocation2 + $0x70] sm:$0xff]
      %v3116 = vld [vmem:[#allocation2 + $0x78] sm:$0xff]
      %v3117 = vld [vmem:[#allocation2 + $0x80] sm:$0xff]
      %v3118 = vld [vmem:[#allocation2 + $0x88] sm:$0xff]
      %v3119 = vld [vmem:[#allocation2 + $0x90] sm:$0xff]
      %v3120 = vld [vmem:[#allocation2 + $0x98] sm:$0xff]
      %v3121 = vld [vmem:[#allocation2 + $0xa0] sm:$0xff]
      %v3122 = vld [vmem:[#allocation2 + $0xa8] sm:$0xff]
      %v3123 = vld [vmem:[#allocation2 + $0xb0] sm:$0xff]
      %v3124 = vld [vmem:[#allocation2 + $0xb8] sm:$0xff]
      %v3125 = vld [vmem:[#allocation2 + $0xc0] sm:$0xff]
      %v3126 = vld [vmem:[#allocation2 + $0xc8] sm:$0xff]
      %v3127 = vld [vmem:[#allocation2 + $0xd0] sm:$0xff]
      %v3128 = vld [vmem:[#allocation2 + $0xd8] sm:$0xff]
      %v3129 = vld [vmem:[#allocation2 + $0xe0] sm:$0xff]
      %v3130 = vld [vmem:[#allocation2 + $0xe8] sm:$0xff]
      %v3131 = vld [vmem:[#allocation2 + $0xf0] sm:$0xff]
      %v3132 = vld [vmem:[#allocation2 + $0xf8] sm:$0xff]
      %v3181 = vrot.slane %v3053, 5
      %v3182 = vrot.slane %v3181, 4
      %v3183 = vrot.slane %v3054, 5
      %v3184 = vsel %vm1533, %v3182, %v3183
      %v3185 = vrot.slane %v3183, 4
      %v3186 = vrot.slane %v3055, 5
      %v3187 = vsel %vm1533, %v3185, %v3186
      %v3188 = vrot.slane %v3056, 5
      %v3189 = vrot.slane %v3188, 4
      %v3190 = vrot.slane %v3057, 5
      %v3191 = vsel %vm1533, %v3189, %v3190
      %v3192 = vrot.slane %v3190, 4
      %v3193 = vrot.slane %v3058, 5
      %v3194 = vsel %vm1533, %v3192, %v3193
      %v3195 = vrot.slane %v3059, 5
      %v3196 = vrot.slane %v3195, 4
      %v3197 = vrot.slane %v3060, 5
      %v3198 = vsel %vm1533, %v3196, %v3197
      %v3199 = vrot.slane %v3197, 4
      %v3200 = vrot.slane %v3061, 5
      %v3201 = vsel %vm1533, %v3199, %v3200
      %v3202 = vrot.slane %v3062, 5
      %v3203 = vrot.slane %v3202, 4
      %v3204 = vrot.slane %v3063, 5
      %v3205 = vsel %vm1533, %v3203, %v3204
      %v3206 = vrot.slane %v3204, 4
      %v3207 = vrot.slane %v3064, 5
      %v3208 = vsel %vm1533, %v3206, %v3207
      %v3209 = vrot.slane %v3065, 5
      %v3210 = vrot.slane %v3209, 4
      %v3211 = vrot.slane %v3066, 5
      %v3212 = vsel %vm1533, %v3210, %v3211
      %v3213 = vrot.slane %v3211, 4
      %v3214 = vrot.slane %v3067, 5
      %v3215 = vsel %vm1533, %v3213, %v3214
      %v3216 = vrot.slane %v3068, 5
      %v3217 = vrot.slane %v3216, 4
      %v3218 = vrot.slane %v3069, 5
      %v3219 = vsel %vm1533, %v3217, %v3218
      %v3220 = vrot.slane %v3218, 4
      %v3221 = vrot.slane %v3070, 5
      %v3222 = vsel %vm1533, %v3220, %v3221
      %v3223 = vrot.slane %v3071, 5
      %v3224 = vrot.slane %v3223, 4
      %v3225 = vrot.slane %v3072, 5
      %v3226 = vsel %vm1533, %v3224, %v3225
      %v3227 = vrot.slane %v3225, 4
      %v3228 = vrot.slane %v3073, 5
      %v3229 = vsel %vm1533, %v3227, %v3228
      %v3230 = vrot.slane %v3074, 5
      %v3231 = vrot.slane %v3230, 4
      %v3232 = vrot.slane %v3075, 5
      %v3233 = vsel %vm1533, %v3231, %v3232
      %v3234 = vrot.slane %v3232, 4
      %v3235 = vrot.slane %v3076, 5
      %v3236 = vsel %vm1533, %v3234, %v3235
      %v3237 = vrot.slane %v3077, 5
      %v3238 = vrot.slane %v3237, 4
      %v3239 = vrot.slane %v3078, 5
      %v3240 = vsel %vm1533, %v3238, %v3239
      %v3241 = vrot.slane %v3239, 4
      %v3242 = vrot.slane %v3079, 5
      %v3243 = vsel %vm1533, %v3241, %v3242
      %v3244 = vrot.slane %v3080, 5
      %v3245 = vrot.slane %v3244, 4
      %v3246 = vrot.slane %v3081, 5
      %v3247 = vsel %vm1533, %v3245, %v3246
      %v3248 = vrot.slane %v3246, 4
      %v3249 = vrot.slane %v3082, 5
      %v3250 = vsel %vm1533, %v3248, %v3249
      %v3251 = vrot.slane %v3083, 5
      %v3252 = vrot.slane %v3251, 4
      %v3253 = vrot.slane %v3084, 5
      %v3254 = vsel %vm1533, %v3252, %v3253
      %v3255 = vrot.slane %v3253, 4
      %v3256 = vrot.slane %v3085, 5
      %v3257 = vsel %vm1533, %v3255, %v3256
      %v3258 = vrot.slane %v3086, 5
      %v3259 = vrot.slane %v3258, 4
      %v3260 = vrot.slane %v3087, 5
      %v3261 = vsel %vm1533, %v3259, %v3260
      %v3262 = vrot.slane %v3260, 4
      %v3263 = vrot.slane %v3088, 5
      %v3264 = vsel %vm1533, %v3262, %v3263
      %v3265 = vrot.slane %v3089, 5
      %v3266 = vrot.slane %v3265, 4
      %v3267 = vrot.slane %v3090, 5
      %v3268 = vsel %vm1533, %v3266, %v3267
      %v3269 = vrot.slane %v3267, 4
      %v3270 = vrot.slane %v3091, 5
      %v3271 = vsel %vm1533, %v3269, %v3270
      %v3272 = vrot.slane %v3092, 5
      %v3273 = vrot.slane %v3272, 4
      %v3274 = vrot.slane %v3093, 5
      %v3275 = vsel %vm1533, %v3273, %v3274
      %v3276 = vrot.slane %v3274, 4
      %v3277 = vrot.slane %v3094, 5
      %v3278 = vsel %vm1533, %v3276, %v3277
      %v3279 = vrot.slane %v3095, 5
      %v3280 = vrot.slane %v3279, 4
      %v3281 = vrot.slane %v3096, 5
      %v3282 = vsel %vm1533, %v3280, %v3281
      %v3283 = vrot.slane %v3281, 4
      %v3284 = vrot.slane %v3097, 5
      %v3285 = vsel %vm1533, %v3283, %v3284
      %v3286 = vrot.slane %v3098, 5
      %v3287 = vrot.slane %v3286, 4
      %v3288 = vrot.slane %v3099, 5
      %v3289 = vsel %vm1533, %v3287, %v3288
      %v3290 = vrot.slane %v3288, 4
      %v3291 = vrot.slane %v3100, 5
      %v3292 = vsel %vm1533, %v3290, %v3291
      %s3293 = scalar_lea.vmem %s224, 320
      %v3294 = vld [vmem:[%s3293] sm:$0xf]
      %v3295 = vld [vmem:[%s3293 + $0x4] sm:$0xf]
      %v3296 = vld [vmem:[%s3293 + $0x8] sm:$0xf]
      %v3297 = vld [vmem:[%s3293 + $0xc] sm:$0xf]
      %v3298 = vld [vmem:[%s3293 + $0x10] sm:$0xf]
      %v3299 = vld [vmem:[%s3293 + $0x14] sm:$0xf]
      %v3300 = vld [vmem:[%s3293 + $0x18] sm:$0xf]
      %v3301 = vld [vmem:[%s3293 + $0x1c] sm:$0xf]
      %v3302 = vld [vmem:[%s3293 + $0x20] sm:$0xf]
      %v3303 = vld [vmem:[%s3293 + $0x24] sm:$0xf]
      %v3304 = vld [vmem:[%s3293 + $0x28] sm:$0xf]
      %v3305 = vld [vmem:[%s3293 + $0x2c] sm:$0xf]
      %v3306 = vld [vmem:[%s3293 + $0x30] sm:$0xf]
      %v3307 = vld [vmem:[%s3293 + $0x34] sm:$0xf]
      %v3308 = vld [vmem:[%s3293 + $0x38] sm:$0xf]
      %v3309 = vld [vmem:[%s3293 + $0x3c] sm:$0xf]
      %v3310 = vunpack.c.l.b16 %v3184
      %v3311 = vunpack.c.l.b16 %v3187
      %v3312 = vunpack.c.l.b16 %v3191
      %v3313 = vunpack.c.l.b16 %v3194
      %v3314 = vunpack.c.l.b16 %v3198
      %v3315 = vunpack.c.l.b16 %v3201
      %v3316 = vunpack.c.l.b16 %v3205
      %v3317 = vunpack.c.l.b16 %v3208
      %v3318 = vunpack.c.l.b16 %v3212
      %v3319 = vunpack.c.l.b16 %v3215
      %v3320 = vunpack.c.l.b16 %v3219
      %v3321 = vunpack.c.l.b16 %v3222
      %v3322 = vunpack.c.l.b16 %v3226
      %v3323 = vunpack.c.l.b16 %v3229
      %v3324 = vunpack.c.l.b16 %v3233
      %v3325 = vunpack.c.l.b16 %v3236
      %v3326 = vunpack.c.l.b16 %v3240
      %v3327 = vunpack.c.l.b16 %v3243
      %v3328 = vunpack.c.l.b16 %v3247
      %v3329 = vunpack.c.l.b16 %v3250
      %v3330 = vunpack.c.l.b16 %v3254
      %v3331 = vunpack.c.l.b16 %v3257
      %v3332 = vunpack.c.l.b16 %v3261
      %v3333 = vunpack.c.l.b16 %v3264
      %v3334 = vunpack.c.l.b16 %v3268
      %v3335 = vunpack.c.l.b16 %v3271
      %v3336 = vunpack.c.l.b16 %v3275
      %v3337 = vunpack.c.l.b16 %v3278
      %v3338 = vunpack.c.l.b16 %v3282
      %v3339 = vunpack.c.l.b16 %v3285
      %v3340 = vunpack.c.l.b16 %v3289
      %v3341 = vunpack.c.l.b16 %v3292
      %v3342 = vpack.c.b16 %v3311, %v3310
      %v3343 = vpack.c.b16 %v3313, %v3312
      %v3344 = vpack.c.b16 %v3315, %v3314
      %v3345 = vpack.c.b16 %v3317, %v3316
      %v3346 = vpack.c.b16 %v3319, %v3318
      %v3347 = vpack.c.b16 %v3321, %v3320
      %v3348 = vpack.c.b16 %v3323, %v3322
      %v3349 = vpack.c.b16 %v3325, %v3324
      %v3350 = vpack.c.b16 %v3327, %v3326
      %v3351 = vpack.c.b16 %v3329, %v3328
      %v3352 = vpack.c.b16 %v3331, %v3330
      %v3353 = vpack.c.b16 %v3333, %v3332
      %v3354 = vpack.c.b16 %v3335, %v3334
      %v3355 = vpack.c.b16 %v3337, %v3336
      %v3356 = vpack.c.b16 %v3339, %v3338
      %v3357 = vpack.c.b16 %v3341, %v3340
      %v3390 = vunpack.c.l.b16 %v3294
      %v3391 = vunpack.c.l.b16 %v3295
      %v3392 = vunpack.c.l.b16 %v3296
      %v3393 = vunpack.c.l.b16 %v3297
      %v3394 = vunpack.c.l.b16 %v3298
      %v3395 = vunpack.c.l.b16 %v3299
      %v3396 = vunpack.c.l.b16 %v3300
      %v3397 = vunpack.c.l.b16 %v3301
      %v3398 = vunpack.c.l.b16 %v3302
      %v3399 = vunpack.c.l.b16 %v3303
      %v3400 = vunpack.c.l.b16 %v3304
      %v3401 = vunpack.c.l.b16 %v3305
      %v3402 = vunpack.c.l.b16 %v3306
      %v3403 = vunpack.c.l.b16 %v3307
      %v3404 = vunpack.c.l.b16 %v3308
      %v3405 = vunpack.c.l.b16 %v3309
      %v3406 = vpack.c.b16 %v3391, %v3390
      %v3407 = vpack.c.b16 %v3393, %v3392
      %v3408 = vpack.c.b16 %v3395, %v3394
      %v3409 = vpack.c.b16 %v3397, %v3396
      %v3410 = vpack.c.b16 %v3399, %v3398
      %v3411 = vpack.c.b16 %v3401, %v3400
      %v3412 = vpack.c.b16 %v3403, %v3402
      %v3413 = vpack.c.b16 %v3405, %v3404
      %3422 = vmatpush.bf16.msra.mxu0 %v3413
      %3423 = vmatpush.bf16.msra.mxu0 %v3412
      %3424 = vmatpush.bf16.msra.mxu0 %v3411
      %3425 = vmatpush.bf16.msra.mxu0 %v3410
      %3426 = vmatpush.bf16.msra.mxu0 %v3409
      %3427 = vmatpush.bf16.msra.mxu0 %v3408
      %3428 = vmatpush.bf16.msra.mxu0 %v3407
      %3429 = vmatpush.bf16.msra.mxu0 %v3406
      %3430 = vmatmul.bf16.gmra.mxu0 %v3342
      %v3431 = vpop.f32.mrf.mxu0
      %v3432 = vadd.f32 0.0, %v3431
      %v3433 = vpop.f32.mrf.mxu0
      %v3434 = vadd.f32 0.0, %v3433
      %3435 = vmatmul.bf16.gmra.mxu0 %v3343
      %v3436 = vpop.f32.mrf.mxu0
      %v3437 = vadd.f32 0.0, %v3436
      %v3438 = vpop.f32.mrf.mxu0
      %v3439 = vadd.f32 0.0, %v3438
      %3440 = vmatmul.bf16.gmra.mxu0 %v3344
      %v3441 = vpop.f32.mrf.mxu0
      %v3442 = vadd.f32 0.0, %v3441
      %v3443 = vpop.f32.mrf.mxu0
      %v3444 = vadd.f32 0.0, %v3443
      %3445 = vmatmul.bf16.gmra.mxu0 %v3345
      %v3446 = vpop.f32.mrf.mxu0
      %v3447 = vadd.f32 0.0, %v3446
      %v3448 = vpop.f32.mrf.mxu0
      %v3449 = vadd.f32 0.0, %v3448
      %3450 = vmatmul.bf16.gmra.mxu0 %v3346
      %v3451 = vpop.f32.mrf.mxu0
      %v3452 = vadd.f32 0.0, %v3451
      %v3453 = vpop.f32.mrf.mxu0
      %v3454 = vadd.f32 0.0, %v3453
      %3455 = vmatmul.bf16.gmra.mxu0 %v3347
      %v3456 = vpop.f32.mrf.mxu0
      %v3457 = vadd.f32 0.0, %v3456
      %v3458 = vpop.f32.mrf.mxu0
      %v3459 = vadd.f32 0.0, %v3458
      %3460 = vmatmul.bf16.gmra.mxu0 %v3348
      %v3461 = vpop.f32.mrf.mxu0
      %v3462 = vadd.f32 0.0, %v3461
      %v3463 = vpop.f32.mrf.mxu0
      %v3464 = vadd.f32 0.0, %v3463
      %3465 = vmatmul.bf16.gmra.mxu0 %v3349
      %v3466 = vpop.f32.mrf.mxu0
      %v3467 = vadd.f32 0.0, %v3466
      %v3468 = vpop.f32.mrf.mxu0
      %v3469 = vadd.f32 0.0, %v3468
      %3470 = vmatmul.bf16.gmra.mxu0 %v3350
      %v3471 = vpop.f32.mrf.mxu0
      %v3472 = vadd.f32 0.0, %v3471
      %v3473 = vpop.f32.mrf.mxu0
      %v3474 = vadd.f32 0.0, %v3473
      %3475 = vmatmul.bf16.gmra.mxu0 %v3351
      %v3476 = vpop.f32.mrf.mxu0
      %v3477 = vadd.f32 0.0, %v3476
      %v3478 = vpop.f32.mrf.mxu0
      %v3479 = vadd.f32 0.0, %v3478
      %3480 = vmatmul.bf16.gmra.mxu0 %v3352
      %v3481 = vpop.f32.mrf.mxu0
      %v3482 = vadd.f32 0.0, %v3481
      %v3483 = vpop.f32.mrf.mxu0
      %v3484 = vadd.f32 0.0, %v3483
      %3485 = vmatmul.bf16.gmra.mxu0 %v3353
      %v3486 = vpop.f32.mrf.mxu0
      %v3487 = vadd.f32 0.0, %v3486
      %v3488 = vpop.f32.mrf.mxu0
      %v3489 = vadd.f32 0.0, %v3488
      %3490 = vmatmul.bf16.gmra.mxu0 %v3354
      %v3491 = vpop.f32.mrf.mxu0
      %v3492 = vadd.f32 0.0, %v3491
      %v3493 = vpop.f32.mrf.mxu0
      %v3494 = vadd.f32 0.0, %v3493
      %3495 = vmatmul.bf16.gmra.mxu0 %v3355
      %v3496 = vpop.f32.mrf.mxu0
      %v3497 = vadd.f32 0.0, %v3496
      %v3498 = vpop.f32.mrf.mxu0
      %v3499 = vadd.f32 0.0, %v3498
      %3500 = vmatmul.bf16.gmra.mxu0 %v3356
      %v3501 = vpop.f32.mrf.mxu0
      %v3502 = vadd.f32 0.0, %v3501
      %v3503 = vpop.f32.mrf.mxu0
      %v3504 = vadd.f32 0.0, %v3503
      %3505 = vmatmul.bf16.gmra.mxu0 %v3357
      %v3506 = vpop.f32.mrf.mxu0
      %v3507 = vadd.f32 0.0, %v3506
      %v3508 = vpop.f32.mrf.mxu0
      %v3509 = vadd.f32 0.0, %v3508
      %3510 = vdwg.mxu0
      %v3511 = vadd.f32 %v3101, %v3432
      %v3512 = vadd.f32 %v3102, %v3434
      %v3513 = vadd.f32 %v3103, %v3437
      %v3514 = vadd.f32 %v3104, %v3439
      %v3515 = vadd.f32 %v3105, %v3442
      %v3516 = vadd.f32 %v3106, %v3444
      %v3517 = vadd.f32 %v3107, %v3447
      %v3518 = vadd.f32 %v3108, %v3449
      %v3519 = vadd.f32 %v3109, %v3452
      %v3520 = vadd.f32 %v3110, %v3454
      %v3521 = vadd.f32 %v3111, %v3457
      %v3522 = vadd.f32 %v3112, %v3459
      %v3523 = vadd.f32 %v3113, %v3462
      %v3524 = vadd.f32 %v3114, %v3464
      %v3525 = vadd.f32 %v3115, %v3467
      %v3526 = vadd.f32 %v3116, %v3469
      %v3527 = vadd.f32 %v3117, %v3472
      %v3528 = vadd.f32 %v3118, %v3474
      %v3529 = vadd.f32 %v3119, %v3477
      %v3530 = vadd.f32 %v3120, %v3479
      %v3531 = vadd.f32 %v3121, %v3482
      %v3532 = vadd.f32 %v3122, %v3484
      %v3533 = vadd.f32 %v3123, %v3487
      %v3534 = vadd.f32 %v3124, %v3489
      %v3535 = vadd.f32 %v3125, %v3492
      %v3536 = vadd.f32 %v3126, %v3494
      %v3537 = vadd.f32 %v3127, %v3497
      %v3538 = vadd.f32 %v3128, %v3499
      %v3539 = vadd.f32 %v3129, %v3502
      %v3540 = vadd.f32 %v3130, %v3504
      %v3541 = vadd.f32 %v3131, %v3507
      %v3542 = vadd.f32 %v3132, %v3509
      %3543 = vst [vmem:[#allocation2] sm:$0xff] %v3511
      %3544 = vst [vmem:[#allocation2 + $0x8] sm:$0xff] %v3512
      %3545 = vst [vmem:[#allocation2 + $0x10] sm:$0xff] %v3513
      %3546 = vst [vmem:[#allocation2 + $0x18] sm:$0xff] %v3514
      %3547 = vst [vmem:[#allocation2 + $0x20] sm:$0xff] %v3515
      %3548 = vst [vmem:[#allocation2 + $0x28] sm:$0xff] %v3516
      %3549 = vst [vmem:[#allocation2 + $0x30] sm:$0xff] %v3517
      %3550 = vst [vmem:[#allocation2 + $0x38] sm:$0xff] %v3518
      %3551 = vst [vmem:[#allocation2 + $0x40] sm:$0xff] %v3519
      %3552 = vst [vmem:[#allocation2 + $0x48] sm:$0xff] %v3520
      %3553 = vst [vmem:[#allocation2 + $0x50] sm:$0xff] %v3521
      %3554 = vst [vmem:[#allocation2 + $0x58] sm:$0xff] %v3522
      %3555 = vst [vmem:[#allocation2 + $0x60] sm:$0xff] %v3523
      %3556 = vst [vmem:[#allocation2 + $0x68] sm:$0xff] %v3524
      %3557 = vst [vmem:[#allocation2 + $0x70] sm:$0xff] %v3525
      %3558 = vst [vmem:[#allocation2 + $0x78] sm:$0xff] %v3526
      %3559 = vst [vmem:[#allocation2 + $0x80] sm:$0xff] %v3527
      %3560 = vst [vmem:[#allocation2 + $0x88] sm:$0xff] %v3528
      %3561 = vst [vmem:[#allocation2 + $0x90] sm:$0xff] %v3529
      %3562 = vst [vmem:[#allocation2 + $0x98] sm:$0xff] %v3530
      %3563 = vst [vmem:[#allocation2 + $0xa0] sm:$0xff] %v3531
      %3564 = vst [vmem:[#allocation2 + $0xa8] sm:$0xff] %v3532
      %3565 = vst [vmem:[#allocation2 + $0xb0] sm:$0xff] %v3533
      %3566 = vst [vmem:[#allocation2 + $0xb8] sm:$0xff] %v3534
      %3567 = vst [vmem:[#allocation2 + $0xc0] sm:$0xff] %v3535
      %3568 = vst [vmem:[#allocation2 + $0xc8] sm:$0xff] %v3536
      %3569 = vst [vmem:[#allocation2 + $0xd0] sm:$0xff] %v3537
      %3570 = vst [vmem:[#allocation2 + $0xd8] sm:$0xff] %v3538
      %3571 = vst [vmem:[#allocation2 + $0xe0] sm:$0xff] %v3539
      %3572 = vst [vmem:[#allocation2 + $0xe8] sm:$0xff] %v3540
      %3573 = vst [vmem:[#allocation2 + $0xf0] sm:$0xff] %v3541
      %3574 = vst [vmem:[#allocation2 + $0xf8] sm:$0xff] %v3542
      %s3575 = scalar_lea.vmem %s220, 24
      %v3576 = vld [vmem:[%s3575] sm:$0xf]
      %v3577 = vld [vmem:[%s3575 + $0x4] sm:$0xf]
      %v3578 = vld [vmem:[%s3575 + $0xc] sm:$0xf]
      %v3579 = vld [vmem:[%s3575 + $0x10] sm:$0xf]
      %v3580 = vld [vmem:[%s3575 + $0x18] sm:$0xf]
      %v3581 = vld [vmem:[%s3575 + $0x1c] sm:$0xf]
      %v3582 = vld [vmem:[%s3575 + $0x24] sm:$0xf]
      %v3583 = vld [vmem:[%s3575 + $0x28] sm:$0xf]
      %v3584 = vld [vmem:[%s3575 + $0x30] sm:$0xf]
      %v3585 = vld [vmem:[%s3575 + $0x34] sm:$0xf]
      %v3586 = vld [vmem:[%s3575 + $0x3c] sm:$0xf]
      %v3587 = vld [vmem:[%s3575 + $0x40] sm:$0xf]
      %v3588 = vld [vmem:[%s3575 + $0x48] sm:$0xf]
      %v3589 = vld [vmem:[%s3575 + $0x4c] sm:$0xf]
      %v3590 = vld [vmem:[%s3575 + $0x54] sm:$0xf]
      %v3591 = vld [vmem:[%s3575 + $0x58] sm:$0xf]
      %v3592 = vld [vmem:[%s3575 + $0x60] sm:$0xf]
      %v3593 = vld [vmem:[%s3575 + $0x64] sm:$0xf]
      %v3594 = vld [vmem:[%s3575 + $0x6c] sm:$0xf]
      %v3595 = vld [vmem:[%s3575 + $0x70] sm:$0xf]
      %v3596 = vld [vmem:[%s3575 + $0x78] sm:$0xf]
      %v3597 = vld [vmem:[%s3575 + $0x7c] sm:$0xf]
      %v3598 = vld [vmem:[%s3575 + $0x84] sm:$0xf]
      %v3599 = vld [vmem:[%s3575 + $0x88] sm:$0xf]
      %v3600 = vld [vmem:[%s3575 + $0x90] sm:$0xf]
      %v3601 = vld [vmem:[%s3575 + $0x94] sm:$0xf]
      %v3602 = vld [vmem:[%s3575 + $0x9c] sm:$0xf]
      %v3603 = vld [vmem:[%s3575 + $0xa0] sm:$0xf]
      %v3604 = vld [vmem:[%s3575 + $0xa8] sm:$0xf]
      %v3605 = vld [vmem:[%s3575 + $0xac] sm:$0xf]
      %v3606 = vld [vmem:[%s3575 + $0xb4] sm:$0xf]
      %v3607 = vld [vmem:[%s3575 + $0xb8] sm:$0xf]
      %v3608 = vld [vmem:[#allocation2] sm:$0xff]
      %v3609 = vld [vmem:[#allocation2 + $0x8] sm:$0xff]
      %v3610 = vld [vmem:[#allocation2 + $0x10] sm:$0xff]
      %v3611 = vld [vmem:[#allocation2 + $0x18] sm:$0xff]
      %v3612 = vld [vmem:[#allocation2 + $0x20] sm:$0xff]
      %v3613 = vld [vmem:[#allocation2 + $0x28] sm:$0xff]
      %v3614 = vld [vmem:[#allocation2 + $0x30] sm:$0xff]
      %v3615 = vld [vmem:[#allocation2 + $0x38] sm:$0xff]
      %v3616 = vld [vmem:[#allocation2 + $0x40] sm:$0xff]
      %v3617 = vld [vmem:[#allocation2 + $0x48] sm:$0xff]
      %v3618 = vld [vmem:[#allocation2 + $0x50] sm:$0xff]
      %v3619 = vld [vmem:[#allocation2 + $0x58] sm:$0xff]
      %v3620 = vld [vmem:[#allocation2 + $0x60] sm:$0xff]
      %v3621 = vld [vmem:[#allocation2 + $0x68] sm:$0xff]
      %v3622 = vld [vmem:[#allocation2 + $0x70] sm:$0xff]
      %v3623 = vld [vmem:[#allocation2 + $0x78] sm:$0xff]
      %v3624 = vld [vmem:[#allocation2 + $0x80] sm:$0xff]
      %v3625 = vld [vmem:[#allocation2 + $0x88] sm:$0xff]
      %v3626 = vld [vmem:[#allocation2 + $0x90] sm:$0xff]
      %v3627 = vld [vmem:[#allocation2 + $0x98] sm:$0xff]
      %v3628 = vld [vmem:[#allocation2 + $0xa0] sm:$0xff]
      %v3629 = vld [vmem:[#allocation2 + $0xa8] sm:$0xff]
      %v3630 = vld [vmem:[#allocation2 + $0xb0] sm:$0xff]
      %v3631 = vld [vmem:[#allocation2 + $0xb8] sm:$0xff]
      %v3632 = vld [vmem:[#allocation2 + $0xc0] sm:$0xff]
      %v3633 = vld [vmem:[#allocation2 + $0xc8] sm:$0xff]
      %v3634 = vld [vmem:[#allocation2 + $0xd0] sm:$0xff]
      %v3635 = vld [vmem:[#allocation2 + $0xd8] sm:$0xff]
      %v3636 = vld [vmem:[#allocation2 + $0xe0] sm:$0xff]
      %v3637 = vld [vmem:[#allocation2 + $0xe8] sm:$0xff]
      %v3638 = vld [vmem:[#allocation2 + $0xf0] sm:$0xff]
      %v3639 = vld [vmem:[#allocation2 + $0xf8] sm:$0xff]
      %s3640 = scalar_lea.vmem %s224, 384
      %v3641 = vld [vmem:[%s3640] sm:$0xf]
      %v3642 = vld [vmem:[%s3640 + $0x4] sm:$0xf]
      %v3643 = vld [vmem:[%s3640 + $0x8] sm:$0xf]
      %v3644 = vld [vmem:[%s3640 + $0xc] sm:$0xf]
      %v3645 = vld [vmem:[%s3640 + $0x10] sm:$0xf]
      %v3646 = vld [vmem:[%s3640 + $0x14] sm:$0xf]
      %v3647 = vld [vmem:[%s3640 + $0x18] sm:$0xf]
      %v3648 = vld [vmem:[%s3640 + $0x1c] sm:$0xf]
      %v3649 = vld [vmem:[%s3640 + $0x20] sm:$0xf]
      %v3650 = vld [vmem:[%s3640 + $0x24] sm:$0xf]
      %v3651 = vld [vmem:[%s3640 + $0x28] sm:$0xf]
      %v3652 = vld [vmem:[%s3640 + $0x2c] sm:$0xf]
      %v3653 = vld [vmem:[%s3640 + $0x30] sm:$0xf]
      %v3654 = vld [vmem:[%s3640 + $0x34] sm:$0xf]
      %v3655 = vld [vmem:[%s3640 + $0x38] sm:$0xf]
      %v3656 = vld [vmem:[%s3640 + $0x3c] sm:$0xf]
      %v3689 = vunpack.c.l.b16 %v3576
      %v3690 = vunpack.c.l.b16 %v3577
      %v3691 = vunpack.c.l.b16 %v3578
      %v3692 = vunpack.c.l.b16 %v3579
      %v3693 = vunpack.c.l.b16 %v3580
      %v3694 = vunpack.c.l.b16 %v3581
      %v3695 = vunpack.c.l.b16 %v3582
      %v3696 = vunpack.c.l.b16 %v3583
      %v3697 = vunpack.c.l.b16 %v3584
      %v3698 = vunpack.c.l.b16 %v3585
      %v3699 = vunpack.c.l.b16 %v3586
      %v3700 = vunpack.c.l.b16 %v3587
      %v3701 = vunpack.c.l.b16 %v3588
      %v3702 = vunpack.c.l.b16 %v3589
      %v3703 = vunpack.c.l.b16 %v3590
      %v3704 = vunpack.c.l.b16 %v3591
      %v3705 = vunpack.c.l.b16 %v3592
      %v3706 = vunpack.c.l.b16 %v3593
      %v3707 = vunpack.c.l.b16 %v3594
      %v3708 = vunpack.c.l.b16 %v3595
      %v3709 = vunpack.c.l.b16 %v3596
      %v3710 = vunpack.c.l.b16 %v3597
      %v3711 = vunpack.c.l.b16 %v3598
      %v3712 = vunpack.c.l.b16 %v3599
      %v3713 = vunpack.c.l.b16 %v3600
      %v3714 = vunpack.c.l.b16 %v3601
      %v3715 = vunpack.c.l.b16 %v3602
      %v3716 = vunpack.c.l.b16 %v3603
      %v3717 = vunpack.c.l.b16 %v3604
      %v3718 = vunpack.c.l.b16 %v3605
      %v3719 = vunpack.c.l.b16 %v3606
      %v3720 = vunpack.c.l.b16 %v3607
      %v3721 = vpack.c.b16 %v3690, %v3689
      %v3722 = vpack.c.b16 %v3692, %v3691
      %v3723 = vpack.c.b16 %v3694, %v3693
      %v3724 = vpack.c.b16 %v3696, %v3695
      %v3725 = vpack.c.b16 %v3698, %v3697
      %v3726 = vpack.c.b16 %v3700, %v3699
      %v3727 = vpack.c.b16 %v3702, %v3701
      %v3728 = vpack.c.b16 %v3704, %v3703
      %v3729 = vpack.c.b16 %v3706, %v3705
      %v3730 = vpack.c.b16 %v3708, %v3707
      %v3731 = vpack.c.b16 %v3710, %v3709
      %v3732 = vpack.c.b16 %v3712, %v3711
      %v3733 = vpack.c.b16 %v3714, %v3713
      %v3734 = vpack.c.b16 %v3716, %v3715
      %v3735 = vpack.c.b16 %v3718, %v3717
      %v3736 = vpack.c.b16 %v3720, %v3719
      %v3769 = vunpack.c.l.b16 %v3641
      %v3770 = vunpack.c.l.b16 %v3642
      %v3771 = vunpack.c.l.b16 %v3643
      %v3772 = vunpack.c.l.b16 %v3644
      %v3773 = vunpack.c.l.b16 %v3645
      %v3774 = vunpack.c.l.b16 %v3646
      %v3775 = vunpack.c.l.b16 %v3647
      %v3776 = vunpack.c.l.b16 %v3648
      %v3777 = vunpack.c.l.b16 %v3649
      %v3778 = vunpack.c.l.b16 %v3650
      %v3779 = vunpack.c.l.b16 %v3651
      %v3780 = vunpack.c.l.b16 %v3652
      %v3781 = vunpack.c.l.b16 %v3653
      %v3782 = vunpack.c.l.b16 %v3654
      %v3783 = vunpack.c.l.b16 %v3655
      %v3784 = vunpack.c.l.b16 %v3656
      %v3785 = vpack.c.b16 %v3770, %v3769
      %v3786 = vpack.c.b16 %v3772, %v3771
      %v3787 = vpack.c.b16 %v3774, %v3773
      %v3788 = vpack.c.b16 %v3776, %v3775
      %v3789 = vpack.c.b16 %v3778, %v3777
      %v3790 = vpack.c.b16 %v3780, %v3779
      %v3791 = vpack.c.b16 %v3782, %v3781
      %v3792 = vpack.c.b16 %v3784, %v3783
      %3801 = vmatpush.bf16.msra.mxu0 %v3792
      %3802 = vmatpush.bf16.msra.mxu0 %v3791
      %3803 = vmatpush.bf16.msra.mxu0 %v3790
      %3804 = vmatpush.bf16.msra.mxu0 %v3789
      %3805 = vmatpush.bf16.msra.mxu0 %v3788
      %3806 = vmatpush.bf16.msra.mxu0 %v3787
      %3807 = vmatpush.bf16.msra.mxu0 %v3786
      %3808 = vmatpush.bf16.msra.mxu0 %v3785
      %3809 = vmatmul.bf16.gmra.mxu0 %v3721
      %v3810 = vpop.f32.mrf.mxu0
      %v3811 = vadd.f32 0.0, %v3810
      %v3812 = vpop.f32.mrf.mxu0
      %v3813 = vadd.f32 0.0, %v3812
      %3814 = vmatmul.bf16.gmra.mxu0 %v3722
      %v3815 = vpop.f32.mrf.mxu0
      %v3816 = vadd.f32 0.0, %v3815
      %v3817 = vpop.f32.mrf.mxu0
      %v3818 = vadd.f32 0.0, %v3817
      %3819 = vmatmul.bf16.gmra.mxu0 %v3723
      %v3820 = vpop.f32.mrf.mxu0
      %v3821 = vadd.f32 0.0, %v3820
      %v3822 = vpop.f32.mrf.mxu0
      %v3823 = vadd.f32 0.0, %v3822
      %3824 = vmatmul.bf16.gmra.mxu0 %v3724
      %v3825 = vpop.f32.mrf.mxu0
      %v3826 = vadd.f32 0.0, %v3825
      %v3827 = vpop.f32.mrf.mxu0
      %v3828 = vadd.f32 0.0, %v3827
      %3829 = vmatmul.bf16.gmra.mxu0 %v3725
      %v3830 = vpop.f32.mrf.mxu0
      %v3831 = vadd.f32 0.0, %v3830
      %v3832 = vpop.f32.mrf.mxu0
      %v3833 = vadd.f32 0.0, %v3832
      %3834 = vmatmul.bf16.gmra.mxu0 %v3726
      %v3835 = vpop.f32.mrf.mxu0
      %v3836 = vadd.f32 0.0, %v3835
      %v3837 = vpop.f32.mrf.mxu0
      %v3838 = vadd.f32 0.0, %v3837
      %3839 = vmatmul.bf16.gmra.mxu0 %v3727
      %v3840 = vpop.f32.mrf.mxu0
      %v3841 = vadd.f32 0.0, %v3840
      %v3842 = vpop.f32.mrf.mxu0
      %v3843 = vadd.f32 0.0, %v3842
      %3844 = vmatmul.bf16.gmra.mxu0 %v3728
      %v3845 = vpop.f32.mrf.mxu0
      %v3846 = vadd.f32 0.0, %v3845
      %v3847 = vpop.f32.mrf.mxu0
      %v3848 = vadd.f32 0.0, %v3847
      %3849 = vmatmul.bf16.gmra.mxu0 %v3729
      %v3850 = vpop.f32.mrf.mxu0
      %v3851 = vadd.f32 0.0, %v3850
      %v3852 = vpop.f32.mrf.mxu0
      %v3853 = vadd.f32 0.0, %v3852
      %3854 = vmatmul.bf16.gmra.mxu0 %v3730
      %v3855 = vpop.f32.mrf.mxu0
      %v3856 = vadd.f32 0.0, %v3855
      %v3857 = vpop.f32.mrf.mxu0
      %v3858 = vadd.f32 0.0, %v3857
      %3859 = vmatmul.bf16.gmra.mxu0 %v3731
      %v3860 = vpop.f32.mrf.mxu0
      %v3861 = vadd.f32 0.0, %v3860
      %v3862 = vpop.f32.mrf.mxu0
      %v3863 = vadd.f32 0.0, %v3862
      %3864 = vmatmul.bf16.gmra.mxu0 %v3732
      %v3865 = vpop.f32.mrf.mxu0
      %v3866 = vadd.f32 0.0, %v3865
      %v3867 = vpop.f32.mrf.mxu0
      %v3868 = vadd.f32 0.0, %v3867
      %3869 = vmatmul.bf16.gmra.mxu0 %v3733
      %v3870 = vpop.f32.mrf.mxu0
      %v3871 = vadd.f32 0.0, %v3870
      %v3872 = vpop.f32.mrf.mxu0
      %v3873 = vadd.f32 0.0, %v3872
      %3874 = vmatmul.bf16.gmra.mxu0 %v3734
      %v3875 = vpop.f32.mrf.mxu0
      %v3876 = vadd.f32 0.0, %v3875
      %v3877 = vpop.f32.mrf.mxu0
      %v3878 = vadd.f32 0.0, %v3877
      %3879 = vmatmul.bf16.gmra.mxu0 %v3735
      %v3880 = vpop.f32.mrf.mxu0
      %v3881 = vadd.f32 0.0, %v3880
      %v3882 = vpop.f32.mrf.mxu0
      %v3883 = vadd.f32 0.0, %v3882
      %3884 = vmatmul.bf16.gmra.mxu0 %v3736
      %v3885 = vpop.f32.mrf.mxu0
      %v3886 = vadd.f32 0.0, %v3885
      %v3887 = vpop.f32.mrf.mxu0
      %v3888 = vadd.f32 0.0, %v3887
      %3889 = vdwg.mxu0
      %v3890 = vadd.f32 %v3608, %v3811
      %v3891 = vadd.f32 %v3609, %v3813
      %v3892 = vadd.f32 %v3610, %v3816
      %v3893 = vadd.f32 %v3611, %v3818
      %v3894 = vadd.f32 %v3612, %v3821
      %v3895 = vadd.f32 %v3613, %v3823
      %v3896 = vadd.f32 %v3614, %v3826
      %v3897 = vadd.f32 %v3615, %v3828
      %v3898 = vadd.f32 %v3616, %v3831
      %v3899 = vadd.f32 %v3617, %v3833
      %v3900 = vadd.f32 %v3618, %v3836
      %v3901 = vadd.f32 %v3619, %v3838
      %v3902 = vadd.f32 %v3620, %v3841
      %v3903 = vadd.f32 %v3621, %v3843
      %v3904 = vadd.f32 %v3622, %v3846
      %v3905 = vadd.f32 %v3623, %v3848
      %v3906 = vadd.f32 %v3624, %v3851
      %v3907 = vadd.f32 %v3625, %v3853
      %v3908 = vadd.f32 %v3626, %v3856
      %v3909 = vadd.f32 %v3627, %v3858
      %v3910 = vadd.f32 %v3628, %v3861
      %v3911 = vadd.f32 %v3629, %v3863
      %v3912 = vadd.f32 %v3630, %v3866
      %v3913 = vadd.f32 %v3631, %v3868
      %v3914 = vadd.f32 %v3632, %v3871
      %v3915 = vadd.f32 %v3633, %v3873
      %v3916 = vadd.f32 %v3634, %v3876
      %v3917 = vadd.f32 %v3635, %v3878
      %v3918 = vadd.f32 %v3636, %v3881
      %v3919 = vadd.f32 %v3637, %v3883
      %v3920 = vadd.f32 %v3638, %v3886
      %v3921 = vadd.f32 %v3639, %v3888
      %3922 = vst [vmem:[#allocation2] sm:$0xff] %v3890
      %3923 = vst [vmem:[#allocation2 + $0x8] sm:$0xff] %v3891
      %3924 = vst [vmem:[#allocation2 + $0x10] sm:$0xff] %v3892
      %3925 = vst [vmem:[#allocation2 + $0x18] sm:$0xff] %v3893
      %3926 = vst [vmem:[#allocation2 + $0x20] sm:$0xff] %v3894
      %3927 = vst [vmem:[#allocation2 + $0x28] sm:$0xff] %v3895
      %3928 = vst [vmem:[#allocation2 + $0x30] sm:$0xff] %v3896
      %3929 = vst [vmem:[#allocation2 + $0x38] sm:$0xff] %v3897
      %3930 = vst [vmem:[#allocation2 + $0x40] sm:$0xff] %v3898
      %3931 = vst [vmem:[#allocation2 + $0x48] sm:$0xff] %v3899
      %3932 = vst [vmem:[#allocation2 + $0x50] sm:$0xff] %v3900
      %3933 = vst [vmem:[#allocation2 + $0x58] sm:$0xff] %v3901
      %3934 = vst [vmem:[#allocation2 + $0x60] sm:$0xff] %v3902
      %3935 = vst [vmem:[#allocation2 + $0x68] sm:$0xff] %v3903
      %3936 = vst [vmem:[#allocation2 + $0x70] sm:$0xff] %v3904
      %3937 = vst [vmem:[#allocation2 + $0x78] sm:$0xff] %v3905
      %3938 = vst [vmem:[#allocation2 + $0x80] sm:$0xff] %v3906
      %3939 = vst [vmem:[#allocation2 + $0x88] sm:$0xff] %v3907
      %3940 = vst [vmem:[#allocation2 + $0x90] sm:$0xff] %v3908
      %3941 = vst [vmem:[#allocation2 + $0x98] sm:$0xff] %v3909
      %3942 = vst [vmem:[#allocation2 + $0xa0] sm:$0xff] %v3910
      %3943 = vst [vmem:[#allocation2 + $0xa8] sm:$0xff] %v3911
      %3944 = vst [vmem:[#allocation2 + $0xb0] sm:$0xff] %v3912
      %3945 = vst [vmem:[#allocation2 + $0xb8] sm:$0xff] %v3913
      %3946 = vst [vmem:[#allocation2 + $0xc0] sm:$0xff] %v3914
      %3947 = vst [vmem:[#allocation2 + $0xc8] sm:$0xff] %v3915
      %3948 = vst [vmem:[#allocation2 + $0xd0] sm:$0xff] %v3916
      %3949 = vst [vmem:[#allocation2 + $0xd8] sm:$0xff] %v3917
      %3950 = vst [vmem:[#allocation2 + $0xe0] sm:$0xff] %v3918
      %3951 = vst [vmem:[#allocation2 + $0xe8] sm:$0xff] %v3919
      %3952 = vst [vmem:[#allocation2 + $0xf0] sm:$0xff] %v3920
      %3953 = vst [vmem:[#allocation2 + $0xf8] sm:$0xff] %v3921
      %v3954 = vld [vmem:[%s3575] sm:$0xf]
      %v3955 = vld [vmem:[%s3575 + $0x4] sm:$0xf]
      %v3956 = vld [vmem:[%s3575 + $0x8] sm:$0x1]
      %v3957 = vld [vmem:[%s3575 + $0xc] sm:$0xf]
      %v3958 = vld [vmem:[%s3575 + $0x10] sm:$0xf]
      %v3959 = vld [vmem:[%s3575 + $0x14] sm:$0x1]
      %v3960 = vld [vmem:[%s3575 + $0x18] sm:$0xf]
      %v3961 = vld [vmem:[%s3575 + $0x1c] sm:$0xf]
      %v3962 = vld [vmem:[%s3575 + $0x20] sm:$0x1]
      %v3963 = vld [vmem:[%s3575 + $0x24] sm:$0xf]
      %v3964 = vld [vmem:[%s3575 + $0x28] sm:$0xf]
      %v3965 = vld [vmem:[%s3575 + $0x2c] sm:$0x1]
      %v3966 = vld [vmem:[%s3575 + $0x30] sm:$0xf]
      %v3967 = vld [vmem:[%s3575 + $0x34] sm:$0xf]
      %v3968 = vld [vmem:[%s3575 + $0x38] sm:$0x1]
      %v3969 = vld [vmem:[%s3575 + $0x3c] sm:$0xf]
      %v3970 = vld [vmem:[%s3575 + $0x40] sm:$0xf]
      %v3971 = vld [vmem:[%s3575 + $0x44] sm:$0x1]
      %v3972 = vld [vmem:[%s3575 + $0x48] sm:$0xf]
      %v3973 = vld [vmem:[%s3575 + $0x4c] sm:$0xf]
      %v3974 = vld [vmem:[%s3575 + $0x50] sm:$0x1]
      %v3975 = vld [vmem:[%s3575 + $0x54] sm:$0xf]
      %v3976 = vld [vmem:[%s3575 + $0x58] sm:$0xf]
      %v3977 = vld [vmem:[%s3575 + $0x5c] sm:$0x1]
      %v3978 = vld [vmem:[%s3575 + $0x60] sm:$0xf]
      %v3979 = vld [vmem:[%s3575 + $0x64] sm:$0xf]
      %v3980 = vld [vmem:[%s3575 + $0x68] sm:$0x1]
      %v3981 = vld [vmem:[%s3575 + $0x6c] sm:$0xf]
      %v3982 = vld [vmem:[%s3575 + $0x70] sm:$0xf]
      %v3983 = vld [vmem:[%s3575 + $0x74] sm:$0x1]
      %v3984 = vld [vmem:[%s3575 + $0x78] sm:$0xf]
      %v3985 = vld [vmem:[%s3575 + $0x7c] sm:$0xf]
      %v3986 = vld [vmem:[%s3575 + $0x80] sm:$0x1]
      %v3987 = vld [vmem:[%s3575 + $0x84] sm:$0xf]
      %v3988 = vld [vmem:[%s3575 + $0x88] sm:$0xf]
      %v3989 = vld [vmem:[%s3575 + $0x8c] sm:$0x1]
      %v3990 = vld [vmem:[%s3575 + $0x90] sm:$0xf]
      %v3991 = vld [vmem:[%s3575 + $0x94] sm:$0xf]
      %v3992 = vld [vmem:[%s3575 + $0x98] sm:$0x1]
      %v3993 = vld [vmem:[%s3575 + $0x9c] sm:$0xf]
      %v3994 = vld [vmem:[%s3575 + $0xa0] sm:$0xf]
      %v3995 = vld [vmem:[%s3575 + $0xa4] sm:$0x1]
      %v3996 = vld [vmem:[%s3575 + $0xa8] sm:$0xf]
      %v3997 = vld [vmem:[%s3575 + $0xac] sm:$0xf]
      %v3998 = vld [vmem:[%s3575 + $0xb0] sm:$0x1]
      %v3999 = vld [vmem:[%s3575 + $0xb4] sm:$0xf]
      %v4000 = vld [vmem:[%s3575 + $0xb8] sm:$0xf]
      %v4001 = vld [vmem:[%s3575 + $0xbc] sm:$0x1]
      %v4002 = vld [vmem:[#allocation2] sm:$0xff]
      %v4003 = vld [vmem:[#allocation2 + $0x8] sm:$0xff]
      %v4004 = vld [vmem:[#allocation2 + $0x10] sm:$0xff]
      %v4005 = vld [vmem:[#allocation2 + $0x18] sm:$0xff]
      %v4006 = vld [vmem:[#allocation2 + $0x20] sm:$0xff]
      %v4007 = vld [vmem:[#allocation2 + $0x28] sm:$0xff]
      %v4008 = vld [vmem:[#allocation2 + $0x30] sm:$0xff]
      %v4009 = vld [vmem:[#allocation2 + $0x38] sm:$0xff]
      %v4010 = vld [vmem:[#allocation2 + $0x40] sm:$0xff]
      %v4011 = vld [vmem:[#allocation2 + $0x48] sm:$0xff]
      %v4012 = vld [vmem:[#allocation2 + $0x50] sm:$0xff]
      %v4013 = vld [vmem:[#allocation2 + $0x58] sm:$0xff]
      %v4014 = vld [vmem:[#allocation2 + $0x60] sm:$0xff]
      %v4015 = vld [vmem:[#allocation2 + $0x68] sm:$0xff]
      %v4016 = vld [vmem:[#allocation2 + $0x70] sm:$0xff]
      %v4017 = vld [vmem:[#allocation2 + $0x78] sm:$0xff]
      %v4018 = vld [vmem:[#allocation2 + $0x80] sm:$0xff]
      %v4019 = vld [vmem:[#allocation2 + $0x88] sm:$0xff]
      %v4020 = vld [vmem:[#allocation2 + $0x90] sm:$0xff]
      %v4021 = vld [vmem:[#allocation2 + $0x98] sm:$0xff]
      %v4022 = vld [vmem:[#allocation2 + $0xa0] sm:$0xff]
      %v4023 = vld [vmem:[#allocation2 + $0xa8] sm:$0xff]
      %v4024 = vld [vmem:[#allocation2 + $0xb0] sm:$0xff]
      %v4025 = vld [vmem:[#allocation2 + $0xb8] sm:$0xff]
      %v4026 = vld [vmem:[#allocation2 + $0xc0] sm:$0xff]
      %v4027 = vld [vmem:[#allocation2 + $0xc8] sm:$0xff]
      %v4028 = vld [vmem:[#allocation2 + $0xd0] sm:$0xff]
      %v4029 = vld [vmem:[#allocation2 + $0xd8] sm:$0xff]
      %v4030 = vld [vmem:[#allocation2 + $0xe0] sm:$0xff]
      %v4031 = vld [vmem:[#allocation2 + $0xe8] sm:$0xff]
      %v4032 = vld [vmem:[#allocation2 + $0xf0] sm:$0xff]
      %v4033 = vld [vmem:[#allocation2 + $0xf8] sm:$0xff]
      %v4035 = vshrl.u32 %v3954, 16
      %v4037 = vrot.slane %v4035, 4
      %v4038 = vshll.u32 %v3954, 16
      %v4040 = vrot.slane %v4038, 5
      %v4041 = vor.u32 %v4037, %v4040
      %v4042 = vrot.slane %v4041, 4
      %v4044 = vshll.u32 %v3955, 16
      %v4046 = vrot.slane %v4044, 5
      %v4047 = vsel %vm736, %v4042, %v4046
      %v4048 = vshrl.u32 %v3955, 16
      %v4050 = vrot.slane %v4048, 4
      %v4051 = vor.u32 %v4050, %v4046
      %v4052 = vrot.slane %v4051, 4
      %v4054 = vshll.u32 %v3956, 16
      %v4056 = vrot.slane %v4054, 5
      %v4057 = vsel %vm736, %v4052, %v4056
      %v4059 = vshrl.u32 %v3957, 16
      %v4061 = vrot.slane %v4059, 4
      %v4062 = vshll.u32 %v3957, 16
      %v4064 = vrot.slane %v4062, 5
      %v4065 = vor.u32 %v4061, %v4064
      %v4066 = vrot.slane %v4065, 4
      %v4068 = vshll.u32 %v3958, 16
      %v4070 = vrot.slane %v4068, 5
      %v4071 = vsel %vm736, %v4066, %v4070
      %v4072 = vshrl.u32 %v3958, 16
      %v4074 = vrot.slane %v4072, 4
      %v4075 = vor.u32 %v4074, %v4070
      %v4076 = vrot.slane %v4075, 4
      %v4078 = vshll.u32 %v3959, 16
      %v4080 = vrot.slane %v4078, 5
      %v4081 = vsel %vm736, %v4076, %v4080
      %v4083 = vshrl.u32 %v3960, 16
      %v4085 = vrot.slane %v4083, 4
      %v4086 = vshll.u32 %v3960, 16
      %v4088 = vrot.slane %v4086, 5
      %v4089 = vor.u32 %v4085, %v4088
      %v4090 = vrot.slane %v4089, 4
      %v4092 = vshll.u32 %v3961, 16
      %v4094 = vrot.slane %v4092, 5
      %v4095 = vsel %vm736, %v4090, %v4094
      %v4096 = vshrl.u32 %v3961, 16
      %v4098 = vrot.slane %v4096, 4
      %v4099 = vor.u32 %v4098, %v4094
      %v4100 = vrot.slane %v4099, 4
      %v4102 = vshll.u32 %v3962, 16
      %v4104 = vrot.slane %v4102, 5
      %v4105 = vsel %vm736, %v4100, %v4104
      %v4107 = vshrl.u32 %v3963, 16
      %v4109 = vrot.slane %v4107, 4
      %v4110 = vshll.u32 %v3963, 16
      %v4112 = vrot.slane %v4110, 5
      %v4113 = vor.u32 %v4109, %v4112
      %v4114 = vrot.slane %v4113, 4
      %v4116 = vshll.u32 %v3964, 16
      %v4118 = vrot.slane %v4116, 5
      %v4119 = vsel %vm736, %v4114, %v4118
      %v4120 = vshrl.u32 %v3964, 16
      %v4122 = vrot.slane %v4120, 4
      %v4123 = vor.u32 %v4122, %v4118
      %v4124 = vrot.slane %v4123, 4
      %v4126 = vshll.u32 %v3965, 16
      %v4128 = vrot.slane %v4126, 5
      %v4129 = vsel %vm736, %v4124, %v4128
      %v4131 = vshrl.u32 %v3966, 16
      %v4133 = vrot.slane %v4131, 4
      %v4134 = vshll.u32 %v3966, 16
      %v4136 = vrot.slane %v4134, 5
      %v4137 = vor.u32 %v4133, %v4136
      %v4138 = vrot.slane %v4137, 4
      %v4140 = vshll.u32 %v3967, 16
      %v4142 = vrot.slane %v4140, 5
      %v4143 = vsel %vm736, %v4138, %v4142
      %v4144 = vshrl.u32 %v3967, 16
      %v4146 = vrot.slane %v4144, 4
      %v4147 = vor.u32 %v4146, %v4142
      %v4148 = vrot.slane %v4147, 4
      %v4150 = vshll.u32 %v3968, 16
      %v4152 = vrot.slane %v4150, 5
      %v4153 = vsel %vm736, %v4148, %v4152
      %v4155 = vshrl.u32 %v3969, 16
      %v4157 = vrot.slane %v4155, 4
      %v4158 = vshll.u32 %v3969, 16
      %v4160 = vrot.slane %v4158, 5
      %v4161 = vor.u32 %v4157, %v4160
      %v4162 = vrot.slane %v4161, 4
      %v4164 = vshll.u32 %v3970, 16
      %v4166 = vrot.slane %v4164, 5
      %v4167 = vsel %vm736, %v4162, %v4166
      %v4168 = vshrl.u32 %v3970, 16
      %v4170 = vrot.slane %v4168, 4
      %v4171 = vor.u32 %v4170, %v4166
      %v4172 = vrot.slane %v4171, 4
      %v4174 = vshll.u32 %v3971, 16
      %v4176 = vrot.slane %v4174, 5
      %v4177 = vsel %vm736, %v4172, %v4176
      %v4179 = vshrl.u32 %v3972, 16
      %v4181 = vrot.slane %v4179, 4
      %v4182 = vshll.u32 %v3972, 16
      %v4184 = vrot.slane %v4182, 5
      %v4185 = vor.u32 %v4181, %v4184
      %v4186 = vrot.slane %v4185, 4
      %v4188 = vshll.u32 %v3973, 16
      %v4190 = vrot.slane %v4188, 5
      %v4191 = vsel %vm736, %v4186, %v4190
      %v4192 = vshrl.u32 %v3973, 16
      %v4194 = vrot.slane %v4192, 4
      %v4195 = vor.u32 %v4194, %v4190
      %v4196 = vrot.slane %v4195, 4
      %v4198 = vshll.u32 %v3974, 16
      %v4200 = vrot.slane %v4198, 5
      %v4201 = vsel %vm736, %v4196, %v4200
      %v4203 = vshrl.u32 %v3975, 16
      %v4205 = vrot.slane %v4203, 4
      %v4206 = vshll.u32 %v3975, 16
      %v4208 = vrot.slane %v4206, 5
      %v4209 = vor.u32 %v4205, %v4208
      %v4210 = vrot.slane %v4209, 4
      %v4212 = vshll.u32 %v3976, 16
      %v4214 = vrot.slane %v4212, 5
      %v4215 = vsel %vm736, %v4210, %v4214
      %v4216 = vshrl.u32 %v3976, 16
      %v4218 = vrot.slane %v4216, 4
      %v4219 = vor.u32 %v4218, %v4214
      %v4220 = vrot.slane %v4219, 4
      %v4222 = vshll.u32 %v3977, 16
      %v4224 = vrot.slane %v4222, 5
      %v4225 = vsel %vm736, %v4220, %v4224
      %v4227 = vshrl.u32 %v3978, 16
      %v4229 = vrot.slane %v4227, 4
      %v4230 = vshll.u32 %v3978, 16
      %v4232 = vrot.slane %v4230, 5
      %v4233 = vor.u32 %v4229, %v4232
      %v4234 = vrot.slane %v4233, 4
      %v4236 = vshll.u32 %v3979, 16
      %v4238 = vrot.slane %v4236, 5
      %v4239 = vsel %vm736, %v4234, %v4238
      %v4240 = vshrl.u32 %v3979, 16
      %v4242 = vrot.slane %v4240, 4
      %v4243 = vor.u32 %v4242, %v4238
      %v4244 = vrot.slane %v4243, 4
      %v4246 = vshll.u32 %v3980, 16
      %v4248 = vrot.slane %v4246, 5
      %v4249 = vsel %vm736, %v4244, %v4248
      %v4251 = vshrl.u32 %v3981, 16
      %v4253 = vrot.slane %v4251, 4
      %v4254 = vshll.u32 %v3981, 16
      %v4256 = vrot.slane %v4254, 5
      %v4257 = vor.u32 %v4253, %v4256
      %v4258 = vrot.slane %v4257, 4
      %v4260 = vshll.u32 %v3982, 16
      %v4262 = vrot.slane %v4260, 5
      %v4263 = vsel %vm736, %v4258, %v4262
      %v4264 = vshrl.u32 %v3982, 16
      %v4266 = vrot.slane %v4264, 4
      %v4267 = vor.u32 %v4266, %v4262
      %v4268 = vrot.slane %v4267, 4
      %v4270 = vshll.u32 %v3983, 16
      %v4272 = vrot.slane %v4270, 5
      %v4273 = vsel %vm736, %v4268, %v4272
      %v4275 = vshrl.u32 %v3984, 16
      %v4277 = vrot.slane %v4275, 4
      %v4278 = vshll.u32 %v3984, 16
      %v4280 = vrot.slane %v4278, 5
      %v4281 = vor.u32 %v4277, %v4280
      %v4282 = vrot.slane %v4281, 4
      %v4284 = vshll.u32 %v3985, 16
      %v4286 = vrot.slane %v4284, 5
      %v4287 = vsel %vm736, %v4282, %v4286
      %v4288 = vshrl.u32 %v3985, 16
      %v4290 = vrot.slane %v4288, 4
      %v4291 = vor.u32 %v4290, %v4286
      %v4292 = vrot.slane %v4291, 4
      %v4294 = vshll.u32 %v3986, 16
      %v4296 = vrot.slane %v4294, 5
      %v4297 = vsel %vm736, %v4292, %v4296
      %v4299 = vshrl.u32 %v3987, 16
      %v4301 = vrot.slane %v4299, 4
      %v4302 = vshll.u32 %v3987, 16
      %v4304 = vrot.slane %v4302, 5
      %v4305 = vor.u32 %v4301, %v4304
      %v4306 = vrot.slane %v4305, 4
      %v4308 = vshll.u32 %v3988, 16
      %v4310 = vrot.slane %v4308, 5
      %v4311 = vsel %vm736, %v4306, %v4310
      %v4312 = vshrl.u32 %v3988, 16
      %v4314 = vrot.slane %v4312, 4
      %v4315 = vor.u32 %v4314, %v4310
      %v4316 = vrot.slane %v4315, 4
      %v4318 = vshll.u32 %v3989, 16
      %v4320 = vrot.slane %v4318, 5
      %v4321 = vsel %vm736, %v4316, %v4320
      %v4323 = vshrl.u32 %v3990, 16
      %v4325 = vrot.slane %v4323, 4
      %v4326 = vshll.u32 %v3990, 16
      %v4328 = vrot.slane %v4326, 5
      %v4329 = vor.u32 %v4325, %v4328
      %v4330 = vrot.slane %v4329, 4
      %v4332 = vshll.u32 %v3991, 16
      %v4334 = vrot.slane %v4332, 5
      %v4335 = vsel %vm736, %v4330, %v4334
      %v4336 = vshrl.u32 %v3991, 16
      %v4338 = vrot.slane %v4336, 4
      %v4339 = vor.u32 %v4338, %v4334
      %v4340 = vrot.slane %v4339, 4
      %v4342 = vshll.u32 %v3992, 16
      %v4344 = vrot.slane %v4342, 5
      %v4345 = vsel %vm736, %v4340, %v4344
      %v4347 = vshrl.u32 %v3993, 16
      %v4349 = vrot.slane %v4347, 4
      %v4350 = vshll.u32 %v3993, 16
      %v4352 = vrot.slane %v4350, 5
      %v4353 = vor.u32 %v4349, %v4352
      %v4354 = vrot.slane %v4353, 4
      %v4356 = vshll.u32 %v3994, 16
      %v4358 = vrot.slane %v4356, 5
      %v4359 = vsel %vm736, %v4354, %v4358
      %v4360 = vshrl.u32 %v3994, 16
      %v4362 = vrot.slane %v4360, 4
      %v4363 = vor.u32 %v4362, %v4358
      %v4364 = vrot.slane %v4363, 4
      %v4366 = vshll.u32 %v3995, 16
      %v4368 = vrot.slane %v4366, 5
      %v4369 = vsel %vm736, %v4364, %v4368
      %v4371 = vshrl.u32 %v3996, 16
      %v4373 = vrot.slane %v4371, 4
      %v4374 = vshll.u32 %v3996, 16
      %v4376 = vrot.slane %v4374, 5
      %v4377 = vor.u32 %v4373, %v4376
      %v4378 = vrot.slane %v4377, 4
      %v4380 = vshll.u32 %v3997, 16
      %v4382 = vrot.slane %v4380, 5
      %v4383 = vsel %vm736, %v4378, %v4382
      %v4384 = vshrl.u32 %v3997, 16
      %v4386 = vrot.slane %v4384, 4
      %v4387 = vor.u32 %v4386, %v4382
      %v4388 = vrot.slane %v4387, 4
      %v4390 = vshll.u32 %v3998, 16
      %v4392 = vrot.slane %v4390, 5
      %v4393 = vsel %vm736, %v4388, %v4392
      %v4395 = vshrl.u32 %v3999, 16
      %v4397 = vrot.slane %v4395, 4
      %v4398 = vshll.u32 %v3999, 16
      %v4400 = vrot.slane %v4398, 5
      %v4401 = vor.u32 %v4397, %v4400
      %v4402 = vrot.slane %v4401, 4
      %v4404 = vshll.u32 %v4000, 16
      %v4406 = vrot.slane %v4404, 5
      %v4407 = vsel %vm736, %v4402, %v4406
      %v4408 = vshrl.u32 %v4000, 16
      %v4410 = vrot.slane %v4408, 4
      %v4411 = vor.u32 %v4410, %v4406
      %v4412 = vrot.slane %v4411, 4
      %v4414 = vshll.u32 %v4001, 16
      %v4416 = vrot.slane %v4414, 5
      %v4417 = vsel %vm736, %v4412, %v4416
      %s4418 = scalar_lea.vmem %s224, 448
      %v4419 = vld [vmem:[%s4418] sm:$0xf]
      %v4420 = vld [vmem:[%s4418 + $0x4] sm:$0xf]
      %v4421 = vld [vmem:[%s4418 + $0x8] sm:$0xf]
      %v4422 = vld [vmem:[%s4418 + $0xc] sm:$0xf]
      %v4423 = vld [vmem:[%s4418 + $0x10] sm:$0xf]
      %v4424 = vld [vmem:[%s4418 + $0x14] sm:$0xf]
      %v4425 = vld [vmem:[%s4418 + $0x18] sm:$0xf]
      %v4426 = vld [vmem:[%s4418 + $0x1c] sm:$0xf]
      %v4427 = vld [vmem:[%s4418 + $0x20] sm:$0xf]
      %v4428 = vld [vmem:[%s4418 + $0x24] sm:$0xf]
      %v4429 = vld [vmem:[%s4418 + $0x28] sm:$0xf]
      %v4430 = vld [vmem:[%s4418 + $0x2c] sm:$0xf]
      %v4431 = vld [vmem:[%s4418 + $0x30] sm:$0xf]
      %v4432 = vld [vmem:[%s4418 + $0x34] sm:$0xf]
      %v4433 = vld [vmem:[%s4418 + $0x38] sm:$0xf]
      %v4434 = vld [vmem:[%s4418 + $0x3c] sm:$0xf]
      %v4435 = vunpack.c.l.b16 %v4047
      %v4436 = vunpack.c.l.b16 %v4057
      %v4437 = vunpack.c.l.b16 %v4071
      %v4438 = vunpack.c.l.b16 %v4081
      %v4439 = vunpack.c.l.b16 %v4095
      %v4440 = vunpack.c.l.b16 %v4105
      %v4441 = vunpack.c.l.b16 %v4119
      %v4442 = vunpack.c.l.b16 %v4129
      %v4443 = vunpack.c.l.b16 %v4143
      %v4444 = vunpack.c.l.b16 %v4153
      %v4445 = vunpack.c.l.b16 %v4167
      %v4446 = vunpack.c.l.b16 %v4177
      %v4447 = vunpack.c.l.b16 %v4191
      %v4448 = vunpack.c.l.b16 %v4201
      %v4449 = vunpack.c.l.b16 %v4215
      %v4450 = vunpack.c.l.b16 %v4225
      %v4451 = vunpack.c.l.b16 %v4239
      %v4452 = vunpack.c.l.b16 %v4249
      %v4453 = vunpack.c.l.b16 %v4263
      %v4454 = vunpack.c.l.b16 %v4273
      %v4455 = vunpack.c.l.b16 %v4287
      %v4456 = vunpack.c.l.b16 %v4297
      %v4457 = vunpack.c.l.b16 %v4311
      %v4458 = vunpack.c.l.b16 %v4321
      %v4459 = vunpack.c.l.b16 %v4335
      %v4460 = vunpack.c.l.b16 %v4345
      %v4461 = vunpack.c.l.b16 %v4359
      %v4462 = vunpack.c.l.b16 %v4369
      %v4463 = vunpack.c.l.b16 %v4383
      %v4464 = vunpack.c.l.b16 %v4393
      %v4465 = vunpack.c.l.b16 %v4407
      %v4466 = vunpack.c.l.b16 %v4417
      %v4467 = vpack.c.b16 %v4436, %v4435
      %v4468 = vpack.c.b16 %v4438, %v4437
      %v4469 = vpack.c.b16 %v4440, %v4439
      %v4470 = vpack.c.b16 %v4442, %v4441
      %v4471 = vpack.c.b16 %v4444, %v4443
      %v4472 = vpack.c.b16 %v4446, %v4445
      %v4473 = vpack.c.b16 %v4448, %v4447
      %v4474 = vpack.c.b16 %v4450, %v4449
      %v4475 = vpack.c.b16 %v4452, %v4451
      %v4476 = vpack.c.b16 %v4454, %v4453
      %v4477 = vpack.c.b16 %v4456, %v4455
      %v4478 = vpack.c.b16 %v4458, %v4457
      %v4479 = vpack.c.b16 %v4460, %v4459
      %v4480 = vpack.c.b16 %v4462, %v4461
      %v4481 = vpack.c.b16 %v4464, %v4463
      %v4482 = vpack.c.b16 %v4466, %v4465
      %v4515 = vunpack.c.l.b16 %v4419
      %v4516 = vunpack.c.l.b16 %v4420
      %v4517 = vunpack.c.l.b16 %v4421
      %v4518 = vunpack.c.l.b16 %v4422
      %v4519 = vunpack.c.l.b16 %v4423
      %v4520 = vunpack.c.l.b16 %v4424
      %v4521 = vunpack.c.l.b16 %v4425
      %v4522 = vunpack.c.l.b16 %v4426
      %v4523 = vunpack.c.l.b16 %v4427
      %v4524 = vunpack.c.l.b16 %v4428
      %v4525 = vunpack.c.l.b16 %v4429
      %v4526 = vunpack.c.l.b16 %v4430
      %v4527 = vunpack.c.l.b16 %v4431
      %v4528 = vunpack.c.l.b16 %v4432
      %v4529 = vunpack.c.l.b16 %v4433
      %v4530 = vunpack.c.l.b16 %v4434
      %v4531 = vpack.c.b16 %v4516, %v4515
      %v4532 = vpack.c.b16 %v4518, %v4517
      %v4533 = vpack.c.b16 %v4520, %v4519
      %v4534 = vpack.c.b16 %v4522, %v4521
      %v4535 = vpack.c.b16 %v4524, %v4523
      %v4536 = vpack.c.b16 %v4526, %v4525
      %v4537 = vpack.c.b16 %v4528, %v4527
      %v4538 = vpack.c.b16 %v4530, %v4529
      %4547 = vmatpush.bf16.msra.mxu0 %v4538
      %4548 = vmatpush.bf16.msra.mxu0 %v4537
      %4549 = vmatpush.bf16.msra.mxu0 %v4536
      %4550 = vmatpush.bf16.msra.mxu0 %v4535
      %4551 = vmatpush.bf16.msra.mxu0 %v4534
      %4552 = vmatpush.bf16.msra.mxu0 %v4533
      %4553 = vmatpush.bf16.msra.mxu0 %v4532
      %4554 = vmatpush.bf16.msra.mxu0 %v4531
      %4555 = vmatmul.bf16.gmra.mxu0 %v4467
      %v4556 = vpop.f32.mrf.mxu0
      %v4557 = vadd.f32 0.0, %v4556
      %v4558 = vpop.f32.mrf.mxu0
      %v4559 = vadd.f32 0.0, %v4558
      %4560 = vmatmul.bf16.gmra.mxu0 %v4468
      %v4561 = vpop.f32.mrf.mxu0
      %v4562 = vadd.f32 0.0, %v4561
      %v4563 = vpop.f32.mrf.mxu0
      %v4564 = vadd.f32 0.0, %v4563
      %4565 = vmatmul.bf16.gmra.mxu0 %v4469
      %v4566 = vpop.f32.mrf.mxu0
      %v4567 = vadd.f32 0.0, %v4566
      %v4568 = vpop.f32.mrf.mxu0
      %v4569 = vadd.f32 0.0, %v4568
      %4570 = vmatmul.bf16.gmra.mxu0 %v4470
      %v4571 = vpop.f32.mrf.mxu0
      %v4572 = vadd.f32 0.0, %v4571
      %v4573 = vpop.f32.mrf.mxu0
      %v4574 = vadd.f32 0.0, %v4573
      %4575 = vmatmul.bf16.gmra.mxu0 %v4471
      %v4576 = vpop.f32.mrf.mxu0
      %v4577 = vadd.f32 0.0, %v4576
      %v4578 = vpop.f32.mrf.mxu0
      %v4579 = vadd.f32 0.0, %v4578
      %4580 = vmatmul.bf16.gmra.mxu0 %v4472
      %v4581 = vpop.f32.mrf.mxu0
      %v4582 = vadd.f32 0.0, %v4581
      %v4583 = vpop.f32.mrf.mxu0
      %v4584 = vadd.f32 0.0, %v4583
      %4585 = vmatmul.bf16.gmra.mxu0 %v4473
      %v4586 = vpop.f32.mrf.mxu0
      %v4587 = vadd.f32 0.0, %v4586
      %v4588 = vpop.f32.mrf.mxu0
      %v4589 = vadd.f32 0.0, %v4588
      %4590 = vmatmul.bf16.gmra.mxu0 %v4474
      %v4591 = vpop.f32.mrf.mxu0
      %v4592 = vadd.f32 0.0, %v4591
      %v4593 = vpop.f32.mrf.mxu0
      %v4594 = vadd.f32 0.0, %v4593
      %4595 = vmatmul.bf16.gmra.mxu0 %v4475
      %v4596 = vpop.f32.mrf.mxu0
      %v4597 = vadd.f32 0.0, %v4596
      %v4598 = vpop.f32.mrf.mxu0
      %v4599 = vadd.f32 0.0, %v4598
      %4600 = vmatmul.bf16.gmra.mxu0 %v4476
      %v4601 = vpop.f32.mrf.mxu0
      %v4602 = vadd.f32 0.0, %v4601
      %v4603 = vpop.f32.mrf.mxu0
      %v4604 = vadd.f32 0.0, %v4603
      %4605 = vmatmul.bf16.gmra.mxu0 %v4477
      %v4606 = vpop.f32.mrf.mxu0
      %v4607 = vadd.f32 0.0, %v4606
      %v4608 = vpop.f32.mrf.mxu0
      %v4609 = vadd.f32 0.0, %v4608
      %4610 = vmatmul.bf16.gmra.mxu0 %v4478
      %v4611 = vpop.f32.mrf.mxu0
      %v4612 = vadd.f32 0.0, %v4611
      %v4613 = vpop.f32.mrf.mxu0
      %v4614 = vadd.f32 0.0, %v4613
      %4615 = vmatmul.bf16.gmra.mxu0 %v4479
      %v4616 = vpop.f32.mrf.mxu0
      %v4617 = vadd.f32 0.0, %v4616
      %v4618 = vpop.f32.mrf.mxu0
      %v4619 = vadd.f32 0.0, %v4618
      %4620 = vmatmul.bf16.gmra.mxu0 %v4480
      %v4621 = vpop.f32.mrf.mxu0
      %v4622 = vadd.f32 0.0, %v4621
      %v4623 = vpop.f32.mrf.mxu0
      %v4624 = vadd.f32 0.0, %v4623
      %4625 = vmatmul.bf16.gmra.mxu0 %v4481
      %v4626 = vpop.f32.mrf.mxu0
      %v4627 = vadd.f32 0.0, %v4626
      %v4628 = vpop.f32.mrf.mxu0
      %v4629 = vadd.f32 0.0, %v4628
      %4630 = vmatmul.bf16.gmra.mxu0 %v4482
      %v4631 = vpop.f32.mrf.mxu0
      %v4632 = vadd.f32 0.0, %v4631
      %v4633 = vpop.f32.mrf.mxu0
      %v4634 = vadd.f32 0.0, %v4633
      %4635 = vdwg.mxu0
      %v4636 = vadd.f32 %v4002, %v4557
      %v4637 = vadd.f32 %v4003, %v4559
      %v4638 = vadd.f32 %v4004, %v4562
      %v4639 = vadd.f32 %v4005, %v4564
      %v4640 = vadd.f32 %v4006, %v4567
      %v4641 = vadd.f32 %v4007, %v4569
      %v4642 = vadd.f32 %v4008, %v4572
      %v4643 = vadd.f32 %v4009, %v4574
      %v4644 = vadd.f32 %v4010, %v4577
      %v4645 = vadd.f32 %v4011, %v4579
      %v4646 = vadd.f32 %v4012, %v4582
      %v4647 = vadd.f32 %v4013, %v4584
      %v4648 = vadd.f32 %v4014, %v4587
      %v4649 = vadd.f32 %v4015, %v4589
      %v4650 = vadd.f32 %v4016, %v4592
      %v4651 = vadd.f32 %v4017, %v4594
      %v4652 = vadd.f32 %v4018, %v4597
      %v4653 = vadd.f32 %v4019, %v4599
      %v4654 = vadd.f32 %v4020, %v4602
      %v4655 = vadd.f32 %v4021, %v4604
      %v4656 = vadd.f32 %v4022, %v4607
      %v4657 = vadd.f32 %v4023, %v4609
      %v4658 = vadd.f32 %v4024, %v4612
      %v4659 = vadd.f32 %v4025, %v4614
      %v4660 = vadd.f32 %v4026, %v4617
      %v4661 = vadd.f32 %v4027, %v4619
      %v4662 = vadd.f32 %v4028, %v4622
      %v4663 = vadd.f32 %v4029, %v4624
      %v4664 = vadd.f32 %v4030, %v4627
      %v4665 = vadd.f32 %v4031, %v4629
      %v4666 = vadd.f32 %v4032, %v4632
      %v4667 = vadd.f32 %v4033, %v4634
      %4668 = vst [vmem:[#allocation2] sm:$0xff] %v4636
      %4669 = vst [vmem:[#allocation2 + $0x8] sm:$0xff] %v4637
      %4670 = vst [vmem:[#allocation2 + $0x10] sm:$0xff] %v4638
      %4671 = vst [vmem:[#allocation2 + $0x18] sm:$0xff] %v4639
      %4672 = vst [vmem:[#allocation2 + $0x20] sm:$0xff] %v4640
      %4673 = vst [vmem:[#allocation2 + $0x28] sm:$0xff] %v4641
      %4674 = vst [vmem:[#allocation2 + $0x30] sm:$0xff] %v4642
      %4675 = vst [vmem:[#allocation2 + $0x38] sm:$0xff] %v4643
      %4676 = vst [vmem:[#allocation2 + $0x40] sm:$0xff] %v4644
      %4677 = vst [vmem:[#allocation2 + $0x48] sm:$0xff] %v4645
      %4678 = vst [vmem:[#allocation2 + $0x50] sm:$0xff] %v4646
      %4679 = vst [vmem:[#allocation2 + $0x58] sm:$0xff] %v4647
      %4680 = vst [vmem:[#allocation2 + $0x60] sm:$0xff] %v4648
      %4681 = vst [vmem:[#allocation2 + $0x68] sm:$0xff] %v4649
      %4682 = vst [vmem:[#allocation2 + $0x70] sm:$0xff] %v4650
      %4683 = vst [vmem:[#allocation2 + $0x78] sm:$0xff] %v4651
      %4684 = vst [vmem:[#allocation2 + $0x80] sm:$0xff] %v4652
      %4685 = vst [vmem:[#allocation2 + $0x88] sm:$0xff] %v4653
      %4686 = vst [vmem:[#allocation2 + $0x90] sm:$0xff] %v4654
      %4687 = vst [vmem:[#allocation2 + $0x98] sm:$0xff] %v4655
      %4688 = vst [vmem:[#allocation2 + $0xa0] sm:$0xff] %v4656
      %4689 = vst [vmem:[#allocation2 + $0xa8] sm:$0xff] %v4657
      %4690 = vst [vmem:[#allocation2 + $0xb0] sm:$0xff] %v4658
      %4691 = vst [vmem:[#allocation2 + $0xb8] sm:$0xff] %v4659
      %4692 = vst [vmem:[#allocation2 + $0xc0] sm:$0xff] %v4660
      %4693 = vst [vmem:[#allocation2 + $0xc8] sm:$0xff] %v4661
      %4694 = vst [vmem:[#allocation2 + $0xd0] sm:$0xff] %v4662
      %4695 = vst [vmem:[#allocation2 + $0xd8] sm:$0xff] %v4663
      %4696 = vst [vmem:[#allocation2 + $0xe0] sm:$0xff] %v4664
      %4697 = vst [vmem:[#allocation2 + $0xe8] sm:$0xff] %v4665
      %4698 = vst [vmem:[#allocation2 + $0xf0] sm:$0xff] %v4666
      %4699 = vst [vmem:[#allocation2 + $0xf8] sm:$0xff] %v4667
      %v4700 = vld [vmem:[%s3575] sm:$0xe]
      %v4701 = vld [vmem:[%s3575 + $0x4] sm:$0xf]
      %v4702 = vld [vmem:[%s3575 + $0x8] sm:$0x1]
      %v4703 = vld [vmem:[%s3575 + $0xc] sm:$0xe]
      %v4704 = vld [vmem:[%s3575 + $0x10] sm:$0xf]
      %v4705 = vld [vmem:[%s3575 + $0x14] sm:$0x1]
      %v4706 = vld [vmem:[%s3575 + $0x18] sm:$0xe]
      %v4707 = vld [vmem:[%s3575 + $0x1c] sm:$0xf]
      %v4708 = vld [vmem:[%s3575 + $0x20] sm:$0x1]
      %v4709 = vld [vmem:[%s3575 + $0x24] sm:$0xe]
      %v4710 = vld [vmem:[%s3575 + $0x28] sm:$0xf]
      %v4711 = vld [vmem:[%s3575 + $0x2c] sm:$0x1]
      %v4712 = vld [vmem:[%s3575 + $0x30] sm:$0xe]
      %v4713 = vld [vmem:[%s3575 + $0x34] sm:$0xf]
      %v4714 = vld [vmem:[%s3575 + $0x38] sm:$0x1]
      %v4715 = vld [vmem:[%s3575 + $0x3c] sm:$0xe]
      %v4716 = vld [vmem:[%s3575 + $0x40] sm:$0xf]
      %v4717 = vld [vmem:[%s3575 + $0x44] sm:$0x1]
      %v4718 = vld [vmem:[%s3575 + $0x48] sm:$0xe]
      %v4719 = vld [vmem:[%s3575 + $0x4c] sm:$0xf]
      %v4720 = vld [vmem:[%s3575 + $0x50] sm:$0x1]
      %v4721 = vld [vmem:[%s3575 + $0x54] sm:$0xe]
      %v4722 = vld [vmem:[%s3575 + $0x58] sm:$0xf]
      %v4723 = vld [vmem:[%s3575 + $0x5c] sm:$0x1]
      %v4724 = vld [vmem:[%s3575 + $0x60] sm:$0xe]
      %v4725 = vld [vmem:[%s3575 + $0x64] sm:$0xf]
      %v4726 = vld [vmem:[%s3575 + $0x68] sm:$0x1]
      %v4727 = vld [vmem:[%s3575 + $0x6c] sm:$0xe]
      %v4728 = vld [vmem:[%s3575 + $0x70] sm:$0xf]
      %v4729 = vld [vmem:[%s3575 + $0x74] sm:$0x1]
      %v4730 = vld [vmem:[%s3575 + $0x78] sm:$0xe]
      %v4731 = vld [vmem:[%s3575 + $0x7c] sm:$0xf]
      %v4732 = vld [vmem:[%s3575 + $0x80] sm:$0x1]
      %v4733 = vld [vmem:[%s3575 + $0x84] sm:$0xe]
      %v4734 = vld [vmem:[%s3575 + $0x88] sm:$0xf]
      %v4735 = vld [vmem:[%s3575 + $0x8c] sm:$0x1]
      %v4736 = vld [vmem:[%s3575 + $0x90] sm:$0xe]
      %v4737 = vld [vmem:[%s3575 + $0x94] sm:$0xf]
      %v4738 = vld [vmem:[%s3575 + $0x98] sm:$0x1]
      %v4739 = vld [vmem:[%s3575 + $0x9c] sm:$0xe]
      %v4740 = vld [vmem:[%s3575 + $0xa0] sm:$0xf]
      %v4741 = vld [vmem:[%s3575 + $0xa4] sm:$0x1]
      %v4742 = vld [vmem:[%s3575 + $0xa8] sm:$0xe]
      %v4743 = vld [vmem:[%s3575 + $0xac] sm:$0xf]
      %v4744 = vld [vmem:[%s3575 + $0xb0] sm:$0x1]
      %v4745 = vld [vmem:[%s3575 + $0xb4] sm:$0xe]
      %v4746 = vld [vmem:[%s3575 + $0xb8] sm:$0xf]
      %v4747 = vld [vmem:[%s3575 + $0xbc] sm:$0x1]
      %v4748 = vld [vmem:[#allocation2] sm:$0xff]
      %v4749 = vld [vmem:[#allocation2 + $0x8] sm:$0xff]
      %v4750 = vld [vmem:[#allocation2 + $0x10] sm:$0xff]
      %v4751 = vld [vmem:[#allocation2 + $0x18] sm:$0xff]
      %v4752 = vld [vmem:[#allocation2 + $0x20] sm:$0xff]
      %v4753 = vld [vmem:[#allocation2 + $0x28] sm:$0xff]
      %v4754 = vld [vmem:[#allocation2 + $0x30] sm:$0xff]
      %v4755 = vld [vmem:[#allocation2 + $0x38] sm:$0xff]
      %v4756 = vld [vmem:[#allocation2 + $0x40] sm:$0xff]
      %v4757 = vld [vmem:[#allocation2 + $0x48] sm:$0xff]
      %v4758 = vld [vmem:[#allocation2 + $0x50] sm:$0xff]
      %v4759 = vld [vmem:[#allocation2 + $0x58] sm:$0xff]
      %v4760 = vld [vmem:[#allocation2 + $0x60] sm:$0xff]
      %v4761 = vld [vmem:[#allocation2 + $0x68] sm:$0xff]
      %v4762 = vld [vmem:[#allocation2 + $0x70] sm:$0xff]
      %v4763 = vld [vmem:[#allocation2 + $0x78] sm:$0xff]
      %v4764 = vld [vmem:[#allocation2 + $0x80] sm:$0xff]
      %v4765 = vld [vmem:[#allocation2 + $0x88] sm:$0xff]
      %v4766 = vld [vmem:[#allocation2 + $0x90] sm:$0xff]
      %v4767 = vld [vmem:[#allocation2 + $0x98] sm:$0xff]
      %v4768 = vld [vmem:[#allocation2 + $0xa0] sm:$0xff]
      %v4769 = vld [vmem:[#allocation2 + $0xa8] sm:$0xff]
      %v4770 = vld [vmem:[#allocation2 + $0xb0] sm:$0xff]
      %v4771 = vld [vmem:[#allocation2 + $0xb8] sm:$0xff]
      %v4772 = vld [vmem:[#allocation2 + $0xc0] sm:$0xff]
      %v4773 = vld [vmem:[#allocation2 + $0xc8] sm:$0xff]
      %v4774 = vld [vmem:[#allocation2 + $0xd0] sm:$0xff]
      %v4775 = vld [vmem:[#allocation2 + $0xd8] sm:$0xff]
      %v4776 = vld [vmem:[#allocation2 + $0xe0] sm:$0xff]
      %v4777 = vld [vmem:[#allocation2 + $0xe8] sm:$0xff]
      %v4778 = vld [vmem:[#allocation2 + $0xf0] sm:$0xff]
      %v4779 = vld [vmem:[#allocation2 + $0xf8] sm:$0xff]
      %v4828 = vrot.slane %v4700, 5
      %v4829 = vrot.slane %v4828, 4
      %v4830 = vrot.slane %v4701, 5
      %v4831 = vsel %vm1533, %v4829, %v4830
      %v4832 = vrot.slane %v4830, 4
      %v4833 = vrot.slane %v4702, 5
      %v4834 = vsel %vm1533, %v4832, %v4833
      %v4835 = vrot.slane %v4703, 5
      %v4836 = vrot.slane %v4835, 4
      %v4837 = vrot.slane %v4704, 5
      %v4838 = vsel %vm1533, %v4836, %v4837
      %v4839 = vrot.slane %v4837, 4
      %v4840 = vrot.slane %v4705, 5
      %v4841 = vsel %vm1533, %v4839, %v4840
      %v4842 = vrot.slane %v4706, 5
      %v4843 = vrot.slane %v4842, 4
      %v4844 = vrot.slane %v4707, 5
      %v4845 = vsel %vm1533, %v4843, %v4844
      %v4846 = vrot.slane %v4844, 4
      %v4847 = vrot.slane %v4708, 5
      %v4848 = vsel %vm1533, %v4846, %v4847
      %v4849 = vrot.slane %v4709, 5
      %v4850 = vrot.slane %v4849, 4
      %v4851 = vrot.slane %v4710, 5
      %v4852 = vsel %vm1533, %v4850, %v4851
      %v4853 = vrot.slane %v4851, 4
      %v4854 = vrot.slane %v4711, 5
      %v4855 = vsel %vm1533, %v4853, %v4854
      %v4856 = vrot.slane %v4712, 5
      %v4857 = vrot.slane %v4856, 4
      %v4858 = vrot.slane %v4713, 5
      %v4859 = vsel %vm1533, %v4857, %v4858
      %v4860 = vrot.slane %v4858, 4
      %v4861 = vrot.slane %v4714, 5
      %v4862 = vsel %vm1533, %v4860, %v4861
      %v4863 = vrot.slane %v4715, 5
      %v4864 = vrot.slane %v4863, 4
      %v4865 = vrot.slane %v4716, 5
      %v4866 = vsel %vm1533, %v4864, %v4865
      %v4867 = vrot.slane %v4865, 4
      %v4868 = vrot.slane %v4717, 5
      %v4869 = vsel %vm1533, %v4867, %v4868
      %v4870 = vrot.slane %v4718, 5
      %v4871 = vrot.slane %v4870, 4
      %v4872 = vrot.slane %v4719, 5
      %v4873 = vsel %vm1533, %v4871, %v4872
      %v4874 = vrot.slane %v4872, 4
      %v4875 = vrot.slane %v4720, 5
      %v4876 = vsel %vm1533, %v4874, %v4875
      %v4877 = vrot.slane %v4721, 5
      %v4878 = vrot.slane %v4877, 4
      %v4879 = vrot.slane %v4722, 5
      %v4880 = vsel %vm1533, %v4878, %v4879
      %v4881 = vrot.slane %v4879, 4
      %v4882 = vrot.slane %v4723, 5
      %v4883 = vsel %vm1533, %v4881, %v4882
      %v4884 = vrot.slane %v4724, 5
      %v4885 = vrot.slane %v4884, 4
      %v4886 = vrot.slane %v4725, 5
      %v4887 = vsel %vm1533, %v4885, %v4886
      %v4888 = vrot.slane %v4886, 4
      %v4889 = vrot.slane %v4726, 5
      %v4890 = vsel %vm1533, %v4888, %v4889
      %v4891 = vrot.slane %v4727, 5
      %v4892 = vrot.slane %v4891, 4
      %v4893 = vrot.slane %v4728, 5
      %v4894 = vsel %vm1533, %v4892, %v4893
      %v4895 = vrot.slane %v4893, 4
      %v4896 = vrot.slane %v4729, 5
      %v4897 = vsel %vm1533, %v4895, %v4896
      %v4898 = vrot.slane %v4730, 5
      %v4899 = vrot.slane %v4898, 4
      %v4900 = vrot.slane %v4731, 5
      %v4901 = vsel %vm1533, %v4899, %v4900
      %v4902 = vrot.slane %v4900, 4
      %v4903 = vrot.slane %v4732, 5
      %v4904 = vsel %vm1533, %v4902, %v4903
      %v4905 = vrot.slane %v4733, 5
      %v4906 = vrot.slane %v4905, 4
      %v4907 = vrot.slane %v4734, 5
      %v4908 = vsel %vm1533, %v4906, %v4907
      %v4909 = vrot.slane %v4907, 4
      %v4910 = vrot.slane %v4735, 5
      %v4911 = vsel %vm1533, %v4909, %v4910
      %v4912 = vrot.slane %v4736, 5
      %v4913 = vrot.slane %v4912, 4
      %v4914 = vrot.slane %v4737, 5
      %v4915 = vsel %vm1533, %v4913, %v4914
      %v4916 = vrot.slane %v4914, 4
      %v4917 = vrot.slane %v4738, 5
      %v4918 = vsel %vm1533, %v4916, %v4917
      %v4919 = vrot.slane %v4739, 5
      %v4920 = vrot.slane %v4919, 4
      %v4921 = vrot.slane %v4740, 5
      %v4922 = vsel %vm1533, %v4920, %v4921
      %v4923 = vrot.slane %v4921, 4
      %v4924 = vrot.slane %v4741, 5
      %v4925 = vsel %vm1533, %v4923, %v4924
      %v4926 = vrot.slane %v4742, 5
      %v4927 = vrot.slane %v4926, 4
      %v4928 = vrot.slane %v4743, 5
      %v4929 = vsel %vm1533, %v4927, %v4928
      %v4930 = vrot.slane %v4928, 4
      %v4931 = vrot.slane %v4744, 5
      %v4932 = vsel %vm1533, %v4930, %v4931
      %v4933 = vrot.slane %v4745, 5
      %v4934 = vrot.slane %v4933, 4
      %v4935 = vrot.slane %v4746, 5
      %v4936 = vsel %vm1533, %v4934, %v4935
      %v4937 = vrot.slane %v4935, 4
      %v4938 = vrot.slane %v4747, 5
      %v4939 = vsel %vm1533, %v4937, %v4938
      %s4940 = scalar_lea.vmem %s224, 512
      %v4941 = vld [vmem:[%s4940] sm:$0xf]
      %v4942 = vld [vmem:[%s4940 + $0x4] sm:$0xf]
      %v4943 = vld [vmem:[%s4940 + $0x8] sm:$0xf]
      %v4944 = vld [vmem:[%s4940 + $0xc] sm:$0xf]
      %v4945 = vld [vmem:[%s4940 + $0x10] sm:$0xf]
      %v4946 = vld [vmem:[%s4940 + $0x14] sm:$0xf]
      %v4947 = vld [vmem:[%s4940 + $0x18] sm:$0xf]
      %v4948 = vld [vmem:[%s4940 + $0x1c] sm:$0xf]
      %v4949 = vld [vmem:[%s4940 + $0x20] sm:$0xf]
      %v4950 = vld [vmem:[%s4940 + $0x24] sm:$0xf]
      %v4951 = vld [vmem:[%s4940 + $0x28] sm:$0xf]
      %v4952 = vld [vmem:[%s4940 + $0x2c] sm:$0xf]
      %v4953 = vld [vmem:[%s4940 + $0x30] sm:$0xf]
      %v4954 = vld [vmem:[%s4940 + $0x34] sm:$0xf]
      %v4955 = vld [vmem:[%s4940 + $0x38] sm:$0xf]
      %v4956 = vld [vmem:[%s4940 + $0x3c] sm:$0xf]
      %v4957 = vunpack.c.l.b16 %v4831
      %v4958 = vunpack.c.l.b16 %v4834
      %v4959 = vunpack.c.l.b16 %v4838
      %v4960 = vunpack.c.l.b16 %v4841
      %v4961 = vunpack.c.l.b16 %v4845
      %v4962 = vunpack.c.l.b16 %v4848
      %v4963 = vunpack.c.l.b16 %v4852
      %v4964 = vunpack.c.l.b16 %v4855
      %v4965 = vunpack.c.l.b16 %v4859
      %v4966 = vunpack.c.l.b16 %v4862
      %v4967 = vunpack.c.l.b16 %v4866
      %v4968 = vunpack.c.l.b16 %v4869
      %v4969 = vunpack.c.l.b16 %v4873
      %v4970 = vunpack.c.l.b16 %v4876
      %v4971 = vunpack.c.l.b16 %v4880
      %v4972 = vunpack.c.l.b16 %v4883
      %v4973 = vunpack.c.l.b16 %v4887
      %v4974 = vunpack.c.l.b16 %v4890
      %v4975 = vunpack.c.l.b16 %v4894
      %v4976 = vunpack.c.l.b16 %v4897
      %v4977 = vunpack.c.l.b16 %v4901
      %v4978 = vunpack.c.l.b16 %v4904
      %v4979 = vunpack.c.l.b16 %v4908
      %v4980 = vunpack.c.l.b16 %v4911
      %v4981 = vunpack.c.l.b16 %v4915
      %v4982 = vunpack.c.l.b16 %v4918
      %v4983 = vunpack.c.l.b16 %v4922
      %v4984 = vunpack.c.l.b16 %v4925
      %v4985 = vunpack.c.l.b16 %v4929
      %v4986 = vunpack.c.l.b16 %v4932
      %v4987 = vunpack.c.l.b16 %v4936
      %v4988 = vunpack.c.l.b16 %v4939
      %v4989 = vpack.c.b16 %v4958, %v4957
      %v4990 = vpack.c.b16 %v4960, %v4959
      %v4991 = vpack.c.b16 %v4962, %v4961
      %v4992 = vpack.c.b16 %v4964, %v4963
      %v4993 = vpack.c.b16 %v4966, %v4965
      %v4994 = vpack.c.b16 %v4968, %v4967
      %v4995 = vpack.c.b16 %v4970, %v4969
      %v4996 = vpack.c.b16 %v4972, %v4971
      %v4997 = vpack.c.b16 %v4974, %v4973
      %v4998 = vpack.c.b16 %v4976, %v4975
      %v4999 = vpack.c.b16 %v4978, %v4977
      %v5000 = vpack.c.b16 %v4980, %v4979
      %v5001 = vpack.c.b16 %v4982, %v4981
      %v5002 = vpack.c.b16 %v4984, %v4983
      %v5003 = vpack.c.b16 %v4986, %v4985
      %v5004 = vpack.c.b16 %v4988, %v4987
      %v5037 = vunpack.c.l.b16 %v4941
      %v5038 = vunpack.c.l.b16 %v4942
      %v5039 = vunpack.c.l.b16 %v4943
      %v5040 = vunpack.c.l.b16 %v4944
      %v5041 = vunpack.c.l.b16 %v4945
      %v5042 = vunpack.c.l.b16 %v4946
      %v5043 = vunpack.c.l.b16 %v4947
      %v5044 = vunpack.c.l.b16 %v4948
      %v5045 = vunpack.c.l.b16 %v4949
      %v5046 = vunpack.c.l.b16 %v4950
      %v5047 = vunpack.c.l.b16 %v4951
      %v5048 = vunpack.c.l.b16 %v4952
      %v5049 = vunpack.c.l.b16 %v4953
      %v5050 = vunpack.c.l.b16 %v4954
      %v5051 = vunpack.c.l.b16 %v4955
      %v5052 = vunpack.c.l.b16 %v4956
      %v5053 = vpack.c.b16 %v5038, %v5037
      %v5054 = vpack.c.b16 %v5040, %v5039
      %v5055 = vpack.c.b16 %v5042, %v5041
      %v5056 = vpack.c.b16 %v5044, %v5043
      %v5057 = vpack.c.b16 %v5046, %v5045
      %v5058 = vpack.c.b16 %v5048, %v5047
      %v5059 = vpack.c.b16 %v5050, %v5049
      %v5060 = vpack.c.b16 %v5052, %v5051
      %5069 = vmatpush.bf16.msra.mxu0 %v5060
      %5070 = vmatpush.bf16.msra.mxu0 %v5059
      %5071 = vmatpush.bf16.msra.mxu0 %v5058
      %5072 = vmatpush.bf16.msra.mxu0 %v5057
      %5073 = vmatpush.bf16.msra.mxu0 %v5056
      %5074 = vmatpush.bf16.msra.mxu0 %v5055
      %5075 = vmatpush.bf16.msra.mxu0 %v5054
      %5076 = vmatpush.bf16.msra.mxu0 %v5053
      %5077 = vmatmul.bf16.gmra.mxu0 %v4989
      %v5078 = vpop.f32.mrf.mxu0
      %v5079 = vadd.f32 0.0, %v5078
      %v5080 = vpop.f32.mrf.mxu0
      %v5081 = vadd.f32 0.0, %v5080
      %5082 = vmatmul.bf16.gmra.mxu0 %v4990
      %v5083 = vpop.f32.mrf.mxu0
      %v5084 = vadd.f32 0.0, %v5083
      %v5085 = vpop.f32.mrf.mxu0
      %v5086 = vadd.f32 0.0, %v5085
      %5087 = vmatmul.bf16.gmra.mxu0 %v4991
      %v5088 = vpop.f32.mrf.mxu0
      %v5089 = vadd.f32 0.0, %v5088
      %v5090 = vpop.f32.mrf.mxu0
      %v5091 = vadd.f32 0.0, %v5090
      %5092 = vmatmul.bf16.gmra.mxu0 %v4992
      %v5093 = vpop.f32.mrf.mxu0
      %v5094 = vadd.f32 0.0, %v5093
      %v5095 = vpop.f32.mrf.mxu0
      %v5096 = vadd.f32 0.0, %v5095
      %5097 = vmatmul.bf16.gmra.mxu0 %v4993
      %v5098 = vpop.f32.mrf.mxu0
      %v5099 = vadd.f32 0.0, %v5098
      %v5100 = vpop.f32.mrf.mxu0
      %v5101 = vadd.f32 0.0, %v5100
      %5102 = vmatmul.bf16.gmra.mxu0 %v4994
      %v5103 = vpop.f32.mrf.mxu0
      %v5104 = vadd.f32 0.0, %v5103
      %v5105 = vpop.f32.mrf.mxu0
      %v5106 = vadd.f32 0.0, %v5105
      %5107 = vmatmul.bf16.gmra.mxu0 %v4995
      %v5108 = vpop.f32.mrf.mxu0
      %v5109 = vadd.f32 0.0, %v5108
      %v5110 = vpop.f32.mrf.mxu0
      %v5111 = vadd.f32 0.0, %v5110
      %5112 = vmatmul.bf16.gmra.mxu0 %v4996
      %v5113 = vpop.f32.mrf.mxu0
      %v5114 = vadd.f32 0.0, %v5113
      %v5115 = vpop.f32.mrf.mxu0
      %v5116 = vadd.f32 0.0, %v5115
      %5117 = vmatmul.bf16.gmra.mxu0 %v4997
      %v5118 = vpop.f32.mrf.mxu0
      %v5119 = vadd.f32 0.0, %v5118
      %v5120 = vpop.f32.mrf.mxu0
      %v5121 = vadd.f32 0.0, %v5120
      %5122 = vmatmul.bf16.gmra.mxu0 %v4998
      %v5123 = vpop.f32.mrf.mxu0
      %v5124 = vadd.f32 0.0, %v5123
      %v5125 = vpop.f32.mrf.mxu0
      %v5126 = vadd.f32 0.0, %v5125
      %5127 = vmatmul.bf16.gmra.mxu0 %v4999
      %v5128 = vpop.f32.mrf.mxu0
      %v5129 = vadd.f32 0.0, %v5128
      %v5130 = vpop.f32.mrf.mxu0
      %v5131 = vadd.f32 0.0, %v5130
      %5132 = vmatmul.bf16.gmra.mxu0 %v5000
      %v5133 = vpop.f32.mrf.mxu0
      %v5134 = vadd.f32 0.0, %v5133
      %v5135 = vpop.f32.mrf.mxu0
      %v5136 = vadd.f32 0.0, %v5135
      %5137 = vmatmul.bf16.gmra.mxu0 %v5001
      %v5138 = vpop.f32.mrf.mxu0
      %v5139 = vadd.f32 0.0, %v5138
      %v5140 = vpop.f32.mrf.mxu0
      %v5141 = vadd.f32 0.0, %v5140
      %5142 = vmatmul.bf16.gmra.mxu0 %v5002
      %v5143 = vpop.f32.mrf.mxu0
      %v5144 = vadd.f32 0.0, %v5143
      %v5145 = vpop.f32.mrf.mxu0
      %v5146 = vadd.f32 0.0, %v5145
      %5147 = vmatmul.bf16.gmra.mxu0 %v5003
      %v5148 = vpop.f32.mrf.mxu0
      %v5149 = vadd.f32 0.0, %v5148
      %v5150 = vpop.f32.mrf.mxu0
      %v5151 = vadd.f32 0.0, %v5150
      %5152 = vmatmul.bf16.gmra.mxu0 %v5004
      %v5153 = vpop.f32.mrf.mxu0
      %v5154 = vadd.f32 0.0, %v5153
      %v5155 = vpop.f32.mrf.mxu0
      %v5156 = vadd.f32 0.0, %v5155
      %5157 = vdwg.mxu0
      %v5158 = vadd.f32 %v4748, %v5079
      %v5159 = vadd.f32 %v4749, %v5081
      %v5160 = vadd.f32 %v4750, %v5084
      %v5161 = vadd.f32 %v4751, %v5086
      %v5162 = vadd.f32 %v4752, %v5089
      %v5163 = vadd.f32 %v4753, %v5091
      %v5164 = vadd.f32 %v4754, %v5094
      %v5165 = vadd.f32 %v4755, %v5096
      %v5166 = vadd.f32 %v4756, %v5099
      %v5167 = vadd.f32 %v4757, %v5101
      %v5168 = vadd.f32 %v4758, %v5104
      %v5169 = vadd.f32 %v4759, %v5106
      %v5170 = vadd.f32 %v4760, %v5109
      %v5171 = vadd.f32 %v4761, %v5111
      %v5172 = vadd.f32 %v4762, %v5114
      %v5173 = vadd.f32 %v4763, %v5116
      %v5174 = vadd.f32 %v4764, %v5119
      %v5175 = vadd.f32 %v4765, %v5121
      %v5176 = vadd.f32 %v4766, %v5124
      %v5177 = vadd.f32 %v4767, %v5126
      %v5178 = vadd.f32 %v4768, %v5129
      %v5179 = vadd.f32 %v4769, %v5131
      %v5180 = vadd.f32 %v4770, %v5134
      %v5181 = vadd.f32 %v4771, %v5136
      %v5182 = vadd.f32 %v4772, %v5139
      %v5183 = vadd.f32 %v4773, %v5141
      %v5184 = vadd.f32 %v4774, %v5144
      %v5185 = vadd.f32 %v4775, %v5146
      %v5186 = vadd.f32 %v4776, %v5149
      %v5187 = vadd.f32 %v4777, %v5151
      %v5188 = vadd.f32 %v4778, %v5154
      %v5189 = vadd.f32 %v4779, %v5156
      %5190 = vst [vmem:[#allocation2] sm:$0xff] %v5158
      %5191 = vst [vmem:[#allocation2 + $0x8] sm:$0xff] %v5159
      %5192 = vst [vmem:[#allocation2 + $0x10] sm:$0xff] %v5160
      %5193 = vst [vmem:[#allocation2 + $0x18] sm:$0xff] %v5161
      %5194 = vst [vmem:[#allocation2 + $0x20] sm:$0xff] %v5162
      %5195 = vst [vmem:[#allocation2 + $0x28] sm:$0xff] %v5163
      %5196 = vst [vmem:[#allocation2 + $0x30] sm:$0xff] %v5164
      %5197 = vst [vmem:[#allocation2 + $0x38] sm:$0xff] %v5165
      %5198 = vst [vmem:[#allocation2 + $0x40] sm:$0xff] %v5166
      %5199 = vst [vmem:[#allocation2 + $0x48] sm:$0xff] %v5167
      %5200 = vst [vmem:[#allocation2 + $0x50] sm:$0xff] %v5168
      %5201 = vst [vmem:[#allocation2 + $0x58] sm:$0xff] %v5169
      %5202 = vst [vmem:[#allocation2 + $0x60] sm:$0xff] %v5170
      %5203 = vst [vmem:[#allocation2 + $0x68] sm:$0xff] %v5171
      %5204 = vst [vmem:[#allocation2 + $0x70] sm:$0xff] %v5172
      %5205 = vst [vmem:[#allocation2 + $0x78] sm:$0xff] %v5173
      %5206 = vst [vmem:[#allocation2 + $0x80] sm:$0xff] %v5174
      %5207 = vst [vmem:[#allocation2 + $0x88] sm:$0xff] %v5175
      %5208 = vst [vmem:[#allocation2 + $0x90] sm:$0xff] %v5176
      %5209 = vst [vmem:[#allocation2 + $0x98] sm:$0xff] %v5177
      %5210 = vst [vmem:[#allocation2 + $0xa0] sm:$0xff] %v5178
      %5211 = vst [vmem:[#allocation2 + $0xa8] sm:$0xff] %v5179
      %5212 = vst [vmem:[#allocation2 + $0xb0] sm:$0xff] %v5180
      %5213 = vst [vmem:[#allocation2 + $0xb8] sm:$0xff] %v5181
      %5214 = vst [vmem:[#allocation2 + $0xc0] sm:$0xff] %v5182
      %5215 = vst [vmem:[#allocation2 + $0xc8] sm:$0xff] %v5183
      %5216 = vst [vmem:[#allocation2 + $0xd0] sm:$0xff] %v5184
      %5217 = vst [vmem:[#allocation2 + $0xd8] sm:$0xff] %v5185
      %5218 = vst [vmem:[#allocation2 + $0xe0] sm:$0xff] %v5186
      %5219 = vst [vmem:[#allocation2 + $0xe8] sm:$0xff] %v5187
      %5220 = vst [vmem:[#allocation2 + $0xf0] sm:$0xff] %v5188
      %5221 = vst [vmem:[#allocation2 + $0xf8] sm:$0xff] %v5189
      %v5222 = vld [vmem:[#allocation2] sm:$0xff]
      %v5223 = vld [vmem:[#allocation2 + $0x8] sm:$0xff]
      %v5224 = vld [vmem:[#allocation2 + $0x10] sm:$0xff]
      %v5225 = vld [vmem:[#allocation2 + $0x18] sm:$0xff]
      %v5226 = vld [vmem:[#allocation2 + $0x20] sm:$0xff]
      %v5227 = vld [vmem:[#allocation2 + $0x28] sm:$0xff]
      %v5228 = vld [vmem:[#allocation2 + $0x30] sm:$0xff]
      %v5229 = vld [vmem:[#allocation2 + $0x38] sm:$0xff]
      %v5230 = vld [vmem:[#allocation2 + $0x40] sm:$0xff]
      %v5231 = vld [vmem:[#allocation2 + $0x48] sm:$0xff]
      %v5232 = vld [vmem:[#allocation2 + $0x50] sm:$0xff]
      %v5233 = vld [vmem:[#allocation2 + $0x58] sm:$0xff]
      %v5234 = vld [vmem:[#allocation2 + $0x60] sm:$0xff]
      %v5235 = vld [vmem:[#allocation2 + $0x68] sm:$0xff]
      %v5236 = vld [vmem:[#allocation2 + $0x70] sm:$0xff]
      %v5237 = vld [vmem:[#allocation2 + $0x78] sm:$0xff]
      %v5238 = vld [vmem:[#allocation2 + $0x80] sm:$0xff]
      %v5239 = vld [vmem:[#allocation2 + $0x88] sm:$0xff]
      %v5240 = vld [vmem:[#allocation2 + $0x90] sm:$0xff]
      %v5241 = vld [vmem:[#allocation2 + $0x98] sm:$0xff]
      %v5242 = vld [vmem:[#allocation2 + $0xa0] sm:$0xff]
      %v5243 = vld [vmem:[#allocation2 + $0xa8] sm:$0xff]
      %v5244 = vld [vmem:[#allocation2 + $0xb0] sm:$0xff]
      %v5245 = vld [vmem:[#allocation2 + $0xb8] sm:$0xff]
      %v5246 = vld [vmem:[#allocation2 + $0xc0] sm:$0xff]
      %v5247 = vld [vmem:[#allocation2 + $0xc8] sm:$0xff]
      %v5248 = vld [vmem:[#allocation2 + $0xd0] sm:$0xff]
      %v5249 = vld [vmem:[#allocation2 + $0xd8] sm:$0xff]
      %v5250 = vld [vmem:[#allocation2 + $0xe0] sm:$0xff]
      %v5251 = vld [vmem:[#allocation2 + $0xe8] sm:$0xff]
      %v5252 = vld [vmem:[#allocation2 + $0xf0] sm:$0xff]
      %v5253 = vld [vmem:[#allocation2 + $0xf8] sm:$0xff]
      %v5254 = vpack.c.bf16 %v5222, %v5222
      %v5255 = vpack.c.bf16 %v5223, %v5223
      %v5256 = vpack.c.bf16 %v5224, %v5224
      %v5257 = vpack.c.bf16 %v5225, %v5225
      %v5258 = vpack.c.bf16 %v5226, %v5226
      %v5259 = vpack.c.bf16 %v5227, %v5227
      %v5260 = vpack.c.bf16 %v5228, %v5228
      %v5261 = vpack.c.bf16 %v5229, %v5229
      %v5262 = vpack.c.bf16 %v5230, %v5230
      %v5263 = vpack.c.bf16 %v5231, %v5231
      %v5264 = vpack.c.bf16 %v5232, %v5232
      %v5265 = vpack.c.bf16 %v5233, %v5233
      %v5266 = vpack.c.bf16 %v5234, %v5234
      %v5267 = vpack.c.bf16 %v5235, %v5235
      %v5268 = vpack.c.bf16 %v5236, %v5236
      %v5269 = vpack.c.bf16 %v5237, %v5237
      %v5270 = vpack.c.bf16 %v5238, %v5238
      %v5271 = vpack.c.bf16 %v5239, %v5239
      %v5272 = vpack.c.bf16 %v5240, %v5240
      %v5273 = vpack.c.bf16 %v5241, %v5241
      %v5274 = vpack.c.bf16 %v5242, %v5242
      %v5275 = vpack.c.bf16 %v5243, %v5243
      %v5276 = vpack.c.bf16 %v5244, %v5244
      %v5277 = vpack.c.bf16 %v5245, %v5245
      %v5278 = vpack.c.bf16 %v5246, %v5246
      %v5279 = vpack.c.bf16 %v5247, %v5247
      %v5280 = vpack.c.bf16 %v5248, %v5248
      %v5281 = vpack.c.bf16 %v5249, %v5249
      %v5282 = vpack.c.bf16 %v5250, %v5250
      %v5283 = vpack.c.bf16 %v5251, %v5251
      %v5284 = vpack.c.bf16 %v5252, %v5252
      %v5285 = vpack.c.bf16 %v5253, %v5253
      %5286 = vst [vmem:[%s233] sm:$0xf] %v5254
      %5287 = vst [vmem:[%s233 + $0x4] sm:$0xf] %v5255
      %5288 = vst [vmem:[%s233 + $0x8] sm:$0xf] %v5256
      %5289 = vst [vmem:[%s233 + $0xc] sm:$0xf] %v5257
      %5290 = vst [vmem:[%s233 + $0x10] sm:$0xf] %v5258
      %5291 = vst [vmem:[%s233 + $0x14] sm:$0xf] %v5259
      %5292 = vst [vmem:[%s233 + $0x18] sm:$0xf] %v5260
      %5293 = vst [vmem:[%s233 + $0x1c] sm:$0xf] %v5261
      %5294 = vst [vmem:[%s233 + $0x20] sm:$0xf] %v5262
      %5295 = vst [vmem:[%s233 + $0x24] sm:$0xf] %v5263
      %5296 = vst [vmem:[%s233 + $0x28] sm:$0xf] %v5264
      %5297 = vst [vmem:[%s233 + $0x2c] sm:$0xf] %v5265
      %5298 = vst [vmem:[%s233 + $0x30] sm:$0xf] %v5266
      %5299 = vst [vmem:[%s233 + $0x34] sm:$0xf] %v5267
      %5300 = vst [vmem:[%s233 + $0x38] sm:$0xf] %v5268
      %5301 = vst [vmem:[%s233 + $0x3c] sm:$0xf] %v5269
      %5302 = vst [vmem:[%s233 + $0x40] sm:$0xf] %v5270
      %5303 = vst [vmem:[%s233 + $0x44] sm:$0xf] %v5271
      %5304 = vst [vmem:[%s233 + $0x48] sm:$0xf] %v5272
      %5305 = vst [vmem:[%s233 + $0x4c] sm:$0xf] %v5273
      %5306 = vst [vmem:[%s233 + $0x50] sm:$0xf] %v5274
      %5307 = vst [vmem:[%s233 + $0x54] sm:$0xf] %v5275
      %5308 = vst [vmem:[%s233 + $0x58] sm:$0xf] %v5276
      %5309 = vst [vmem:[%s233 + $0x5c] sm:$0xf] %v5277
      %5310 = vst [vmem:[%s233 + $0x60] sm:$0xf] %v5278
      %5311 = vst [vmem:[%s233 + $0x64] sm:$0xf] %v5279
      %5312 = vst [vmem:[%s233 + $0x68] sm:$0xf] %v5280
      %5313 = vst [vmem:[%s233 + $0x6c] sm:$0xf] %v5281
      %5314 = vst [vmem:[%s233 + $0x70] sm:$0xf] %v5282
      %5315 = vst [vmem:[%s233 + $0x74] sm:$0xf] %v5283
      %5316 = vst [vmem:[%s233 + $0x78] sm:$0xf] %v5284
      %5317 = vst [vmem:[%s233 + $0x7c] sm:$0xf] %v5285
      %v5318 = vadd.f32 %v5222, %v5223
      %v5319 = vadd.f32 %v5318, %v5224
      %v5320 = vadd.f32 %v5319, %v5225
      %v5321 = vadd.f32 %v5320, %v5226
      %v5322 = vadd.f32 %v5321, %v5227
      %v5323 = vadd.f32 %v5322, %v5228
      %v5324 = vadd.f32 %v5323, %v5229
      %v5325 = vadd.f32 %v5324, %v5230
      %v5326 = vadd.f32 %v5325, %v5231
      %v5327 = vadd.f32 %v5326, %v5232
      %v5328 = vadd.f32 %v5327, %v5233
      %v5329 = vadd.f32 %v5328, %v5234
      %v5330 = vadd.f32 %v5329, %v5235
      %v5331 = vadd.f32 %v5330, %v5236
      %v5332 = vadd.f32 %v5331, %v5237
      %v5333 = vadd.f32 %v5332, %v5238
      %v5334 = vadd.f32 %v5333, %v5239
      %v5335 = vadd.f32 %v5334, %v5240
      %v5336 = vadd.f32 %v5335, %v5241
      %v5337 = vadd.f32 %v5336, %v5242
      %v5338 = vadd.f32 %v5337, %v5243
      %v5339 = vadd.f32 %v5338, %v5244
      %v5340 = vadd.f32 %v5339, %v5245
      %v5341 = vadd.f32 %v5340, %v5246
      %v5342 = vadd.f32 %v5341, %v5247
      %v5343 = vadd.f32 %v5342, %v5248
      %v5344 = vadd.f32 %v5343, %v5249
      %v5345 = vadd.f32 %v5344, %v5250
      %v5346 = vadd.f32 %v5345, %v5251
      %v5347 = vadd.f32 %v5346, %v5252
      %v5348 = vadd.f32 %v5347, %v5253
      %v5349 = vrot.slane %v5348, 4
      %v5350 = vadd.f32 %v5348, %v5349
      %v5351 = vrot.slane %v5350, 2
      %v5352 = vadd.f32 %v5350, %v5351
      %v5353 = vrot.slane %v5352, 1
      %v5354 = vadd.f32 %v5352, %v5353
      %v5355 = vmul.f32 %v5222, %v5222
      %v5356 = vmul.f32 %v5223, %v5223
      %v5357 = vmul.f32 %v5224, %v5224
      %v5358 = vmul.f32 %v5225, %v5225
      %v5359 = vmul.f32 %v5226, %v5226
      %v5360 = vmul.f32 %v5227, %v5227
      %v5361 = vmul.f32 %v5228, %v5228
      %v5362 = vmul.f32 %v5229, %v5229
      %v5363 = vmul.f32 %v5230, %v5230
      %v5364 = vmul.f32 %v5231, %v5231
      %v5365 = vmul.f32 %v5232, %v5232
      %v5366 = vmul.f32 %v5233, %v5233
      %v5367 = vmul.f32 %v5234, %v5234
      %v5368 = vmul.f32 %v5235, %v5235
      %v5369 = vmul.f32 %v5236, %v5236
      %v5370 = vmul.f32 %v5237, %v5237
      %v5371 = vmul.f32 %v5238, %v5238
      %v5372 = vmul.f32 %v5239, %v5239
      %v5373 = vmul.f32 %v5240, %v5240
      %v5374 = vmul.f32 %v5241, %v5241
      %v5375 = vmul.f32 %v5242, %v5242
      %v5376 = vmul.f32 %v5243, %v5243
      %v5377 = vmul.f32 %v5244, %v5244
      %v5378 = vmul.f32 %v5245, %v5245
      %v5379 = vmul.f32 %v5246, %v5246
      %v5380 = vmul.f32 %v5247, %v5247
      %v5381 = vmul.f32 %v5248, %v5248
      %v5382 = vmul.f32 %v5249, %v5249
      %v5383 = vmul.f32 %v5250, %v5250
      %v5384 = vmul.f32 %v5251, %v5251
      %v5385 = vmul.f32 %v5252, %v5252
      %v5386 = vmul.f32 %v5253, %v5253
      %v5387 = vadd.f32 %v5355, %v5356
      %v5388 = vadd.f32 %v5387, %v5357
      %v5389 = vadd.f32 %v5388, %v5358
      %v5390 = vadd.f32 %v5389, %v5359
      %v5391 = vadd.f32 %v5390, %v5360
      %v5392 = vadd.f32 %v5391, %v5361
      %v5393 = vadd.f32 %v5392, %v5362
      %v5394 = vadd.f32 %v5393, %v5363
      %v5395 = vadd.f32 %v5394, %v5364
      %v5396 = vadd.f32 %v5395, %v5365
      %v5397 = vadd.f32 %v5396, %v5366
      %v5398 = vadd.f32 %v5397, %v5367
      %v5399 = vadd.f32 %v5398, %v5368
      %v5400 = vadd.f32 %v5399, %v5369
      %v5401 = vadd.f32 %v5400, %v5370
      %v5402 = vadd.f32 %v5401, %v5371
      %v5403 = vadd.f32 %v5402, %v5372
      %v5404 = vadd.f32 %v5403, %v5373
      %v5405 = vadd.f32 %v5404, %v5374
      %v5406 = vadd.f32 %v5405, %v5375
      %v5407 = vadd.f32 %v5406, %v5376
      %v5408 = vadd.f32 %v5407, %v5377
      %v5409 = vadd.f32 %v5408, %v5378
      %v5410 = vadd.f32 %v5409, %v5379
      %v5411 = vadd.f32 %v5410, %v5380
      %v5412 = vadd.f32 %v5411, %v5381
      %v5413 = vadd.f32 %v5412, %v5382
      %v5414 = vadd.f32 %v5413, %v5383
      %v5415 = vadd.f32 %v5414, %v5384
      %v5416 = vadd.f32 %v5415, %v5385
      %v5417 = vadd.f32 %v5416, %v5386
      %v5418 = vrot.slane %v5417, 4
      %v5419 = vadd.f32 %v5417, %v5418
      %v5420 = vrot.slane %v5419, 2
      %v5421 = vadd.f32 %v5419, %v5420
      %v5422 = vrot.slane %v5421, 1
      %v5423 = vadd.f32 %v5421, %v5422
      %vm5424 = vcmask 1040384
      %v5425 = vsel %vm5424, %v5354, %v5423
      %5426 = vst [vmem:[%s243] sm:$0x3] %v5425
      %s5427 = sadd.s32 %s20, %s21
      %s5428 = smul.u32 32, %s5427
      %p5429 = scmp.lt.s32.totalorder %s5428, 63
      %s5430 = scalar_select %p5429, %s5428, 63
      %p5431 = scmp.lt.s32.totalorder %s22, 0
      %s5432 = scalar_select %p5431, %s22, 0
      %s5433 = sadd.s32 %s5432, %s5430
      %s5434 = smul.addr %s5433, 4
      %s5435 = scalar_lea.vmem %s2, %s5434
      %s5436 = sadd.s32 %s20, %s21
      %p5437 = scmp.lt.s32.totalorder %s5436, 1
      %s5438 = scalar_select %p5437, %s5436, 1
      %p5439 = scmp.lt.s32.totalorder %s22, 0
      %s5440 = scalar_select %p5439, %s22, 0
      %s5441 = sadd.s32 %s5440, %s5438
      %s5442 = smul.addr %s5441, 2
      %s5443 = scalar_lea.vmem %s3, %s5442
      // Predicated region
      $region29: #{bottleneck_forward.9} parent=27 // pred_check
        %p5444 = pneg %p108
      $region30: #{bottleneck_forward.9} parent=27 // pred_check_branch
        %5446 = sbr.rel (%p5444) target = $region32
      $region31: #{bottleneck_forward.9} parent=27 // pred_region
        %s5447 = sadd.s32 %s20, %s21
        %s5448 = smul.u32 32, %s5447
      $region32: #{bottleneck_forward.9} parent=27 // pred_fallthru
        _
      // Predicated region
      $region33: #{bottleneck_forward.9} parent=27 // pred_check
        %p5449 = pneg %p138
      $region34: #{bottleneck_forward.9} parent=27 // pred_check_branch
        %5451 = sbr.rel (%p5449) target = $region36
      $region35: #{bottleneck_forward.9} parent=27 // pred_region
        %s5452 = sadd.s32 %s20, %s21
      $region36: #{bottleneck_forward.9} parent=27 // pred_fallthru
        _
    $region28: #{bottleneck_forward.9} parent=5 // pred_fallthru
      _
    %p5453 = scmp.le.s32.totalorder 2, %s10
    // Predicated region
    $region37: #{bottleneck_forward.9} parent=5 // pred_check
      %p5454 = pneg %p5453
    $region38: #{bottleneck_forward.9} parent=5 // pred_check_branch
      %5456 = sbr.rel (%p5454) target = $region40
    $region39: #{bottleneck_forward.9} parent=5 // pred_region
      %s5457 = ssub.s32 %s10, 2
      // Predicated region
      $region41: #{bottleneck_forward.9} parent=39 // pred_check
        %p5458 = pneg %p114
      $region42: #{bottleneck_forward.9} parent=39 // pred_check_branch
        %5460 = sbr.rel (%p5458) target = $region44
      $region43: #{bottleneck_forward.9} parent=39 // pred_region
        %s5461 = sadd.s32 %s23, %s24
        %s5462 = smul.u32 32, %s5461
        %p5463 = scmp.lt.s32.totalorder %s5462, 63
        %s5464 = scalar_select %p5463, %s5462, 63
        %p5465 = scmp.lt.s32.totalorder %s25, 0
        %s5466 = scalar_select %p5465, %s25, 0
        %s5467 = sadd.s32 %s5466, %s5464
        %s5468 = smul.addr %s5467, 4
        %s5469 = scalar_lea.vmem %s2, %s5468
      $region44: #{bottleneck_forward.9} parent=39 // pred_fallthru
        _
      // Predicated region
      $region45: #{bottleneck_forward.9} parent=39 // pred_check
        %p5470 = pneg %p144
      $region46: #{bottleneck_forward.9} parent=39 // pred_check_branch
        %5472 = sbr.rel (%p5470) target = $region48
      $region47: #{bottleneck_forward.9} parent=39 // pred_region
        %s5473 = sadd.s32 %s23, %s24
        %p5474 = scmp.lt.s32.totalorder %s5473, 1
        %s5475 = scalar_select %p5474, %s5473, 1
        %p5476 = scmp.lt.s32.totalorder %s25, 0
        %s5477 = scalar_select %p5476, %s25, 0
        %s5478 = sadd.s32 %s5477, %s5475
        %s5479 = smul.addr %s5478, 2
        %s5480 = scalar_lea.vmem %s3, %s5479
      $region48: #{bottleneck_forward.9} parent=39 // pred_fallthru
        _
    $region40: #{bottleneck_forward.9} parent=5 // pred_fallthru
      _
  $region6: #{bottleneck_forward.9} parent=0 // loop_footer
    %s14 = sadd.s32 1, %s10
  $region7: #{bottleneck_forward.9} parent=0 // loop_footer_branch
    %9 = sbr.rel target = $region3
  $region8: #{bottleneck_forward.9} parent=0 // loop_exit
    _

</llo_original>
